<compile_context>
chip_gen: v7x
topology: tpu7x:2x2x1
jax: 0.10.0
libtpu: 0.0.40
codegen_flags: <defaults>
</compile_context>

<pallas_src>
import functools

import jax
import jax.numpy as jnp
from jax import lax
from jax.experimental import pallas as pl
from jax.experimental.pallas import tpu as pltpu


def _fused_banded_conv_weight(w_hwio, W):
    """Fold ALL KxK taps + C_in of a SAME conv into one matmul weight.

    Returns Wcat of shape (K*W*Ci, W*Co) such that, for an operand row
        op[y] = concat_ky( x[y + ky - K//2, :] )        (lane-dense (W*Ci) rows,
                                                         zeros out of range)
    the whole KxK conv is a single matmul:  conv(x)[y, :] = op[y] @ Wcat.
    The horizontal zero padding is implicit in the block-band structure.
    """
    K, _, Ci, Co = w_hwio.shape
    P = K // 2
    xr = jnp.arange(W)[:, None]          # input x position
    xo = jnp.arange(W)[None, :]          # output x position
    kx = xr - xo + P                     # horizontal tap connecting them
    valid = (kx >= 0) & (kx < K)
    taps = w_hwio[:, jnp.clip(kx, 0, K - 1)]               # (K, W, W, Ci, Co)
    taps = jnp.where(valid[None, :, :, None, None], taps, 0.0)
    # (ky, xr, xo, ci, co) -> (ky, xr, ci, xo, co) -> (K, W*Ci, W*Co)
    banded = taps.transpose(0, 1, 3, 2, 4).reshape(K, W * Ci, W * Co)
    # Fold the K vertical taps into the contraction axis: (K*W*Ci, W*Co).
    return banded.reshape(K * W * Ci, W * Co)


def rcab_kernel(x_ref, w1_ref, b1_ref, w2_ref, b2_ref,
                wd_ref, bd_ref, wu_ref, bu_ref, o_ref,
                op_ref, *, Bt, H, W, C, K):
    P = K // 2
    WC = W * C
    inv_hw = 1.0 / (H * W)

    def build_operand(get_rows):
        """Stage the (Bt*H, K*WC) bf16 fused-conv operand (aligned stores only).

        Chunk ky of output row y holds input row y + ky - P (zeros at image
        borders); the zero borders also isolate stacked images.  Every element
        is rewritten on every call, so nothing stale survives across steps.
        """
        for b in range(Bt):
            rows = get_rows(b)                               # (H, WC) bf16
            chunks = []
            for ky in range(K):
                d = ky - P                                   # input-row offset
                if d == 0:
                    chunks.append(rows)
                elif d < 0:
                    chunks.append(jnp.concatenate(
                        [jnp.zeros((-d, WC), jnp.bfloat16), rows[:H + d, :]],
                        axis=0))
                else:
                    chunks.append(jnp.concatenate(
                        [rows[d:, :], jnp.zeros((d, WC), jnp.bfloat16)],
                        axis=0))
            # Single aligned (H, K*WC) store per image per conv.
            op_ref[b * H:(b + 1) * H, :] = jnp.concatenate(chunks, axis=1)

    def conv(w_ref, b_row):
        # One deep MXU contraction: (Bt*H, K*WC) x (K*WC, WC), f32 accumulate.
        y = jnp.dot(op_ref[...], w_ref[...], preferred_element_type=jnp.float32)
        return y + b_row                                      # (Bt*H, WC) f32

    x_all = x_ref[...]                                        # (Bt, H, WC) f32

    # ---- conv1 + ReLU (bias / ReLU in f32) ----
    build_operand(lambda b: x_all[b].astype(jnp.bfloat16))
    h1 = jnp.maximum(conv(w1_ref, b1_ref[...]), 0.0)          # (Bt*H, WC) f32

    # ---- conv2 ----
    build_operand(lambda b: h1[b * H:(b + 1) * H, :].astype(jnp.bfloat16))
    res = conv(w2_ref, b2_ref[...])                           # (Bt*H, WC) f32
    res3 = res.reshape(Bt, H, WC)

    # ---- CALayer ----
    # Row-reduce first (VPU), then project: the per-image global average pool
    # folds into the 1x1 down-projection because wd is tiled W times:
    #   mean_{H,W}(res) @ wd == (sum_H(res) / (H*W)) @ tile_W(wd)
    pooled = jnp.sum(res3, axis=1) * inv_hw                   # (Bt, WC) f32
    z = jnp.maximum(
        jnp.dot(pooled, wd_ref[...], preferred_element_type=jnp.float32)
        + bd_ref[...], 0.0)                                   # (Bt, C//r)
    # Up-projection weight/bias are pre-tiled on the host, so the per-image
    # channel scale comes out directly as a lane-dense (Bt, WC) block.
    s = jax.nn.sigmoid(
        jnp.dot(z, wu_ref[...], preferred_element_type=jnp.float32)
        + bu_ref[...])                                        # (Bt, WC)

    # channel-wise scale + residual add, all lane-dense.
    o_ref[...] = (res3 * s[:, None, :] + x_all).astype(o_ref.dtype)


def rcab_forward(x, params, *, kernel_size=3, batch_tile=None,
                 single_buffer_weights=True):
    """x: (B, H, W, C) float32; params = (w1, b1, w2, b2, wd, bd, wu, bu).

    w1/w2: (K, K, C, C) HWIO, b1/b2: (1, C), wd: (C, C//r), bd: (1, C//r),
    wu: (C//r, C), bu: (1, C).
    """
    w1, b1, w2, b2, wd, bd, wu, bu = params
    B, H, W, C = x.shape
    K = kernel_size
    WC = W * C
    Cr = wd.shape[1]

    if batch_tile is None:
        # Stack images along the matmul M dimension to raise MXU utilisation,
        # but keep >= 2 grid steps when possible so both v7x TensorCores get
        # work ("parallel" grid axes shard across cores; steps on one core run
        # sequentially).  On single-TC chips pass batch_tile=B for max M.
        batch_tile = 1 if B < 2 else next(
            d for d in range(B // 2, 0, -1) if B % d == 0)
    Bt = batch_tile
    assert B % Bt == 0, "batch_tile must divide the batch size"
    G = B // Bt

    # Host-side one-time weight prep: fused block-banded bf16 conv weights and
    # lane-dense (., W*C) tilings of the biases / CA projections.
    w1c = _fused_banded_conv_weight(w1, W).astype(jnp.bfloat16)   # (K*WC, WC)
    w2c = _fused_banded_conv_weight(w2, W).astype(jnp.bfloat16)
    b1r = jnp.tile(b1, (1, W))                                    # (1, WC)
    b2r = jnp.tile(b2, (1, W))
    wdr = jnp.tile(wd, (W, 1))                                    # (WC, Cr)
    wur = jnp.tile(wu, (1, W))                                    # (Cr, WC)
    bur = jnp.tile(bu, (1, W))                                    # (1, WC)

    x_flat = x.reshape(B, H, WC)                                  # lane-dense slab

    def const_spec(shape):
        # Constant-index operands are fetched once; single-buffer them to avoid
        # the default double-buffer VMEM cost (review item 4).
        n = len(shape)
        idx = lambda g: (0,) * n
        if single_buffer_weights:
            return pl.BlockSpec(shape, idx, pipeline_mode=pl.Buffered(1))
        return pl.BlockSpec(shape, idx)

    kern = functools.partial(rcab_kernel, Bt=Bt, H=H, W=W, C=C, K=K)

    out_flat = pl.pallas_call(
        kern,
        out_shape=jax.ShapeDtypeStruct((B, H, WC), x.dtype),
        grid_spec=pltpu.PrefetchScalarGridSpec(
            num_scalar_prefetch=0,
            grid=(G,),
            in_specs=[
                pl.BlockSpec((Bt, H, WC), lambda g: (g, 0, 0)),   # x (lane-dense)
                const_spec((K * WC, WC)),                         # conv1 fused weight
                const_spec((1, WC)),                              # conv1 bias row
                const_spec((K * WC, WC)),                         # conv2 fused weight
                const_spec((1, WC)),                              # conv2 bias row
                const_spec((WC, Cr)),                             # CA down proj (tiled)
                const_spec((1, Cr)),                              # CA down bias
                const_spec((Cr, WC)),                             # CA up proj (tiled)
                const_spec((1, WC)),                              # CA up bias (tiled)
            ],
            out_specs=pl.BlockSpec((Bt, H, WC), lambda g: (g, 0, 0)),
            scratch_shapes=[
                # Fused conv operand, bf16, reused by both convs.
                pltpu.VMEM((Bt * H, K * WC), jnp.bfloat16),
            ],
        ),
        compiler_params=pltpu.CompilerParams(
            dimension_semantics=("parallel",)),   # batch groups are independent
    )(x_flat, w1c, b1r, w2c, b2r, wdr, bd, wur, bur)

    return out_flat.reshape(B, H, W, C)


def rcab_reference(x, params):
    """Pure-JAX reference (mirrors the PyTorch forward, NHWC layout, all f32)."""
    w1, b1, w2, b2, wd, bd, wu, bu = params

    def conv(v, w, b):
        y = lax.conv_general_dilated(
            v, w, window_strides=(1, 1), padding="SAME",
            dimension_numbers=("NHWC", "HWIO", "NHWC"))
        return y + b.reshape(1, 1, 1, -1)

    h = jax.nn.relu(conv(x, w1, b1))
    res = conv(h, w2, b2)
    y = jnp.mean(res, axis=(1, 2), keepdims=True)                 # (B,1,1,C)
    z = jax.nn.relu(jnp.einsum("bijc,cd->bijd", y, wd) + bd.reshape(1, 1, 1, -1))
    s = jax.nn.sigmoid(jnp.einsum("bijd,dc->bijc", z, wu) + bu.reshape(1, 1, 1, -1))
    return res * s + x


if __name__ == "__main__":
    B, H, W = 2, 16, 16
    n_feat, kernel_size, reduction = 32, 3, 4
    Cr = n_feat // reduction

    key = jax.random.PRNGKey(0)
    ks = jax.random.split(key, 9)
    x = jax.random.normal(ks[0], (B, H, W, n_feat), jnp.float32)

    # Deterministic synthetic parameters (shapes match the nn.Module __init__).
    w1 = 0.05 * jax.random.normal(ks[1], (kernel_size, kernel_size, n_feat, n_feat), jnp.float32)
    b1 = 0.05 * jax.random.normal(ks[2], (1, n_feat), jnp.float32)
    w2 = 0.05 * jax.random.normal(ks[3], (kernel_size, kernel_size, n_feat, n_feat), jnp.float32)
    b2 = 0.05 * jax.random.normal(ks[4], (1, n_feat), jnp.float32)
    wd = 0.05 * jax.random.normal(ks[5], (n_feat, Cr), jnp.float32)
    bd = 0.05 * jax.random.normal(ks[6], (1, Cr), jnp.float32)
    wu = 0.05 * jax.random.normal(ks[7], (Cr, n_feat), jnp.float32)
    bu = 0.05 * jax.random.normal(ks[8], (1, n_feat), jnp.float32)
    params = (w1, b1, w2, b2, wd, bd, wu, bu)

    def run(single_buffer):
        f_default = jax.jit(functools.partial(
            rcab_forward, kernel_size=kernel_size,
            single_buffer_weights=single_buffer))
        f_stacked = jax.jit(functools.partial(
            rcab_forward, kernel_size=kernel_size, batch_tile=B,
            single_buffer_weights=single_buffer))
        return (jax.block_until_ready(f_default(x, params)),
                jax.block_until_ready(f_stacked(x, params)))

    try:
        out, out_stacked = run(True)
    except Exception:
        # Fallback for JAX builds whose TPU pallas_call lowering does not accept
        # BlockSpec(pipeline_mode=pl.Buffered(1)): rerun with the default
        # (double-buffered) weight specs; every other optimization still applies.
        out, out_stacked = run(False)

    ref = jax.block_until_ready(rcab_reference(x, params))

    assert out.shape == (B, H, W, n_feat) and out.dtype == jnp.float32
    max_err = float(jnp.max(jnp.abs(out - ref)))
    max_err_stacked = float(jnp.max(jnp.abs(out_stacked - ref)))
    # Tolerance reflects the bf16 MXU conv operands; accumulation stays f32.
    assert jnp.allclose(out, ref, rtol=5e-2, atol=5e-2), f"max abs err {max_err}"
    assert jnp.allclose(out_stacked, ref, rtol=5e-2, atol=5e-2), \
        f"stacked max abs err {max_err_stacked}"
    print("KERNEL_OK")
</pallas_src>

<mosaic_0001>
module attributes {stable_mosaic.version = 11 : i64} {
  func.func @rcab_kernel(%arg0: i32, %arg1: memref<1x16x512xf32, #tpu.memory_space<vmem>>, %arg2: memref<1536x512xbf16, #tpu.memory_space<vmem>>, %arg3: memref<1x512xf32, #tpu.memory_space<vmem>>, %arg4: memref<1536x512xbf16, #tpu.memory_space<vmem>>, %arg5: memref<1x512xf32, #tpu.memory_space<vmem>>, %arg6: memref<512x8xf32, #tpu.memory_space<vmem>>, %arg7: memref<1x8xf32, #tpu.memory_space<vmem>>, %arg8: memref<8x512xf32, #tpu.memory_space<vmem>>, %arg9: memref<1x512xf32, #tpu.memory_space<vmem>>, %arg10: memref<1x16x512xf32, #tpu.memory_space<vmem>>, %arg11: memref<16x1536xbf16, #tpu.memory_space<vmem>>) attributes {dimension_semantics = [#tpu.dimension_semantics<parallel>], iteration_bounds = array<i64: 2>, scalar_prefetch = 0 : i64, scratch_operands = 1 : i64, tpu.core_type = #tpu.core_type<tc>, window_params = [{transform_indices = @transform_0, window_bounds = array<i64: 1, 16, 512>}, {pipeline_mode = #tpu.pipeline_mode<synchronous>, transform_indices = @transform_1, window_bounds = array<i64: 1536, 512>}, {pipeline_mode = #tpu.pipeline_mode<synchronous>, transform_indices = @transform_2, window_bounds = array<i64: 1, 512>}, {pipeline_mode = #tpu.pipeline_mode<synchronous>, transform_indices = @transform_3, window_bounds = array<i64: 1536, 512>}, {pipeline_mode = #tpu.pipeline_mode<synchronous>, transform_indices = @transform_4, window_bounds = array<i64: 1, 512>}, {pipeline_mode = #tpu.pipeline_mode<synchronous>, transform_indices = @transform_5, window_bounds = array<i64: 512, 8>}, {pipeline_mode = #tpu.pipeline_mode<synchronous>, transform_indices = @transform_6, window_bounds = array<i64: 1, 8>}, {pipeline_mode = #tpu.pipeline_mode<synchronous>, transform_indices = @transform_7, window_bounds = array<i64: 8, 512>}, {pipeline_mode = #tpu.pipeline_mode<synchronous>, transform_indices = @transform_8, window_bounds = array<i64: 1, 512>}, {transform_indices = @transform_9, window_bounds = array<i64: 1, 16, 512>}]} {
    %c0 = arith.constant 0 : index
    %c0_0 = arith.constant 0 : index
    %c0_1 = arith.constant 0 : index
    %0 = vector.load %arg1[%c0, %c0_0, %c0_1] : memref<1x16x512xf32, #tpu.memory_space<vmem>>, vector<1x16x512xf32>
    %1 = vector.shape_cast %0 : vector<1x16x512xf32> to vector<16x512xf32>
    %2 = arith.truncf %1 : vector<16x512xf32> to vector<16x512xbf16>
    %cst = arith.constant 0.000000e+00 : bf16
    %3 = vector.broadcast %cst : bf16 to vector<1x512xbf16>
    %4 = vector.extract_strided_slice %2 {offsets = [0, 0], sizes = [15, 512], strides = [1, 1]} : vector<16x512xbf16> to vector<15x512xbf16>
    %5 = tpu.concatenate %3, %4 in 0 : vector<1x512xbf16>, vector<15x512xbf16> -> vector<16x512xbf16>
    %6 = vector.extract_strided_slice %2 {offsets = [1, 0], sizes = [15, 512], strides = [1, 1]} : vector<16x512xbf16> to vector<15x512xbf16>
    %cst_2 = arith.constant 0.000000e+00 : bf16
    %7 = vector.broadcast %cst_2 : bf16 to vector<1x512xbf16>
    %8 = tpu.concatenate %6, %7 in 0 : vector<15x512xbf16>, vector<1x512xbf16> -> vector<16x512xbf16>
    %9 = tpu.concatenate %5, %2, %8 in 1 : vector<16x512xbf16>, vector<16x512xbf16>, vector<16x512xbf16> -> vector<16x1536xbf16>
    %c0_3 = arith.constant 0 : index
    %c0_4 = arith.constant 0 : index
    %10 = vector.load %arg11[%c0_3, %c0_4] : memref<16x1536xbf16, #tpu.memory_space<vmem>>, vector<16x1536xbf16>
    tpu.vector_store %arg11[%c0_3, %c0_4], %9 {strides = array<i32>} : memref<16x1536xbf16, #tpu.memory_space<vmem>>, vector<16x1536xbf16>,
    %c0_5 = arith.constant 0 : index
    %c0_6 = arith.constant 0 : index
    %11 = vector.load %arg3[%c0_5, %c0_6] : memref<1x512xf32, #tpu.memory_space<vmem>>, vector<1x512xf32>
    %c0_7 = arith.constant 0 : index
    %c0_8 = arith.constant 0 : index
    %12 = vector.load %arg11[%c0_7, %c0_8] : memref<16x1536xbf16, #tpu.memory_space<vmem>>, vector<16x1536xbf16>
    %c0_9 = arith.constant 0 : index
    %c0_10 = arith.constant 0 : index
    %13 = vector.load %arg2[%c0_9, %c0_10] : memref<1536x512xbf16, #tpu.memory_space<vmem>>, vector<1536x512xbf16>
    %cst_11 = arith.constant dense<0.000000e+00> : vector<16x512xf32>
    %14 = tpu.matmul %12, %13, %cst_11 {dimension_numbers = #tpu.dot_dimension_numbers<[1], [0], [0], [1], [0, 0, 1, 1], [], []>} : vector<16x1536xbf16>, vector<1536x512xbf16>, vector<16x512xf32> -> vector<16x512xf32>
    %15 = vector.broadcast %11 : vector<1x512xf32> to vector<16x512xf32>
    %16 = arith.addf %14, %15 : vector<16x512xf32>
    %cst_12 = arith.constant 0.000000e+00 : f32
    %17 = vector.broadcast %cst_12 : f32 to vector<16x512xf32>
    %18 = arith.maximumf %16, %17 : vector<16x512xf32>
    %19 = arith.truncf %18 : vector<16x512xf32> to vector<16x512xbf16>
    %cst_13 = arith.constant 0.000000e+00 : bf16
    %20 = vector.broadcast %cst_13 : bf16 to vector<1x512xbf16>
    %21 = vector.extract_strided_slice %19 {offsets = [0, 0], sizes = [15, 512], strides = [1, 1]} : vector<16x512xbf16> to vector<15x512xbf16>
    %22 = tpu.concatenate %20, %21 in 0 : vector<1x512xbf16>, vector<15x512xbf16> -> vector<16x512xbf16>
    %23 = vector.extract_strided_slice %19 {offsets = [1, 0], sizes = [15, 512], strides = [1, 1]} : vector<16x512xbf16> to vector<15x512xbf16>
    %cst_14 = arith.constant 0.000000e+00 : bf16
    %24 = vector.broadcast %cst_14 : bf16 to vector<1x512xbf16>
    %25 = tpu.concatenate %23, %24 in 0 : vector<15x512xbf16>, vector<1x512xbf16> -> vector<16x512xbf16>
    %26 = tpu.concatenate %22, %19, %25 in 1 : vector<16x512xbf16>, vector<16x512xbf16>, vector<16x512xbf16> -> vector<16x1536xbf16>
    %c0_15 = arith.constant 0 : index
    %c0_16 = arith.constant 0 : index
    %27 = vector.load %arg11[%c0_15, %c0_16] : memref<16x1536xbf16, #tpu.memory_space<vmem>>, vector<16x1536xbf16>
    tpu.vector_store %arg11[%c0_15, %c0_16], %26 {strides = array<i32>} : memref<16x1536xbf16, #tpu.memory_space<vmem>>, vector<16x1536xbf16>,
    %c0_17 = arith.constant 0 : index
    %c0_18 = arith.constant 0 : index
    %28 = vector.load %arg5[%c0_17, %c0_18] : memref<1x512xf32, #tpu.memory_space<vmem>>, vector<1x512xf32>
    %c0_19 = arith.constant 0 : index
    %c0_20 = arith.constant 0 : index
    %29 = vector.load %arg11[%c0_19, %c0_20] : memref<16x1536xbf16, #tpu.memory_space<vmem>>, vector<16x1536xbf16>
    %c0_21 = arith.constant 0 : index
    %c0_22 = arith.constant 0 : index
    %30 = vector.load %arg4[%c0_21, %c0_22] : memref<1536x512xbf16, #tpu.memory_space<vmem>>, vector<1536x512xbf16>
    %cst_23 = arith.constant dense<0.000000e+00> : vector<16x512xf32>
    %31 = tpu.matmul %29, %30, %cst_23 {dimension_numbers = #tpu.dot_dimension_numbers<[1], [0], [0], [1], [0, 0, 1, 1], [], []>} : vector<16x1536xbf16>, vector<1536x512xbf16>, vector<16x512xf32> -> vector<16x512xf32>
    %32 = vector.broadcast %28 : vector<1x512xf32> to vector<16x512xf32>
    %33 = arith.addf %31, %32 : vector<16x512xf32>
    %34 = vector.shape_cast %33 : vector<16x512xf32> to vector<1x16x512xf32>
    %cst_24 = arith.constant dense<0.000000e+00> : vector<1x512xf32>
    %35 = vector.multi_reduction <add>, %34, %cst_24 [1] : vector<1x16x512xf32> to vector<1x512xf32>
    %cst_25 = arith.constant 3.906250e-03 : f32
    %36 = vector.broadcast %cst_25 : f32 to vector<1x512xf32>
    %37 = arith.mulf %35, %36 : vector<1x512xf32>
    %c0_26 = arith.constant 0 : index
    %c0_27 = arith.constant 0 : index
    %38 = vector.load %arg6[%c0_26, %c0_27] : memref<512x8xf32, #tpu.memory_space<vmem>>, vector<512x8xf32>
    %cst_28 = arith.constant dense<0.000000e+00> : vector<1x8xf32>
    %39 = tpu.matmul %37, %38, %cst_28 {dimension_numbers = #tpu.dot_dimension_numbers<[1], [0], [0], [1], [0, 0, 1, 1], [], []>} : vector<1x512xf32>, vector<512x8xf32>, vector<1x8xf32> -> vector<1x8xf32>
    %c0_29 = arith.constant 0 : index
    %c0_30 = arith.constant 0 : index
    %40 = vector.load %arg7[%c0_29, %c0_30] : memref<1x8xf32, #tpu.memory_space<vmem>>, vector<1x8xf32>
    %41 = arith.addf %39, %40 : vector<1x8xf32>
    %cst_31 = arith.constant 0.000000e+00 : f32
    %42 = vector.broadcast %cst_31 : f32 to vector<1x8xf32>
    %43 = arith.maximumf %41, %42 : vector<1x8xf32>
    %c0_32 = arith.constant 0 : index
    %c0_33 = arith.constant 0 : index
    %44 = vector.load %arg8[%c0_32, %c0_33] : memref<8x512xf32, #tpu.memory_space<vmem>>, vector<8x512xf32>
    %cst_34 = arith.constant dense<0.000000e+00> : vector<1x512xf32>
    %45 = tpu.matmul %43, %44, %cst_34 {dimension_numbers = #tpu.dot_dimension_numbers<[1], [0], [0], [1], [0, 0, 1, 1], [], []>} : vector<1x8xf32>, vector<8x512xf32>, vector<1x512xf32> -> vector<1x512xf32>
    %c0_35 = arith.constant 0 : index
    %c0_36 = arith.constant 0 : index
    %46 = vector.load %arg9[%c0_35, %c0_36] : memref<1x512xf32, #tpu.memory_space<vmem>>, vector<1x512xf32>
    %47 = arith.addf %45, %46 : vector<1x512xf32>
    %48 = arith.negf %47 : vector<1x512xf32>
    %49 = math.exp %48 : vector<1x512xf32>
    %cst_37 = arith.constant 1.000000e+00 : f32
    %50 = vector.broadcast %cst_37 : f32 to vector<1x512xf32>
    %51 = arith.addf %50, %49 : vector<1x512xf32>
    %52 = arith.divf %50, %51 : vector<1x512xf32>
    %53 = vector.shape_cast %52 : vector<1x512xf32> to vector<1x1x512xf32>
    %54 = vector.broadcast %53 : vector<1x1x512xf32> to vector<1x16x512xf32>
    %55 = arith.mulf %34, %54 : vector<1x16x512xf32>
    %56 = arith.addf %55, %0 : vector<1x16x512xf32>
    %c0_38 = arith.constant 0 : index
    %c0_39 = arith.constant 0 : index
    %c0_40 = arith.constant 0 : index
    %57 = vector.load %arg10[%c0_38, %c0_39, %c0_40] : memref<1x16x512xf32, #tpu.memory_space<vmem>>, vector<1x16x512xf32>
    tpu.vector_store %arg10[%c0_38, %c0_39, %c0_40], %56 {strides = array<i32>} : memref<1x16x512xf32, #tpu.memory_space<vmem>>, vector<1x16x512xf32>,
    return
  }
  func.func @transform_0(%arg0: i32) -> (i32, i32, i32) {
    %c0_i32 = arith.constant 0 : i32
    %c0_i32_0 = arith.constant 0 : i32
    %c0_i32_1 = arith.constant 0 : i32
    return %arg0, %c0_i32, %c0_i32_0 : i32, i32, i32
  }
  func.func @transform_1(%arg0: i32) -> (i32, i32) {
    %c0_i32 = arith.constant 0 : i32
    %c0_i32_0 = arith.constant 0 : i32
    %c0_i32_1 = arith.constant 0 : i32
    return %c0_i32, %c0_i32_0 : i32, i32
  }
  func.func @transform_2(%arg0: i32) -> (i32, i32) {
    %c0_i32 = arith.constant 0 : i32
    %c0_i32_0 = arith.constant 0 : i32
    %c0_i32_1 = arith.constant 0 : i32
    return %c0_i32, %c0_i32_0 : i32, i32
  }
  func.func @transform_3(%arg0: i32) -> (i32, i32) {
    %c0_i32 = arith.constant 0 : i32
    %c0_i32_0 = arith.constant 0 : i32
    %c0_i32_1 = arith.constant 0 : i32
    return %c0_i32, %c0_i32_0 : i32, i32
  }
  func.func @transform_4(%arg0: i32) -> (i32, i32) {
    %c0_i32 = arith.constant 0 : i32
    %c0_i32_0 = arith.constant 0 : i32
    %c0_i32_1 = arith.constant 0 : i32
    return %c0_i32, %c0_i32_0 : i32, i32
  }
  func.func @transform_5(%arg0: i32) -> (i32, i32) {
    %c0_i32 = arith.constant 0 : i32
    %c0_i32_0 = arith.constant 0 : i32
    %c0_i32_1 = arith.constant 0 : i32
    return %c0_i32, %c0_i32_0 : i32, i32
  }
  func.func @transform_6(%arg0: i32) -> (i32, i32) {
    %c0_i32 = arith.constant 0 : i32
    %c0_i32_0 = arith.constant 0 : i32
    %c0_i32_1 = arith.constant 0 : i32
    return %c0_i32, %c0_i32_0 : i32, i32
  }
  func.func @transform_7(%arg0: i32) -> (i32, i32) {
    %c0_i32 = arith.constant 0 : i32
    %c0_i32_0 = arith.constant 0 : i32
    %c0_i32_1 = arith.constant 0 : i32
    return %c0_i32, %c0_i32_0 : i32, i32
  }
  func.func @transform_8(%arg0: i32) -> (i32, i32) {
    %c0_i32 = arith.constant 0 : i32
    %c0_i32_0 = arith.constant 0 : i32
    %c0_i32_1 = arith.constant 0 : i32
    return %c0_i32, %c0_i32_0 : i32, i32
  }
  func.func @transform_9(%arg0: i32) -> (i32, i32, i32) {
    %c0_i32 = arith.constant 0 : i32
    %c0_i32_0 = arith.constant 0 : i32
    %c0_i32_1 = arith.constant 0 : i32
    return %arg0, %c0_i32, %c0_i32_0 : i32, i32, i32
  }
}

module attributes {stable_mosaic.version = 11 : i64} {
  func.func @rcab_kernel(%arg0: i32, %arg1: memref<1x16x512xf32, #tpu.memory_space<vmem>>, %arg2: memref<1536x512xbf16, #tpu.memory_space<vmem>>, %arg3: memref<1x512xf32, #tpu.memory_space<vmem>>, %arg4: memref<1536x512xbf16, #tpu.memory_space<vmem>>, %arg5: memref<1x512xf32, #tpu.memory_space<vmem>>, %arg6: memref<512x8xf32, #tpu.memory_space<vmem>>, %arg7: memref<1x8xf32, #tpu.memory_space<vmem>>, %arg8: memref<8x512xf32, #tpu.memory_space<vmem>>, %arg9: memref<1x512xf32, #tpu.memory_space<vmem>>, %arg10: memref<1x16x512xf32, #tpu.memory_space<vmem>>, %arg11: memref<16x1536xbf16, #tpu.memory_space<vmem>>) attributes {dimension_semantics = [#tpu.dimension_semantics<parallel>], iteration_bounds = array<i64: 2>, scalar_prefetch = 0 : i64, scratch_operands = 1 : i64, tpu.core_type = #tpu.core_type<tc>, window_params = [{transform_indices = @transform_0, window_bounds = array<i64: 1, 16, 512>}, {pipeline_mode = #tpu.pipeline_mode<synchronous>, transform_indices = @transform_1, window_bounds = array<i64: 1536, 512>}, {pipeline_mode = #tpu.pipeline_mode<synchronous>, transform_indices = @transform_2, window_bounds = array<i64: 1, 512>}, {pipeline_mode = #tpu.pipeline_mode<synchronous>, transform_indices = @transform_3, window_bounds = array<i64: 1536, 512>}, {pipeline_mode = #tpu.pipeline_mode<synchronous>, transform_indices = @transform_4, window_bounds = array<i64: 1, 512>}, {pipeline_mode = #tpu.pipeline_mode<synchronous>, transform_indices = @transform_5, window_bounds = array<i64: 512, 8>}, {pipeline_mode = #tpu.pipeline_mode<synchronous>, transform_indices = @transform_6, window_bounds = array<i64: 1, 8>}, {pipeline_mode = #tpu.pipeline_mode<synchronous>, transform_indices = @transform_7, window_bounds = array<i64: 8, 512>}, {pipeline_mode = #tpu.pipeline_mode<synchronous>, transform_indices = @transform_8, window_bounds = array<i64: 1, 512>}, {transform_indices = @transform_9, window_bounds = array<i64: 1, 16, 512>}]} {
    %c0 = arith.constant 0 : index
    %c0_0 = arith.constant 0 : index
    %c0_1 = arith.constant 0 : index
    %0 = vector.load %arg1[%c0, %c0_0, %c0_1] : memref<1x16x512xf32, #tpu.memory_space<vmem>>, vector<1x16x512xf32>
    %1 = vector.shape_cast %0 : vector<1x16x512xf32> to vector<16x512xf32>
    %2 = arith.truncf %1 : vector<16x512xf32> to vector<16x512xbf16>
    %cst = arith.constant 0.000000e+00 : bf16
    %3 = vector.broadcast %cst : bf16 to vector<1x512xbf16>
    %4 = vector.extract_strided_slice %2 {offsets = [0, 0], sizes = [15, 512], strides = [1, 1]} : vector<16x512xbf16> to vector<15x512xbf16>
    %5 = tpu.concatenate %3, %4 in 0 : vector<1x512xbf16>, vector<15x512xbf16> -> vector<16x512xbf16>
    %6 = vector.extract_strided_slice %2 {offsets = [1, 0], sizes = [15, 512], strides = [1, 1]} : vector<16x512xbf16> to vector<15x512xbf16>
    %cst_2 = arith.constant 0.000000e+00 : bf16
    %7 = vector.broadcast %cst_2 : bf16 to vector<1x512xbf16>
    %8 = tpu.concatenate %6, %7 in 0 : vector<15x512xbf16>, vector<1x512xbf16> -> vector<16x512xbf16>
    %9 = tpu.concatenate %5, %2, %8 in 1 : vector<16x512xbf16>, vector<16x512xbf16>, vector<16x512xbf16> -> vector<16x1536xbf16>
    %c0_3 = arith.constant 0 : index
    %c0_4 = arith.constant 0 : index
    %10 = vector.load %arg11[%c0_3, %c0_4] : memref<16x1536xbf16, #tpu.memory_space<vmem>>, vector<16x1536xbf16>
    tpu.vector_store %arg11[%c0_3, %c0_4], %9 {strides = array<i32>} : memref<16x1536xbf16, #tpu.memory_space<vmem>>, vector<16x1536xbf16>,
    %c0_5 = arith.constant 0 : index
    %c0_6 = arith.constant 0 : index
    %11 = vector.load %arg3[%c0_5, %c0_6] : memref<1x512xf32, #tpu.memory_space<vmem>>, vector<1x512xf32>
    %c0_7 = arith.constant 0 : index
    %c0_8 = arith.constant 0 : index
    %12 = vector.load %arg11[%c0_7, %c0_8] : memref<16x1536xbf16, #tpu.memory_space<vmem>>, vector<16x1536xbf16>
    %c0_9 = arith.constant 0 : index
    %c0_10 = arith.constant 0 : index
    %13 = vector.load %arg2[%c0_9, %c0_10] : memref<1536x512xbf16, #tpu.memory_space<vmem>>, vector<1536x512xbf16>
    %cst_11 = arith.constant dense<0.000000e+00> : vector<16x512xf32>
    %14 = tpu.matmul %12, %13, %cst_11 {dimension_numbers = #tpu.dot_dimension_numbers<[1], [0], [0], [1], [0, 0, 1, 1], [], []>} : vector<16x1536xbf16>, vector<1536x512xbf16>, vector<16x512xf32> -> vector<16x512xf32>
    %15 = vector.broadcast %11 : vector<1x512xf32> to vector<16x512xf32>
    %16 = arith.addf %14, %15 : vector<16x512xf32>
    %cst_12 = arith.constant 0.000000e+00 : f32
    %17 = vector.broadcast %cst_12 : f32 to vector<16x512xf32>
    %18 = arith.maximumf %16, %17 : vector<16x512xf32>
    %19 = arith.truncf %18 : vector<16x512xf32> to vector<16x512xbf16>
    %cst_13 = arith.constant 0.000000e+00 : bf16
    %20 = vector.broadcast %cst_13 : bf16 to vector<1x512xbf16>
    %21 = vector.extract_strided_slice %19 {offsets = [0, 0], sizes = [15, 512], strides = [1, 1]} : vector<16x512xbf16> to vector<15x512xbf16>
    %22 = tpu.concatenate %20, %21 in 0 : vector<1x512xbf16>, vector<15x512xbf16> -> vector<16x512xbf16>
    %23 = vector.extract_strided_slice %19 {offsets = [1, 0], sizes = [15, 512], strides = [1, 1]} : vector<16x512xbf16> to vector<15x512xbf16>
    %cst_14 = arith.constant 0.000000e+00 : bf16
    %24 = vector.broadcast %cst_14 : bf16 to vector<1x512xbf16>
    %25 = tpu.concatenate %23, %24 in 0 : vector<15x512xbf16>, vector<1x512xbf16> -> vector<16x512xbf16>
    %26 = tpu.concatenate %22, %19, %25 in 1 : vector<16x512xbf16>, vector<16x512xbf16>, vector<16x512xbf16> -> vector<16x1536xbf16>
    %c0_15 = arith.constant 0 : index
    %c0_16 = arith.constant 0 : index
    %27 = vector.load %arg11[%c0_15, %c0_16] : memref<16x1536xbf16, #tpu.memory_space<vmem>>, vector<16x1536xbf16>
    tpu.vector_store %arg11[%c0_15, %c0_16], %26 {strides = array<i32>} : memref<16x1536xbf16, #tpu.memory_space<vmem>>, vector<16x1536xbf16>,
    %c0_17 = arith.constant 0 : index
    %c0_18 = arith.constant 0 : index
    %28 = vector.load %arg5[%c0_17, %c0_18] : memref<1x512xf32, #tpu.memory_space<vmem>>, vector<1x512xf32>
    %c0_19 = arith.constant 0 : index
    %c0_20 = arith.constant 0 : index
    %29 = vector.load %arg11[%c0_19, %c0_20] : memref<16x1536xbf16, #tpu.memory_space<vmem>>, vector<16x1536xbf16>
    %c0_21 = arith.constant 0 : index
    %c0_22 = arith.constant 0 : index
    %30 = vector.load %arg4[%c0_21, %c0_22] : memref<1536x512xbf16, #tpu.memory_space<vmem>>, vector<1536x512xbf16>
    %cst_23 = arith.constant dense<0.000000e+00> : vector<16x512xf32>
    %31 = tpu.matmul %29, %30, %cst_23 {dimension_numbers = #tpu.dot_dimension_numbers<[1], [0], [0], [1], [0, 0, 1, 1], [], []>} : vector<16x1536xbf16>, vector<1536x512xbf16>, vector<16x512xf32> -> vector<16x512xf32>
    %32 = vector.broadcast %28 : vector<1x512xf32> to vector<16x512xf32>
    %33 = arith.addf %31, %32 : vector<16x512xf32>
    %34 = vector.shape_cast %33 : vector<16x512xf32> to vector<1x16x512xf32>
    %cst_24 = arith.constant dense<0.000000e+00> : vector<1x512xf32>
    %35 = vector.multi_reduction <add>, %34, %cst_24 [1] : vector<1x16x512xf32> to vector<1x512xf32>
    %cst_25 = arith.constant 3.906250e-03 : f32
    %36 = vector.broadcast %cst_25 : f32 to vector<1x512xf32>
    %37 = arith.mulf %35, %36 : vector<1x512xf32>
    %c0_26 = arith.constant 0 : index
    %c0_27 = arith.constant 0 : index
    %38 = vector.load %arg6[%c0_26, %c0_27] : memref<512x8xf32, #tpu.memory_space<vmem>>, vector<512x8xf32>
    %cst_28 = arith.constant dense<0.000000e+00> : vector<1x8xf32>
    %39 = tpu.matmul %37, %38, %cst_28 {dimension_numbers = #tpu.dot_dimension_numbers<[1], [0], [0], [1], [0, 0, 1, 1], [], []>} : vector<1x512xf32>, vector<512x8xf32>, vector<1x8xf32> -> vector<1x8xf32>
    %c0_29 = arith.constant 0 : index
    %c0_30 = arith.constant 0 : index
    %40 = vector.load %arg7[%c0_29, %c0_30] : memref<1x8xf32, #tpu.memory_space<vmem>>, vector<1x8xf32>
    %41 = arith.addf %39, %40 : vector<1x8xf32>
    %cst_31 = arith.constant 0.000000e+00 : f32
    %42 = vector.broadcast %cst_31 : f32 to vector<1x8xf32>
    %43 = arith.maximumf %41, %42 : vector<1x8xf32>
    %c0_32 = arith.constant 0 : index
    %c0_33 = arith.constant 0 : index
    %44 = vector.load %arg8[%c0_32, %c0_33] : memref<8x512xf32, #tpu.memory_space<vmem>>, vector<8x512xf32>
    %cst_34 = arith.constant dense<0.000000e+00> : vector<1x512xf32>
    %45 = tpu.matmul %43, %44, %cst_34 {dimension_numbers = #tpu.dot_dimension_numbers<[1], [0], [0], [1], [0, 0, 1, 1], [], []>} : vector<1x8xf32>, vector<8x512xf32>, vector<1x512xf32> -> vector<1x512xf32>
    %c0_35 = arith.constant 0 : index
    %c0_36 = arith.constant 0 : index
    %46 = vector.load %arg9[%c0_35, %c0_36] : memref<1x512xf32, #tpu.memory_space<vmem>>, vector<1x512xf32>
    %47 = arith.addf %45, %46 : vector<1x512xf32>
    %48 = arith.negf %47 : vector<1x512xf32>
    %49 = math.exp %48 : vector<1x512xf32>
    %cst_37 = arith.constant 1.000000e+00 : f32
    %50 = vector.broadcast %cst_37 : f32 to vector<1x512xf32>
    %51 = arith.addf %50, %49 : vector<1x512xf32>
    %52 = arith.divf %50, %51 : vector<1x512xf32>
    %53 = vector.shape_cast %52 : vector<1x512xf32> to vector<1x1x512xf32>
    %54 = vector.broadcast %53 : vector<1x1x512xf32> to vector<1x16x512xf32>
    %55 = arith.mulf %34, %54 : vector<1x16x512xf32>
    %56 = arith.addf %55, %0 : vector<1x16x512xf32>
    %c0_38 = arith.constant 0 : index
    %c0_39 = arith.constant 0 : index
    %c0_40 = arith.constant 0 : index
    %57 = vector.load %arg10[%c0_38, %c0_39, %c0_40] : memref<1x16x512xf32, #tpu.memory_space<vmem>>, vector<1x16x512xf32>
    tpu.vector_store %arg10[%c0_38, %c0_39, %c0_40], %56 {strides = array<i32>} : memref<1x16x512xf32, #tpu.memory_space<vmem>>, vector<1x16x512xf32>,
    return
  }
  func.func @transform_0(%arg0: i32) -> (i32, i32, i32) {
    %c0_i32 = arith.constant 0 : i32
    %c0_i32_0 = arith.constant 0 : i32
    %c0_i32_1 = arith.constant 0 : i32
    return %arg0, %c0_i32, %c0_i32_0 : i32, i32, i32
  }
  func.func @transform_1(%arg0: i32) -> (i32, i32) {
    %c0_i32 = arith.constant 0 : i32
    %c0_i32_0 = arith.constant 0 : i32
    %c0_i32_1 = arith.constant 0 : i32
    return %c0_i32, %c0_i32_0 : i32, i32
  }
  func.func @transform_2(%arg0: i32) -> (i32, i32) {
    %c0_i32 = arith.constant 0 : i32
    %c0_i32_0 = arith.constant 0 : i32
    %c0_i32_1 = arith.constant 0 : i32
    return %c0_i32, %c0_i32_0 : i32, i32
  }
  func.func @transform_3(%arg0: i32) -> (i32, i32) {
    %c0_i32 = arith.constant 0 : i32
    %c0_i32_0 = arith.constant 0 : i32
    %c0_i32_1 = arith.constant 0 : i32
    return %c0_i32, %c0_i32_0 : i32, i32
  }
  func.func @transform_4(%arg0: i32) -> (i32, i32) {
    %c0_i32 = arith.constant 0 : i32
    %c0_i32_0 = arith.constant 0 : i32
    %c0_i32_1 = arith.constant 0 : i32
    return %c0_i32, %c0_i32_0 : i32, i32
  }
  func.func @transform_5(%arg0: i32) -> (i32, i32) {
    %c0_i32 = arith.constant 0 : i32
    %c0_i32_0 = arith.constant 0 : i32
    %c0_i32_1 = arith.constant 0 : i32
    return %c0_i32, %c0_i32_0 : i32, i32
  }
  func.func @transform_6(%arg0: i32) -> (i32, i32) {
    %c0_i32 = arith.constant 0 : i32
    %c0_i32_0 = arith.constant 0 : i32
    %c0_i32_1 = arith.constant 0 : i32
    return %c0_i32, %c0_i32_0 : i32, i32
  }
  func.func @transform_7(%arg0: i32) -> (i32, i32) {
    %c0_i32 = arith.constant 0 : i32
    %c0_i32_0 = arith.constant 0 : i32
    %c0_i32_1 = arith.constant 0 : i32
    return %c0_i32, %c0_i32_0 : i32, i32
  }
  func.func @transform_8(%arg0: i32) -> (i32, i32) {
    %c0_i32 = arith.constant 0 : i32
    %c0_i32_0 = arith.constant 0 : i32
    %c0_i32_1 = arith.constant 0 : i32
    return %c0_i32, %c0_i32_0 : i32, i32
  }
  func.func @transform_9(%arg0: i32) -> (i32, i32, i32) {
    %c0_i32 = arith.constant 0 : i32
    %c0_i32_0 = arith.constant 0 : i32
    %c0_i32_1 = arith.constant 0 : i32
    return %arg0, %c0_i32, %c0_i32_0 : i32, i32, i32
  }
}

</mosaic_0001>

<llo_original>
// kernel: tile.44
$region0: #{tile.44}
  %s0 = inlined_call_operand.vmem [shape: f32[8,16,32], index: 0, kind: input, shape index: {}]
  %s1 = inlined_call_operand.vmem [shape: f32[8,512], index: 1, kind: output, shape index: {}]
  %v2 = vld [vmem:[%s0] ss:$4 sm:$0xff]
  %vm3 = vcmask 261120
  %4 = vst.msk [vmem:[%s1] ss:$8 sm:$0xf] %vm3, %v2
  %s5 = scalar_lea.vmem %s1, 4294967265
  %6 = vst.msk [vmem:[%s5] ss:$8 sm:$0xf0] %vm3, %v2
  %s7 = scalar_lea.vmem %s0, 32
  %v8 = vld [vmem:[%s7] ss:$4 sm:$0xff]
  %vm9 = vcmask 261120
  %s10 = scalar_lea.vmem %s1, 2
  %11 = vst.msk [vmem:[%s10] ss:$8 sm:$0xf] %vm9, %v8
  %s12 = scalar_lea.vmem %s1, 4294967267
  %13 = vst.msk [vmem:[%s12] ss:$8 sm:$0xf0] %vm9, %v8
  %s14 = scalar_lea.vmem %s0, 64
  %v15 = vld [vmem:[%s14] ss:$4 sm:$0xff]
  %vm16 = vcmask 261120
  %s17 = scalar_lea.vmem %s1, 4
  %18 = vst.msk [vmem:[%s17] ss:$8 sm:$0xf] %vm16, %v15
  %s19 = scalar_lea.vmem %s1, 4294967269
  %20 = vst.msk [vmem:[%s19] ss:$8 sm:$0xf0] %vm16, %v15
  %s21 = scalar_lea.vmem %s0, 96
  %v22 = vld [vmem:[%s21] ss:$4 sm:$0xff]
  %vm23 = vcmask 261120
  %s24 = scalar_lea.vmem %s1, 6
  %25 = vst.msk [vmem:[%s24] ss:$8 sm:$0xf] %vm23, %v22
  %s26 = scalar_lea.vmem %s1, 4294967271
  %27 = vst.msk [vmem:[%s26] ss:$8 sm:$0xf0] %vm23, %v22
  %s28 = scalar_lea.vmem %s0, 3
  %s29 = smov 3
  %v30 = vld [vmem:[%s28] ss:$16 sm:%s29]
  %s31 = scalar_lea.vmem %s0, 3
  %s32 = smov 12
  %v33 = vld [vmem:[%s31] ss:$16 sm:%s32]
  %vm34 = vcmask 1043458
  %v35 = vsel %vm34, %v33, %v30
  %s36 = scalar_lea.vmem %s0, 3
  %s37 = smov 48
  %v38 = vld [vmem:[%s36] ss:$16 sm:%s37]
  %vm39 = vcmask 1045508
  %v40 = vsel %vm39, %v38, %v35
  %s41 = scalar_lea.vmem %s0, 3
  %s42 = smov 192
  %v43 = vld [vmem:[%s41] ss:$16 sm:%s42]
  %vm44 = vcmask 1047558
  %v45 = vsel %vm44, %v43, %v40
  %46 = vrot.lane.b32.xlu0 %v45, 96
  %v47 = vpop.permute.xlu0 %46
  %vm48 = vcmask 1048320
  %49 = vst.msk [vmem:[%s1] sm:$0xff] %vm48, %v47
  %s50 = scalar_lea.vmem %s0, 7
  %s51 = smov 3
  %v52 = vld [vmem:[%s50] ss:$16 sm:%s51]
  %s53 = scalar_lea.vmem %s0, 7
  %s54 = smov 12
  %v55 = vld [vmem:[%s53] ss:$16 sm:%s54]
  %vm56 = vcmask 1043458
  %v57 = vsel %vm56, %v55, %v52
  %s58 = scalar_lea.vmem %s0, 7
  %s59 = smov 48
  %v60 = vld [vmem:[%s58] ss:$16 sm:%s59]
  %vm61 = vcmask 1045508
  %v62 = vsel %vm61, %v60, %v57
  %s63 = scalar_lea.vmem %s0, 7
  %s64 = smov 192
  %v65 = vld [vmem:[%s63] ss:$16 sm:%s64]
  %vm66 = vcmask 1047558
  %v67 = vsel %vm66, %v65, %v62
  %68 = vrot.lane.b32.xlu0 %v67, 96
  %v69 = vpop.permute.xlu0 %68
  %vm70 = vcmask 1048320
  %s71 = scalar_lea.vmem %s1, 8
  %72 = vst.msk [vmem:[%s71] sm:$0xff] %vm70, %v69
  %s73 = scalar_lea.vmem %s0, 11
  %s74 = smov 3
  %v75 = vld [vmem:[%s73] ss:$16 sm:%s74]
  %s76 = scalar_lea.vmem %s0, 11
  %s77 = smov 12
  %v78 = vld [vmem:[%s76] ss:$16 sm:%s77]
  %vm79 = vcmask 1043458
  %v80 = vsel %vm79, %v78, %v75
  %s81 = scalar_lea.vmem %s0, 11
  %s82 = smov 48
  %v83 = vld [vmem:[%s81] ss:$16 sm:%s82]
  %vm84 = vcmask 1045508
  %v85 = vsel %vm84, %v83, %v80
  %s86 = scalar_lea.vmem %s0, 11
  %s87 = smov 192
  %v88 = vld [vmem:[%s86] ss:$16 sm:%s87]
  %vm89 = vcmask 1047558
  %v90 = vsel %vm89, %v88, %v85
  %91 = vrot.lane.b32.xlu0 %v90, 96
  %v92 = vpop.permute.xlu0 %91
  %vm93 = vcmask 1048320
  %s94 = scalar_lea.vmem %s1, 16
  %95 = vst.msk [vmem:[%s94] sm:$0xff] %vm93, %v92
  %s96 = scalar_lea.vmem %s0, 15
  %s97 = smov 3
  %v98 = vld [vmem:[%s96] ss:$16 sm:%s97]
  %s99 = scalar_lea.vmem %s0, 15
  %s100 = smov 12
  %v101 = vld [vmem:[%s99] ss:$16 sm:%s100]
  %vm102 = vcmask 1043458
  %v103 = vsel %vm102, %v101, %v98
  %s104 = scalar_lea.vmem %s0, 15
  %s105 = smov 48
  %v106 = vld [vmem:[%s104] ss:$16 sm:%s105]
  %vm107 = vcmask 1045508
  %v108 = vsel %vm107, %v106, %v103
  %s109 = scalar_lea.vmem %s0, 15
  %s110 = smov 192
  %v111 = vld [vmem:[%s109] ss:$16 sm:%s110]
  %vm112 = vcmask 1047558
  %v113 = vsel %vm112, %v111, %v108
  %114 = vrot.lane.b32.xlu0 %v113, 96
  %v115 = vpop.permute.xlu0 %114
  %vm116 = vcmask 1048320
  %s117 = scalar_lea.vmem %s1, 24
  %118 = vst.msk [vmem:[%s117] sm:$0xff] %vm116, %v115
  %s119 = scalar_lea.vmem %s0, 2
  %s120 = smov 3
  %v121 = vld [vmem:[%s119] ss:$16 sm:%s120]
  %s122 = scalar_lea.vmem %s0, 2
  %s123 = smov 12
  %v124 = vld [vmem:[%s122] ss:$16 sm:%s123]
  %vm125 = vcmask 1043458
  %v126 = vsel %vm125, %v124, %v121
  %s127 = scalar_lea.vmem %s0, 2
  %s128 = smov 48
  %v129 = vld [vmem:[%s127] ss:$16 sm:%s128]
  %vm130 = vcmask 1045508
  %v131 = vsel %vm130, %v129, %v126
  %s132 = scalar_lea.vmem %s0, 2
  %s133 = smov 192
  %v134 = vld [vmem:[%s132] ss:$16 sm:%s133]
  %vm135 = vcmask 1047558
  %v136 = vsel %vm135, %v134, %v131
  %137 = vrot.lane.b32.xlu0 %v136, 64
  %v138 = vpop.permute.xlu0 %137
  %vm139 = vcmask 785920
  %140 = vst.msk [vmem:[%s1] sm:$0xff] %vm139, %v138
  %s141 = scalar_lea.vmem %s0, 6
  %s142 = smov 3
  %v143 = vld [vmem:[%s141] ss:$16 sm:%s142]
  %s144 = scalar_lea.vmem %s0, 6
  %s145 = smov 12
  %v146 = vld [vmem:[%s144] ss:$16 sm:%s145]
  %vm147 = vcmask 1043458
  %v148 = vsel %vm147, %v146, %v143
  %s149 = scalar_lea.vmem %s0, 6
  %s150 = smov 48
  %v151 = vld [vmem:[%s149] ss:$16 sm:%s150]
  %vm152 = vcmask 1045508
  %v153 = vsel %vm152, %v151, %v148
  %s154 = scalar_lea.vmem %s0, 6
  %s155 = smov 192
  %v156 = vld [vmem:[%s154] ss:$16 sm:%s155]
  %vm157 = vcmask 1047558
  %v158 = vsel %vm157, %v156, %v153
  %159 = vrot.lane.b32.xlu0 %v158, 64
  %v160 = vpop.permute.xlu0 %159
  %vm161 = vcmask 785920
  %s162 = scalar_lea.vmem %s1, 8
  %163 = vst.msk [vmem:[%s162] sm:$0xff] %vm161, %v160
  %s164 = scalar_lea.vmem %s0, 10
  %s165 = smov 3
  %v166 = vld [vmem:[%s164] ss:$16 sm:%s165]
  %s167 = scalar_lea.vmem %s0, 10
  %s168 = smov 12
  %v169 = vld [vmem:[%s167] ss:$16 sm:%s168]
  %vm170 = vcmask 1043458
  %v171 = vsel %vm170, %v169, %v166
  %s172 = scalar_lea.vmem %s0, 10
  %s173 = smov 48
  %v174 = vld [vmem:[%s172] ss:$16 sm:%s173]
  %vm175 = vcmask 1045508
  %v176 = vsel %vm175, %v174, %v171
  %s177 = scalar_lea.vmem %s0, 10
  %s178 = smov 192
  %v179 = vld [vmem:[%s177] ss:$16 sm:%s178]
  %vm180 = vcmask 1047558
  %v181 = vsel %vm180, %v179, %v176
  %182 = vrot.lane.b32.xlu0 %v181, 64
  %v183 = vpop.permute.xlu0 %182
  %vm184 = vcmask 785920
  %s185 = scalar_lea.vmem %s1, 16
  %186 = vst.msk [vmem:[%s185] sm:$0xff] %vm184, %v183
  %s187 = scalar_lea.vmem %s0, 14
  %s188 = smov 3
  %v189 = vld [vmem:[%s187] ss:$16 sm:%s188]
  %s190 = scalar_lea.vmem %s0, 14
  %s191 = smov 12
  %v192 = vld [vmem:[%s190] ss:$16 sm:%s191]
  %vm193 = vcmask 1043458
  %v194 = vsel %vm193, %v192, %v189
  %s195 = scalar_lea.vmem %s0, 14
  %s196 = smov 48
  %v197 = vld [vmem:[%s195] ss:$16 sm:%s196]
  %vm198 = vcmask 1045508
  %v199 = vsel %vm198, %v197, %v194
  %s200 = scalar_lea.vmem %s0, 14
  %s201 = smov 192
  %v202 = vld [vmem:[%s200] ss:$16 sm:%s201]
  %vm203 = vcmask 1047558
  %v204 = vsel %vm203, %v202, %v199
  %205 = vrot.lane.b32.xlu0 %v204, 64
  %v206 = vpop.permute.xlu0 %205
  %vm207 = vcmask 785920
  %s208 = scalar_lea.vmem %s1, 24
  %209 = vst.msk [vmem:[%s208] sm:$0xff] %vm207, %v206
  %s210 = scalar_lea.vmem %s0, 1
  %s211 = smov 3
  %v212 = vld [vmem:[%s210] ss:$16 sm:%s211]
  %s213 = scalar_lea.vmem %s0, 1
  %s214 = smov 12
  %v215 = vld [vmem:[%s213] ss:$16 sm:%s214]
  %vm216 = vcmask 1043458
  %v217 = vsel %vm216, %v215, %v212
  %s218 = scalar_lea.vmem %s0, 1
  %s219 = smov 48
  %v220 = vld [vmem:[%s218] ss:$16 sm:%s219]
  %vm221 = vcmask 1045508
  %v222 = vsel %vm221, %v220, %v217
  %s223 = scalar_lea.vmem %s0, 1
  %s224 = smov 192
  %v225 = vld [vmem:[%s223] ss:$16 sm:%s224]
  %vm226 = vcmask 1047558
  %v227 = vsel %vm226, %v225, %v222
  %228 = vrot.lane.b32.xlu0 %v227, 32
  %v229 = vpop.permute.xlu0 %228
  %vm230 = vcmask 523520
  %231 = vst.msk [vmem:[%s1] sm:$0xff] %vm230, %v229
  %s232 = scalar_lea.vmem %s0, 5
  %s233 = smov 3
  %v234 = vld [vmem:[%s232] ss:$16 sm:%s233]
  %s235 = scalar_lea.vmem %s0, 5
  %s236 = smov 12
  %v237 = vld [vmem:[%s235] ss:$16 sm:%s236]
  %vm238 = vcmask 1043458
  %v239 = vsel %vm238, %v237, %v234
  %s240 = scalar_lea.vmem %s0, 5
  %s241 = smov 48
  %v242 = vld [vmem:[%s240] ss:$16 sm:%s241]
  %vm243 = vcmask 1045508
  %v244 = vsel %vm243, %v242, %v239
  %s245 = scalar_lea.vmem %s0, 5
  %s246 = smov 192
  %v247 = vld [vmem:[%s245] ss:$16 sm:%s246]
  %vm248 = vcmask 1047558
  %v249 = vsel %vm248, %v247, %v244
  %250 = vrot.lane.b32.xlu0 %v249, 32
  %v251 = vpop.permute.xlu0 %250
  %vm252 = vcmask 523520
  %s253 = scalar_lea.vmem %s1, 8
  %254 = vst.msk [vmem:[%s253] sm:$0xff] %vm252, %v251
  %s255 = scalar_lea.vmem %s0, 9
  %s256 = smov 3
  %v257 = vld [vmem:[%s255] ss:$16 sm:%s256]
  %s258 = scalar_lea.vmem %s0, 9
  %s259 = smov 12
  %v260 = vld [vmem:[%s258] ss:$16 sm:%s259]
  %vm261 = vcmask 1043458
  %v262 = vsel %vm261, %v260, %v257
  %s263 = scalar_lea.vmem %s0, 9
  %s264 = smov 48
  %v265 = vld [vmem:[%s263] ss:$16 sm:%s264]
  %vm266 = vcmask 1045508
  %v267 = vsel %vm266, %v265, %v262
  %s268 = scalar_lea.vmem %s0, 9
  %s269 = smov 192
  %v270 = vld [vmem:[%s268] ss:$16 sm:%s269]
  %vm271 = vcmask 1047558
  %v272 = vsel %vm271, %v270, %v267
  %273 = vrot.lane.b32.xlu0 %v272, 32
  %v274 = vpop.permute.xlu0 %273
  %vm275 = vcmask 523520
  %s276 = scalar_lea.vmem %s1, 16
  %277 = vst.msk [vmem:[%s276] sm:$0xff] %vm275, %v274
  %s278 = scalar_lea.vmem %s0, 13
  %s279 = smov 3
  %v280 = vld [vmem:[%s278] ss:$16 sm:%s279]
  %s281 = scalar_lea.vmem %s0, 13
  %s282 = smov 12
  %v283 = vld [vmem:[%s281] ss:$16 sm:%s282]
  %vm284 = vcmask 1043458
  %v285 = vsel %vm284, %v283, %v280
  %s286 = scalar_lea.vmem %s0, 13
  %s287 = smov 48
  %v288 = vld [vmem:[%s286] ss:$16 sm:%s287]
  %vm289 = vcmask 1045508
  %v290 = vsel %vm289, %v288, %v285
  %s291 = scalar_lea.vmem %s0, 13
  %s292 = smov 192
  %v293 = vld [vmem:[%s291] ss:$16 sm:%s292]
  %vm294 = vcmask 1047558
  %v295 = vsel %vm294, %v293, %v290
  %296 = vrot.lane.b32.xlu0 %v295, 32
  %v297 = vpop.permute.xlu0 %296
  %vm298 = vcmask 523520
  %s299 = scalar_lea.vmem %s1, 24
  %300 = vst.msk [vmem:[%s299] sm:$0xff] %vm298, %v297

// kernel: rcab_forward.1
$region0: #{rcab_forward.1}
  #allocation0 [shape = 'u32[]', space=smem, size = 0x4, offset = 0x4, fixed_abs, tag = 'smem constant byte address 0x4 - core index']
  #allocation1 [shape = 'u32[144,128]{1,0:T(1,128)}', space=vmem, size = 0x12000, scoped, tag = 'internal scratch']
  #allocation2 [shape = 'bf16[16,1536]{1,0:T(16,128)(2,1)}', space=vmem, size = 0xc000, scoped, tag = 'scratch operand']
  %s0 = inlined_call_operand.vmem [shape: f32[2,16,512], index: 0, kind: input, shape index: {}]
  %s1 = inlined_call_operand.vmem [shape: bf16[1536,512], index: 1, kind: input, shape index: {}]
  %s2 = inlined_call_operand.vmem [shape: f32[1,512], index: 2, kind: input, shape index: {}]
  %s3 = inlined_call_operand.vmem [shape: bf16[1536,512], index: 3, kind: input, shape index: {}]
  %s4 = inlined_call_operand.vmem [shape: f32[1,512], index: 4, kind: input, shape index: {}]
  %s5 = inlined_call_operand.vmem [shape: f32[512,8], index: 5, kind: input, shape index: {}]
  %s6 = inlined_call_operand.vmem [shape: f32[1,8], index: 6, kind: input, shape index: {}]
  %s7 = inlined_call_operand.vmem [shape: f32[8,512], index: 7, kind: input, shape index: {}]
  %s8 = inlined_call_operand.vmem [shape: f32[1,512], index: 8, kind: input, shape index: {}]
  %s9 = inlined_call_operand.vmem [shape: f32[2,16,512], index: 9, kind: output, shape index: {}]
  %s10 = sld [smem:[#allocation0]]
  $region69: #{rcab_forward.1} parent=0
    _
  %s12 = ssub.s32 1, %s10
  %s13 = scalar_select 0, %s12, %s10
  loop: start=0, step=1, limit=4
  $region2: #{rcab_forward.1} parent=0 // loop_pre_header
    _
  $region3: #{rcab_forward.1} parent=0 // loop_header
    %s15 = sphi 0, %s19
    %p16 = scmp.ge.s32.totalorder %s15, 4
    %s25 = sphi 0, %s27
    %s28 = sphi 0, %s25
    %s29 = sphi 0, %s28
    %s45 = sphi 0, %s29
    %s49 = sphi 0, %s49
    %s51 = sphi 0, %s49
    %s52 = sphi 0, %s51
    %s66 = sphi 0, %s52
    %s70 = sphi 0, %s70
    %s72 = sphi 0, %s70
    %s73 = sphi 0, %s72
    %s87 = sphi 0, %s73
    %s91 = sphi 0, %s91
    %s93 = sphi 0, %s91
    %s94 = sphi 0, %s93
    %s108 = sphi 0, %s94
    %s112 = sphi 0, %s112
    %s114 = sphi 0, %s112
    %s115 = sphi 0, %s114
    %s129 = sphi 0, %s115
    %s133 = sphi 0, %s133
    %s135 = sphi 0, %s133
    %s136 = sphi 0, %s135
    %s150 = sphi 0, %s136
    %s154 = sphi 0, %s154
    %s156 = sphi 0, %s154
    %s157 = sphi 0, %s156
    %s171 = sphi 0, %s157
    %s175 = sphi 0, %s175
    %s177 = sphi 0, %s175
    %s178 = sphi 0, %s177
    %s192 = sphi 0, %s178
    %s196 = sphi 0, %s196
    %s198 = sphi 0, %s196
    %s199 = sphi 0, %s198
    %s213 = sphi 0, %s199
    %s219 = sphi 0, %s221
    %s222 = sphi 0, %s219
    %s223 = sphi 0, %s222
    %s239 = sphi 0, %s223
  $region4: #{rcab_forward.1} parent=0 // loop_header_branch
    %18 = sbr.rel (%p16) target = $region8
  $region5: #{rcab_forward.1} parent=0 // loop_body
    %s20 = ssub.s32 %s15, 1
    %s21 = ssub.s32 %s15, 2
    %s22 = sadd.s32 %s15, 1
    %s23 = ssub.s32 %s15, %s22
    %p24 = scmp.eq.s32.totalorder %s23, 0
    %s26 = sadd.s32 %s25, 1
    %s27 = scalar_select %p24, %s25, %s26
    %p30 = pneg %p24
    %p31 = scmp.eq.s32.totalorder %s15, 1
    %p32 = por %p30, %p31
    %p33 = scmp.ne.s32.totalorder %s25, %s28
    %p34 = scmp.eq.s32.totalorder %s15, 0
    %p35 = por %p33, %p34
    %p36 = scmp.ne.s32.totalorder %s25, %s28
    %p37 = scmp.eq.s32.totalorder %s20, 1
    %p38 = por %p36, %p37
    %p39 = scmp.ne.s32.totalorder %s28, %s29
    %p40 = scmp.eq.s32.totalorder %s20, 0
    %p41 = por %p39, %p40
    %p42 = scmp.ne.s32.totalorder %s28, %s29
    %p43 = scmp.eq.s32.totalorder %s21, 1
    %p44 = por %p42, %p43
    %p46 = scmp.ne.s32.totalorder %s29, %s45
    %p47 = scmp.eq.s32.totalorder %s21, 0
    %p48 = por %p46, %p47
    %s50 = sadd.s32 %s49, 1
    %p53 = scmp.eq.s32.totalorder %s15, 1
    %p54 = scmp.ne.s32.totalorder %s49, %s51
    %p55 = scmp.eq.s32.totalorder %s15, 0
    %p56 = por %p54, %p55
    %p57 = scmp.ne.s32.totalorder %s49, %s51
    %p58 = scmp.eq.s32.totalorder %s20, 1
    %p59 = por %p57, %p58
    %p60 = scmp.ne.s32.totalorder %s51, %s52
    %p61 = scmp.eq.s32.totalorder %s20, 0
    %p62 = por %p60, %p61
    %p63 = scmp.ne.s32.totalorder %s51, %s52
    %p64 = scmp.eq.s32.totalorder %s21, 1
    %p65 = por %p63, %p64
    %p67 = scmp.ne.s32.totalorder %s52, %s66
    %p68 = scmp.eq.s32.totalorder %s21, 0
    %p69 = por %p67, %p68
    %s71 = sadd.s32 %s70, 1
    %p74 = scmp.eq.s32.totalorder %s15, 1
    %p75 = scmp.ne.s32.totalorder %s70, %s72
    %p76 = scmp.eq.s32.totalorder %s15, 0
    %p77 = por %p75, %p76
    %p78 = scmp.ne.s32.totalorder %s70, %s72
    %p79 = scmp.eq.s32.totalorder %s20, 1
    %p80 = por %p78, %p79
    %p81 = scmp.ne.s32.totalorder %s72, %s73
    %p82 = scmp.eq.s32.totalorder %s20, 0
    %p83 = por %p81, %p82
    %p84 = scmp.ne.s32.totalorder %s72, %s73
    %p85 = scmp.eq.s32.totalorder %s21, 1
    %p86 = por %p84, %p85
    %p88 = scmp.ne.s32.totalorder %s73, %s87
    %p89 = scmp.eq.s32.totalorder %s21, 0
    %p90 = por %p88, %p89
    %s92 = sadd.s32 %s91, 1
    %p95 = scmp.eq.s32.totalorder %s15, 1
    %p96 = scmp.ne.s32.totalorder %s91, %s93
    %p97 = scmp.eq.s32.totalorder %s15, 0
    %p98 = por %p96, %p97
    %p99 = scmp.ne.s32.totalorder %s91, %s93
    %p100 = scmp.eq.s32.totalorder %s20, 1
    %p101 = por %p99, %p100
    %p102 = scmp.ne.s32.totalorder %s93, %s94
    %p103 = scmp.eq.s32.totalorder %s20, 0
    %p104 = por %p102, %p103
    %p105 = scmp.ne.s32.totalorder %s93, %s94
    %p106 = scmp.eq.s32.totalorder %s21, 1
    %p107 = por %p105, %p106
    %p109 = scmp.ne.s32.totalorder %s94, %s108
    %p110 = scmp.eq.s32.totalorder %s21, 0
    %p111 = por %p109, %p110
    %s113 = sadd.s32 %s112, 1
    %p116 = scmp.eq.s32.totalorder %s15, 1
    %p117 = scmp.ne.s32.totalorder %s112, %s114
    %p118 = scmp.eq.s32.totalorder %s15, 0
    %p119 = por %p117, %p118
    %p120 = scmp.ne.s32.totalorder %s112, %s114
    %p121 = scmp.eq.s32.totalorder %s20, 1
    %p122 = por %p120, %p121
    %p123 = scmp.ne.s32.totalorder %s114, %s115
    %p124 = scmp.eq.s32.totalorder %s20, 0
    %p125 = por %p123, %p124
    %p126 = scmp.ne.s32.totalorder %s114, %s115
    %p127 = scmp.eq.s32.totalorder %s21, 1
    %p128 = por %p126, %p127
    %p130 = scmp.ne.s32.totalorder %s115, %s129
    %p131 = scmp.eq.s32.totalorder %s21, 0
    %p132 = por %p130, %p131
    %s134 = sadd.s32 %s133, 1
    %p137 = scmp.eq.s32.totalorder %s15, 1
    %p138 = scmp.ne.s32.totalorder %s133, %s135
    %p139 = scmp.eq.s32.totalorder %s15, 0
    %p140 = por %p138, %p139
    %p141 = scmp.ne.s32.totalorder %s133, %s135
    %p142 = scmp.eq.s32.totalorder %s20, 1
    %p143 = por %p141, %p142
    %p144 = scmp.ne.s32.totalorder %s135, %s136
    %p145 = scmp.eq.s32.totalorder %s20, 0
    %p146 = por %p144, %p145
    %p147 = scmp.ne.s32.totalorder %s135, %s136
    %p148 = scmp.eq.s32.totalorder %s21, 1
    %p149 = por %p147, %p148
    %p151 = scmp.ne.s32.totalorder %s136, %s150
    %p152 = scmp.eq.s32.totalorder %s21, 0
    %p153 = por %p151, %p152
    %s155 = sadd.s32 %s154, 1
    %p158 = scmp.eq.s32.totalorder %s15, 1
    %p159 = scmp.ne.s32.totalorder %s154, %s156
    %p160 = scmp.eq.s32.totalorder %s15, 0
    %p161 = por %p159, %p160
    %p162 = scmp.ne.s32.totalorder %s154, %s156
    %p163 = scmp.eq.s32.totalorder %s20, 1
    %p164 = por %p162, %p163
    %p165 = scmp.ne.s32.totalorder %s156, %s157
    %p166 = scmp.eq.s32.totalorder %s20, 0
    %p167 = por %p165, %p166
    %p168 = scmp.ne.s32.totalorder %s156, %s157
    %p169 = scmp.eq.s32.totalorder %s21, 1
    %p170 = por %p168, %p169
    %p172 = scmp.ne.s32.totalorder %s157, %s171
    %p173 = scmp.eq.s32.totalorder %s21, 0
    %p174 = por %p172, %p173
    %s176 = sadd.s32 %s175, 1
    %p179 = scmp.eq.s32.totalorder %s15, 1
    %p180 = scmp.ne.s32.totalorder %s175, %s177
    %p181 = scmp.eq.s32.totalorder %s15, 0
    %p182 = por %p180, %p181
    %p183 = scmp.ne.s32.totalorder %s175, %s177
    %p184 = scmp.eq.s32.totalorder %s20, 1
    %p185 = por %p183, %p184
    %p186 = scmp.ne.s32.totalorder %s177, %s178
    %p187 = scmp.eq.s32.totalorder %s20, 0
    %p188 = por %p186, %p187
    %p189 = scmp.ne.s32.totalorder %s177, %s178
    %p190 = scmp.eq.s32.totalorder %s21, 1
    %p191 = por %p189, %p190
    %p193 = scmp.ne.s32.totalorder %s178, %s192
    %p194 = scmp.eq.s32.totalorder %s21, 0
    %p195 = por %p193, %p194
    %s197 = sadd.s32 %s196, 1
    %p200 = scmp.eq.s32.totalorder %s15, 1
    %p201 = scmp.ne.s32.totalorder %s196, %s198
    %p202 = scmp.eq.s32.totalorder %s15, 0
    %p203 = por %p201, %p202
    %p204 = scmp.ne.s32.totalorder %s196, %s198
    %p205 = scmp.eq.s32.totalorder %s20, 1
    %p206 = por %p204, %p205
    %p207 = scmp.ne.s32.totalorder %s198, %s199
    %p208 = scmp.eq.s32.totalorder %s20, 0
    %p209 = por %p207, %p208
    %p210 = scmp.ne.s32.totalorder %s198, %s199
    %p211 = scmp.eq.s32.totalorder %s21, 1
    %p212 = por %p210, %p211
    %p214 = scmp.ne.s32.totalorder %s199, %s213
    %p215 = scmp.eq.s32.totalorder %s21, 0
    %p216 = por %p214, %p215
    %s217 = ssub.s32 %s15, %s22
    %p218 = scmp.eq.s32.totalorder %s217, 0
    %s220 = sadd.s32 %s219, 1
    %s221 = scalar_select %p218, %s219, %s220
    %p224 = pneg %p218
    %p225 = scmp.eq.s32.totalorder %s15, 1
    %p226 = por %p224, %p225
    %p227 = scmp.ne.s32.totalorder %s219, %s222
    %p228 = scmp.eq.s32.totalorder %s15, 0
    %p229 = por %p227, %p228
    %p230 = scmp.ne.s32.totalorder %s219, %s222
    %p231 = scmp.eq.s32.totalorder %s20, 1
    %p232 = por %p230, %p231
    %p233 = scmp.ne.s32.totalorder %s222, %s223
    %p234 = scmp.eq.s32.totalorder %s20, 0
    %p235 = por %p233, %p234
    %p236 = scmp.ne.s32.totalorder %s222, %s223
    %p237 = scmp.eq.s32.totalorder %s21, 1
    %p238 = por %p236, %p237
    %p240 = scmp.ne.s32.totalorder %s223, %s239
    %p241 = scmp.eq.s32.totalorder %s21, 0
    %p242 = por %p240, %p241
    %p243 = scmp.le.s32.totalorder 1, %s15
    %p244 = scmp.lt.s32.totalorder %s15, 3
    %p245 = pnand %p243, %p244
    %p246 = pneg %p245
    // Predicated region
    $region9: #{rcab_forward.1} parent=5 // pred_check
      _
    $region10: #{rcab_forward.1} parent=5 // pred_check_branch
      %248 = sbr.rel (%p245) target = $region12
    $region11: #{rcab_forward.1} parent=5 // pred_region
      %s249 = ssub.s32 %s15, 1
      // Predicated region
      $region13: #{rcab_forward.1} parent=11 // pred_check
        %p250 = pneg %p62
      $region14: #{rcab_forward.1} parent=11 // pred_check_branch
        %252 = sbr.rel (%p250) target = $region16
      $region15: #{rcab_forward.1} parent=11 // pred_region
        _
      $region16: #{rcab_forward.1} parent=11 // pred_fallthru
        _
      // Predicated region
      $region17: #{rcab_forward.1} parent=11 // pred_check
        %p253 = pneg %p83
      $region18: #{rcab_forward.1} parent=11 // pred_check_branch
        %255 = sbr.rel (%p253) target = $region20
      $region19: #{rcab_forward.1} parent=11 // pred_region
        _
      $region20: #{rcab_forward.1} parent=11 // pred_fallthru
        _
      // Predicated region
      $region21: #{rcab_forward.1} parent=11 // pred_check
        %p256 = pneg %p104
      $region22: #{rcab_forward.1} parent=11 // pred_check_branch
        %258 = sbr.rel (%p256) target = $region24
      $region23: #{rcab_forward.1} parent=11 // pred_region
        _
      $region24: #{rcab_forward.1} parent=11 // pred_fallthru
        _
      // Predicated region
      $region25: #{rcab_forward.1} parent=11 // pred_check
        %p259 = pneg %p125
      $region26: #{rcab_forward.1} parent=11 // pred_check_branch
        %261 = sbr.rel (%p259) target = $region28
      $region27: #{rcab_forward.1} parent=11 // pred_region
        _
      $region28: #{rcab_forward.1} parent=11 // pred_fallthru
        _
      // Predicated region
      $region29: #{rcab_forward.1} parent=11 // pred_check
        %p262 = pneg %p146
      $region30: #{rcab_forward.1} parent=11 // pred_check_branch
        %264 = sbr.rel (%p262) target = $region32
      $region31: #{rcab_forward.1} parent=11 // pred_region
        _
      $region32: #{rcab_forward.1} parent=11 // pred_fallthru
        _
      // Predicated region
      $region33: #{rcab_forward.1} parent=11 // pred_check
        %p265 = pneg %p167
      $region34: #{rcab_forward.1} parent=11 // pred_check_branch
        %267 = sbr.rel (%p265) target = $region36
      $region35: #{rcab_forward.1} parent=11 // pred_region
        _
      $region36: #{rcab_forward.1} parent=11 // pred_fallthru
        _
      // Predicated region
      $region37: #{rcab_forward.1} parent=11 // pred_check
        %p268 = pneg %p188
      $region38: #{rcab_forward.1} parent=11 // pred_check_branch
        %270 = sbr.rel (%p268) target = $region40
      $region39: #{rcab_forward.1} parent=11 // pred_region
        _
      $region40: #{rcab_forward.1} parent=11 // pred_fallthru
        _
      // Predicated region
      $region41: #{rcab_forward.1} parent=11 // pred_check
        %p271 = pneg %p209
      $region42: #{rcab_forward.1} parent=11 // pred_check_branch
        %273 = sbr.rel (%p271) target = $region44
      $region43: #{rcab_forward.1} parent=11 // pred_region
        _
      $region44: #{rcab_forward.1} parent=11 // pred_fallthru
        _
    $region12: #{rcab_forward.1} parent=5 // pred_fallthru
      _
    %p274 = scmp.lt.s32.totalorder %s15, 2
    // Predicated region
    $region45: #{rcab_forward.1} parent=5 // pred_check
      %p275 = pneg %p274
    $region46: #{rcab_forward.1} parent=5 // pred_check_branch
      %277 = sbr.rel (%p275) target = $region48
    $region47: #{rcab_forward.1} parent=5 // pred_region
      // Predicated region
      $region49: #{rcab_forward.1} parent=47 // pred_check
        %p278 = pneg %p35
      $region50: #{rcab_forward.1} parent=47 // pred_check_branch
        %280 = sbr.rel (%p278) target = $region52
      $region51: #{rcab_forward.1} parent=47 // pred_region
        %p281 = scmp.lt.s32.totalorder %s15, 1
        %s282 = scalar_select %p281, %s15, 1
        %s283 = smul.addr %s282, 8
        %s284 = smul.addr %s283, 8
        %s285 = scalar_lea.vmem %s0, %s284
      $region52: #{rcab_forward.1} parent=47 // pred_fallthru
        _
    $region48: #{rcab_forward.1} parent=5 // pred_fallthru
      _
    %p286 = scmp.le.s32.totalorder 1, %s15
    %p287 = scmp.lt.s32.totalorder %s15, 3
    %p288 = pnand %p286, %p287
    %p289 = pneg %p288
    // Predicated region
    $region53: #{rcab_forward.1} parent=5 // pred_check
      _
    $region54: #{rcab_forward.1} parent=5 // pred_check_branch
      %291 = sbr.rel (%p288) target = $region56
    $region55: #{rcab_forward.1} parent=5 // pred_region
      %s292 = ssub.s32 %s15, 1
      %p293 = scmp.lt.s32.totalorder %s20, 1
      %s294 = scalar_select %p293, %s20, 1
      %s295 = smul.addr %s294, 8
      %s296 = smul.addr %s295, 8
      %s297 = scalar_lea.vmem %s0, %s296
      %p298 = pneg %p41
      %p299 = pneg %p38
      %p300 = pneg %p62
      %p301 = pneg %p59
      %p302 = pneg %p83
      %p303 = pneg %p80
      %p304 = pneg %p104
      %p305 = pneg %p101
      %p306 = pneg %p125
      %p307 = pneg %p122
      %p308 = pneg %p146
      %p309 = pneg %p143
      %p310 = pneg %p167
      %p311 = pneg %p164
      %p312 = pneg %p188
      %p313 = pneg %p185
      %p314 = pneg %p209
      %p315 = pneg %p206
      %p316 = pneg %p235
      %p317 = pneg %p232
      %p318 = scmp.lt.s32.totalorder %s20, 1
      %s319 = scalar_select %p318, %s20, 1
      %s320 = smul.addr %s319, 8
      %s321 = smul.addr %s320, 8
      %s322 = scalar_lea.vmem %s9, %s321
      %p323 = scmp.lt.s32.totalorder %s20, 1
      %s324 = scalar_select %p323, %s20, 1
      %s325 = smul.addr %s324, 8
      %s326 = smul.addr %s325, 8
      %s327 = scalar_lea.vmem %s0, %s326
      %p328 = scmp.lt.s32.totalorder %s20, 1
      %s329 = scalar_select %p328, %s20, 1
      %s330 = smul.addr %s329, 8
      %s331 = smul.addr %s330, 8
      %s332 = scalar_lea.vmem %s9, %s331
      %v334 = vld [vmem:[%s327] sm:$0xff]
      %v335 = vld [vmem:[%s327 + $0x8] sm:$0xff]
      %v336 = vld [vmem:[%s327 + $0x10] sm:$0xff]
      %v337 = vld [vmem:[%s327 + $0x18] sm:$0xff]
      %v338 = vld [vmem:[%s327 + $0x20] sm:$0xff]
      %v339 = vld [vmem:[%s327 + $0x28] sm:$0xff]
      %v340 = vld [vmem:[%s327 + $0x30] sm:$0xff]
      %v341 = vld [vmem:[%s327 + $0x38] sm:$0xff]
      %v342 = vpack.c.bf16 %v338, %v334
      %v343 = vpack.c.bf16 %v339, %v335
      %v344 = vpack.c.bf16 %v340, %v336
      %v345 = vpack.c.bf16 %v341, %v337
      %v347 = vshrl.u32 %v342, 16
      %v349 = vrot.slane %v347, 7
      %v350 = vshll.u32 %v342, 16
      %v352 = vor.u32 %v349, %v350
      %v354 = vshrl.u32 %v343, 16
      %v356 = vrot.slane %v354, 7
      %v357 = vshll.u32 %v343, 16
      %v359 = vor.u32 %v356, %v357
      %v361 = vshrl.u32 %v344, 16
      %v363 = vrot.slane %v361, 7
      %v364 = vshll.u32 %v344, 16
      %v366 = vor.u32 %v363, %v364
      %v368 = vshrl.u32 %v345, 16
      %v370 = vrot.slane %v368, 7
      %v371 = vshll.u32 %v345, 16
      %v373 = vor.u32 %v370, %v371
      %vm378 = vcmask 1040384
      %vm379 = vsmask.f32 256
      %vm380 = vmand %vm378, %vm379
      %v381 = vsel %vm380, 0, %v352
      %v382 = vsel %vm380, 0, %v359
      %v383 = vsel %vm380, 0, %v366
      %v384 = vsel %vm380, 0, %v373
      %v385 = vrot.slane %v350, 1
      %v386 = vor.u32 %v347, %v385
      %v387 = vrot.slane %v357, 1
      %v388 = vor.u32 %v354, %v387
      %v389 = vrot.slane %v364, 1
      %v390 = vor.u32 %v361, %v389
      %v391 = vrot.slane %v371, 1
      %v392 = vor.u32 %v368, %v391
      %vm397 = vcmask 1047552
      %vm398 = vsmask.f32 7424
      %vm399 = vmand %vm397, %vm398
      %v400 = vsel %vm399, %v386, 0
      %v401 = vsel %vm399, %v388, 0
      %v402 = vsel %vm399, %v390, 0
      %v403 = vsel %vm399, %v392, 0
      %404 = vst [vmem:[#allocation2] sm:$0xff] %v381
      %405 = vst [vmem:[#allocation2 + $0x8] sm:$0xff] %v382
      %406 = vst [vmem:[#allocation2 + $0x10] sm:$0xff] %v383
      %407 = vst [vmem:[#allocation2 + $0x18] sm:$0xff] %v384
      %408 = vst [vmem:[#allocation2 + $0x20] sm:$0xff] %v342
      %409 = vst [vmem:[#allocation2 + $0x28] sm:$0xff] %v343
      %410 = vst [vmem:[#allocation2 + $0x30] sm:$0xff] %v344
      %411 = vst [vmem:[#allocation2 + $0x38] sm:$0xff] %v345
      %412 = vst [vmem:[#allocation2 + $0x40] sm:$0xff] %v400
      %413 = vst [vmem:[#allocation2 + $0x48] sm:$0xff] %v401
      %414 = vst [vmem:[#allocation2 + $0x50] sm:$0xff] %v402
      %415 = vst [vmem:[#allocation2 + $0x58] sm:$0xff] %v403
      %v416 = vld [vmem:[%s2] sm:$0xf]
      %v417 = vld [vmem:[#allocation2] sm:$0xff]
      %v418 = vld [vmem:[#allocation2 + $0x8] sm:$0xff]
      %v419 = vld [vmem:[#allocation2 + $0x10] sm:$0xff]
      %v420 = vld [vmem:[#allocation2 + $0x18] sm:$0xff]
      %v421 = vld [vmem:[#allocation2 + $0x20] sm:$0xff]
      %v422 = vld [vmem:[#allocation2 + $0x28] sm:$0xff]
      %v423 = vld [vmem:[#allocation2 + $0x30] sm:$0xff]
      %v424 = vld [vmem:[#allocation2 + $0x38] sm:$0xff]
      %v425 = vld [vmem:[#allocation2 + $0x40] sm:$0xff]
      %v426 = vld [vmem:[#allocation2 + $0x48] sm:$0xff]
      %v427 = vld [vmem:[#allocation2 + $0x50] sm:$0xff]
      %v428 = vld [vmem:[#allocation2 + $0x58] sm:$0xff]
      %v429 = vld [vmem:[%s1] sm:$0xff]
      %v430 = vld [vmem:[%s1 + $0x8] sm:$0xff]
      %v431 = vld [vmem:[%s1 + $0x10] sm:$0xff]
      %v432 = vld [vmem:[%s1 + $0x18] sm:$0xff]
      %v433 = vld [vmem:[%s1 + $0x20] sm:$0xff]
      %v434 = vld [vmem:[%s1 + $0x28] sm:$0xff]
      %v435 = vld [vmem:[%s1 + $0x30] sm:$0xff]
      %v436 = vld [vmem:[%s1 + $0x38] sm:$0xff]
      %v437 = vld [vmem:[%s1 + $0x40] sm:$0xff]
      %v438 = vld [vmem:[%s1 + $0x48] sm:$0xff]
      %v439 = vld [vmem:[%s1 + $0x50] sm:$0xff]
      %v440 = vld [vmem:[%s1 + $0x58] sm:$0xff]
      %v441 = vld [vmem:[%s1 + $0x60] sm:$0xff]
      %v442 = vld [vmem:[%s1 + $0x68] sm:$0xff]
      %v443 = vld [vmem:[%s1 + $0x70] sm:$0xff]
      %v444 = vld [vmem:[%s1 + $0x78] sm:$0xff]
      %v445 = vld [vmem:[%s1 + $0x80] sm:$0xff]
      %v446 = vld [vmem:[%s1 + $0x88] sm:$0xff]
      %v447 = vld [vmem:[%s1 + $0x90] sm:$0xff]
      %v448 = vld [vmem:[%s1 + $0x98] sm:$0xff]
      %v449 = vld [vmem:[%s1 + $0xa0] sm:$0xff]
      %v450 = vld [vmem:[%s1 + $0xa8] sm:$0xff]
      %v451 = vld [vmem:[%s1 + $0xb0] sm:$0xff]
      %v452 = vld [vmem:[%s1 + $0xb8] sm:$0xff]
      %v453 = vld [vmem:[%s1 + $0xc0] sm:$0xff]
      %v454 = vld [vmem:[%s1 + $0xc8] sm:$0xff]
      %v455 = vld [vmem:[%s1 + $0xd0] sm:$0xff]
      %v456 = vld [vmem:[%s1 + $0xd8] sm:$0xff]
      %v457 = vld [vmem:[%s1 + $0xe0] sm:$0xff]
      %v458 = vld [vmem:[%s1 + $0xe8] sm:$0xff]
      %v459 = vld [vmem:[%s1 + $0xf0] sm:$0xff]
      %v460 = vld [vmem:[%s1 + $0xf8] sm:$0xff]
      %v461 = vld [vmem:[%s1 + $0x100] sm:$0xff]
      %v462 = vld [vmem:[%s1 + $0x108] sm:$0xff]
      %v463 = vld [vmem:[%s1 + $0x110] sm:$0xff]
      %v464 = vld [vmem:[%s1 + $0x118] sm:$0xff]
      %v465 = vld [vmem:[%s1 + $0x120] sm:$0xff]
      %v466 = vld [vmem:[%s1 + $0x128] sm:$0xff]
      %v467 = vld [vmem:[%s1 + $0x130] sm:$0xff]
      %v468 = vld [vmem:[%s1 + $0x138] sm:$0xff]
      %v469 = vld [vmem:[%s1 + $0x140] sm:$0xff]
      %v470 = vld [vmem:[%s1 + $0x148] sm:$0xff]
      %v471 = vld [vmem:[%s1 + $0x150] sm:$0xff]
      %v472 = vld [vmem:[%s1 + $0x158] sm:$0xff]
      %v473 = vld [vmem:[%s1 + $0x160] sm:$0xff]
      %v474 = vld [vmem:[%s1 + $0x168] sm:$0xff]
      %v475 = vld [vmem:[%s1 + $0x170] sm:$0xff]
      %v476 = vld [vmem:[%s1 + $0x178] sm:$0xff]
      %v477 = vld [vmem:[%s1 + $0x180] sm:$0xff]
      %v478 = vld [vmem:[%s1 + $0x188] sm:$0xff]
      %v479 = vld [vmem:[%s1 + $0x190] sm:$0xff]
      %v480 = vld [vmem:[%s1 + $0x198] sm:$0xff]
      %v481 = vld [vmem:[%s1 + $0x1a0] sm:$0xff]
      %v482 = vld [vmem:[%s1 + $0x1a8] sm:$0xff]
      %v483 = vld [vmem:[%s1 + $0x1b0] sm:$0xff]
      %v484 = vld [vmem:[%s1 + $0x1b8] sm:$0xff]
      %v485 = vld [vmem:[%s1 + $0x1c0] sm:$0xff]
      %v486 = vld [vmem:[%s1 + $0x1c8] sm:$0xff]
      %v487 = vld [vmem:[%s1 + $0x1d0] sm:$0xff]
      %v488 = vld [vmem:[%s1 + $0x1d8] sm:$0xff]
      %v489 = vld [vmem:[%s1 + $0x1e0] sm:$0xff]
      %v490 = vld [vmem:[%s1 + $0x1e8] sm:$0xff]
      %v491 = vld [vmem:[%s1 + $0x1f0] sm:$0xff]
      %v492 = vld [vmem:[%s1 + $0x1f8] sm:$0xff]
      %v493 = vld [vmem:[%s1 + $0x200] sm:$0xff]
      %v494 = vld [vmem:[%s1 + $0x208] sm:$0xff]
      %v495 = vld [vmem:[%s1 + $0x210] sm:$0xff]
      %v496 = vld [vmem:[%s1 + $0x218] sm:$0xff]
      %v497 = vld [vmem:[%s1 + $0x220] sm:$0xff]
      %v498 = vld [vmem:[%s1 + $0x228] sm:$0xff]
      %v499 = vld [vmem:[%s1 + $0x230] sm:$0xff]
      %v500 = vld [vmem:[%s1 + $0x238] sm:$0xff]
      %v501 = vld [vmem:[%s1 + $0x240] sm:$0xff]
      %v502 = vld [vmem:[%s1 + $0x248] sm:$0xff]
      %v503 = vld [vmem:[%s1 + $0x250] sm:$0xff]
      %v504 = vld [vmem:[%s1 + $0x258] sm:$0xff]
      %v505 = vld [vmem:[%s1 + $0x260] sm:$0xff]
      %v506 = vld [vmem:[%s1 + $0x268] sm:$0xff]
      %v507 = vld [vmem:[%s1 + $0x270] sm:$0xff]
      %v508 = vld [vmem:[%s1 + $0x278] sm:$0xff]
      %v509 = vld [vmem:[%s1 + $0x280] sm:$0xff]
      %v510 = vld [vmem:[%s1 + $0x288] sm:$0xff]
      %v511 = vld [vmem:[%s1 + $0x290] sm:$0xff]
      %v512 = vld [vmem:[%s1 + $0x298] sm:$0xff]
      %v513 = vld [vmem:[%s1 + $0x2a0] sm:$0xff]
      %v514 = vld [vmem:[%s1 + $0x2a8] sm:$0xff]
      %v515 = vld [vmem:[%s1 + $0x2b0] sm:$0xff]
      %v516 = vld [vmem:[%s1 + $0x2b8] sm:$0xff]
      %v517 = vld [vmem:[%s1 + $0x2c0] sm:$0xff]
      %v518 = vld [vmem:[%s1 + $0x2c8] sm:$0xff]
      %v519 = vld [vmem:[%s1 + $0x2d0] sm:$0xff]
      %v520 = vld [vmem:[%s1 + $0x2d8] sm:$0xff]
      %v521 = vld [vmem:[%s1 + $0x2e0] sm:$0xff]
      %v522 = vld [vmem:[%s1 + $0x2e8] sm:$0xff]
      %v523 = vld [vmem:[%s1 + $0x2f0] sm:$0xff]
      %v524 = vld [vmem:[%s1 + $0x2f8] sm:$0xff]
      %v525 = vld [vmem:[%s1 + $0x300] sm:$0xff]
      %v526 = vld [vmem:[%s1 + $0x308] sm:$0xff]
      %v527 = vld [vmem:[%s1 + $0x310] sm:$0xff]
      %v528 = vld [vmem:[%s1 + $0x318] sm:$0xff]
      %v529 = vld [vmem:[%s1 + $0x320] sm:$0xff]
      %v530 = vld [vmem:[%s1 + $0x328] sm:$0xff]
      %v531 = vld [vmem:[%s1 + $0x330] sm:$0xff]
      %v532 = vld [vmem:[%s1 + $0x338] sm:$0xff]
      %v533 = vld [vmem:[%s1 + $0x340] sm:$0xff]
      %v534 = vld [vmem:[%s1 + $0x348] sm:$0xff]
      %v535 = vld [vmem:[%s1 + $0x350] sm:$0xff]
      %v536 = vld [vmem:[%s1 + $0x358] sm:$0xff]
      %v537 = vld [vmem:[%s1 + $0x360] sm:$0xff]
      %v538 = vld [vmem:[%s1 + $0x368] sm:$0xff]
      %v539 = vld [vmem:[%s1 + $0x370] sm:$0xff]
      %v540 = vld [vmem:[%s1 + $0x378] sm:$0xff]
      %v541 = vld [vmem:[%s1 + $0x380] sm:$0xff]
      %v542 = vld [vmem:[%s1 + $0x388] sm:$0xff]
      %v543 = vld [vmem:[%s1 + $0x390] sm:$0xff]
      %v544 = vld [vmem:[%s1 + $0x398] sm:$0xff]
      %v545 = vld [vmem:[%s1 + $0x3a0] sm:$0xff]
      %v546 = vld [vmem:[%s1 + $0x3a8] sm:$0xff]
      %v547 = vld [vmem:[%s1 + $0x3b0] sm:$0xff]
      %v548 = vld [vmem:[%s1 + $0x3b8] sm:$0xff]
      %v549 = vld [vmem:[%s1 + $0x3c0] sm:$0xff]
      %v550 = vld [vmem:[%s1 + $0x3c8] sm:$0xff]
      %v551 = vld [vmem:[%s1 + $0x3d0] sm:$0xff]
      %v552 = vld [vmem:[%s1 + $0x3d8] sm:$0xff]
      %v553 = vld [vmem:[%s1 + $0x3e0] sm:$0xff]
      %v554 = vld [vmem:[%s1 + $0x3e8] sm:$0xff]
      %v555 = vld [vmem:[%s1 + $0x3f0] sm:$0xff]
      %v556 = vld [vmem:[%s1 + $0x3f8] sm:$0xff]
      %v557 = vld [vmem:[%s1 + $0x400] sm:$0xff]
      %v558 = vld [vmem:[%s1 + $0x408] sm:$0xff]
      %v559 = vld [vmem:[%s1 + $0x410] sm:$0xff]
      %v560 = vld [vmem:[%s1 + $0x418] sm:$0xff]
      %v561 = vld [vmem:[%s1 + $0x420] sm:$0xff]
      %v562 = vld [vmem:[%s1 + $0x428] sm:$0xff]
      %v563 = vld [vmem:[%s1 + $0x430] sm:$0xff]
      %v564 = vld [vmem:[%s1 + $0x438] sm:$0xff]
      %v565 = vld [vmem:[%s1 + $0x440] sm:$0xff]
      %v566 = vld [vmem:[%s1 + $0x448] sm:$0xff]
      %v567 = vld [vmem:[%s1 + $0x450] sm:$0xff]
      %v568 = vld [vmem:[%s1 + $0x458] sm:$0xff]
      %v569 = vld [vmem:[%s1 + $0x460] sm:$0xff]
      %v570 = vld [vmem:[%s1 + $0x468] sm:$0xff]
      %v571 = vld [vmem:[%s1 + $0x470] sm:$0xff]
      %v572 = vld [vmem:[%s1 + $0x478] sm:$0xff]
      %v573 = vld [vmem:[%s1 + $0x480] sm:$0xff]
      %v574 = vld [vmem:[%s1 + $0x488] sm:$0xff]
      %v575 = vld [vmem:[%s1 + $0x490] sm:$0xff]
      %v576 = vld [vmem:[%s1 + $0x498] sm:$0xff]
      %v577 = vld [vmem:[%s1 + $0x4a0] sm:$0xff]
      %v578 = vld [vmem:[%s1 + $0x4a8] sm:$0xff]
      %v579 = vld [vmem:[%s1 + $0x4b0] sm:$0xff]
      %v580 = vld [vmem:[%s1 + $0x4b8] sm:$0xff]
      %v581 = vld [vmem:[%s1 + $0x4c0] sm:$0xff]
      %v582 = vld [vmem:[%s1 + $0x4c8] sm:$0xff]
      %v583 = vld [vmem:[%s1 + $0x4d0] sm:$0xff]
      %v584 = vld [vmem:[%s1 + $0x4d8] sm:$0xff]
      %v585 = vld [vmem:[%s1 + $0x4e0] sm:$0xff]
      %v586 = vld [vmem:[%s1 + $0x4e8] sm:$0xff]
      %v587 = vld [vmem:[%s1 + $0x4f0] sm:$0xff]
      %v588 = vld [vmem:[%s1 + $0x4f8] sm:$0xff]
      %v589 = vld [vmem:[%s1 + $0x500] sm:$0xff]
      %v590 = vld [vmem:[%s1 + $0x508] sm:$0xff]
      %v591 = vld [vmem:[%s1 + $0x510] sm:$0xff]
      %v592 = vld [vmem:[%s1 + $0x518] sm:$0xff]
      %v593 = vld [vmem:[%s1 + $0x520] sm:$0xff]
      %v594 = vld [vmem:[%s1 + $0x528] sm:$0xff]
      %v595 = vld [vmem:[%s1 + $0x530] sm:$0xff]
      %v596 = vld [vmem:[%s1 + $0x538] sm:$0xff]
      %v597 = vld [vmem:[%s1 + $0x540] sm:$0xff]
      %v598 = vld [vmem:[%s1 + $0x548] sm:$0xff]
      %v599 = vld [vmem:[%s1 + $0x550] sm:$0xff]
      %v600 = vld [vmem:[%s1 + $0x558] sm:$0xff]
      %v601 = vld [vmem:[%s1 + $0x560] sm:$0xff]
      %v602 = vld [vmem:[%s1 + $0x568] sm:$0xff]
      %v603 = vld [vmem:[%s1 + $0x570] sm:$0xff]
      %v604 = vld [vmem:[%s1 + $0x578] sm:$0xff]
      %v605 = vld [vmem:[%s1 + $0x580] sm:$0xff]
      %v606 = vld [vmem:[%s1 + $0x588] sm:$0xff]
      %v607 = vld [vmem:[%s1 + $0x590] sm:$0xff]
      %v608 = vld [vmem:[%s1 + $0x598] sm:$0xff]
      %v609 = vld [vmem:[%s1 + $0x5a0] sm:$0xff]
      %v610 = vld [vmem:[%s1 + $0x5a8] sm:$0xff]
      %v611 = vld [vmem:[%s1 + $0x5b0] sm:$0xff]
      %v612 = vld [vmem:[%s1 + $0x5b8] sm:$0xff]
      %v613 = vld [vmem:[%s1 + $0x5c0] sm:$0xff]
      %v614 = vld [vmem:[%s1 + $0x5c8] sm:$0xff]
      %v615 = vld [vmem:[%s1 + $0x5d0] sm:$0xff]
      %v616 = vld [vmem:[%s1 + $0x5d8] sm:$0xff]
      %v617 = vld [vmem:[%s1 + $0x5e0] sm:$0xff]
      %v618 = vld [vmem:[%s1 + $0x5e8] sm:$0xff]
      %v619 = vld [vmem:[%s1 + $0x5f0] sm:$0xff]
      %v620 = vld [vmem:[%s1 + $0x5f8] sm:$0xff]
      %v621 = vld [vmem:[%s1 + $0x600] sm:$0xff]
      %v622 = vld [vmem:[%s1 + $0x608] sm:$0xff]
      %v623 = vld [vmem:[%s1 + $0x610] sm:$0xff]
      %v624 = vld [vmem:[%s1 + $0x618] sm:$0xff]
      %v625 = vld [vmem:[%s1 + $0x620] sm:$0xff]
      %v626 = vld [vmem:[%s1 + $0x628] sm:$0xff]
      %v627 = vld [vmem:[%s1 + $0x630] sm:$0xff]
      %v628 = vld [vmem:[%s1 + $0x638] sm:$0xff]
      %v629 = vld [vmem:[%s1 + $0x640] sm:$0xff]
      %v630 = vld [vmem:[%s1 + $0x648] sm:$0xff]
      %v631 = vld [vmem:[%s1 + $0x650] sm:$0xff]
      %v632 = vld [vmem:[%s1 + $0x658] sm:$0xff]
      %v633 = vld [vmem:[%s1 + $0x660] sm:$0xff]
      %v634 = vld [vmem:[%s1 + $0x668] sm:$0xff]
      %v635 = vld [vmem:[%s1 + $0x670] sm:$0xff]
      %v636 = vld [vmem:[%s1 + $0x678] sm:$0xff]
      %v637 = vld [vmem:[%s1 + $0x680] sm:$0xff]
      %v638 = vld [vmem:[%s1 + $0x688] sm:$0xff]
      %v639 = vld [vmem:[%s1 + $0x690] sm:$0xff]
      %v640 = vld [vmem:[%s1 + $0x698] sm:$0xff]
      %v641 = vld [vmem:[%s1 + $0x6a0] sm:$0xff]
      %v642 = vld [vmem:[%s1 + $0x6a8] sm:$0xff]
      %v643 = vld [vmem:[%s1 + $0x6b0] sm:$0xff]
      %v644 = vld [vmem:[%s1 + $0x6b8] sm:$0xff]
      %v645 = vld [vmem:[%s1 + $0x6c0] sm:$0xff]
      %v646 = vld [vmem:[%s1 + $0x6c8] sm:$0xff]
      %v647 = vld [vmem:[%s1 + $0x6d0] sm:$0xff]
      %v648 = vld [vmem:[%s1 + $0x6d8] sm:$0xff]
      %v649 = vld [vmem:[%s1 + $0x6e0] sm:$0xff]
      %v650 = vld [vmem:[%s1 + $0x6e8] sm:$0xff]
      %v651 = vld [vmem:[%s1 + $0x6f0] sm:$0xff]
      %v652 = vld [vmem:[%s1 + $0x6f8] sm:$0xff]
      %v653 = vld [vmem:[%s1 + $0x700] sm:$0xff]
      %v654 = vld [vmem:[%s1 + $0x708] sm:$0xff]
      %v655 = vld [vmem:[%s1 + $0x710] sm:$0xff]
      %v656 = vld [vmem:[%s1 + $0x718] sm:$0xff]
      %v657 = vld [vmem:[%s1 + $0x720] sm:$0xff]
      %v658 = vld [vmem:[%s1 + $0x728] sm:$0xff]
      %v659 = vld [vmem:[%s1 + $0x730] sm:$0xff]
      %v660 = vld [vmem:[%s1 + $0x738] sm:$0xff]
      %v661 = vld [vmem:[%s1 + $0x740] sm:$0xff]
      %v662 = vld [vmem:[%s1 + $0x748] sm:$0xff]
      %v663 = vld [vmem:[%s1 + $0x750] sm:$0xff]
      %v664 = vld [vmem:[%s1 + $0x758] sm:$0xff]
      %v665 = vld [vmem:[%s1 + $0x760] sm:$0xff]
      %v666 = vld [vmem:[%s1 + $0x768] sm:$0xff]
      %v667 = vld [vmem:[%s1 + $0x770] sm:$0xff]
      %v668 = vld [vmem:[%s1 + $0x778] sm:$0xff]
      %v669 = vld [vmem:[%s1 + $0x780] sm:$0xff]
      %v670 = vld [vmem:[%s1 + $0x788] sm:$0xff]
      %v671 = vld [vmem:[%s1 + $0x790] sm:$0xff]
      %v672 = vld [vmem:[%s1 + $0x798] sm:$0xff]
      %v673 = vld [vmem:[%s1 + $0x7a0] sm:$0xff]
      %v674 = vld [vmem:[%s1 + $0x7a8] sm:$0xff]
      %v675 = vld [vmem:[%s1 + $0x7b0] sm:$0xff]
      %v676 = vld [vmem:[%s1 + $0x7b8] sm:$0xff]
      %v677 = vld [vmem:[%s1 + $0x7c0] sm:$0xff]
      %v678 = vld [vmem:[%s1 + $0x7c8] sm:$0xff]
      %v679 = vld [vmem:[%s1 + $0x7d0] sm:$0xff]
      %v680 = vld [vmem:[%s1 + $0x7d8] sm:$0xff]
      %v681 = vld [vmem:[%s1 + $0x7e0] sm:$0xff]
      %v682 = vld [vmem:[%s1 + $0x7e8] sm:$0xff]
      %v683 = vld [vmem:[%s1 + $0x7f0] sm:$0xff]
      %v684 = vld [vmem:[%s1 + $0x7f8] sm:$0xff]
      %v685 = vld [vmem:[%s1 + $0x800] sm:$0xff]
      %v686 = vld [vmem:[%s1 + $0x808] sm:$0xff]
      %v687 = vld [vmem:[%s1 + $0x810] sm:$0xff]
      %v688 = vld [vmem:[%s1 + $0x818] sm:$0xff]
      %v689 = vld [vmem:[%s1 + $0x820] sm:$0xff]
      %v690 = vld [vmem:[%s1 + $0x828] sm:$0xff]
      %v691 = vld [vmem:[%s1 + $0x830] sm:$0xff]
      %v692 = vld [vmem:[%s1 + $0x838] sm:$0xff]
      %v693 = vld [vmem:[%s1 + $0x840] sm:$0xff]
      %v694 = vld [vmem:[%s1 + $0x848] sm:$0xff]
      %v695 = vld [vmem:[%s1 + $0x850] sm:$0xff]
      %v696 = vld [vmem:[%s1 + $0x858] sm:$0xff]
      %v697 = vld [vmem:[%s1 + $0x860] sm:$0xff]
      %v698 = vld [vmem:[%s1 + $0x868] sm:$0xff]
      %v699 = vld [vmem:[%s1 + $0x870] sm:$0xff]
      %v700 = vld [vmem:[%s1 + $0x878] sm:$0xff]
      %v701 = vld [vmem:[%s1 + $0x880] sm:$0xff]
      %v702 = vld [vmem:[%s1 + $0x888] sm:$0xff]
      %v703 = vld [vmem:[%s1 + $0x890] sm:$0xff]
      %v704 = vld [vmem:[%s1 + $0x898] sm:$0xff]
      %v705 = vld [vmem:[%s1 + $0x8a0] sm:$0xff]
      %v706 = vld [vmem:[%s1 + $0x8a8] sm:$0xff]
      %v707 = vld [vmem:[%s1 + $0x8b0] sm:$0xff]
      %v708 = vld [vmem:[%s1 + $0x8b8] sm:$0xff]
      %v709 = vld [vmem:[%s1 + $0x8c0] sm:$0xff]
      %v710 = vld [vmem:[%s1 + $0x8c8] sm:$0xff]
      %v711 = vld [vmem:[%s1 + $0x8d0] sm:$0xff]
      %v712 = vld [vmem:[%s1 + $0x8d8] sm:$0xff]
      %v713 = vld [vmem:[%s1 + $0x8e0] sm:$0xff]
      %v714 = vld [vmem:[%s1 + $0x8e8] sm:$0xff]
      %v715 = vld [vmem:[%s1 + $0x8f0] sm:$0xff]
      %v716 = vld [vmem:[%s1 + $0x8f8] sm:$0xff]
      %v717 = vld [vmem:[%s1 + $0x900] sm:$0xff]
      %v718 = vld [vmem:[%s1 + $0x908] sm:$0xff]
      %v719 = vld [vmem:[%s1 + $0x910] sm:$0xff]
      %v720 = vld [vmem:[%s1 + $0x918] sm:$0xff]
      %v721 = vld [vmem:[%s1 + $0x920] sm:$0xff]
      %v722 = vld [vmem:[%s1 + $0x928] sm:$0xff]
      %v723 = vld [vmem:[%s1 + $0x930] sm:$0xff]
      %v724 = vld [vmem:[%s1 + $0x938] sm:$0xff]
      %v725 = vld [vmem:[%s1 + $0x940] sm:$0xff]
      %v726 = vld [vmem:[%s1 + $0x948] sm:$0xff]
      %v727 = vld [vmem:[%s1 + $0x950] sm:$0xff]
      %v728 = vld [vmem:[%s1 + $0x958] sm:$0xff]
      %v729 = vld [vmem:[%s1 + $0x960] sm:$0xff]
      %v730 = vld [vmem:[%s1 + $0x968] sm:$0xff]
      %v731 = vld [vmem:[%s1 + $0x970] sm:$0xff]
      %v732 = vld [vmem:[%s1 + $0x978] sm:$0xff]
      %v733 = vld [vmem:[%s1 + $0x980] sm:$0xff]
      %v734 = vld [vmem:[%s1 + $0x988] sm:$0xff]
      %v735 = vld [vmem:[%s1 + $0x990] sm:$0xff]
      %v736 = vld [vmem:[%s1 + $0x998] sm:$0xff]
      %v737 = vld [vmem:[%s1 + $0x9a0] sm:$0xff]
      %v738 = vld [vmem:[%s1 + $0x9a8] sm:$0xff]
      %v739 = vld [vmem:[%s1 + $0x9b0] sm:$0xff]
      %v740 = vld [vmem:[%s1 + $0x9b8] sm:$0xff]
      %v741 = vld [vmem:[%s1 + $0x9c0] sm:$0xff]
      %v742 = vld [vmem:[%s1 + $0x9c8] sm:$0xff]
      %v743 = vld [vmem:[%s1 + $0x9d0] sm:$0xff]
      %v744 = vld [vmem:[%s1 + $0x9d8] sm:$0xff]
      %v745 = vld [vmem:[%s1 + $0x9e0] sm:$0xff]
      %v746 = vld [vmem:[%s1 + $0x9e8] sm:$0xff]
      %v747 = vld [vmem:[%s1 + $0x9f0] sm:$0xff]
      %v748 = vld [vmem:[%s1 + $0x9f8] sm:$0xff]
      %v749 = vld [vmem:[%s1 + $0xa00] sm:$0xff]
      %v750 = vld [vmem:[%s1 + $0xa08] sm:$0xff]
      %v751 = vld [vmem:[%s1 + $0xa10] sm:$0xff]
      %v752 = vld [vmem:[%s1 + $0xa18] sm:$0xff]
      %v753 = vld [vmem:[%s1 + $0xa20] sm:$0xff]
      %v754 = vld [vmem:[%s1 + $0xa28] sm:$0xff]
      %v755 = vld [vmem:[%s1 + $0xa30] sm:$0xff]
      %v756 = vld [vmem:[%s1 + $0xa38] sm:$0xff]
      %v757 = vld [vmem:[%s1 + $0xa40] sm:$0xff]
      %v758 = vld [vmem:[%s1 + $0xa48] sm:$0xff]
      %v759 = vld [vmem:[%s1 + $0xa50] sm:$0xff]
      %v760 = vld [vmem:[%s1 + $0xa58] sm:$0xff]
      %v761 = vld [vmem:[%s1 + $0xa60] sm:$0xff]
      %v762 = vld [vmem:[%s1 + $0xa68] sm:$0xff]
      %v763 = vld [vmem:[%s1 + $0xa70] sm:$0xff]
      %v764 = vld [vmem:[%s1 + $0xa78] sm:$0xff]
      %v765 = vld [vmem:[%s1 + $0xa80] sm:$0xff]
      %v766 = vld [vmem:[%s1 + $0xa88] sm:$0xff]
      %v767 = vld [vmem:[%s1 + $0xa90] sm:$0xff]
      %v768 = vld [vmem:[%s1 + $0xa98] sm:$0xff]
      %v769 = vld [vmem:[%s1 + $0xaa0] sm:$0xff]
      %v770 = vld [vmem:[%s1 + $0xaa8] sm:$0xff]
      %v771 = vld [vmem:[%s1 + $0xab0] sm:$0xff]
      %v772 = vld [vmem:[%s1 + $0xab8] sm:$0xff]
      %v773 = vld [vmem:[%s1 + $0xac0] sm:$0xff]
      %v774 = vld [vmem:[%s1 + $0xac8] sm:$0xff]
      %v775 = vld [vmem:[%s1 + $0xad0] sm:$0xff]
      %v776 = vld [vmem:[%s1 + $0xad8] sm:$0xff]
      %v777 = vld [vmem:[%s1 + $0xae0] sm:$0xff]
      %v778 = vld [vmem:[%s1 + $0xae8] sm:$0xff]
      %v779 = vld [vmem:[%s1 + $0xaf0] sm:$0xff]
      %v780 = vld [vmem:[%s1 + $0xaf8] sm:$0xff]
      %v781 = vld [vmem:[%s1 + $0xb00] sm:$0xff]
      %v782 = vld [vmem:[%s1 + $0xb08] sm:$0xff]
      %v783 = vld [vmem:[%s1 + $0xb10] sm:$0xff]
      %v784 = vld [vmem:[%s1 + $0xb18] sm:$0xff]
      %v785 = vld [vmem:[%s1 + $0xb20] sm:$0xff]
      %v786 = vld [vmem:[%s1 + $0xb28] sm:$0xff]
      %v787 = vld [vmem:[%s1 + $0xb30] sm:$0xff]
      %v788 = vld [vmem:[%s1 + $0xb38] sm:$0xff]
      %v789 = vld [vmem:[%s1 + $0xb40] sm:$0xff]
      %v790 = vld [vmem:[%s1 + $0xb48] sm:$0xff]
      %v791 = vld [vmem:[%s1 + $0xb50] sm:$0xff]
      %v792 = vld [vmem:[%s1 + $0xb58] sm:$0xff]
      %v793 = vld [vmem:[%s1 + $0xb60] sm:$0xff]
      %v794 = vld [vmem:[%s1 + $0xb68] sm:$0xff]
      %v795 = vld [vmem:[%s1 + $0xb70] sm:$0xff]
      %v796 = vld [vmem:[%s1 + $0xb78] sm:$0xff]
      %v797 = vld [vmem:[%s1 + $0xb80] sm:$0xff]
      %v798 = vld [vmem:[%s1 + $0xb88] sm:$0xff]
      %v799 = vld [vmem:[%s1 + $0xb90] sm:$0xff]
      %v800 = vld [vmem:[%s1 + $0xb98] sm:$0xff]
      %v801 = vld [vmem:[%s1 + $0xba0] sm:$0xff]
      %v802 = vld [vmem:[%s1 + $0xba8] sm:$0xff]
      %v803 = vld [vmem:[%s1 + $0xbb0] sm:$0xff]
      %v804 = vld [vmem:[%s1 + $0xbb8] sm:$0xff]
      %v805 = vld [vmem:[%s1 + $0xbc0] sm:$0xff]
      %v806 = vld [vmem:[%s1 + $0xbc8] sm:$0xff]
      %v807 = vld [vmem:[%s1 + $0xbd0] sm:$0xff]
      %v808 = vld [vmem:[%s1 + $0xbd8] sm:$0xff]
      %v809 = vld [vmem:[%s1 + $0xbe0] sm:$0xff]
      %v810 = vld [vmem:[%s1 + $0xbe8] sm:$0xff]
      %v811 = vld [vmem:[%s1 + $0xbf0] sm:$0xff]
      %v812 = vld [vmem:[%s1 + $0xbf8] sm:$0xff]
      %v814 = vlaneseq
      %v815 = vshrl.u32 %v814, 7
      %v816 = vsub.s32 0, %v815
      %v817 = vrot.slane %v416, %v816
      %v818 = vlaneseq
      %v819 = vshrl.u32 %v818, 7
      %v820 = vsub.s32 1, %v819
      %v821 = vrot.slane %v416, %v820
      %v822 = vlaneseq
      %v823 = vshrl.u32 %v822, 7
      %v824 = vsub.s32 2, %v823
      %v825 = vrot.slane %v416, %v824
      %v826 = vlaneseq
      %v827 = vshrl.u32 %v826, 7
      %v828 = vsub.s32 3, %v827
      %v829 = vrot.slane %v416, %v828
      %v1218 = vunpack.c.l.b16 %v429
      %v1219 = vunpack.c.h.b16 %v429
      %v1220 = vunpack.c.l.b16 %v430
      %v1221 = vunpack.c.h.b16 %v430
      %v1222 = vunpack.c.l.b16 %v431
      %v1223 = vunpack.c.h.b16 %v431
      %v1224 = vunpack.c.l.b16 %v432
      %v1225 = vunpack.c.h.b16 %v432
      %v1226 = vunpack.c.l.b16 %v433
      %v1227 = vunpack.c.h.b16 %v433
      %v1228 = vunpack.c.l.b16 %v434
      %v1229 = vunpack.c.h.b16 %v434
      %v1230 = vunpack.c.l.b16 %v435
      %v1231 = vunpack.c.h.b16 %v435
      %v1232 = vunpack.c.l.b16 %v436
      %v1233 = vunpack.c.h.b16 %v436
      %v1234 = vunpack.c.l.b16 %v437
      %v1235 = vunpack.c.h.b16 %v437
      %v1236 = vunpack.c.l.b16 %v438
      %v1237 = vunpack.c.h.b16 %v438
      %v1238 = vunpack.c.l.b16 %v439
      %v1239 = vunpack.c.h.b16 %v439
      %v1240 = vunpack.c.l.b16 %v440
      %v1241 = vunpack.c.h.b16 %v440
      %v1242 = vunpack.c.l.b16 %v441
      %v1243 = vunpack.c.h.b16 %v441
      %v1244 = vunpack.c.l.b16 %v442
      %v1245 = vunpack.c.h.b16 %v442
      %v1246 = vunpack.c.l.b16 %v443
      %v1247 = vunpack.c.h.b16 %v443
      %v1248 = vunpack.c.l.b16 %v444
      %v1249 = vunpack.c.h.b16 %v444
      %v1250 = vunpack.c.l.b16 %v445
      %v1251 = vunpack.c.h.b16 %v445
      %v1252 = vunpack.c.l.b16 %v446
      %v1253 = vunpack.c.h.b16 %v446
      %v1254 = vunpack.c.l.b16 %v447
      %v1255 = vunpack.c.h.b16 %v447
      %v1256 = vunpack.c.l.b16 %v448
      %v1257 = vunpack.c.h.b16 %v448
      %v1258 = vunpack.c.l.b16 %v449
      %v1259 = vunpack.c.h.b16 %v449
      %v1260 = vunpack.c.l.b16 %v450
      %v1261 = vunpack.c.h.b16 %v450
      %v1262 = vunpack.c.l.b16 %v451
      %v1263 = vunpack.c.h.b16 %v451
      %v1264 = vunpack.c.l.b16 %v452
      %v1265 = vunpack.c.h.b16 %v452
      %v1266 = vunpack.c.l.b16 %v453
      %v1267 = vunpack.c.h.b16 %v453
      %v1268 = vunpack.c.l.b16 %v454
      %v1269 = vunpack.c.h.b16 %v454
      %v1270 = vunpack.c.l.b16 %v455
      %v1271 = vunpack.c.h.b16 %v455
      %v1272 = vunpack.c.l.b16 %v456
      %v1273 = vunpack.c.h.b16 %v456
      %v1274 = vunpack.c.l.b16 %v457
      %v1275 = vunpack.c.h.b16 %v457
      %v1276 = vunpack.c.l.b16 %v458
      %v1277 = vunpack.c.h.b16 %v458
      %v1278 = vunpack.c.l.b16 %v459
      %v1279 = vunpack.c.h.b16 %v459
      %v1280 = vunpack.c.l.b16 %v460
      %v1281 = vunpack.c.h.b16 %v460
      %v1282 = vunpack.c.l.b16 %v461
      %v1283 = vunpack.c.h.b16 %v461
      %v1284 = vunpack.c.l.b16 %v462
      %v1285 = vunpack.c.h.b16 %v462
      %v1286 = vunpack.c.l.b16 %v463
      %v1287 = vunpack.c.h.b16 %v463
      %v1288 = vunpack.c.l.b16 %v464
      %v1289 = vunpack.c.h.b16 %v464
      %v1290 = vunpack.c.l.b16 %v465
      %v1291 = vunpack.c.h.b16 %v465
      %v1292 = vunpack.c.l.b16 %v466
      %v1293 = vunpack.c.h.b16 %v466
      %v1294 = vunpack.c.l.b16 %v467
      %v1295 = vunpack.c.h.b16 %v467
      %v1296 = vunpack.c.l.b16 %v468
      %v1297 = vunpack.c.h.b16 %v468
      %v1298 = vunpack.c.l.b16 %v469
      %v1299 = vunpack.c.h.b16 %v469
      %v1300 = vunpack.c.l.b16 %v470
      %v1301 = vunpack.c.h.b16 %v470
      %v1302 = vunpack.c.l.b16 %v471
      %v1303 = vunpack.c.h.b16 %v471
      %v1304 = vunpack.c.l.b16 %v472
      %v1305 = vunpack.c.h.b16 %v472
      %v1306 = vunpack.c.l.b16 %v473
      %v1307 = vunpack.c.h.b16 %v473
      %v1308 = vunpack.c.l.b16 %v474
      %v1309 = vunpack.c.h.b16 %v474
      %v1310 = vunpack.c.l.b16 %v475
      %v1311 = vunpack.c.h.b16 %v475
      %v1312 = vunpack.c.l.b16 %v476
      %v1313 = vunpack.c.h.b16 %v476
      %v1314 = vunpack.c.l.b16 %v477
      %v1315 = vunpack.c.h.b16 %v477
      %v1316 = vunpack.c.l.b16 %v478
      %v1317 = vunpack.c.h.b16 %v478
      %v1318 = vunpack.c.l.b16 %v479
      %v1319 = vunpack.c.h.b16 %v479
      %v1320 = vunpack.c.l.b16 %v480
      %v1321 = vunpack.c.h.b16 %v480
      %v1322 = vunpack.c.l.b16 %v481
      %v1323 = vunpack.c.h.b16 %v481
      %v1324 = vunpack.c.l.b16 %v482
      %v1325 = vunpack.c.h.b16 %v482
      %v1326 = vunpack.c.l.b16 %v483
      %v1327 = vunpack.c.h.b16 %v483
      %v1328 = vunpack.c.l.b16 %v484
      %v1329 = vunpack.c.h.b16 %v484
      %v1330 = vunpack.c.l.b16 %v485
      %v1331 = vunpack.c.h.b16 %v485
      %v1332 = vunpack.c.l.b16 %v486
      %v1333 = vunpack.c.h.b16 %v486
      %v1334 = vunpack.c.l.b16 %v487
      %v1335 = vunpack.c.h.b16 %v487
      %v1336 = vunpack.c.l.b16 %v488
      %v1337 = vunpack.c.h.b16 %v488
      %v1338 = vunpack.c.l.b16 %v489
      %v1339 = vunpack.c.h.b16 %v489
      %v1340 = vunpack.c.l.b16 %v490
      %v1341 = vunpack.c.h.b16 %v490
      %v1342 = vunpack.c.l.b16 %v491
      %v1343 = vunpack.c.h.b16 %v491
      %v1344 = vunpack.c.l.b16 %v492
      %v1345 = vunpack.c.h.b16 %v492
      %v1346 = vunpack.c.l.b16 %v493
      %v1347 = vunpack.c.h.b16 %v493
      %v1348 = vunpack.c.l.b16 %v494
      %v1349 = vunpack.c.h.b16 %v494
      %v1350 = vunpack.c.l.b16 %v495
      %v1351 = vunpack.c.h.b16 %v495
      %v1352 = vunpack.c.l.b16 %v496
      %v1353 = vunpack.c.h.b16 %v496
      %v1354 = vunpack.c.l.b16 %v497
      %v1355 = vunpack.c.h.b16 %v497
      %v1356 = vunpack.c.l.b16 %v498
      %v1357 = vunpack.c.h.b16 %v498
      %v1358 = vunpack.c.l.b16 %v499
      %v1359 = vunpack.c.h.b16 %v499
      %v1360 = vunpack.c.l.b16 %v500
      %v1361 = vunpack.c.h.b16 %v500
      %v1362 = vunpack.c.l.b16 %v501
      %v1363 = vunpack.c.h.b16 %v501
      %v1364 = vunpack.c.l.b16 %v502
      %v1365 = vunpack.c.h.b16 %v502
      %v1366 = vunpack.c.l.b16 %v503
      %v1367 = vunpack.c.h.b16 %v503
      %v1368 = vunpack.c.l.b16 %v504
      %v1369 = vunpack.c.h.b16 %v504
      %v1370 = vunpack.c.l.b16 %v505
      %v1371 = vunpack.c.h.b16 %v505
      %v1372 = vunpack.c.l.b16 %v506
      %v1373 = vunpack.c.h.b16 %v506
      %v1374 = vunpack.c.l.b16 %v507
      %v1375 = vunpack.c.h.b16 %v507
      %v1376 = vunpack.c.l.b16 %v508
      %v1377 = vunpack.c.h.b16 %v508
      %v1378 = vunpack.c.l.b16 %v509
      %v1379 = vunpack.c.h.b16 %v509
      %v1380 = vunpack.c.l.b16 %v510
      %v1381 = vunpack.c.h.b16 %v510
      %v1382 = vunpack.c.l.b16 %v511
      %v1383 = vunpack.c.h.b16 %v511
      %v1384 = vunpack.c.l.b16 %v512
      %v1385 = vunpack.c.h.b16 %v512
      %v1386 = vunpack.c.l.b16 %v513
      %v1387 = vunpack.c.h.b16 %v513
      %v1388 = vunpack.c.l.b16 %v514
      %v1389 = vunpack.c.h.b16 %v514
      %v1390 = vunpack.c.l.b16 %v515
      %v1391 = vunpack.c.h.b16 %v515
      %v1392 = vunpack.c.l.b16 %v516
      %v1393 = vunpack.c.h.b16 %v516
      %v1394 = vunpack.c.l.b16 %v517
      %v1395 = vunpack.c.h.b16 %v517
      %v1396 = vunpack.c.l.b16 %v518
      %v1397 = vunpack.c.h.b16 %v518
      %v1398 = vunpack.c.l.b16 %v519
      %v1399 = vunpack.c.h.b16 %v519
      %v1400 = vunpack.c.l.b16 %v520
      %v1401 = vunpack.c.h.b16 %v520
      %v1402 = vunpack.c.l.b16 %v521
      %v1403 = vunpack.c.h.b16 %v521
      %v1404 = vunpack.c.l.b16 %v522
      %v1405 = vunpack.c.h.b16 %v522
      %v1406 = vunpack.c.l.b16 %v523
      %v1407 = vunpack.c.h.b16 %v523
      %v1408 = vunpack.c.l.b16 %v524
      %v1409 = vunpack.c.h.b16 %v524
      %v1410 = vunpack.c.l.b16 %v525
      %v1411 = vunpack.c.h.b16 %v525
      %v1412 = vunpack.c.l.b16 %v526
      %v1413 = vunpack.c.h.b16 %v526
      %v1414 = vunpack.c.l.b16 %v527
      %v1415 = vunpack.c.h.b16 %v527
      %v1416 = vunpack.c.l.b16 %v528
      %v1417 = vunpack.c.h.b16 %v528
      %v1418 = vunpack.c.l.b16 %v529
      %v1419 = vunpack.c.h.b16 %v529
      %v1420 = vunpack.c.l.b16 %v530
      %v1421 = vunpack.c.h.b16 %v530
      %v1422 = vunpack.c.l.b16 %v531
      %v1423 = vunpack.c.h.b16 %v531
      %v1424 = vunpack.c.l.b16 %v532
      %v1425 = vunpack.c.h.b16 %v532
      %v1426 = vunpack.c.l.b16 %v533
      %v1427 = vunpack.c.h.b16 %v533
      %v1428 = vunpack.c.l.b16 %v534
      %v1429 = vunpack.c.h.b16 %v534
      %v1430 = vunpack.c.l.b16 %v535
      %v1431 = vunpack.c.h.b16 %v535
      %v1432 = vunpack.c.l.b16 %v536
      %v1433 = vunpack.c.h.b16 %v536
      %v1434 = vunpack.c.l.b16 %v537
      %v1435 = vunpack.c.h.b16 %v537
      %v1436 = vunpack.c.l.b16 %v538
      %v1437 = vunpack.c.h.b16 %v538
      %v1438 = vunpack.c.l.b16 %v539
      %v1439 = vunpack.c.h.b16 %v539
      %v1440 = vunpack.c.l.b16 %v540
      %v1441 = vunpack.c.h.b16 %v540
      %v1442 = vunpack.c.l.b16 %v541
      %v1443 = vunpack.c.h.b16 %v541
      %v1444 = vunpack.c.l.b16 %v542
      %v1445 = vunpack.c.h.b16 %v542
      %v1446 = vunpack.c.l.b16 %v543
      %v1447 = vunpack.c.h.b16 %v543
      %v1448 = vunpack.c.l.b16 %v544
      %v1449 = vunpack.c.h.b16 %v544
      %v1450 = vunpack.c.l.b16 %v545
      %v1451 = vunpack.c.h.b16 %v545
      %v1452 = vunpack.c.l.b16 %v546
      %v1453 = vunpack.c.h.b16 %v546
      %v1454 = vunpack.c.l.b16 %v547
      %v1455 = vunpack.c.h.b16 %v547
      %v1456 = vunpack.c.l.b16 %v548
      %v1457 = vunpack.c.h.b16 %v548
      %v1458 = vunpack.c.l.b16 %v549
      %v1459 = vunpack.c.h.b16 %v549
      %v1460 = vunpack.c.l.b16 %v550
      %v1461 = vunpack.c.h.b16 %v550
      %v1462 = vunpack.c.l.b16 %v551
      %v1463 = vunpack.c.h.b16 %v551
      %v1464 = vunpack.c.l.b16 %v552
      %v1465 = vunpack.c.h.b16 %v552
      %v1466 = vunpack.c.l.b16 %v553
      %v1467 = vunpack.c.h.b16 %v553
      %v1468 = vunpack.c.l.b16 %v554
      %v1469 = vunpack.c.h.b16 %v554
      %v1470 = vunpack.c.l.b16 %v555
      %v1471 = vunpack.c.h.b16 %v555
      %v1472 = vunpack.c.l.b16 %v556
      %v1473 = vunpack.c.h.b16 %v556
      %v1474 = vunpack.c.l.b16 %v557
      %v1475 = vunpack.c.h.b16 %v557
      %v1476 = vunpack.c.l.b16 %v558
      %v1477 = vunpack.c.h.b16 %v558
      %v1478 = vunpack.c.l.b16 %v559
      %v1479 = vunpack.c.h.b16 %v559
      %v1480 = vunpack.c.l.b16 %v560
      %v1481 = vunpack.c.h.b16 %v560
      %v1482 = vunpack.c.l.b16 %v561
      %v1483 = vunpack.c.h.b16 %v561
      %v1484 = vunpack.c.l.b16 %v562
      %v1485 = vunpack.c.h.b16 %v562
      %v1486 = vunpack.c.l.b16 %v563
      %v1487 = vunpack.c.h.b16 %v563
      %v1488 = vunpack.c.l.b16 %v564
      %v1489 = vunpack.c.h.b16 %v564
      %v1490 = vunpack.c.l.b16 %v565
      %v1491 = vunpack.c.h.b16 %v565
      %v1492 = vunpack.c.l.b16 %v566
      %v1493 = vunpack.c.h.b16 %v566
      %v1494 = vunpack.c.l.b16 %v567
      %v1495 = vunpack.c.h.b16 %v567
      %v1496 = vunpack.c.l.b16 %v568
      %v1497 = vunpack.c.h.b16 %v568
      %v1498 = vunpack.c.l.b16 %v569
      %v1499 = vunpack.c.h.b16 %v569
      %v1500 = vunpack.c.l.b16 %v570
      %v1501 = vunpack.c.h.b16 %v570
      %v1502 = vunpack.c.l.b16 %v571
      %v1503 = vunpack.c.h.b16 %v571
      %v1504 = vunpack.c.l.b16 %v572
      %v1505 = vunpack.c.h.b16 %v572
      %v1506 = vunpack.c.l.b16 %v573
      %v1507 = vunpack.c.h.b16 %v573
      %v1508 = vunpack.c.l.b16 %v574
      %v1509 = vunpack.c.h.b16 %v574
      %v1510 = vunpack.c.l.b16 %v575
      %v1511 = vunpack.c.h.b16 %v575
      %v1512 = vunpack.c.l.b16 %v576
      %v1513 = vunpack.c.h.b16 %v576
      %v1514 = vunpack.c.l.b16 %v577
      %v1515 = vunpack.c.h.b16 %v577
      %v1516 = vunpack.c.l.b16 %v578
      %v1517 = vunpack.c.h.b16 %v578
      %v1518 = vunpack.c.l.b16 %v579
      %v1519 = vunpack.c.h.b16 %v579
      %v1520 = vunpack.c.l.b16 %v580
      %v1521 = vunpack.c.h.b16 %v580
      %v1522 = vunpack.c.l.b16 %v581
      %v1523 = vunpack.c.h.b16 %v581
      %v1524 = vunpack.c.l.b16 %v582
      %v1525 = vunpack.c.h.b16 %v582
      %v1526 = vunpack.c.l.b16 %v583
      %v1527 = vunpack.c.h.b16 %v583
      %v1528 = vunpack.c.l.b16 %v584
      %v1529 = vunpack.c.h.b16 %v584
      %v1530 = vunpack.c.l.b16 %v585
      %v1531 = vunpack.c.h.b16 %v585
      %v1532 = vunpack.c.l.b16 %v586
      %v1533 = vunpack.c.h.b16 %v586
      %v1534 = vunpack.c.l.b16 %v587
      %v1535 = vunpack.c.h.b16 %v587
      %v1536 = vunpack.c.l.b16 %v588
      %v1537 = vunpack.c.h.b16 %v588
      %v1538 = vunpack.c.l.b16 %v589
      %v1539 = vunpack.c.h.b16 %v589
      %v1540 = vunpack.c.l.b16 %v590
      %v1541 = vunpack.c.h.b16 %v590
      %v1542 = vunpack.c.l.b16 %v591
      %v1543 = vunpack.c.h.b16 %v591
      %v1544 = vunpack.c.l.b16 %v592
      %v1545 = vunpack.c.h.b16 %v592
      %v1546 = vunpack.c.l.b16 %v593
      %v1547 = vunpack.c.h.b16 %v593
      %v1548 = vunpack.c.l.b16 %v594
      %v1549 = vunpack.c.h.b16 %v594
      %v1550 = vunpack.c.l.b16 %v595
      %v1551 = vunpack.c.h.b16 %v595
      %v1552 = vunpack.c.l.b16 %v596
      %v1553 = vunpack.c.h.b16 %v596
      %v1554 = vunpack.c.l.b16 %v597
      %v1555 = vunpack.c.h.b16 %v597
      %v1556 = vunpack.c.l.b16 %v598
      %v1557 = vunpack.c.h.b16 %v598
      %v1558 = vunpack.c.l.b16 %v599
      %v1559 = vunpack.c.h.b16 %v599
      %v1560 = vunpack.c.l.b16 %v600
      %v1561 = vunpack.c.h.b16 %v600
      %v1562 = vunpack.c.l.b16 %v601
      %v1563 = vunpack.c.h.b16 %v601
      %v1564 = vunpack.c.l.b16 %v602
      %v1565 = vunpack.c.h.b16 %v602
      %v1566 = vunpack.c.l.b16 %v603
      %v1567 = vunpack.c.h.b16 %v603
      %v1568 = vunpack.c.l.b16 %v604
      %v1569 = vunpack.c.h.b16 %v604
      %v1570 = vunpack.c.l.b16 %v605
      %v1571 = vunpack.c.h.b16 %v605
      %v1572 = vunpack.c.l.b16 %v606
      %v1573 = vunpack.c.h.b16 %v606
      %v1574 = vunpack.c.l.b16 %v607
      %v1575 = vunpack.c.h.b16 %v607
      %v1576 = vunpack.c.l.b16 %v608
      %v1577 = vunpack.c.h.b16 %v608
      %v1578 = vunpack.c.l.b16 %v609
      %v1579 = vunpack.c.h.b16 %v609
      %v1580 = vunpack.c.l.b16 %v610
      %v1581 = vunpack.c.h.b16 %v610
      %v1582 = vunpack.c.l.b16 %v611
      %v1583 = vunpack.c.h.b16 %v611
      %v1584 = vunpack.c.l.b16 %v612
      %v1585 = vunpack.c.h.b16 %v612
      %v1586 = vunpack.c.l.b16 %v613
      %v1587 = vunpack.c.h.b16 %v613
      %v1588 = vunpack.c.l.b16 %v614
      %v1589 = vunpack.c.h.b16 %v614
      %v1590 = vunpack.c.l.b16 %v615
      %v1591 = vunpack.c.h.b16 %v615
      %v1592 = vunpack.c.l.b16 %v616
      %v1593 = vunpack.c.h.b16 %v616
      %v1594 = vunpack.c.l.b16 %v617
      %v1595 = vunpack.c.h.b16 %v617
      %v1596 = vunpack.c.l.b16 %v618
      %v1597 = vunpack.c.h.b16 %v618
      %v1598 = vunpack.c.l.b16 %v619
      %v1599 = vunpack.c.h.b16 %v619
      %v1600 = vunpack.c.l.b16 %v620
      %v1601 = vunpack.c.h.b16 %v620
      %v1602 = vunpack.c.l.b16 %v621
      %v1603 = vunpack.c.h.b16 %v621
      %v1604 = vunpack.c.l.b16 %v622
      %v1605 = vunpack.c.h.b16 %v622
      %v1606 = vunpack.c.l.b16 %v623
      %v1607 = vunpack.c.h.b16 %v623
      %v1608 = vunpack.c.l.b16 %v624
      %v1609 = vunpack.c.h.b16 %v624
      %v1610 = vunpack.c.l.b16 %v625
      %v1611 = vunpack.c.h.b16 %v625
      %v1612 = vunpack.c.l.b16 %v626
      %v1613 = vunpack.c.h.b16 %v626
      %v1614 = vunpack.c.l.b16 %v627
      %v1615 = vunpack.c.h.b16 %v627
      %v1616 = vunpack.c.l.b16 %v628
      %v1617 = vunpack.c.h.b16 %v628
      %v1618 = vunpack.c.l.b16 %v629
      %v1619 = vunpack.c.h.b16 %v629
      %v1620 = vunpack.c.l.b16 %v630
      %v1621 = vunpack.c.h.b16 %v630
      %v1622 = vunpack.c.l.b16 %v631
      %v1623 = vunpack.c.h.b16 %v631
      %v1624 = vunpack.c.l.b16 %v632
      %v1625 = vunpack.c.h.b16 %v632
      %v1626 = vunpack.c.l.b16 %v633
      %v1627 = vunpack.c.h.b16 %v633
      %v1628 = vunpack.c.l.b16 %v634
      %v1629 = vunpack.c.h.b16 %v634
      %v1630 = vunpack.c.l.b16 %v635
      %v1631 = vunpack.c.h.b16 %v635
      %v1632 = vunpack.c.l.b16 %v636
      %v1633 = vunpack.c.h.b16 %v636
      %v1634 = vunpack.c.l.b16 %v637
      %v1635 = vunpack.c.h.b16 %v637
      %v1636 = vunpack.c.l.b16 %v638
      %v1637 = vunpack.c.h.b16 %v638
      %v1638 = vunpack.c.l.b16 %v639
      %v1639 = vunpack.c.h.b16 %v639
      %v1640 = vunpack.c.l.b16 %v640
      %v1641 = vunpack.c.h.b16 %v640
      %v1642 = vunpack.c.l.b16 %v641
      %v1643 = vunpack.c.h.b16 %v641
      %v1644 = vunpack.c.l.b16 %v642
      %v1645 = vunpack.c.h.b16 %v642
      %v1646 = vunpack.c.l.b16 %v643
      %v1647 = vunpack.c.h.b16 %v643
      %v1648 = vunpack.c.l.b16 %v644
      %v1649 = vunpack.c.h.b16 %v644
      %v1650 = vunpack.c.l.b16 %v645
      %v1651 = vunpack.c.h.b16 %v645
      %v1652 = vunpack.c.l.b16 %v646
      %v1653 = vunpack.c.h.b16 %v646
      %v1654 = vunpack.c.l.b16 %v647
      %v1655 = vunpack.c.h.b16 %v647
      %v1656 = vunpack.c.l.b16 %v648
      %v1657 = vunpack.c.h.b16 %v648
      %v1658 = vunpack.c.l.b16 %v649
      %v1659 = vunpack.c.h.b16 %v649
      %v1660 = vunpack.c.l.b16 %v650
      %v1661 = vunpack.c.h.b16 %v650
      %v1662 = vunpack.c.l.b16 %v651
      %v1663 = vunpack.c.h.b16 %v651
      %v1664 = vunpack.c.l.b16 %v652
      %v1665 = vunpack.c.h.b16 %v652
      %v1666 = vunpack.c.l.b16 %v653
      %v1667 = vunpack.c.h.b16 %v653
      %v1668 = vunpack.c.l.b16 %v654
      %v1669 = vunpack.c.h.b16 %v654
      %v1670 = vunpack.c.l.b16 %v655
      %v1671 = vunpack.c.h.b16 %v655
      %v1672 = vunpack.c.l.b16 %v656
      %v1673 = vunpack.c.h.b16 %v656
      %v1674 = vunpack.c.l.b16 %v657
      %v1675 = vunpack.c.h.b16 %v657
      %v1676 = vunpack.c.l.b16 %v658
      %v1677 = vunpack.c.h.b16 %v658
      %v1678 = vunpack.c.l.b16 %v659
      %v1679 = vunpack.c.h.b16 %v659
      %v1680 = vunpack.c.l.b16 %v660
      %v1681 = vunpack.c.h.b16 %v660
      %v1682 = vunpack.c.l.b16 %v661
      %v1683 = vunpack.c.h.b16 %v661
      %v1684 = vunpack.c.l.b16 %v662
      %v1685 = vunpack.c.h.b16 %v662
      %v1686 = vunpack.c.l.b16 %v663
      %v1687 = vunpack.c.h.b16 %v663
      %v1688 = vunpack.c.l.b16 %v664
      %v1689 = vunpack.c.h.b16 %v664
      %v1690 = vunpack.c.l.b16 %v665
      %v1691 = vunpack.c.h.b16 %v665
      %v1692 = vunpack.c.l.b16 %v666
      %v1693 = vunpack.c.h.b16 %v666
      %v1694 = vunpack.c.l.b16 %v667
      %v1695 = vunpack.c.h.b16 %v667
      %v1696 = vunpack.c.l.b16 %v668
      %v1697 = vunpack.c.h.b16 %v668
      %v1698 = vunpack.c.l.b16 %v669
      %v1699 = vunpack.c.h.b16 %v669
      %v1700 = vunpack.c.l.b16 %v670
      %v1701 = vunpack.c.h.b16 %v670
      %v1702 = vunpack.c.l.b16 %v671
      %v1703 = vunpack.c.h.b16 %v671
      %v1704 = vunpack.c.l.b16 %v672
      %v1705 = vunpack.c.h.b16 %v672
      %v1706 = vunpack.c.l.b16 %v673
      %v1707 = vunpack.c.h.b16 %v673
      %v1708 = vunpack.c.l.b16 %v674
      %v1709 = vunpack.c.h.b16 %v674
      %v1710 = vunpack.c.l.b16 %v675
      %v1711 = vunpack.c.h.b16 %v675
      %v1712 = vunpack.c.l.b16 %v676
      %v1713 = vunpack.c.h.b16 %v676
      %v1714 = vunpack.c.l.b16 %v677
      %v1715 = vunpack.c.h.b16 %v677
      %v1716 = vunpack.c.l.b16 %v678
      %v1717 = vunpack.c.h.b16 %v678
      %v1718 = vunpack.c.l.b16 %v679
      %v1719 = vunpack.c.h.b16 %v679
      %v1720 = vunpack.c.l.b16 %v680
      %v1721 = vunpack.c.h.b16 %v680
      %v1722 = vunpack.c.l.b16 %v681
      %v1723 = vunpack.c.h.b16 %v681
      %v1724 = vunpack.c.l.b16 %v682
      %v1725 = vunpack.c.h.b16 %v682
      %v1726 = vunpack.c.l.b16 %v683
      %v1727 = vunpack.c.h.b16 %v683
      %v1728 = vunpack.c.l.b16 %v684
      %v1729 = vunpack.c.h.b16 %v684
      %v1730 = vunpack.c.l.b16 %v685
      %v1731 = vunpack.c.h.b16 %v685
      %v1732 = vunpack.c.l.b16 %v686
      %v1733 = vunpack.c.h.b16 %v686
      %v1734 = vunpack.c.l.b16 %v687
      %v1735 = vunpack.c.h.b16 %v687
      %v1736 = vunpack.c.l.b16 %v688
      %v1737 = vunpack.c.h.b16 %v688
      %v1738 = vunpack.c.l.b16 %v689
      %v1739 = vunpack.c.h.b16 %v689
      %v1740 = vunpack.c.l.b16 %v690
      %v1741 = vunpack.c.h.b16 %v690
      %v1742 = vunpack.c.l.b16 %v691
      %v1743 = vunpack.c.h.b16 %v691
      %v1744 = vunpack.c.l.b16 %v692
      %v1745 = vunpack.c.h.b16 %v692
      %v1746 = vunpack.c.l.b16 %v693
      %v1747 = vunpack.c.h.b16 %v693
      %v1748 = vunpack.c.l.b16 %v694
      %v1749 = vunpack.c.h.b16 %v694
      %v1750 = vunpack.c.l.b16 %v695
      %v1751 = vunpack.c.h.b16 %v695
      %v1752 = vunpack.c.l.b16 %v696
      %v1753 = vunpack.c.h.b16 %v696
      %v1754 = vunpack.c.l.b16 %v697
      %v1755 = vunpack.c.h.b16 %v697
      %v1756 = vunpack.c.l.b16 %v698
      %v1757 = vunpack.c.h.b16 %v698
      %v1758 = vunpack.c.l.b16 %v699
      %v1759 = vunpack.c.h.b16 %v699
      %v1760 = vunpack.c.l.b16 %v700
      %v1761 = vunpack.c.h.b16 %v700
      %v1762 = vunpack.c.l.b16 %v701
      %v1763 = vunpack.c.h.b16 %v701
      %v1764 = vunpack.c.l.b16 %v702
      %v1765 = vunpack.c.h.b16 %v702
      %v1766 = vunpack.c.l.b16 %v703
      %v1767 = vunpack.c.h.b16 %v703
      %v1768 = vunpack.c.l.b16 %v704
      %v1769 = vunpack.c.h.b16 %v704
      %v1770 = vunpack.c.l.b16 %v705
      %v1771 = vunpack.c.h.b16 %v705
      %v1772 = vunpack.c.l.b16 %v706
      %v1773 = vunpack.c.h.b16 %v706
      %v1774 = vunpack.c.l.b16 %v707
      %v1775 = vunpack.c.h.b16 %v707
      %v1776 = vunpack.c.l.b16 %v708
      %v1777 = vunpack.c.h.b16 %v708
      %v1778 = vunpack.c.l.b16 %v709
      %v1779 = vunpack.c.h.b16 %v709
      %v1780 = vunpack.c.l.b16 %v710
      %v1781 = vunpack.c.h.b16 %v710
      %v1782 = vunpack.c.l.b16 %v711
      %v1783 = vunpack.c.h.b16 %v711
      %v1784 = vunpack.c.l.b16 %v712
      %v1785 = vunpack.c.h.b16 %v712
      %v1786 = vunpack.c.l.b16 %v713
      %v1787 = vunpack.c.h.b16 %v713
      %v1788 = vunpack.c.l.b16 %v714
      %v1789 = vunpack.c.h.b16 %v714
      %v1790 = vunpack.c.l.b16 %v715
      %v1791 = vunpack.c.h.b16 %v715
      %v1792 = vunpack.c.l.b16 %v716
      %v1793 = vunpack.c.h.b16 %v716
      %v1794 = vunpack.c.l.b16 %v717
      %v1795 = vunpack.c.h.b16 %v717
      %v1796 = vunpack.c.l.b16 %v718
      %v1797 = vunpack.c.h.b16 %v718
      %v1798 = vunpack.c.l.b16 %v719
      %v1799 = vunpack.c.h.b16 %v719
      %v1800 = vunpack.c.l.b16 %v720
      %v1801 = vunpack.c.h.b16 %v720
      %v1802 = vunpack.c.l.b16 %v721
      %v1803 = vunpack.c.h.b16 %v721
      %v1804 = vunpack.c.l.b16 %v722
      %v1805 = vunpack.c.h.b16 %v722
      %v1806 = vunpack.c.l.b16 %v723
      %v1807 = vunpack.c.h.b16 %v723
      %v1808 = vunpack.c.l.b16 %v724
      %v1809 = vunpack.c.h.b16 %v724
      %v1810 = vunpack.c.l.b16 %v725
      %v1811 = vunpack.c.h.b16 %v725
      %v1812 = vunpack.c.l.b16 %v726
      %v1813 = vunpack.c.h.b16 %v726
      %v1814 = vunpack.c.l.b16 %v727
      %v1815 = vunpack.c.h.b16 %v727
      %v1816 = vunpack.c.l.b16 %v728
      %v1817 = vunpack.c.h.b16 %v728
      %v1818 = vunpack.c.l.b16 %v729
      %v1819 = vunpack.c.h.b16 %v729
      %v1820 = vunpack.c.l.b16 %v730
      %v1821 = vunpack.c.h.b16 %v730
      %v1822 = vunpack.c.l.b16 %v731
      %v1823 = vunpack.c.h.b16 %v731
      %v1824 = vunpack.c.l.b16 %v732
      %v1825 = vunpack.c.h.b16 %v732
      %v1826 = vunpack.c.l.b16 %v733
      %v1827 = vunpack.c.h.b16 %v733
      %v1828 = vunpack.c.l.b16 %v734
      %v1829 = vunpack.c.h.b16 %v734
      %v1830 = vunpack.c.l.b16 %v735
      %v1831 = vunpack.c.h.b16 %v735
      %v1832 = vunpack.c.l.b16 %v736
      %v1833 = vunpack.c.h.b16 %v736
      %v1834 = vunpack.c.l.b16 %v737
      %v1835 = vunpack.c.h.b16 %v737
      %v1836 = vunpack.c.l.b16 %v738
      %v1837 = vunpack.c.h.b16 %v738
      %v1838 = vunpack.c.l.b16 %v739
      %v1839 = vunpack.c.h.b16 %v739
      %v1840 = vunpack.c.l.b16 %v740
      %v1841 = vunpack.c.h.b16 %v740
      %v1842 = vunpack.c.l.b16 %v741
      %v1843 = vunpack.c.h.b16 %v741
      %v1844 = vunpack.c.l.b16 %v742
      %v1845 = vunpack.c.h.b16 %v742
      %v1846 = vunpack.c.l.b16 %v743
      %v1847 = vunpack.c.h.b16 %v743
      %v1848 = vunpack.c.l.b16 %v744
      %v1849 = vunpack.c.h.b16 %v744
      %v1850 = vunpack.c.l.b16 %v745
      %v1851 = vunpack.c.h.b16 %v745
      %v1852 = vunpack.c.l.b16 %v746
      %v1853 = vunpack.c.h.b16 %v746
      %v1854 = vunpack.c.l.b16 %v747
      %v1855 = vunpack.c.h.b16 %v747
      %v1856 = vunpack.c.l.b16 %v748
      %v1857 = vunpack.c.h.b16 %v748
      %v1858 = vunpack.c.l.b16 %v749
      %v1859 = vunpack.c.h.b16 %v749
      %v1860 = vunpack.c.l.b16 %v750
      %v1861 = vunpack.c.h.b16 %v750
      %v1862 = vunpack.c.l.b16 %v751
      %v1863 = vunpack.c.h.b16 %v751
      %v1864 = vunpack.c.l.b16 %v752
      %v1865 = vunpack.c.h.b16 %v752
      %v1866 = vunpack.c.l.b16 %v753
      %v1867 = vunpack.c.h.b16 %v753
      %v1868 = vunpack.c.l.b16 %v754
      %v1869 = vunpack.c.h.b16 %v754
      %v1870 = vunpack.c.l.b16 %v755
      %v1871 = vunpack.c.h.b16 %v755
      %v1872 = vunpack.c.l.b16 %v756
      %v1873 = vunpack.c.h.b16 %v756
      %v1874 = vunpack.c.l.b16 %v757
      %v1875 = vunpack.c.h.b16 %v757
      %v1876 = vunpack.c.l.b16 %v758
      %v1877 = vunpack.c.h.b16 %v758
      %v1878 = vunpack.c.l.b16 %v759
      %v1879 = vunpack.c.h.b16 %v759
      %v1880 = vunpack.c.l.b16 %v760
      %v1881 = vunpack.c.h.b16 %v760
      %v1882 = vunpack.c.l.b16 %v761
      %v1883 = vunpack.c.h.b16 %v761
      %v1884 = vunpack.c.l.b16 %v762
      %v1885 = vunpack.c.h.b16 %v762
      %v1886 = vunpack.c.l.b16 %v763
      %v1887 = vunpack.c.h.b16 %v763
      %v1888 = vunpack.c.l.b16 %v764
      %v1889 = vunpack.c.h.b16 %v764
      %v1890 = vunpack.c.l.b16 %v765
      %v1891 = vunpack.c.h.b16 %v765
      %v1892 = vunpack.c.l.b16 %v766
      %v1893 = vunpack.c.h.b16 %v766
      %v1894 = vunpack.c.l.b16 %v767
      %v1895 = vunpack.c.h.b16 %v767
      %v1896 = vunpack.c.l.b16 %v768
      %v1897 = vunpack.c.h.b16 %v768
      %v1898 = vunpack.c.l.b16 %v769
      %v1899 = vunpack.c.h.b16 %v769
      %v1900 = vunpack.c.l.b16 %v770
      %v1901 = vunpack.c.h.b16 %v770
      %v1902 = vunpack.c.l.b16 %v771
      %v1903 = vunpack.c.h.b16 %v771
      %v1904 = vunpack.c.l.b16 %v772
      %v1905 = vunpack.c.h.b16 %v772
      %v1906 = vunpack.c.l.b16 %v773
      %v1907 = vunpack.c.h.b16 %v773
      %v1908 = vunpack.c.l.b16 %v774
      %v1909 = vunpack.c.h.b16 %v774
      %v1910 = vunpack.c.l.b16 %v775
      %v1911 = vunpack.c.h.b16 %v775
      %v1912 = vunpack.c.l.b16 %v776
      %v1913 = vunpack.c.h.b16 %v776
      %v1914 = vunpack.c.l.b16 %v777
      %v1915 = vunpack.c.h.b16 %v777
      %v1916 = vunpack.c.l.b16 %v778
      %v1917 = vunpack.c.h.b16 %v778
      %v1918 = vunpack.c.l.b16 %v779
      %v1919 = vunpack.c.h.b16 %v779
      %v1920 = vunpack.c.l.b16 %v780
      %v1921 = vunpack.c.h.b16 %v780
      %v1922 = vunpack.c.l.b16 %v781
      %v1923 = vunpack.c.h.b16 %v781
      %v1924 = vunpack.c.l.b16 %v782
      %v1925 = vunpack.c.h.b16 %v782
      %v1926 = vunpack.c.l.b16 %v783
      %v1927 = vunpack.c.h.b16 %v783
      %v1928 = vunpack.c.l.b16 %v784
      %v1929 = vunpack.c.h.b16 %v784
      %v1930 = vunpack.c.l.b16 %v785
      %v1931 = vunpack.c.h.b16 %v785
      %v1932 = vunpack.c.l.b16 %v786
      %v1933 = vunpack.c.h.b16 %v786
      %v1934 = vunpack.c.l.b16 %v787
      %v1935 = vunpack.c.h.b16 %v787
      %v1936 = vunpack.c.l.b16 %v788
      %v1937 = vunpack.c.h.b16 %v788
      %v1938 = vunpack.c.l.b16 %v789
      %v1939 = vunpack.c.h.b16 %v789
      %v1940 = vunpack.c.l.b16 %v790
      %v1941 = vunpack.c.h.b16 %v790
      %v1942 = vunpack.c.l.b16 %v791
      %v1943 = vunpack.c.h.b16 %v791
      %v1944 = vunpack.c.l.b16 %v792
      %v1945 = vunpack.c.h.b16 %v792
      %v1946 = vunpack.c.l.b16 %v793
      %v1947 = vunpack.c.h.b16 %v793
      %v1948 = vunpack.c.l.b16 %v794
      %v1949 = vunpack.c.h.b16 %v794
      %v1950 = vunpack.c.l.b16 %v795
      %v1951 = vunpack.c.h.b16 %v795
      %v1952 = vunpack.c.l.b16 %v796
      %v1953 = vunpack.c.h.b16 %v796
      %v1954 = vunpack.c.l.b16 %v797
      %v1955 = vunpack.c.h.b16 %v797
      %v1956 = vunpack.c.l.b16 %v798
      %v1957 = vunpack.c.h.b16 %v798
      %v1958 = vunpack.c.l.b16 %v799
      %v1959 = vunpack.c.h.b16 %v799
      %v1960 = vunpack.c.l.b16 %v800
      %v1961 = vunpack.c.h.b16 %v800
      %v1962 = vunpack.c.l.b16 %v801
      %v1963 = vunpack.c.h.b16 %v801
      %v1964 = vunpack.c.l.b16 %v802
      %v1965 = vunpack.c.h.b16 %v802
      %v1966 = vunpack.c.l.b16 %v803
      %v1967 = vunpack.c.h.b16 %v803
      %v1968 = vunpack.c.l.b16 %v804
      %v1969 = vunpack.c.h.b16 %v804
      %v1970 = vunpack.c.l.b16 %v805
      %v1971 = vunpack.c.h.b16 %v805
      %v1972 = vunpack.c.l.b16 %v806
      %v1973 = vunpack.c.h.b16 %v806
      %v1974 = vunpack.c.l.b16 %v807
      %v1975 = vunpack.c.h.b16 %v807
      %v1976 = vunpack.c.l.b16 %v808
      %v1977 = vunpack.c.h.b16 %v808
      %v1978 = vunpack.c.l.b16 %v809
      %v1979 = vunpack.c.h.b16 %v809
      %v1980 = vunpack.c.l.b16 %v810
      %v1981 = vunpack.c.h.b16 %v810
      %v1982 = vunpack.c.l.b16 %v811
      %v1983 = vunpack.c.h.b16 %v811
      %v1984 = vunpack.c.l.b16 %v812
      %v1985 = vunpack.c.h.b16 %v812
      %v1986 = vpack.c.b16 %v1222, %v1218
      %v1987 = vpack.c.b16 %v1223, %v1219
      %v1988 = vpack.c.b16 %v1224, %v1220
      %v1989 = vpack.c.b16 %v1225, %v1221
      %v1990 = vpack.c.b16 %v1230, %v1226
      %v1991 = vpack.c.b16 %v1231, %v1227
      %v1992 = vpack.c.b16 %v1232, %v1228
      %v1993 = vpack.c.b16 %v1233, %v1229
      %v1994 = vpack.c.b16 %v1238, %v1234
      %v1995 = vpack.c.b16 %v1239, %v1235
      %v1996 = vpack.c.b16 %v1240, %v1236
      %v1997 = vpack.c.b16 %v1241, %v1237
      %v1998 = vpack.c.b16 %v1246, %v1242
      %v1999 = vpack.c.b16 %v1247, %v1243
      %v2000 = vpack.c.b16 %v1248, %v1244
      %v2001 = vpack.c.b16 %v1249, %v1245
      %v2002 = vpack.c.b16 %v1254, %v1250
      %v2003 = vpack.c.b16 %v1255, %v1251
      %v2004 = vpack.c.b16 %v1256, %v1252
      %v2005 = vpack.c.b16 %v1257, %v1253
      %v2006 = vpack.c.b16 %v1262, %v1258
      %v2007 = vpack.c.b16 %v1263, %v1259
      %v2008 = vpack.c.b16 %v1264, %v1260
      %v2009 = vpack.c.b16 %v1265, %v1261
      %v2010 = vpack.c.b16 %v1270, %v1266
      %v2011 = vpack.c.b16 %v1271, %v1267
      %v2012 = vpack.c.b16 %v1272, %v1268
      %v2013 = vpack.c.b16 %v1273, %v1269
      %v2014 = vpack.c.b16 %v1278, %v1274
      %v2015 = vpack.c.b16 %v1279, %v1275
      %v2016 = vpack.c.b16 %v1280, %v1276
      %v2017 = vpack.c.b16 %v1281, %v1277
      %v2018 = vpack.c.b16 %v1286, %v1282
      %v2019 = vpack.c.b16 %v1287, %v1283
      %v2020 = vpack.c.b16 %v1288, %v1284
      %v2021 = vpack.c.b16 %v1289, %v1285
      %v2022 = vpack.c.b16 %v1294, %v1290
      %v2023 = vpack.c.b16 %v1295, %v1291
      %v2024 = vpack.c.b16 %v1296, %v1292
      %v2025 = vpack.c.b16 %v1297, %v1293
      %v2026 = vpack.c.b16 %v1302, %v1298
      %v2027 = vpack.c.b16 %v1303, %v1299
      %v2028 = vpack.c.b16 %v1304, %v1300
      %v2029 = vpack.c.b16 %v1305, %v1301
      %v2030 = vpack.c.b16 %v1310, %v1306
      %v2031 = vpack.c.b16 %v1311, %v1307
      %v2032 = vpack.c.b16 %v1312, %v1308
      %v2033 = vpack.c.b16 %v1313, %v1309
      %v2034 = vpack.c.b16 %v1318, %v1314
      %v2035 = vpack.c.b16 %v1319, %v1315
      %v2036 = vpack.c.b16 %v1320, %v1316
      %v2037 = vpack.c.b16 %v1321, %v1317
      %v2038 = vpack.c.b16 %v1326, %v1322
      %v2039 = vpack.c.b16 %v1327, %v1323
      %v2040 = vpack.c.b16 %v1328, %v1324
      %v2041 = vpack.c.b16 %v1329, %v1325
      %v2042 = vpack.c.b16 %v1334, %v1330
      %v2043 = vpack.c.b16 %v1335, %v1331
      %v2044 = vpack.c.b16 %v1336, %v1332
      %v2045 = vpack.c.b16 %v1337, %v1333
      %v2046 = vpack.c.b16 %v1342, %v1338
      %v2047 = vpack.c.b16 %v1343, %v1339
      %v2048 = vpack.c.b16 %v1344, %v1340
      %v2049 = vpack.c.b16 %v1345, %v1341
      %v2050 = vpack.c.b16 %v1350, %v1346
      %v2051 = vpack.c.b16 %v1351, %v1347
      %v2052 = vpack.c.b16 %v1352, %v1348
      %v2053 = vpack.c.b16 %v1353, %v1349
      %v2054 = vpack.c.b16 %v1358, %v1354
      %v2055 = vpack.c.b16 %v1359, %v1355
      %v2056 = vpack.c.b16 %v1360, %v1356
      %v2057 = vpack.c.b16 %v1361, %v1357
      %v2058 = vpack.c.b16 %v1366, %v1362
      %v2059 = vpack.c.b16 %v1367, %v1363
      %v2060 = vpack.c.b16 %v1368, %v1364
      %v2061 = vpack.c.b16 %v1369, %v1365
      %v2062 = vpack.c.b16 %v1374, %v1370
      %v2063 = vpack.c.b16 %v1375, %v1371
      %v2064 = vpack.c.b16 %v1376, %v1372
      %v2065 = vpack.c.b16 %v1377, %v1373
      %v2066 = vpack.c.b16 %v1382, %v1378
      %v2067 = vpack.c.b16 %v1383, %v1379
      %v2068 = vpack.c.b16 %v1384, %v1380
      %v2069 = vpack.c.b16 %v1385, %v1381
      %v2070 = vpack.c.b16 %v1390, %v1386
      %v2071 = vpack.c.b16 %v1391, %v1387
      %v2072 = vpack.c.b16 %v1392, %v1388
      %v2073 = vpack.c.b16 %v1393, %v1389
      %v2074 = vpack.c.b16 %v1398, %v1394
      %v2075 = vpack.c.b16 %v1399, %v1395
      %v2076 = vpack.c.b16 %v1400, %v1396
      %v2077 = vpack.c.b16 %v1401, %v1397
      %v2078 = vpack.c.b16 %v1406, %v1402
      %v2079 = vpack.c.b16 %v1407, %v1403
      %v2080 = vpack.c.b16 %v1408, %v1404
      %v2081 = vpack.c.b16 %v1409, %v1405
      %v2082 = vpack.c.b16 %v1414, %v1410
      %v2083 = vpack.c.b16 %v1415, %v1411
      %v2084 = vpack.c.b16 %v1416, %v1412
      %v2085 = vpack.c.b16 %v1417, %v1413
      %v2086 = vpack.c.b16 %v1422, %v1418
      %v2087 = vpack.c.b16 %v1423, %v1419
      %v2088 = vpack.c.b16 %v1424, %v1420
      %v2089 = vpack.c.b16 %v1425, %v1421
      %v2090 = vpack.c.b16 %v1430, %v1426
      %v2091 = vpack.c.b16 %v1431, %v1427
      %v2092 = vpack.c.b16 %v1432, %v1428
      %v2093 = vpack.c.b16 %v1433, %v1429
      %v2094 = vpack.c.b16 %v1438, %v1434
      %v2095 = vpack.c.b16 %v1439, %v1435
      %v2096 = vpack.c.b16 %v1440, %v1436
      %v2097 = vpack.c.b16 %v1441, %v1437
      %v2098 = vpack.c.b16 %v1446, %v1442
      %v2099 = vpack.c.b16 %v1447, %v1443
      %v2100 = vpack.c.b16 %v1448, %v1444
      %v2101 = vpack.c.b16 %v1449, %v1445
      %v2102 = vpack.c.b16 %v1454, %v1450
      %v2103 = vpack.c.b16 %v1455, %v1451
      %v2104 = vpack.c.b16 %v1456, %v1452
      %v2105 = vpack.c.b16 %v1457, %v1453
      %v2106 = vpack.c.b16 %v1462, %v1458
      %v2107 = vpack.c.b16 %v1463, %v1459
      %v2108 = vpack.c.b16 %v1464, %v1460
      %v2109 = vpack.c.b16 %v1465, %v1461
      %v2110 = vpack.c.b16 %v1470, %v1466
      %v2111 = vpack.c.b16 %v1471, %v1467
      %v2112 = vpack.c.b16 %v1472, %v1468
      %v2113 = vpack.c.b16 %v1473, %v1469
      %v2114 = vpack.c.b16 %v1478, %v1474
      %v2115 = vpack.c.b16 %v1479, %v1475
      %v2116 = vpack.c.b16 %v1480, %v1476
      %v2117 = vpack.c.b16 %v1481, %v1477
      %v2118 = vpack.c.b16 %v1486, %v1482
      %v2119 = vpack.c.b16 %v1487, %v1483
      %v2120 = vpack.c.b16 %v1488, %v1484
      %v2121 = vpack.c.b16 %v1489, %v1485
      %v2122 = vpack.c.b16 %v1494, %v1490
      %v2123 = vpack.c.b16 %v1495, %v1491
      %v2124 = vpack.c.b16 %v1496, %v1492
      %v2125 = vpack.c.b16 %v1497, %v1493
      %v2126 = vpack.c.b16 %v1502, %v1498
      %v2127 = vpack.c.b16 %v1503, %v1499
      %v2128 = vpack.c.b16 %v1504, %v1500
      %v2129 = vpack.c.b16 %v1505, %v1501
      %v2130 = vpack.c.b16 %v1510, %v1506
      %v2131 = vpack.c.b16 %v1511, %v1507
      %v2132 = vpack.c.b16 %v1512, %v1508
      %v2133 = vpack.c.b16 %v1513, %v1509
      %v2134 = vpack.c.b16 %v1518, %v1514
      %v2135 = vpack.c.b16 %v1519, %v1515
      %v2136 = vpack.c.b16 %v1520, %v1516
      %v2137 = vpack.c.b16 %v1521, %v1517
      %v2138 = vpack.c.b16 %v1526, %v1522
      %v2139 = vpack.c.b16 %v1527, %v1523
      %v2140 = vpack.c.b16 %v1528, %v1524
      %v2141 = vpack.c.b16 %v1529, %v1525
      %v2142 = vpack.c.b16 %v1534, %v1530
      %v2143 = vpack.c.b16 %v1535, %v1531
      %v2144 = vpack.c.b16 %v1536, %v1532
      %v2145 = vpack.c.b16 %v1537, %v1533
      %v2146 = vpack.c.b16 %v1542, %v1538
      %v2147 = vpack.c.b16 %v1543, %v1539
      %v2148 = vpack.c.b16 %v1544, %v1540
      %v2149 = vpack.c.b16 %v1545, %v1541
      %v2150 = vpack.c.b16 %v1550, %v1546
      %v2151 = vpack.c.b16 %v1551, %v1547
      %v2152 = vpack.c.b16 %v1552, %v1548
      %v2153 = vpack.c.b16 %v1553, %v1549
      %v2154 = vpack.c.b16 %v1558, %v1554
      %v2155 = vpack.c.b16 %v1559, %v1555
      %v2156 = vpack.c.b16 %v1560, %v1556
      %v2157 = vpack.c.b16 %v1561, %v1557
      %v2158 = vpack.c.b16 %v1566, %v1562
      %v2159 = vpack.c.b16 %v1567, %v1563
      %v2160 = vpack.c.b16 %v1568, %v1564
      %v2161 = vpack.c.b16 %v1569, %v1565
      %v2162 = vpack.c.b16 %v1574, %v1570
      %v2163 = vpack.c.b16 %v1575, %v1571
      %v2164 = vpack.c.b16 %v1576, %v1572
      %v2165 = vpack.c.b16 %v1577, %v1573
      %v2166 = vpack.c.b16 %v1582, %v1578
      %v2167 = vpack.c.b16 %v1583, %v1579
      %v2168 = vpack.c.b16 %v1584, %v1580
      %v2169 = vpack.c.b16 %v1585, %v1581
      %v2170 = vpack.c.b16 %v1590, %v1586
      %v2171 = vpack.c.b16 %v1591, %v1587
      %v2172 = vpack.c.b16 %v1592, %v1588
      %v2173 = vpack.c.b16 %v1593, %v1589
      %v2174 = vpack.c.b16 %v1598, %v1594
      %v2175 = vpack.c.b16 %v1599, %v1595
      %v2176 = vpack.c.b16 %v1600, %v1596
      %v2177 = vpack.c.b16 %v1601, %v1597
      %v2178 = vpack.c.b16 %v1606, %v1602
      %v2179 = vpack.c.b16 %v1607, %v1603
      %v2180 = vpack.c.b16 %v1608, %v1604
      %v2181 = vpack.c.b16 %v1609, %v1605
      %v2182 = vpack.c.b16 %v1614, %v1610
      %v2183 = vpack.c.b16 %v1615, %v1611
      %v2184 = vpack.c.b16 %v1616, %v1612
      %v2185 = vpack.c.b16 %v1617, %v1613
      %v2186 = vpack.c.b16 %v1622, %v1618
      %v2187 = vpack.c.b16 %v1623, %v1619
      %v2188 = vpack.c.b16 %v1624, %v1620
      %v2189 = vpack.c.b16 %v1625, %v1621
      %v2190 = vpack.c.b16 %v1630, %v1626
      %v2191 = vpack.c.b16 %v1631, %v1627
      %v2192 = vpack.c.b16 %v1632, %v1628
      %v2193 = vpack.c.b16 %v1633, %v1629
      %v2194 = vpack.c.b16 %v1638, %v1634
      %v2195 = vpack.c.b16 %v1639, %v1635
      %v2196 = vpack.c.b16 %v1640, %v1636
      %v2197 = vpack.c.b16 %v1641, %v1637
      %v2198 = vpack.c.b16 %v1646, %v1642
      %v2199 = vpack.c.b16 %v1647, %v1643
      %v2200 = vpack.c.b16 %v1648, %v1644
      %v2201 = vpack.c.b16 %v1649, %v1645
      %v2202 = vpack.c.b16 %v1654, %v1650
      %v2203 = vpack.c.b16 %v1655, %v1651
      %v2204 = vpack.c.b16 %v1656, %v1652
      %v2205 = vpack.c.b16 %v1657, %v1653
      %v2206 = vpack.c.b16 %v1662, %v1658
      %v2207 = vpack.c.b16 %v1663, %v1659
      %v2208 = vpack.c.b16 %v1664, %v1660
      %v2209 = vpack.c.b16 %v1665, %v1661
      %v2210 = vpack.c.b16 %v1670, %v1666
      %v2211 = vpack.c.b16 %v1671, %v1667
      %v2212 = vpack.c.b16 %v1672, %v1668
      %v2213 = vpack.c.b16 %v1673, %v1669
      %v2214 = vpack.c.b16 %v1678, %v1674
      %v2215 = vpack.c.b16 %v1679, %v1675
      %v2216 = vpack.c.b16 %v1680, %v1676
      %v2217 = vpack.c.b16 %v1681, %v1677
      %v2218 = vpack.c.b16 %v1686, %v1682
      %v2219 = vpack.c.b16 %v1687, %v1683
      %v2220 = vpack.c.b16 %v1688, %v1684
      %v2221 = vpack.c.b16 %v1689, %v1685
      %v2222 = vpack.c.b16 %v1694, %v1690
      %v2223 = vpack.c.b16 %v1695, %v1691
      %v2224 = vpack.c.b16 %v1696, %v1692
      %v2225 = vpack.c.b16 %v1697, %v1693
      %v2226 = vpack.c.b16 %v1702, %v1698
      %v2227 = vpack.c.b16 %v1703, %v1699
      %v2228 = vpack.c.b16 %v1704, %v1700
      %v2229 = vpack.c.b16 %v1705, %v1701
      %v2230 = vpack.c.b16 %v1710, %v1706
      %v2231 = vpack.c.b16 %v1711, %v1707
      %v2232 = vpack.c.b16 %v1712, %v1708
      %v2233 = vpack.c.b16 %v1713, %v1709
      %v2234 = vpack.c.b16 %v1718, %v1714
      %v2235 = vpack.c.b16 %v1719, %v1715
      %v2236 = vpack.c.b16 %v1720, %v1716
      %v2237 = vpack.c.b16 %v1721, %v1717
      %v2238 = vpack.c.b16 %v1726, %v1722
      %v2239 = vpack.c.b16 %v1727, %v1723
      %v2240 = vpack.c.b16 %v1728, %v1724
      %v2241 = vpack.c.b16 %v1729, %v1725
      %v2242 = vpack.c.b16 %v1734, %v1730
      %v2243 = vpack.c.b16 %v1735, %v1731
      %v2244 = vpack.c.b16 %v1736, %v1732
      %v2245 = vpack.c.b16 %v1737, %v1733
      %v2246 = vpack.c.b16 %v1742, %v1738
      %v2247 = vpack.c.b16 %v1743, %v1739
      %v2248 = vpack.c.b16 %v1744, %v1740
      %v2249 = vpack.c.b16 %v1745, %v1741
      %v2250 = vpack.c.b16 %v1750, %v1746
      %v2251 = vpack.c.b16 %v1751, %v1747
      %v2252 = vpack.c.b16 %v1752, %v1748
      %v2253 = vpack.c.b16 %v1753, %v1749
      %v2254 = vpack.c.b16 %v1758, %v1754
      %v2255 = vpack.c.b16 %v1759, %v1755
      %v2256 = vpack.c.b16 %v1760, %v1756
      %v2257 = vpack.c.b16 %v1761, %v1757
      %v2258 = vpack.c.b16 %v1766, %v1762
      %v2259 = vpack.c.b16 %v1767, %v1763
      %v2260 = vpack.c.b16 %v1768, %v1764
      %v2261 = vpack.c.b16 %v1769, %v1765
      %v2262 = vpack.c.b16 %v1774, %v1770
      %v2263 = vpack.c.b16 %v1775, %v1771
      %v2264 = vpack.c.b16 %v1776, %v1772
      %v2265 = vpack.c.b16 %v1777, %v1773
      %v2266 = vpack.c.b16 %v1782, %v1778
      %v2267 = vpack.c.b16 %v1783, %v1779
      %v2268 = vpack.c.b16 %v1784, %v1780
      %v2269 = vpack.c.b16 %v1785, %v1781
      %v2270 = vpack.c.b16 %v1790, %v1786
      %v2271 = vpack.c.b16 %v1791, %v1787
      %v2272 = vpack.c.b16 %v1792, %v1788
      %v2273 = vpack.c.b16 %v1793, %v1789
      %v2274 = vpack.c.b16 %v1798, %v1794
      %v2275 = vpack.c.b16 %v1799, %v1795
      %v2276 = vpack.c.b16 %v1800, %v1796
      %v2277 = vpack.c.b16 %v1801, %v1797
      %v2278 = vpack.c.b16 %v1806, %v1802
      %v2279 = vpack.c.b16 %v1807, %v1803
      %v2280 = vpack.c.b16 %v1808, %v1804
      %v2281 = vpack.c.b16 %v1809, %v1805
      %v2282 = vpack.c.b16 %v1814, %v1810
      %v2283 = vpack.c.b16 %v1815, %v1811
      %v2284 = vpack.c.b16 %v1816, %v1812
      %v2285 = vpack.c.b16 %v1817, %v1813
      %v2286 = vpack.c.b16 %v1822, %v1818
      %v2287 = vpack.c.b16 %v1823, %v1819
      %v2288 = vpack.c.b16 %v1824, %v1820
      %v2289 = vpack.c.b16 %v1825, %v1821
      %v2290 = vpack.c.b16 %v1830, %v1826
      %v2291 = vpack.c.b16 %v1831, %v1827
      %v2292 = vpack.c.b16 %v1832, %v1828
      %v2293 = vpack.c.b16 %v1833, %v1829
      %v2294 = vpack.c.b16 %v1838, %v1834
      %v2295 = vpack.c.b16 %v1839, %v1835
      %v2296 = vpack.c.b16 %v1840, %v1836
      %v2297 = vpack.c.b16 %v1841, %v1837
      %v2298 = vpack.c.b16 %v1846, %v1842
      %v2299 = vpack.c.b16 %v1847, %v1843
      %v2300 = vpack.c.b16 %v1848, %v1844
      %v2301 = vpack.c.b16 %v1849, %v1845
      %v2302 = vpack.c.b16 %v1854, %v1850
      %v2303 = vpack.c.b16 %v1855, %v1851
      %v2304 = vpack.c.b16 %v1856, %v1852
      %v2305 = vpack.c.b16 %v1857, %v1853
      %v2306 = vpack.c.b16 %v1862, %v1858
      %v2307 = vpack.c.b16 %v1863, %v1859
      %v2308 = vpack.c.b16 %v1864, %v1860
      %v2309 = vpack.c.b16 %v1865, %v1861
      %v2310 = vpack.c.b16 %v1870, %v1866
      %v2311 = vpack.c.b16 %v1871, %v1867
      %v2312 = vpack.c.b16 %v1872, %v1868
      %v2313 = vpack.c.b16 %v1873, %v1869
      %v2314 = vpack.c.b16 %v1878, %v1874
      %v2315 = vpack.c.b16 %v1879, %v1875
      %v2316 = vpack.c.b16 %v1880, %v1876
      %v2317 = vpack.c.b16 %v1881, %v1877
      %v2318 = vpack.c.b16 %v1886, %v1882
      %v2319 = vpack.c.b16 %v1887, %v1883
      %v2320 = vpack.c.b16 %v1888, %v1884
      %v2321 = vpack.c.b16 %v1889, %v1885
      %v2322 = vpack.c.b16 %v1894, %v1890
      %v2323 = vpack.c.b16 %v1895, %v1891
      %v2324 = vpack.c.b16 %v1896, %v1892
      %v2325 = vpack.c.b16 %v1897, %v1893
      %v2326 = vpack.c.b16 %v1902, %v1898
      %v2327 = vpack.c.b16 %v1903, %v1899
      %v2328 = vpack.c.b16 %v1904, %v1900
      %v2329 = vpack.c.b16 %v1905, %v1901
      %v2330 = vpack.c.b16 %v1910, %v1906
      %v2331 = vpack.c.b16 %v1911, %v1907
      %v2332 = vpack.c.b16 %v1912, %v1908
      %v2333 = vpack.c.b16 %v1913, %v1909
      %v2334 = vpack.c.b16 %v1918, %v1914
      %v2335 = vpack.c.b16 %v1919, %v1915
      %v2336 = vpack.c.b16 %v1920, %v1916
      %v2337 = vpack.c.b16 %v1921, %v1917
      %v2338 = vpack.c.b16 %v1926, %v1922
      %v2339 = vpack.c.b16 %v1927, %v1923
      %v2340 = vpack.c.b16 %v1928, %v1924
      %v2341 = vpack.c.b16 %v1929, %v1925
      %v2342 = vpack.c.b16 %v1934, %v1930
      %v2343 = vpack.c.b16 %v1935, %v1931
      %v2344 = vpack.c.b16 %v1936, %v1932
      %v2345 = vpack.c.b16 %v1937, %v1933
      %v2346 = vpack.c.b16 %v1942, %v1938
      %v2347 = vpack.c.b16 %v1943, %v1939
      %v2348 = vpack.c.b16 %v1944, %v1940
      %v2349 = vpack.c.b16 %v1945, %v1941
      %v2350 = vpack.c.b16 %v1950, %v1946
      %v2351 = vpack.c.b16 %v1951, %v1947
      %v2352 = vpack.c.b16 %v1952, %v1948
      %v2353 = vpack.c.b16 %v1953, %v1949
      %v2354 = vpack.c.b16 %v1958, %v1954
      %v2355 = vpack.c.b16 %v1959, %v1955
      %v2356 = vpack.c.b16 %v1960, %v1956
      %v2357 = vpack.c.b16 %v1961, %v1957
      %v2358 = vpack.c.b16 %v1966, %v1962
      %v2359 = vpack.c.b16 %v1967, %v1963
      %v2360 = vpack.c.b16 %v1968, %v1964
      %v2361 = vpack.c.b16 %v1969, %v1965
      %v2362 = vpack.c.b16 %v1974, %v1970
      %v2363 = vpack.c.b16 %v1975, %v1971
      %v2364 = vpack.c.b16 %v1976, %v1972
      %v2365 = vpack.c.b16 %v1977, %v1973
      %v2366 = vpack.c.b16 %v1982, %v1978
      %v2367 = vpack.c.b16 %v1983, %v1979
      %v2368 = vpack.c.b16 %v1984, %v1980
      %v2369 = vpack.c.b16 %v1985, %v1981
      %2754 = vmatprep.subr.bf16.mxu0 %v1987
      %2755 = vmatpush1.bf16.msra.mxu0 %v1986
      %2756 = vmatprep.subr.bf16.mxu0 %v1991
      %2757 = vmatpush1.bf16.msra.mxu0 %v1990
      %2758 = vmatprep.subr.bf16.mxu0 %v1995
      %2759 = vmatpush1.bf16.msra.mxu0 %v1994
      %2760 = vmatprep.subr.bf16.mxu0 %v1999
      %2761 = vmatpush1.bf16.msra.mxu0 %v1998
      %2762 = vmatprep.subr.bf16.mxu0 %v2003
      %2763 = vmatpush1.bf16.msra.mxu0 %v2002
      %2764 = vmatprep.subr.bf16.mxu0 %v2007
      %2765 = vmatpush1.bf16.msra.mxu0 %v2006
      %2766 = vmatprep.subr.bf16.mxu0 %v2011
      %2767 = vmatpush1.bf16.msra.mxu0 %v2010
      %2768 = vmatprep.subr.bf16.mxu0 %v2015
      %2769 = vmatpush1.bf16.msra.mxu0 %v2014
      %2770 = vmatprep.subr.bf16.mxu0 %v2019
      %2771 = vmatpush1.bf16.msra.mxu0 %v2018
      %2772 = vmatprep.subr.bf16.mxu0 %v2023
      %2773 = vmatpush1.bf16.msra.mxu0 %v2022
      %2774 = vmatprep.subr.bf16.mxu0 %v2027
      %2775 = vmatpush1.bf16.msra.mxu0 %v2026
      %2776 = vmatprep.subr.bf16.mxu0 %v2031
      %2777 = vmatpush1.bf16.msra.mxu0 %v2030
      %2778 = vmatprep.subr.bf16.mxu0 %v2035
      %2779 = vmatpush1.bf16.msra.mxu0 %v2034
      %2780 = vmatprep.subr.bf16.mxu0 %v2039
      %2781 = vmatpush1.bf16.msra.mxu0 %v2038
      %2782 = vmatprep.subr.bf16.mxu0 %v2043
      %2783 = vmatpush1.bf16.msra.mxu0 %v2042
      %2784 = vmatprep.subr.bf16.mxu0 %v2047
      %2785 = vmatpush1.bf16.msra.mxu0 %v2046
      %2786 = vmatprep.mubr.bf16.mxu0 %v418
      %2787 = vmatmul.mubr.bf16.gmra.mrb[0].mxu0 %v417
      %v2788 = vpop.f32.mrb[0].mxu0
      %v2789 = vadd.f32 %v817, %v2788
      %v2790 = vpop.f32.mrb[0].mxu0
      %v2791 = vadd.f32 %v821, %v2790
      %v2792 = vpop.f32.mrb[0].mxu0
      %v2793 = vadd.f32 %v817, %v2792
      %v2794 = vpop.f32.mrb[0].mxu0
      %v2795 = vadd.f32 %v821, %v2794
      %2796 = vdwg.mxu0
      %2797 = vmatprep.subr.bf16.mxu0 %v2051
      %2798 = vmatpush1.bf16.msra.mxu0 %v2050
      %2799 = vmatprep.subr.bf16.mxu0 %v2055
      %2800 = vmatpush1.bf16.msra.mxu0 %v2054
      %2801 = vmatprep.subr.bf16.mxu0 %v2059
      %2802 = vmatpush1.bf16.msra.mxu0 %v2058
      %2803 = vmatprep.subr.bf16.mxu0 %v2063
      %2804 = vmatpush1.bf16.msra.mxu0 %v2062
      %2805 = vmatprep.subr.bf16.mxu0 %v2067
      %2806 = vmatpush1.bf16.msra.mxu0 %v2066
      %2807 = vmatprep.subr.bf16.mxu0 %v2071
      %2808 = vmatpush1.bf16.msra.mxu0 %v2070
      %2809 = vmatprep.subr.bf16.mxu0 %v2075
      %2810 = vmatpush1.bf16.msra.mxu0 %v2074
      %2811 = vmatprep.subr.bf16.mxu0 %v2079
      %2812 = vmatpush1.bf16.msra.mxu0 %v2078
      %2813 = vmatprep.subr.bf16.mxu0 %v2083
      %2814 = vmatpush1.bf16.msra.mxu0 %v2082
      %2815 = vmatprep.subr.bf16.mxu0 %v2087
      %2816 = vmatpush1.bf16.msra.mxu0 %v2086
      %2817 = vmatprep.subr.bf16.mxu0 %v2091
      %2818 = vmatpush1.bf16.msra.mxu0 %v2090
      %2819 = vmatprep.subr.bf16.mxu0 %v2095
      %2820 = vmatpush1.bf16.msra.mxu0 %v2094
      %2821 = vmatprep.subr.bf16.mxu0 %v2099
      %2822 = vmatpush1.bf16.msra.mxu0 %v2098
      %2823 = vmatprep.subr.bf16.mxu0 %v2103
      %2824 = vmatpush1.bf16.msra.mxu0 %v2102
      %2825 = vmatprep.subr.bf16.mxu0 %v2107
      %2826 = vmatpush1.bf16.msra.mxu0 %v2106
      %2827 = vmatprep.subr.bf16.mxu0 %v2111
      %2828 = vmatpush1.bf16.msra.mxu0 %v2110
      %2829 = vmatprep.mubr.bf16.mxu0 %v420
      %2830 = vmatmul.mubr.bf16.gmra.mrb[0].mxu0 %v419
      %v2831 = vpop.f32.mrb[0].mxu0
      %v2832 = vadd.f32 %v2789, %v2831
      %v2833 = vpop.f32.mrb[0].mxu0
      %v2834 = vadd.f32 %v2791, %v2833
      %v2835 = vpop.f32.mrb[0].mxu0
      %v2836 = vadd.f32 %v2793, %v2835
      %v2837 = vpop.f32.mrb[0].mxu0
      %v2838 = vadd.f32 %v2795, %v2837
      %2839 = vdwg.mxu0
      %2840 = vmatprep.subr.bf16.mxu0 %v2115
      %2841 = vmatpush1.bf16.msra.mxu0 %v2114
      %2842 = vmatprep.subr.bf16.mxu0 %v2119
      %2843 = vmatpush1.bf16.msra.mxu0 %v2118
      %2844 = vmatprep.subr.bf16.mxu0 %v2123
      %2845 = vmatpush1.bf16.msra.mxu0 %v2122
      %2846 = vmatprep.subr.bf16.mxu0 %v2127
      %2847 = vmatpush1.bf16.msra.mxu0 %v2126
      %2848 = vmatprep.subr.bf16.mxu0 %v2131
      %2849 = vmatpush1.bf16.msra.mxu0 %v2130
      %2850 = vmatprep.subr.bf16.mxu0 %v2135
      %2851 = vmatpush1.bf16.msra.mxu0 %v2134
      %2852 = vmatprep.subr.bf16.mxu0 %v2139
      %2853 = vmatpush1.bf16.msra.mxu0 %v2138
      %2854 = vmatprep.subr.bf16.mxu0 %v2143
      %2855 = vmatpush1.bf16.msra.mxu0 %v2142
      %2856 = vmatprep.subr.bf16.mxu0 %v2147
      %2857 = vmatpush1.bf16.msra.mxu0 %v2146
      %2858 = vmatprep.subr.bf16.mxu0 %v2151
      %2859 = vmatpush1.bf16.msra.mxu0 %v2150
      %2860 = vmatprep.subr.bf16.mxu0 %v2155
      %2861 = vmatpush1.bf16.msra.mxu0 %v2154
      %2862 = vmatprep.subr.bf16.mxu0 %v2159
      %2863 = vmatpush1.bf16.msra.mxu0 %v2158
      %2864 = vmatprep.subr.bf16.mxu0 %v2163
      %2865 = vmatpush1.bf16.msra.mxu0 %v2162
      %2866 = vmatprep.subr.bf16.mxu0 %v2167
      %2867 = vmatpush1.bf16.msra.mxu0 %v2166
      %2868 = vmatprep.subr.bf16.mxu0 %v2171
      %2869 = vmatpush1.bf16.msra.mxu0 %v2170
      %2870 = vmatprep.subr.bf16.mxu0 %v2175
      %2871 = vmatpush1.bf16.msra.mxu0 %v2174
      %2872 = vmatprep.mubr.bf16.mxu0 %v422
      %2873 = vmatmul.mubr.bf16.gmra.mrb[0].mxu0 %v421
      %v2874 = vpop.f32.mrb[0].mxu0
      %v2875 = vadd.f32 %v2832, %v2874
      %v2876 = vpop.f32.mrb[0].mxu0
      %v2877 = vadd.f32 %v2834, %v2876
      %v2878 = vpop.f32.mrb[0].mxu0
      %v2879 = vadd.f32 %v2836, %v2878
      %v2880 = vpop.f32.mrb[0].mxu0
      %v2881 = vadd.f32 %v2838, %v2880
      %2882 = vdwg.mxu0
      %2883 = vmatprep.subr.bf16.mxu0 %v2179
      %2884 = vmatpush1.bf16.msra.mxu0 %v2178
      %2885 = vmatprep.subr.bf16.mxu0 %v2183
      %2886 = vmatpush1.bf16.msra.mxu0 %v2182
      %2887 = vmatprep.subr.bf16.mxu0 %v2187
      %2888 = vmatpush1.bf16.msra.mxu0 %v2186
      %2889 = vmatprep.subr.bf16.mxu0 %v2191
      %2890 = vmatpush1.bf16.msra.mxu0 %v2190
      %2891 = vmatprep.subr.bf16.mxu0 %v2195
      %2892 = vmatpush1.bf16.msra.mxu0 %v2194
      %2893 = vmatprep.subr.bf16.mxu0 %v2199
      %2894 = vmatpush1.bf16.msra.mxu0 %v2198
      %2895 = vmatprep.subr.bf16.mxu0 %v2203
      %2896 = vmatpush1.bf16.msra.mxu0 %v2202
      %2897 = vmatprep.subr.bf16.mxu0 %v2207
      %2898 = vmatpush1.bf16.msra.mxu0 %v2206
      %2899 = vmatprep.subr.bf16.mxu0 %v2211
      %2900 = vmatpush1.bf16.msra.mxu0 %v2210
      %2901 = vmatprep.subr.bf16.mxu0 %v2215
      %2902 = vmatpush1.bf16.msra.mxu0 %v2214
      %2903 = vmatprep.subr.bf16.mxu0 %v2219
      %2904 = vmatpush1.bf16.msra.mxu0 %v2218
      %2905 = vmatprep.subr.bf16.mxu0 %v2223
      %2906 = vmatpush1.bf16.msra.mxu0 %v2222
      %2907 = vmatprep.subr.bf16.mxu0 %v2227
      %2908 = vmatpush1.bf16.msra.mxu0 %v2226
      %2909 = vmatprep.subr.bf16.mxu0 %v2231
      %2910 = vmatpush1.bf16.msra.mxu0 %v2230
      %2911 = vmatprep.subr.bf16.mxu0 %v2235
      %2912 = vmatpush1.bf16.msra.mxu0 %v2234
      %2913 = vmatprep.subr.bf16.mxu0 %v2239
      %2914 = vmatpush1.bf16.msra.mxu0 %v2238
      %2915 = vmatprep.mubr.bf16.mxu0 %v424
      %2916 = vmatmul.mubr.bf16.gmra.mrb[0].mxu0 %v423
      %v2917 = vpop.f32.mrb[0].mxu0
      %v2918 = vadd.f32 %v2875, %v2917
      %v2919 = vpop.f32.mrb[0].mxu0
      %v2920 = vadd.f32 %v2877, %v2919
      %v2921 = vpop.f32.mrb[0].mxu0
      %v2922 = vadd.f32 %v2879, %v2921
      %v2923 = vpop.f32.mrb[0].mxu0
      %v2924 = vadd.f32 %v2881, %v2923
      %2925 = vdwg.mxu0
      %2926 = vmatprep.subr.bf16.mxu0 %v2243
      %2927 = vmatpush1.bf16.msra.mxu0 %v2242
      %2928 = vmatprep.subr.bf16.mxu0 %v2247
      %2929 = vmatpush1.bf16.msra.mxu0 %v2246
      %2930 = vmatprep.subr.bf16.mxu0 %v2251
      %2931 = vmatpush1.bf16.msra.mxu0 %v2250
      %2932 = vmatprep.subr.bf16.mxu0 %v2255
      %2933 = vmatpush1.bf16.msra.mxu0 %v2254
      %2934 = vmatprep.subr.bf16.mxu0 %v2259
      %2935 = vmatpush1.bf16.msra.mxu0 %v2258
      %2936 = vmatprep.subr.bf16.mxu0 %v2263
      %2937 = vmatpush1.bf16.msra.mxu0 %v2262
      %2938 = vmatprep.subr.bf16.mxu0 %v2267
      %2939 = vmatpush1.bf16.msra.mxu0 %v2266
      %2940 = vmatprep.subr.bf16.mxu0 %v2271
      %2941 = vmatpush1.bf16.msra.mxu0 %v2270
      %2942 = vmatprep.subr.bf16.mxu0 %v2275
      %2943 = vmatpush1.bf16.msra.mxu0 %v2274
      %2944 = vmatprep.subr.bf16.mxu0 %v2279
      %2945 = vmatpush1.bf16.msra.mxu0 %v2278
      %2946 = vmatprep.subr.bf16.mxu0 %v2283
      %2947 = vmatpush1.bf16.msra.mxu0 %v2282
      %2948 = vmatprep.subr.bf16.mxu0 %v2287
      %2949 = vmatpush1.bf16.msra.mxu0 %v2286
      %2950 = vmatprep.subr.bf16.mxu0 %v2291
      %2951 = vmatpush1.bf16.msra.mxu0 %v2290
      %2952 = vmatprep.subr.bf16.mxu0 %v2295
      %2953 = vmatpush1.bf16.msra.mxu0 %v2294
      %2954 = vmatprep.subr.bf16.mxu0 %v2299
      %2955 = vmatpush1.bf16.msra.mxu0 %v2298
      %2956 = vmatprep.subr.bf16.mxu0 %v2303
      %2957 = vmatpush1.bf16.msra.mxu0 %v2302
      %2958 = vmatprep.mubr.bf16.mxu0 %v426
      %2959 = vmatmul.mubr.bf16.gmra.mrb[0].mxu0 %v425
      %v2960 = vpop.f32.mrb[0].mxu0
      %v2961 = vadd.f32 %v2918, %v2960
      %v2962 = vpop.f32.mrb[0].mxu0
      %v2963 = vadd.f32 %v2920, %v2962
      %v2964 = vpop.f32.mrb[0].mxu0
      %v2965 = vadd.f32 %v2922, %v2964
      %v2966 = vpop.f32.mrb[0].mxu0
      %v2967 = vadd.f32 %v2924, %v2966
      %2968 = vdwg.mxu0
      %2969 = vmatprep.subr.bf16.mxu0 %v2307
      %2970 = vmatpush1.bf16.msra.mxu0 %v2306
      %2971 = vmatprep.subr.bf16.mxu0 %v2311
      %2972 = vmatpush1.bf16.msra.mxu0 %v2310
      %2973 = vmatprep.subr.bf16.mxu0 %v2315
      %2974 = vmatpush1.bf16.msra.mxu0 %v2314
      %2975 = vmatprep.subr.bf16.mxu0 %v2319
      %2976 = vmatpush1.bf16.msra.mxu0 %v2318
      %2977 = vmatprep.subr.bf16.mxu0 %v2323
      %2978 = vmatpush1.bf16.msra.mxu0 %v2322
      %2979 = vmatprep.subr.bf16.mxu0 %v2327
      %2980 = vmatpush1.bf16.msra.mxu0 %v2326
      %2981 = vmatprep.subr.bf16.mxu0 %v2331
      %2982 = vmatpush1.bf16.msra.mxu0 %v2330
      %2983 = vmatprep.subr.bf16.mxu0 %v2335
      %2984 = vmatpush1.bf16.msra.mxu0 %v2334
      %2985 = vmatprep.subr.bf16.mxu0 %v2339
      %2986 = vmatpush1.bf16.msra.mxu0 %v2338
      %2987 = vmatprep.subr.bf16.mxu0 %v2343
      %2988 = vmatpush1.bf16.msra.mxu0 %v2342
      %2989 = vmatprep.subr.bf16.mxu0 %v2347
      %2990 = vmatpush1.bf16.msra.mxu0 %v2346
      %2991 = vmatprep.subr.bf16.mxu0 %v2351
      %2992 = vmatpush1.bf16.msra.mxu0 %v2350
      %2993 = vmatprep.subr.bf16.mxu0 %v2355
      %2994 = vmatpush1.bf16.msra.mxu0 %v2354
      %2995 = vmatprep.subr.bf16.mxu0 %v2359
      %2996 = vmatpush1.bf16.msra.mxu0 %v2358
      %2997 = vmatprep.subr.bf16.mxu0 %v2363
      %2998 = vmatpush1.bf16.msra.mxu0 %v2362
      %2999 = vmatprep.subr.bf16.mxu0 %v2367
      %3000 = vmatpush1.bf16.msra.mxu0 %v2366
      %3001 = vmatprep.mubr.bf16.mxu0 %v428
      %3002 = vmatmul.mubr.bf16.gmra.mrb[0].mxu0 %v427
      %v3003 = vpop.f32.mrb[0].mxu0
      %v3004 = vadd.f32 %v2961, %v3003
      %v3005 = vpop.f32.mrb[0].mxu0
      %v3006 = vadd.f32 %v2963, %v3005
      %v3007 = vpop.f32.mrb[0].mxu0
      %v3008 = vadd.f32 %v2965, %v3007
      %v3009 = vpop.f32.mrb[0].mxu0
      %v3010 = vadd.f32 %v2967, %v3009
      %3011 = vdwg.mxu0
      %3012 = vmatprep.subr.bf16.mxu0 %v1989
      %3013 = vmatpush1.bf16.msra.mxu0 %v1988
      %3014 = vmatprep.subr.bf16.mxu0 %v1993
      %3015 = vmatpush1.bf16.msra.mxu0 %v1992
      %3016 = vmatprep.subr.bf16.mxu0 %v1997
      %3017 = vmatpush1.bf16.msra.mxu0 %v1996
      %3018 = vmatprep.subr.bf16.mxu0 %v2001
      %3019 = vmatpush1.bf16.msra.mxu0 %v2000
      %3020 = vmatprep.subr.bf16.mxu0 %v2005
      %3021 = vmatpush1.bf16.msra.mxu0 %v2004
      %3022 = vmatprep.subr.bf16.mxu0 %v2009
      %3023 = vmatpush1.bf16.msra.mxu0 %v2008
      %3024 = vmatprep.subr.bf16.mxu0 %v2013
      %3025 = vmatpush1.bf16.msra.mxu0 %v2012
      %3026 = vmatprep.subr.bf16.mxu0 %v2017
      %3027 = vmatpush1.bf16.msra.mxu0 %v2016
      %3028 = vmatprep.subr.bf16.mxu0 %v2021
      %3029 = vmatpush1.bf16.msra.mxu0 %v2020
      %3030 = vmatprep.subr.bf16.mxu0 %v2025
      %3031 = vmatpush1.bf16.msra.mxu0 %v2024
      %3032 = vmatprep.subr.bf16.mxu0 %v2029
      %3033 = vmatpush1.bf16.msra.mxu0 %v2028
      %3034 = vmatprep.subr.bf16.mxu0 %v2033
      %3035 = vmatpush1.bf16.msra.mxu0 %v2032
      %3036 = vmatprep.subr.bf16.mxu0 %v2037
      %3037 = vmatpush1.bf16.msra.mxu0 %v2036
      %3038 = vmatprep.subr.bf16.mxu0 %v2041
      %3039 = vmatpush1.bf16.msra.mxu0 %v2040
      %3040 = vmatprep.subr.bf16.mxu0 %v2045
      %3041 = vmatpush1.bf16.msra.mxu0 %v2044
      %3042 = vmatprep.subr.bf16.mxu0 %v2049
      %3043 = vmatpush1.bf16.msra.mxu0 %v2048
      %3044 = vmatprep.mubr.bf16.mxu0 %v418
      %3045 = vmatmul.mubr.bf16.gmra.mrb[0].mxu0 %v417
      %v3046 = vpop.f32.mrb[0].mxu0
      %v3047 = vadd.f32 %v825, %v3046
      %v3048 = vpop.f32.mrb[0].mxu0
      %v3049 = vadd.f32 %v829, %v3048
      %v3050 = vpop.f32.mrb[0].mxu0
      %v3051 = vadd.f32 %v825, %v3050
      %v3052 = vpop.f32.mrb[0].mxu0
      %v3053 = vadd.f32 %v829, %v3052
      %3054 = vdwg.mxu0
      %3055 = vmatprep.subr.bf16.mxu0 %v2053
      %3056 = vmatpush1.bf16.msra.mxu0 %v2052
      %3057 = vmatprep.subr.bf16.mxu0 %v2057
      %3058 = vmatpush1.bf16.msra.mxu0 %v2056
      %3059 = vmatprep.subr.bf16.mxu0 %v2061
      %3060 = vmatpush1.bf16.msra.mxu0 %v2060
      %3061 = vmatprep.subr.bf16.mxu0 %v2065
      %3062 = vmatpush1.bf16.msra.mxu0 %v2064
      %3063 = vmatprep.subr.bf16.mxu0 %v2069
      %3064 = vmatpush1.bf16.msra.mxu0 %v2068
      %3065 = vmatprep.subr.bf16.mxu0 %v2073
      %3066 = vmatpush1.bf16.msra.mxu0 %v2072
      %3067 = vmatprep.subr.bf16.mxu0 %v2077
      %3068 = vmatpush1.bf16.msra.mxu0 %v2076
      %3069 = vmatprep.subr.bf16.mxu0 %v2081
      %3070 = vmatpush1.bf16.msra.mxu0 %v2080
      %3071 = vmatprep.subr.bf16.mxu0 %v2085
      %3072 = vmatpush1.bf16.msra.mxu0 %v2084
      %3073 = vmatprep.subr.bf16.mxu0 %v2089
      %3074 = vmatpush1.bf16.msra.mxu0 %v2088
      %3075 = vmatprep.subr.bf16.mxu0 %v2093
      %3076 = vmatpush1.bf16.msra.mxu0 %v2092
      %3077 = vmatprep.subr.bf16.mxu0 %v2097
      %3078 = vmatpush1.bf16.msra.mxu0 %v2096
      %3079 = vmatprep.subr.bf16.mxu0 %v2101
      %3080 = vmatpush1.bf16.msra.mxu0 %v2100
      %3081 = vmatprep.subr.bf16.mxu0 %v2105
      %3082 = vmatpush1.bf16.msra.mxu0 %v2104
      %3083 = vmatprep.subr.bf16.mxu0 %v2109
      %3084 = vmatpush1.bf16.msra.mxu0 %v2108
      %3085 = vmatprep.subr.bf16.mxu0 %v2113
      %3086 = vmatpush1.bf16.msra.mxu0 %v2112
      %3087 = vmatprep.mubr.bf16.mxu0 %v420
      %3088 = vmatmul.mubr.bf16.gmra.mrb[0].mxu0 %v419
      %v3089 = vpop.f32.mrb[0].mxu0
      %v3090 = vadd.f32 %v3047, %v3089
      %v3091 = vpop.f32.mrb[0].mxu0
      %v3092 = vadd.f32 %v3049, %v3091
      %v3093 = vpop.f32.mrb[0].mxu0
      %v3094 = vadd.f32 %v3051, %v3093
      %v3095 = vpop.f32.mrb[0].mxu0
      %v3096 = vadd.f32 %v3053, %v3095
      %3097 = vdwg.mxu0
      %3098 = vmatprep.subr.bf16.mxu0 %v2117
      %3099 = vmatpush1.bf16.msra.mxu0 %v2116
      %3100 = vmatprep.subr.bf16.mxu0 %v2121
      %3101 = vmatpush1.bf16.msra.mxu0 %v2120
      %3102 = vmatprep.subr.bf16.mxu0 %v2125
      %3103 = vmatpush1.bf16.msra.mxu0 %v2124
      %3104 = vmatprep.subr.bf16.mxu0 %v2129
      %3105 = vmatpush1.bf16.msra.mxu0 %v2128
      %3106 = vmatprep.subr.bf16.mxu0 %v2133
      %3107 = vmatpush1.bf16.msra.mxu0 %v2132
      %3108 = vmatprep.subr.bf16.mxu0 %v2137
      %3109 = vmatpush1.bf16.msra.mxu0 %v2136
      %3110 = vmatprep.subr.bf16.mxu0 %v2141
      %3111 = vmatpush1.bf16.msra.mxu0 %v2140
      %3112 = vmatprep.subr.bf16.mxu0 %v2145
      %3113 = vmatpush1.bf16.msra.mxu0 %v2144
      %3114 = vmatprep.subr.bf16.mxu0 %v2149
      %3115 = vmatpush1.bf16.msra.mxu0 %v2148
      %3116 = vmatprep.subr.bf16.mxu0 %v2153
      %3117 = vmatpush1.bf16.msra.mxu0 %v2152
      %3118 = vmatprep.subr.bf16.mxu0 %v2157
      %3119 = vmatpush1.bf16.msra.mxu0 %v2156
      %3120 = vmatprep.subr.bf16.mxu0 %v2161
      %3121 = vmatpush1.bf16.msra.mxu0 %v2160
      %3122 = vmatprep.subr.bf16.mxu0 %v2165
      %3123 = vmatpush1.bf16.msra.mxu0 %v2164
      %3124 = vmatprep.subr.bf16.mxu0 %v2169
      %3125 = vmatpush1.bf16.msra.mxu0 %v2168
      %3126 = vmatprep.subr.bf16.mxu0 %v2173
      %3127 = vmatpush1.bf16.msra.mxu0 %v2172
      %3128 = vmatprep.subr.bf16.mxu0 %v2177
      %3129 = vmatpush1.bf16.msra.mxu0 %v2176
      %3130 = vmatprep.mubr.bf16.mxu0 %v422
      %3131 = vmatmul.mubr.bf16.gmra.mrb[0].mxu0 %v421
      %v3132 = vpop.f32.mrb[0].mxu0
      %v3133 = vadd.f32 %v3090, %v3132
      %v3134 = vpop.f32.mrb[0].mxu0
      %v3135 = vadd.f32 %v3092, %v3134
      %v3136 = vpop.f32.mrb[0].mxu0
      %v3137 = vadd.f32 %v3094, %v3136
      %v3138 = vpop.f32.mrb[0].mxu0
      %v3139 = vadd.f32 %v3096, %v3138
      %3140 = vdwg.mxu0
      %3141 = vmatprep.subr.bf16.mxu0 %v2181
      %3142 = vmatpush1.bf16.msra.mxu0 %v2180
      %3143 = vmatprep.subr.bf16.mxu0 %v2185
      %3144 = vmatpush1.bf16.msra.mxu0 %v2184
      %3145 = vmatprep.subr.bf16.mxu0 %v2189
      %3146 = vmatpush1.bf16.msra.mxu0 %v2188
      %3147 = vmatprep.subr.bf16.mxu0 %v2193
      %3148 = vmatpush1.bf16.msra.mxu0 %v2192
      %3149 = vmatprep.subr.bf16.mxu0 %v2197
      %3150 = vmatpush1.bf16.msra.mxu0 %v2196
      %3151 = vmatprep.subr.bf16.mxu0 %v2201
      %3152 = vmatpush1.bf16.msra.mxu0 %v2200
      %3153 = vmatprep.subr.bf16.mxu0 %v2205
      %3154 = vmatpush1.bf16.msra.mxu0 %v2204
      %3155 = vmatprep.subr.bf16.mxu0 %v2209
      %3156 = vmatpush1.bf16.msra.mxu0 %v2208
      %3157 = vmatprep.subr.bf16.mxu0 %v2213
      %3158 = vmatpush1.bf16.msra.mxu0 %v2212
      %3159 = vmatprep.subr.bf16.mxu0 %v2217
      %3160 = vmatpush1.bf16.msra.mxu0 %v2216
      %3161 = vmatprep.subr.bf16.mxu0 %v2221
      %3162 = vmatpush1.bf16.msra.mxu0 %v2220
      %3163 = vmatprep.subr.bf16.mxu0 %v2225
      %3164 = vmatpush1.bf16.msra.mxu0 %v2224
      %3165 = vmatprep.subr.bf16.mxu0 %v2229
      %3166 = vmatpush1.bf16.msra.mxu0 %v2228
      %3167 = vmatprep.subr.bf16.mxu0 %v2233
      %3168 = vmatpush1.bf16.msra.mxu0 %v2232
      %3169 = vmatprep.subr.bf16.mxu0 %v2237
      %3170 = vmatpush1.bf16.msra.mxu0 %v2236
      %3171 = vmatprep.subr.bf16.mxu0 %v2241
      %3172 = vmatpush1.bf16.msra.mxu0 %v2240
      %3173 = vmatprep.mubr.bf16.mxu0 %v424
      %3174 = vmatmul.mubr.bf16.gmra.mrb[0].mxu0 %v423
      %v3175 = vpop.f32.mrb[0].mxu0
      %v3176 = vadd.f32 %v3133, %v3175
      %v3177 = vpop.f32.mrb[0].mxu0
      %v3178 = vadd.f32 %v3135, %v3177
      %v3179 = vpop.f32.mrb[0].mxu0
      %v3180 = vadd.f32 %v3137, %v3179
      %v3181 = vpop.f32.mrb[0].mxu0
      %v3182 = vadd.f32 %v3139, %v3181
      %3183 = vdwg.mxu0
      %3184 = vmatprep.subr.bf16.mxu0 %v2245
      %3185 = vmatpush1.bf16.msra.mxu0 %v2244
      %3186 = vmatprep.subr.bf16.mxu0 %v2249
      %3187 = vmatpush1.bf16.msra.mxu0 %v2248
      %3188 = vmatprep.subr.bf16.mxu0 %v2253
      %3189 = vmatpush1.bf16.msra.mxu0 %v2252
      %3190 = vmatprep.subr.bf16.mxu0 %v2257
      %3191 = vmatpush1.bf16.msra.mxu0 %v2256
      %3192 = vmatprep.subr.bf16.mxu0 %v2261
      %3193 = vmatpush1.bf16.msra.mxu0 %v2260
      %3194 = vmatprep.subr.bf16.mxu0 %v2265
      %3195 = vmatpush1.bf16.msra.mxu0 %v2264
      %3196 = vmatprep.subr.bf16.mxu0 %v2269
      %3197 = vmatpush1.bf16.msra.mxu0 %v2268
      %3198 = vmatprep.subr.bf16.mxu0 %v2273
      %3199 = vmatpush1.bf16.msra.mxu0 %v2272
      %3200 = vmatprep.subr.bf16.mxu0 %v2277
      %3201 = vmatpush1.bf16.msra.mxu0 %v2276
      %3202 = vmatprep.subr.bf16.mxu0 %v2281
      %3203 = vmatpush1.bf16.msra.mxu0 %v2280
      %3204 = vmatprep.subr.bf16.mxu0 %v2285
      %3205 = vmatpush1.bf16.msra.mxu0 %v2284
      %3206 = vmatprep.subr.bf16.mxu0 %v2289
      %3207 = vmatpush1.bf16.msra.mxu0 %v2288
      %3208 = vmatprep.subr.bf16.mxu0 %v2293
      %3209 = vmatpush1.bf16.msra.mxu0 %v2292
      %3210 = vmatprep.subr.bf16.mxu0 %v2297
      %3211 = vmatpush1.bf16.msra.mxu0 %v2296
      %3212 = vmatprep.subr.bf16.mxu0 %v2301
      %3213 = vmatpush1.bf16.msra.mxu0 %v2300
      %3214 = vmatprep.subr.bf16.mxu0 %v2305
      %3215 = vmatpush1.bf16.msra.mxu0 %v2304
      %3216 = vmatprep.mubr.bf16.mxu0 %v426
      %3217 = vmatmul.mubr.bf16.gmra.mrb[0].mxu0 %v425
      %v3218 = vpop.f32.mrb[0].mxu0
      %v3219 = vadd.f32 %v3176, %v3218
      %v3220 = vpop.f32.mrb[0].mxu0
      %v3221 = vadd.f32 %v3178, %v3220
      %v3222 = vpop.f32.mrb[0].mxu0
      %v3223 = vadd.f32 %v3180, %v3222
      %v3224 = vpop.f32.mrb[0].mxu0
      %v3225 = vadd.f32 %v3182, %v3224
      %3226 = vdwg.mxu0
      %3227 = vmatprep.subr.bf16.mxu0 %v2309
      %3228 = vmatpush1.bf16.msra.mxu0 %v2308
      %3229 = vmatprep.subr.bf16.mxu0 %v2313
      %3230 = vmatpush1.bf16.msra.mxu0 %v2312
      %3231 = vmatprep.subr.bf16.mxu0 %v2317
      %3232 = vmatpush1.bf16.msra.mxu0 %v2316
      %3233 = vmatprep.subr.bf16.mxu0 %v2321
      %3234 = vmatpush1.bf16.msra.mxu0 %v2320
      %3235 = vmatprep.subr.bf16.mxu0 %v2325
      %3236 = vmatpush1.bf16.msra.mxu0 %v2324
      %3237 = vmatprep.subr.bf16.mxu0 %v2329
      %3238 = vmatpush1.bf16.msra.mxu0 %v2328
      %3239 = vmatprep.subr.bf16.mxu0 %v2333
      %3240 = vmatpush1.bf16.msra.mxu0 %v2332
      %3241 = vmatprep.subr.bf16.mxu0 %v2337
      %3242 = vmatpush1.bf16.msra.mxu0 %v2336
      %3243 = vmatprep.subr.bf16.mxu0 %v2341
      %3244 = vmatpush1.bf16.msra.mxu0 %v2340
      %3245 = vmatprep.subr.bf16.mxu0 %v2345
      %3246 = vmatpush1.bf16.msra.mxu0 %v2344
      %3247 = vmatprep.subr.bf16.mxu0 %v2349
      %3248 = vmatpush1.bf16.msra.mxu0 %v2348
      %3249 = vmatprep.subr.bf16.mxu0 %v2353
      %3250 = vmatpush1.bf16.msra.mxu0 %v2352
      %3251 = vmatprep.subr.bf16.mxu0 %v2357
      %3252 = vmatpush1.bf16.msra.mxu0 %v2356
      %3253 = vmatprep.subr.bf16.mxu0 %v2361
      %3254 = vmatpush1.bf16.msra.mxu0 %v2360
      %3255 = vmatprep.subr.bf16.mxu0 %v2365
      %3256 = vmatpush1.bf16.msra.mxu0 %v2364
      %3257 = vmatprep.subr.bf16.mxu0 %v2369
      %3258 = vmatpush1.bf16.msra.mxu0 %v2368
      %3259 = vmatprep.mubr.bf16.mxu0 %v428
      %3260 = vmatmul.mubr.bf16.gmra.mrb[0].mxu0 %v427
      %v3261 = vpop.f32.mrb[0].mxu0
      %v3262 = vadd.f32 %v3219, %v3261
      %v3263 = vpop.f32.mrb[0].mxu0
      %v3264 = vadd.f32 %v3221, %v3263
      %v3265 = vpop.f32.mrb[0].mxu0
      %v3266 = vadd.f32 %v3223, %v3265
      %v3267 = vpop.f32.mrb[0].mxu0
      %v3268 = vadd.f32 %v3225, %v3267
      %3269 = vdwg.mxu0
      %v3270 = vmax.f32 %v3004, 0.0
      %v3271 = vmax.f32 %v3006, 0.0
      %v3272 = vmax.f32 %v3262, 0.0
      %v3273 = vmax.f32 %v3264, 0.0
      %v3274 = vmax.f32 %v3008, 0.0
      %v3275 = vmax.f32 %v3010, 0.0
      %v3276 = vmax.f32 %v3266, 0.0
      %v3277 = vmax.f32 %v3268, 0.0
      %v3278 = vpack.c.bf16 %v3274, %v3270
      %v3279 = vpack.c.bf16 %v3275, %v3271
      %v3280 = vpack.c.bf16 %v3276, %v3272
      %v3281 = vpack.c.bf16 %v3277, %v3273
      %v3283 = vshrl.u32 %v3278, 16
      %v3285 = vrot.slane %v3283, 7
      %v3286 = vshll.u32 %v3278, 16
      %v3288 = vor.u32 %v3285, %v3286
      %v3290 = vshrl.u32 %v3279, 16
      %v3292 = vrot.slane %v3290, 7
      %v3293 = vshll.u32 %v3279, 16
      %v3295 = vor.u32 %v3292, %v3293
      %v3297 = vshrl.u32 %v3280, 16
      %v3299 = vrot.slane %v3297, 7
      %v3300 = vshll.u32 %v3280, 16
      %v3302 = vor.u32 %v3299, %v3300
      %v3304 = vshrl.u32 %v3281, 16
      %v3306 = vrot.slane %v3304, 7
      %v3307 = vshll.u32 %v3281, 16
      %v3309 = vor.u32 %v3306, %v3307
      %v3314 = vsel %vm380, 0, %v3288
      %v3315 = vsel %vm380, 0, %v3295
      %v3316 = vsel %vm380, 0, %v3302
      %v3317 = vsel %vm380, 0, %v3309
      %v3318 = vrot.slane %v3286, 1
      %v3319 = vor.u32 %v3283, %v3318
      %v3320 = vrot.slane %v3293, 1
      %v3321 = vor.u32 %v3290, %v3320
      %v3322 = vrot.slane %v3300, 1
      %v3323 = vor.u32 %v3297, %v3322
      %v3324 = vrot.slane %v3307, 1
      %v3325 = vor.u32 %v3304, %v3324
      %v3330 = vsel %vm399, %v3319, 0
      %v3331 = vsel %vm399, %v3321, 0
      %v3332 = vsel %vm399, %v3323, 0
      %v3333 = vsel %vm399, %v3325, 0
      %3334 = vst [vmem:[#allocation2] sm:$0xff] %v3314
      %3335 = vst [vmem:[#allocation2 + $0x8] sm:$0xff] %v3315
      %3336 = vst [vmem:[#allocation2 + $0x10] sm:$0xff] %v3316
      %3337 = vst [vmem:[#allocation2 + $0x18] sm:$0xff] %v3317
      %3338 = vst [vmem:[#allocation2 + $0x20] sm:$0xff] %v3278
      %3339 = vst [vmem:[#allocation2 + $0x28] sm:$0xff] %v3279
      %3340 = vst [vmem:[#allocation2 + $0x30] sm:$0xff] %v3280
      %3341 = vst [vmem:[#allocation2 + $0x38] sm:$0xff] %v3281
      %3342 = vst [vmem:[#allocation2 + $0x40] sm:$0xff] %v3330
      %3343 = vst [vmem:[#allocation2 + $0x48] sm:$0xff] %v3331
      %3344 = vst [vmem:[#allocation2 + $0x50] sm:$0xff] %v3332
      %3345 = vst [vmem:[#allocation2 + $0x58] sm:$0xff] %v3333
      %v3346 = vld [vmem:[%s4] sm:$0xf]
      %v3347 = vld [vmem:[#allocation2] sm:$0xff]
      %v3348 = vld [vmem:[#allocation2 + $0x8] sm:$0xff]
      %v3349 = vld [vmem:[#allocation2 + $0x10] sm:$0xff]
      %v3350 = vld [vmem:[#allocation2 + $0x18] sm:$0xff]
      %v3351 = vld [vmem:[#allocation2 + $0x20] sm:$0xff]
      %v3352 = vld [vmem:[#allocation2 + $0x28] sm:$0xff]
      %v3353 = vld [vmem:[#allocation2 + $0x30] sm:$0xff]
      %v3354 = vld [vmem:[#allocation2 + $0x38] sm:$0xff]
      %v3355 = vld [vmem:[#allocation2 + $0x40] sm:$0xff]
      %v3356 = vld [vmem:[#allocation2 + $0x48] sm:$0xff]
      %v3357 = vld [vmem:[#allocation2 + $0x50] sm:$0xff]
      %v3358 = vld [vmem:[#allocation2 + $0x58] sm:$0xff]
      %v3359 = vld [vmem:[%s3] sm:$0xff]
      %v3360 = vld [vmem:[%s3 + $0x8] sm:$0xff]
      %v3361 = vld [vmem:[%s3 + $0x10] sm:$0xff]
      %v3362 = vld [vmem:[%s3 + $0x18] sm:$0xff]
      %v3363 = vld [vmem:[%s3 + $0x20] sm:$0xff]
      %v3364 = vld [vmem:[%s3 + $0x28] sm:$0xff]
      %v3365 = vld [vmem:[%s3 + $0x30] sm:$0xff]
      %v3366 = vld [vmem:[%s3 + $0x38] sm:$0xff]
      %v3367 = vld [vmem:[%s3 + $0x40] sm:$0xff]
      %v3368 = vld [vmem:[%s3 + $0x48] sm:$0xff]
      %v3369 = vld [vmem:[%s3 + $0x50] sm:$0xff]
      %v3370 = vld [vmem:[%s3 + $0x58] sm:$0xff]
      %v3371 = vld [vmem:[%s3 + $0x60] sm:$0xff]
      %v3372 = vld [vmem:[%s3 + $0x68] sm:$0xff]
      %v3373 = vld [vmem:[%s3 + $0x70] sm:$0xff]
      %v3374 = vld [vmem:[%s3 + $0x78] sm:$0xff]
      %v3375 = vld [vmem:[%s3 + $0x80] sm:$0xff]
      %v3376 = vld [vmem:[%s3 + $0x88] sm:$0xff]
      %v3377 = vld [vmem:[%s3 + $0x90] sm:$0xff]
      %v3378 = vld [vmem:[%s3 + $0x98] sm:$0xff]
      %v3379 = vld [vmem:[%s3 + $0xa0] sm:$0xff]
      %v3380 = vld [vmem:[%s3 + $0xa8] sm:$0xff]
      %v3381 = vld [vmem:[%s3 + $0xb0] sm:$0xff]
      %v3382 = vld [vmem:[%s3 + $0xb8] sm:$0xff]
      %v3383 = vld [vmem:[%s3 + $0xc0] sm:$0xff]
      %v3384 = vld [vmem:[%s3 + $0xc8] sm:$0xff]
      %v3385 = vld [vmem:[%s3 + $0xd0] sm:$0xff]
      %v3386 = vld [vmem:[%s3 + $0xd8] sm:$0xff]
      %v3387 = vld [vmem:[%s3 + $0xe0] sm:$0xff]
      %v3388 = vld [vmem:[%s3 + $0xe8] sm:$0xff]
      %v3389 = vld [vmem:[%s3 + $0xf0] sm:$0xff]
      %v3390 = vld [vmem:[%s3 + $0xf8] sm:$0xff]
      %v3391 = vld [vmem:[%s3 + $0x100] sm:$0xff]
      %v3392 = vld [vmem:[%s3 + $0x108] sm:$0xff]
      %v3393 = vld [vmem:[%s3 + $0x110] sm:$0xff]
      %v3394 = vld [vmem:[%s3 + $0x118] sm:$0xff]
      %v3395 = vld [vmem:[%s3 + $0x120] sm:$0xff]
      %v3396 = vld [vmem:[%s3 + $0x128] sm:$0xff]
      %v3397 = vld [vmem:[%s3 + $0x130] sm:$0xff]
      %v3398 = vld [vmem:[%s3 + $0x138] sm:$0xff]
      %v3399 = vld [vmem:[%s3 + $0x140] sm:$0xff]
      %v3400 = vld [vmem:[%s3 + $0x148] sm:$0xff]
      %v3401 = vld [vmem:[%s3 + $0x150] sm:$0xff]
      %v3402 = vld [vmem:[%s3 + $0x158] sm:$0xff]
      %v3403 = vld [vmem:[%s3 + $0x160] sm:$0xff]
      %v3404 = vld [vmem:[%s3 + $0x168] sm:$0xff]
      %v3405 = vld [vmem:[%s3 + $0x170] sm:$0xff]
      %v3406 = vld [vmem:[%s3 + $0x178] sm:$0xff]
      %v3407 = vld [vmem:[%s3 + $0x180] sm:$0xff]
      %v3408 = vld [vmem:[%s3 + $0x188] sm:$0xff]
      %v3409 = vld [vmem:[%s3 + $0x190] sm:$0xff]
      %v3410 = vld [vmem:[%s3 + $0x198] sm:$0xff]
      %v3411 = vld [vmem:[%s3 + $0x1a0] sm:$0xff]
      %v3412 = vld [vmem:[%s3 + $0x1a8] sm:$0xff]
      %v3413 = vld [vmem:[%s3 + $0x1b0] sm:$0xff]
      %v3414 = vld [vmem:[%s3 + $0x1b8] sm:$0xff]
      %v3415 = vld [vmem:[%s3 + $0x1c0] sm:$0xff]
      %v3416 = vld [vmem:[%s3 + $0x1c8] sm:$0xff]
      %v3417 = vld [vmem:[%s3 + $0x1d0] sm:$0xff]
      %v3418 = vld [vmem:[%s3 + $0x1d8] sm:$0xff]
      %v3419 = vld [vmem:[%s3 + $0x1e0] sm:$0xff]
      %v3420 = vld [vmem:[%s3 + $0x1e8] sm:$0xff]
      %v3421 = vld [vmem:[%s3 + $0x1f0] sm:$0xff]
      %v3422 = vld [vmem:[%s3 + $0x1f8] sm:$0xff]
      %v3423 = vld [vmem:[%s3 + $0x200] sm:$0xff]
      %v3424 = vld [vmem:[%s3 + $0x208] sm:$0xff]
      %v3425 = vld [vmem:[%s3 + $0x210] sm:$0xff]
      %v3426 = vld [vmem:[%s3 + $0x218] sm:$0xff]
      %v3427 = vld [vmem:[%s3 + $0x220] sm:$0xff]
      %v3428 = vld [vmem:[%s3 + $0x228] sm:$0xff]
      %v3429 = vld [vmem:[%s3 + $0x230] sm:$0xff]
      %v3430 = vld [vmem:[%s3 + $0x238] sm:$0xff]
      %v3431 = vld [vmem:[%s3 + $0x240] sm:$0xff]
      %v3432 = vld [vmem:[%s3 + $0x248] sm:$0xff]
      %v3433 = vld [vmem:[%s3 + $0x250] sm:$0xff]
      %v3434 = vld [vmem:[%s3 + $0x258] sm:$0xff]
      %v3435 = vld [vmem:[%s3 + $0x260] sm:$0xff]
      %v3436 = vld [vmem:[%s3 + $0x268] sm:$0xff]
      %v3437 = vld [vmem:[%s3 + $0x270] sm:$0xff]
      %v3438 = vld [vmem:[%s3 + $0x278] sm:$0xff]
      %v3439 = vld [vmem:[%s3 + $0x280] sm:$0xff]
      %v3440 = vld [vmem:[%s3 + $0x288] sm:$0xff]
      %v3441 = vld [vmem:[%s3 + $0x290] sm:$0xff]
      %v3442 = vld [vmem:[%s3 + $0x298] sm:$0xff]
      %v3443 = vld [vmem:[%s3 + $0x2a0] sm:$0xff]
      %v3444 = vld [vmem:[%s3 + $0x2a8] sm:$0xff]
      %v3445 = vld [vmem:[%s3 + $0x2b0] sm:$0xff]
      %v3446 = vld [vmem:[%s3 + $0x2b8] sm:$0xff]
      %v3447 = vld [vmem:[%s3 + $0x2c0] sm:$0xff]
      %v3448 = vld [vmem:[%s3 + $0x2c8] sm:$0xff]
      %v3449 = vld [vmem:[%s3 + $0x2d0] sm:$0xff]
      %v3450 = vld [vmem:[%s3 + $0x2d8] sm:$0xff]
      %v3451 = vld [vmem:[%s3 + $0x2e0] sm:$0xff]
      %v3452 = vld [vmem:[%s3 + $0x2e8] sm:$0xff]
      %v3453 = vld [vmem:[%s3 + $0x2f0] sm:$0xff]
      %v3454 = vld [vmem:[%s3 + $0x2f8] sm:$0xff]
      %v3455 = vld [vmem:[%s3 + $0x300] sm:$0xff]
      %v3456 = vld [vmem:[%s3 + $0x308] sm:$0xff]
      %v3457 = vld [vmem:[%s3 + $0x310] sm:$0xff]
      %v3458 = vld [vmem:[%s3 + $0x318] sm:$0xff]
      %v3459 = vld [vmem:[%s3 + $0x320] sm:$0xff]
      %v3460 = vld [vmem:[%s3 + $0x328] sm:$0xff]
      %v3461 = vld [vmem:[%s3 + $0x330] sm:$0xff]
      %v3462 = vld [vmem:[%s3 + $0x338] sm:$0xff]
      %v3463 = vld [vmem:[%s3 + $0x340] sm:$0xff]
      %v3464 = vld [vmem:[%s3 + $0x348] sm:$0xff]
      %v3465 = vld [vmem:[%s3 + $0x350] sm:$0xff]
      %v3466 = vld [vmem:[%s3 + $0x358] sm:$0xff]
      %v3467 = vld [vmem:[%s3 + $0x360] sm:$0xff]
      %v3468 = vld [vmem:[%s3 + $0x368] sm:$0xff]
      %v3469 = vld [vmem:[%s3 + $0x370] sm:$0xff]
      %v3470 = vld [vmem:[%s3 + $0x378] sm:$0xff]
      %v3471 = vld [vmem:[%s3 + $0x380] sm:$0xff]
      %v3472 = vld [vmem:[%s3 + $0x388] sm:$0xff]
      %v3473 = vld [vmem:[%s3 + $0x390] sm:$0xff]
      %v3474 = vld [vmem:[%s3 + $0x398] sm:$0xff]
      %v3475 = vld [vmem:[%s3 + $0x3a0] sm:$0xff]
      %v3476 = vld [vmem:[%s3 + $0x3a8] sm:$0xff]
      %v3477 = vld [vmem:[%s3 + $0x3b0] sm:$0xff]
      %v3478 = vld [vmem:[%s3 + $0x3b8] sm:$0xff]
      %v3479 = vld [vmem:[%s3 + $0x3c0] sm:$0xff]
      %v3480 = vld [vmem:[%s3 + $0x3c8] sm:$0xff]
      %v3481 = vld [vmem:[%s3 + $0x3d0] sm:$0xff]
      %v3482 = vld [vmem:[%s3 + $0x3d8] sm:$0xff]
      %v3483 = vld [vmem:[%s3 + $0x3e0] sm:$0xff]
      %v3484 = vld [vmem:[%s3 + $0x3e8] sm:$0xff]
      %v3485 = vld [vmem:[%s3 + $0x3f0] sm:$0xff]
      %v3486 = vld [vmem:[%s3 + $0x3f8] sm:$0xff]
      %v3487 = vld [vmem:[%s3 + $0x400] sm:$0xff]
      %v3488 = vld [vmem:[%s3 + $0x408] sm:$0xff]
      %v3489 = vld [vmem:[%s3 + $0x410] sm:$0xff]
      %v3490 = vld [vmem:[%s3 + $0x418] sm:$0xff]
      %v3491 = vld [vmem:[%s3 + $0x420] sm:$0xff]
      %v3492 = vld [vmem:[%s3 + $0x428] sm:$0xff]
      %v3493 = vld [vmem:[%s3 + $0x430] sm:$0xff]
      %v3494 = vld [vmem:[%s3 + $0x438] sm:$0xff]
      %v3495 = vld [vmem:[%s3 + $0x440] sm:$0xff]
      %v3496 = vld [vmem:[%s3 + $0x448] sm:$0xff]
      %v3497 = vld [vmem:[%s3 + $0x450] sm:$0xff]
      %v3498 = vld [vmem:[%s3 + $0x458] sm:$0xff]
      %v3499 = vld [vmem:[%s3 + $0x460] sm:$0xff]
      %v3500 = vld [vmem:[%s3 + $0x468] sm:$0xff]
      %v3501 = vld [vmem:[%s3 + $0x470] sm:$0xff]
      %v3502 = vld [vmem:[%s3 + $0x478] sm:$0xff]
      %v3503 = vld [vmem:[%s3 + $0x480] sm:$0xff]
      %v3504 = vld [vmem:[%s3 + $0x488] sm:$0xff]
      %v3505 = vld [vmem:[%s3 + $0x490] sm:$0xff]
      %v3506 = vld [vmem:[%s3 + $0x498] sm:$0xff]
      %v3507 = vld [vmem:[%s3 + $0x4a0] sm:$0xff]
      %v3508 = vld [vmem:[%s3 + $0x4a8] sm:$0xff]
      %v3509 = vld [vmem:[%s3 + $0x4b0] sm:$0xff]
      %v3510 = vld [vmem:[%s3 + $0x4b8] sm:$0xff]
      %v3511 = vld [vmem:[%s3 + $0x4c0] sm:$0xff]
      %v3512 = vld [vmem:[%s3 + $0x4c8] sm:$0xff]
      %v3513 = vld [vmem:[%s3 + $0x4d0] sm:$0xff]
      %v3514 = vld [vmem:[%s3 + $0x4d8] sm:$0xff]
      %v3515 = vld [vmem:[%s3 + $0x4e0] sm:$0xff]
      %v3516 = vld [vmem:[%s3 + $0x4e8] sm:$0xff]
      %v3517 = vld [vmem:[%s3 + $0x4f0] sm:$0xff]
      %v3518 = vld [vmem:[%s3 + $0x4f8] sm:$0xff]
      %v3519 = vld [vmem:[%s3 + $0x500] sm:$0xff]
      %v3520 = vld [vmem:[%s3 + $0x508] sm:$0xff]
      %v3521 = vld [vmem:[%s3 + $0x510] sm:$0xff]
      %v3522 = vld [vmem:[%s3 + $0x518] sm:$0xff]
      %v3523 = vld [vmem:[%s3 + $0x520] sm:$0xff]
      %v3524 = vld [vmem:[%s3 + $0x528] sm:$0xff]
      %v3525 = vld [vmem:[%s3 + $0x530] sm:$0xff]
      %v3526 = vld [vmem:[%s3 + $0x538] sm:$0xff]
      %v3527 = vld [vmem:[%s3 + $0x540] sm:$0xff]
      %v3528 = vld [vmem:[%s3 + $0x548] sm:$0xff]
      %v3529 = vld [vmem:[%s3 + $0x550] sm:$0xff]
      %v3530 = vld [vmem:[%s3 + $0x558] sm:$0xff]
      %v3531 = vld [vmem:[%s3 + $0x560] sm:$0xff]
      %v3532 = vld [vmem:[%s3 + $0x568] sm:$0xff]
      %v3533 = vld [vmem:[%s3 + $0x570] sm:$0xff]
      %v3534 = vld [vmem:[%s3 + $0x578] sm:$0xff]
      %v3535 = vld [vmem:[%s3 + $0x580] sm:$0xff]
      %v3536 = vld [vmem:[%s3 + $0x588] sm:$0xff]
      %v3537 = vld [vmem:[%s3 + $0x590] sm:$0xff]
      %v3538 = vld [vmem:[%s3 + $0x598] sm:$0xff]
      %v3539 = vld [vmem:[%s3 + $0x5a0] sm:$0xff]
      %v3540 = vld [vmem:[%s3 + $0x5a8] sm:$0xff]
      %v3541 = vld [vmem:[%s3 + $0x5b0] sm:$0xff]
      %v3542 = vld [vmem:[%s3 + $0x5b8] sm:$0xff]
      %v3543 = vld [vmem:[%s3 + $0x5c0] sm:$0xff]
      %v3544 = vld [vmem:[%s3 + $0x5c8] sm:$0xff]
      %v3545 = vld [vmem:[%s3 + $0x5d0] sm:$0xff]
      %v3546 = vld [vmem:[%s3 + $0x5d8] sm:$0xff]
      %v3547 = vld [vmem:[%s3 + $0x5e0] sm:$0xff]
      %v3548 = vld [vmem:[%s3 + $0x5e8] sm:$0xff]
      %v3549 = vld [vmem:[%s3 + $0x5f0] sm:$0xff]
      %v3550 = vld [vmem:[%s3 + $0x5f8] sm:$0xff]
      %v3551 = vld [vmem:[%s3 + $0x600] sm:$0xff]
      %v3552 = vld [vmem:[%s3 + $0x608] sm:$0xff]
      %v3553 = vld [vmem:[%s3 + $0x610] sm:$0xff]
      %v3554 = vld [vmem:[%s3 + $0x618] sm:$0xff]
      %v3555 = vld [vmem:[%s3 + $0x620] sm:$0xff]
      %v3556 = vld [vmem:[%s3 + $0x628] sm:$0xff]
      %v3557 = vld [vmem:[%s3 + $0x630] sm:$0xff]
      %v3558 = vld [vmem:[%s3 + $0x638] sm:$0xff]
      %v3559 = vld [vmem:[%s3 + $0x640] sm:$0xff]
      %v3560 = vld [vmem:[%s3 + $0x648] sm:$0xff]
      %v3561 = vld [vmem:[%s3 + $0x650] sm:$0xff]
      %v3562 = vld [vmem:[%s3 + $0x658] sm:$0xff]
      %v3563 = vld [vmem:[%s3 + $0x660] sm:$0xff]
      %v3564 = vld [vmem:[%s3 + $0x668] sm:$0xff]
      %v3565 = vld [vmem:[%s3 + $0x670] sm:$0xff]
      %v3566 = vld [vmem:[%s3 + $0x678] sm:$0xff]
      %v3567 = vld [vmem:[%s3 + $0x680] sm:$0xff]
      %v3568 = vld [vmem:[%s3 + $0x688] sm:$0xff]
      %v3569 = vld [vmem:[%s3 + $0x690] sm:$0xff]
      %v3570 = vld [vmem:[%s3 + $0x698] sm:$0xff]
      %v3571 = vld [vmem:[%s3 + $0x6a0] sm:$0xff]
      %v3572 = vld [vmem:[%s3 + $0x6a8] sm:$0xff]
      %v3573 = vld [vmem:[%s3 + $0x6b0] sm:$0xff]
      %v3574 = vld [vmem:[%s3 + $0x6b8] sm:$0xff]
      %v3575 = vld [vmem:[%s3 + $0x6c0] sm:$0xff]
      %v3576 = vld [vmem:[%s3 + $0x6c8] sm:$0xff]
      %v3577 = vld [vmem:[%s3 + $0x6d0] sm:$0xff]
      %v3578 = vld [vmem:[%s3 + $0x6d8] sm:$0xff]
      %v3579 = vld [vmem:[%s3 + $0x6e0] sm:$0xff]
      %v3580 = vld [vmem:[%s3 + $0x6e8] sm:$0xff]
      %v3581 = vld [vmem:[%s3 + $0x6f0] sm:$0xff]
      %v3582 = vld [vmem:[%s3 + $0x6f8] sm:$0xff]
      %v3583 = vld [vmem:[%s3 + $0x700] sm:$0xff]
      %v3584 = vld [vmem:[%s3 + $0x708] sm:$0xff]
      %v3585 = vld [vmem:[%s3 + $0x710] sm:$0xff]
      %v3586 = vld [vmem:[%s3 + $0x718] sm:$0xff]
      %v3587 = vld [vmem:[%s3 + $0x720] sm:$0xff]
      %v3588 = vld [vmem:[%s3 + $0x728] sm:$0xff]
      %v3589 = vld [vmem:[%s3 + $0x730] sm:$0xff]
      %v3590 = vld [vmem:[%s3 + $0x738] sm:$0xff]
      %v3591 = vld [vmem:[%s3 + $0x740] sm:$0xff]
      %v3592 = vld [vmem:[%s3 + $0x748] sm:$0xff]
      %v3593 = vld [vmem:[%s3 + $0x750] sm:$0xff]
      %v3594 = vld [vmem:[%s3 + $0x758] sm:$0xff]
      %v3595 = vld [vmem:[%s3 + $0x760] sm:$0xff]
      %v3596 = vld [vmem:[%s3 + $0x768] sm:$0xff]
      %v3597 = vld [vmem:[%s3 + $0x770] sm:$0xff]
      %v3598 = vld [vmem:[%s3 + $0x778] sm:$0xff]
      %v3599 = vld [vmem:[%s3 + $0x780] sm:$0xff]
      %v3600 = vld [vmem:[%s3 + $0x788] sm:$0xff]
      %v3601 = vld [vmem:[%s3 + $0x790] sm:$0xff]
      %v3602 = vld [vmem:[%s3 + $0x798] sm:$0xff]
      %v3603 = vld [vmem:[%s3 + $0x7a0] sm:$0xff]
      %v3604 = vld [vmem:[%s3 + $0x7a8] sm:$0xff]
      %v3605 = vld [vmem:[%s3 + $0x7b0] sm:$0xff]
      %v3606 = vld [vmem:[%s3 + $0x7b8] sm:$0xff]
      %v3607 = vld [vmem:[%s3 + $0x7c0] sm:$0xff]
      %v3608 = vld [vmem:[%s3 + $0x7c8] sm:$0xff]
      %v3609 = vld [vmem:[%s3 + $0x7d0] sm:$0xff]
      %v3610 = vld [vmem:[%s3 + $0x7d8] sm:$0xff]
      %v3611 = vld [vmem:[%s3 + $0x7e0] sm:$0xff]
      %v3612 = vld [vmem:[%s3 + $0x7e8] sm:$0xff]
      %v3613 = vld [vmem:[%s3 + $0x7f0] sm:$0xff]
      %v3614 = vld [vmem:[%s3 + $0x7f8] sm:$0xff]
      %v3615 = vld [vmem:[%s3 + $0x800] sm:$0xff]
      %v3616 = vld [vmem:[%s3 + $0x808] sm:$0xff]
      %v3617 = vld [vmem:[%s3 + $0x810] sm:$0xff]
      %v3618 = vld [vmem:[%s3 + $0x818] sm:$0xff]
      %v3619 = vld [vmem:[%s3 + $0x820] sm:$0xff]
      %v3620 = vld [vmem:[%s3 + $0x828] sm:$0xff]
      %v3621 = vld [vmem:[%s3 + $0x830] sm:$0xff]
      %v3622 = vld [vmem:[%s3 + $0x838] sm:$0xff]
      %v3623 = vld [vmem:[%s3 + $0x840] sm:$0xff]
      %v3624 = vld [vmem:[%s3 + $0x848] sm:$0xff]
      %v3625 = vld [vmem:[%s3 + $0x850] sm:$0xff]
      %v3626 = vld [vmem:[%s3 + $0x858] sm:$0xff]
      %v3627 = vld [vmem:[%s3 + $0x860] sm:$0xff]
      %v3628 = vld [vmem:[%s3 + $0x868] sm:$0xff]
      %v3629 = vld [vmem:[%s3 + $0x870] sm:$0xff]
      %v3630 = vld [vmem:[%s3 + $0x878] sm:$0xff]
      %v3631 = vld [vmem:[%s3 + $0x880] sm:$0xff]
      %v3632 = vld [vmem:[%s3 + $0x888] sm:$0xff]
      %v3633 = vld [vmem:[%s3 + $0x890] sm:$0xff]
      %v3634 = vld [vmem:[%s3 + $0x898] sm:$0xff]
      %v3635 = vld [vmem:[%s3 + $0x8a0] sm:$0xff]
      %v3636 = vld [vmem:[%s3 + $0x8a8] sm:$0xff]
      %v3637 = vld [vmem:[%s3 + $0x8b0] sm:$0xff]
      %v3638 = vld [vmem:[%s3 + $0x8b8] sm:$0xff]
      %v3639 = vld [vmem:[%s3 + $0x8c0] sm:$0xff]
      %v3640 = vld [vmem:[%s3 + $0x8c8] sm:$0xff]
      %v3641 = vld [vmem:[%s3 + $0x8d0] sm:$0xff]
      %v3642 = vld [vmem:[%s3 + $0x8d8] sm:$0xff]
      %v3643 = vld [vmem:[%s3 + $0x8e0] sm:$0xff]
      %v3644 = vld [vmem:[%s3 + $0x8e8] sm:$0xff]
      %v3645 = vld [vmem:[%s3 + $0x8f0] sm:$0xff]
      %v3646 = vld [vmem:[%s3 + $0x8f8] sm:$0xff]
      %v3647 = vld [vmem:[%s3 + $0x900] sm:$0xff]
      %v3648 = vld [vmem:[%s3 + $0x908] sm:$0xff]
      %v3649 = vld [vmem:[%s3 + $0x910] sm:$0xff]
      %v3650 = vld [vmem:[%s3 + $0x918] sm:$0xff]
      %v3651 = vld [vmem:[%s3 + $0x920] sm:$0xff]
      %v3652 = vld [vmem:[%s3 + $0x928] sm:$0xff]
      %v3653 = vld [vmem:[%s3 + $0x930] sm:$0xff]
      %v3654 = vld [vmem:[%s3 + $0x938] sm:$0xff]
      %v3655 = vld [vmem:[%s3 + $0x940] sm:$0xff]
      %v3656 = vld [vmem:[%s3 + $0x948] sm:$0xff]
      %v3657 = vld [vmem:[%s3 + $0x950] sm:$0xff]
      %v3658 = vld [vmem:[%s3 + $0x958] sm:$0xff]
      %v3659 = vld [vmem:[%s3 + $0x960] sm:$0xff]
      %v3660 = vld [vmem:[%s3 + $0x968] sm:$0xff]
      %v3661 = vld [vmem:[%s3 + $0x970] sm:$0xff]
      %v3662 = vld [vmem:[%s3 + $0x978] sm:$0xff]
      %v3663 = vld [vmem:[%s3 + $0x980] sm:$0xff]
      %v3664 = vld [vmem:[%s3 + $0x988] sm:$0xff]
      %v3665 = vld [vmem:[%s3 + $0x990] sm:$0xff]
      %v3666 = vld [vmem:[%s3 + $0x998] sm:$0xff]
      %v3667 = vld [vmem:[%s3 + $0x9a0] sm:$0xff]
      %v3668 = vld [vmem:[%s3 + $0x9a8] sm:$0xff]
      %v3669 = vld [vmem:[%s3 + $0x9b0] sm:$0xff]
      %v3670 = vld [vmem:[%s3 + $0x9b8] sm:$0xff]
      %v3671 = vld [vmem:[%s3 + $0x9c0] sm:$0xff]
      %v3672 = vld [vmem:[%s3 + $0x9c8] sm:$0xff]
      %v3673 = vld [vmem:[%s3 + $0x9d0] sm:$0xff]
      %v3674 = vld [vmem:[%s3 + $0x9d8] sm:$0xff]
      %v3675 = vld [vmem:[%s3 + $0x9e0] sm:$0xff]
      %v3676 = vld [vmem:[%s3 + $0x9e8] sm:$0xff]
      %v3677 = vld [vmem:[%s3 + $0x9f0] sm:$0xff]
      %v3678 = vld [vmem:[%s3 + $0x9f8] sm:$0xff]
      %v3679 = vld [vmem:[%s3 + $0xa00] sm:$0xff]
      %v3680 = vld [vmem:[%s3 + $0xa08] sm:$0xff]
      %v3681 = vld [vmem:[%s3 + $0xa10] sm:$0xff]
      %v3682 = vld [vmem:[%s3 + $0xa18] sm:$0xff]
      %v3683 = vld [vmem:[%s3 + $0xa20] sm:$0xff]
      %v3684 = vld [vmem:[%s3 + $0xa28] sm:$0xff]
      %v3685 = vld [vmem:[%s3 + $0xa30] sm:$0xff]
      %v3686 = vld [vmem:[%s3 + $0xa38] sm:$0xff]
      %v3687 = vld [vmem:[%s3 + $0xa40] sm:$0xff]
      %v3688 = vld [vmem:[%s3 + $0xa48] sm:$0xff]
      %v3689 = vld [vmem:[%s3 + $0xa50] sm:$0xff]
      %v3690 = vld [vmem:[%s3 + $0xa58] sm:$0xff]
      %v3691 = vld [vmem:[%s3 + $0xa60] sm:$0xff]
      %v3692 = vld [vmem:[%s3 + $0xa68] sm:$0xff]
      %v3693 = vld [vmem:[%s3 + $0xa70] sm:$0xff]
      %v3694 = vld [vmem:[%s3 + $0xa78] sm:$0xff]
      %v3695 = vld [vmem:[%s3 + $0xa80] sm:$0xff]
      %v3696 = vld [vmem:[%s3 + $0xa88] sm:$0xff]
      %v3697 = vld [vmem:[%s3 + $0xa90] sm:$0xff]
      %v3698 = vld [vmem:[%s3 + $0xa98] sm:$0xff]
      %v3699 = vld [vmem:[%s3 + $0xaa0] sm:$0xff]
      %v3700 = vld [vmem:[%s3 + $0xaa8] sm:$0xff]
      %v3701 = vld [vmem:[%s3 + $0xab0] sm:$0xff]
      %v3702 = vld [vmem:[%s3 + $0xab8] sm:$0xff]
      %v3703 = vld [vmem:[%s3 + $0xac0] sm:$0xff]
      %v3704 = vld [vmem:[%s3 + $0xac8] sm:$0xff]
      %v3705 = vld [vmem:[%s3 + $0xad0] sm:$0xff]
      %v3706 = vld [vmem:[%s3 + $0xad8] sm:$0xff]
      %v3707 = vld [vmem:[%s3 + $0xae0] sm:$0xff]
      %v3708 = vld [vmem:[%s3 + $0xae8] sm:$0xff]
      %v3709 = vld [vmem:[%s3 + $0xaf0] sm:$0xff]
      %v3710 = vld [vmem:[%s3 + $0xaf8] sm:$0xff]
      %v3711 = vld [vmem:[%s3 + $0xb00] sm:$0xff]
      %v3712 = vld [vmem:[%s3 + $0xb08] sm:$0xff]
      %v3713 = vld [vmem:[%s3 + $0xb10] sm:$0xff]
      %v3714 = vld [vmem:[%s3 + $0xb18] sm:$0xff]
      %v3715 = vld [vmem:[%s3 + $0xb20] sm:$0xff]
      %v3716 = vld [vmem:[%s3 + $0xb28] sm:$0xff]
      %v3717 = vld [vmem:[%s3 + $0xb30] sm:$0xff]
      %v3718 = vld [vmem:[%s3 + $0xb38] sm:$0xff]
      %v3719 = vld [vmem:[%s3 + $0xb40] sm:$0xff]
      %v3720 = vld [vmem:[%s3 + $0xb48] sm:$0xff]
      %v3721 = vld [vmem:[%s3 + $0xb50] sm:$0xff]
      %v3722 = vld [vmem:[%s3 + $0xb58] sm:$0xff]
      %v3723 = vld [vmem:[%s3 + $0xb60] sm:$0xff]
      %v3724 = vld [vmem:[%s3 + $0xb68] sm:$0xff]
      %v3725 = vld [vmem:[%s3 + $0xb70] sm:$0xff]
      %v3726 = vld [vmem:[%s3 + $0xb78] sm:$0xff]
      %v3727 = vld [vmem:[%s3 + $0xb80] sm:$0xff]
      %v3728 = vld [vmem:[%s3 + $0xb88] sm:$0xff]
      %v3729 = vld [vmem:[%s3 + $0xb90] sm:$0xff]
      %v3730 = vld [vmem:[%s3 + $0xb98] sm:$0xff]
      %v3731 = vld [vmem:[%s3 + $0xba0] sm:$0xff]
      %v3732 = vld [vmem:[%s3 + $0xba8] sm:$0xff]
      %v3733 = vld [vmem:[%s3 + $0xbb0] sm:$0xff]
      %v3734 = vld [vmem:[%s3 + $0xbb8] sm:$0xff]
      %v3735 = vld [vmem:[%s3 + $0xbc0] sm:$0xff]
      %v3736 = vld [vmem:[%s3 + $0xbc8] sm:$0xff]
      %v3737 = vld [vmem:[%s3 + $0xbd0] sm:$0xff]
      %v3738 = vld [vmem:[%s3 + $0xbd8] sm:$0xff]
      %v3739 = vld [vmem:[%s3 + $0xbe0] sm:$0xff]
      %v3740 = vld [vmem:[%s3 + $0xbe8] sm:$0xff]
      %v3741 = vld [vmem:[%s3 + $0xbf0] sm:$0xff]
      %v3742 = vld [vmem:[%s3 + $0xbf8] sm:$0xff]
      %v3744 = vlaneseq
      %v3745 = vshrl.u32 %v3744, 7
      %v3746 = vsub.s32 0, %v3745
      %v3747 = vrot.slane %v3346, %v3746
      %v3748 = vlaneseq
      %v3749 = vshrl.u32 %v3748, 7
      %v3750 = vsub.s32 1, %v3749
      %v3751 = vrot.slane %v3346, %v3750
      %v3752 = vlaneseq
      %v3753 = vshrl.u32 %v3752, 7
      %v3754 = vsub.s32 2, %v3753
      %v3755 = vrot.slane %v3346, %v3754
      %v3756 = vlaneseq
      %v3757 = vshrl.u32 %v3756, 7
      %v3758 = vsub.s32 3, %v3757
      %v3759 = vrot.slane %v3346, %v3758
      %v4148 = vunpack.c.l.b16 %v3359
      %v4149 = vunpack.c.h.b16 %v3359
      %v4150 = vunpack.c.l.b16 %v3360
      %v4151 = vunpack.c.h.b16 %v3360
      %v4152 = vunpack.c.l.b16 %v3361
      %v4153 = vunpack.c.h.b16 %v3361
      %v4154 = vunpack.c.l.b16 %v3362
      %v4155 = vunpack.c.h.b16 %v3362
      %v4156 = vunpack.c.l.b16 %v3363
      %v4157 = vunpack.c.h.b16 %v3363
      %v4158 = vunpack.c.l.b16 %v3364
      %v4159 = vunpack.c.h.b16 %v3364
      %v4160 = vunpack.c.l.b16 %v3365
      %v4161 = vunpack.c.h.b16 %v3365
      %v4162 = vunpack.c.l.b16 %v3366
      %v4163 = vunpack.c.h.b16 %v3366
      %v4164 = vunpack.c.l.b16 %v3367
      %v4165 = vunpack.c.h.b16 %v3367
      %v4166 = vunpack.c.l.b16 %v3368
      %v4167 = vunpack.c.h.b16 %v3368
      %v4168 = vunpack.c.l.b16 %v3369
      %v4169 = vunpack.c.h.b16 %v3369
      %v4170 = vunpack.c.l.b16 %v3370
      %v4171 = vunpack.c.h.b16 %v3370
      %v4172 = vunpack.c.l.b16 %v3371
      %v4173 = vunpack.c.h.b16 %v3371
      %v4174 = vunpack.c.l.b16 %v3372
      %v4175 = vunpack.c.h.b16 %v3372
      %v4176 = vunpack.c.l.b16 %v3373
      %v4177 = vunpack.c.h.b16 %v3373
      %v4178 = vunpack.c.l.b16 %v3374
      %v4179 = vunpack.c.h.b16 %v3374
      %v4180 = vunpack.c.l.b16 %v3375
      %v4181 = vunpack.c.h.b16 %v3375
      %v4182 = vunpack.c.l.b16 %v3376
      %v4183 = vunpack.c.h.b16 %v3376
      %v4184 = vunpack.c.l.b16 %v3377
      %v4185 = vunpack.c.h.b16 %v3377
      %v4186 = vunpack.c.l.b16 %v3378
      %v4187 = vunpack.c.h.b16 %v3378
      %v4188 = vunpack.c.l.b16 %v3379
      %v4189 = vunpack.c.h.b16 %v3379
      %v4190 = vunpack.c.l.b16 %v3380
      %v4191 = vunpack.c.h.b16 %v3380
      %v4192 = vunpack.c.l.b16 %v3381
      %v4193 = vunpack.c.h.b16 %v3381
      %v4194 = vunpack.c.l.b16 %v3382
      %v4195 = vunpack.c.h.b16 %v3382
      %v4196 = vunpack.c.l.b16 %v3383
      %v4197 = vunpack.c.h.b16 %v3383
      %v4198 = vunpack.c.l.b16 %v3384
      %v4199 = vunpack.c.h.b16 %v3384
      %v4200 = vunpack.c.l.b16 %v3385
      %v4201 = vunpack.c.h.b16 %v3385
      %v4202 = vunpack.c.l.b16 %v3386
      %v4203 = vunpack.c.h.b16 %v3386
      %v4204 = vunpack.c.l.b16 %v3387
      %v4205 = vunpack.c.h.b16 %v3387
      %v4206 = vunpack.c.l.b16 %v3388
      %v4207 = vunpack.c.h.b16 %v3388
      %v4208 = vunpack.c.l.b16 %v3389
      %v4209 = vunpack.c.h.b16 %v3389
      %v4210 = vunpack.c.l.b16 %v3390
      %v4211 = vunpack.c.h.b16 %v3390
      %v4212 = vunpack.c.l.b16 %v3391
      %v4213 = vunpack.c.h.b16 %v3391
      %v4214 = vunpack.c.l.b16 %v3392
      %v4215 = vunpack.c.h.b16 %v3392
      %v4216 = vunpack.c.l.b16 %v3393
      %v4217 = vunpack.c.h.b16 %v3393
      %v4218 = vunpack.c.l.b16 %v3394
      %v4219 = vunpack.c.h.b16 %v3394
      %v4220 = vunpack.c.l.b16 %v3395
      %v4221 = vunpack.c.h.b16 %v3395
      %v4222 = vunpack.c.l.b16 %v3396
      %v4223 = vunpack.c.h.b16 %v3396
      %v4224 = vunpack.c.l.b16 %v3397
      %v4225 = vunpack.c.h.b16 %v3397
      %v4226 = vunpack.c.l.b16 %v3398
      %v4227 = vunpack.c.h.b16 %v3398
      %v4228 = vunpack.c.l.b16 %v3399
      %v4229 = vunpack.c.h.b16 %v3399
      %v4230 = vunpack.c.l.b16 %v3400
      %v4231 = vunpack.c.h.b16 %v3400
      %v4232 = vunpack.c.l.b16 %v3401
      %v4233 = vunpack.c.h.b16 %v3401
      %v4234 = vunpack.c.l.b16 %v3402
      %v4235 = vunpack.c.h.b16 %v3402
      %v4236 = vunpack.c.l.b16 %v3403
      %v4237 = vunpack.c.h.b16 %v3403
      %v4238 = vunpack.c.l.b16 %v3404
      %v4239 = vunpack.c.h.b16 %v3404
      %v4240 = vunpack.c.l.b16 %v3405
      %v4241 = vunpack.c.h.b16 %v3405
      %v4242 = vunpack.c.l.b16 %v3406
      %v4243 = vunpack.c.h.b16 %v3406
      %v4244 = vunpack.c.l.b16 %v3407
      %v4245 = vunpack.c.h.b16 %v3407
      %v4246 = vunpack.c.l.b16 %v3408
      %v4247 = vunpack.c.h.b16 %v3408
      %v4248 = vunpack.c.l.b16 %v3409
      %v4249 = vunpack.c.h.b16 %v3409
      %v4250 = vunpack.c.l.b16 %v3410
      %v4251 = vunpack.c.h.b16 %v3410
      %v4252 = vunpack.c.l.b16 %v3411
      %v4253 = vunpack.c.h.b16 %v3411
      %v4254 = vunpack.c.l.b16 %v3412
      %v4255 = vunpack.c.h.b16 %v3412
      %v4256 = vunpack.c.l.b16 %v3413
      %v4257 = vunpack.c.h.b16 %v3413
      %v4258 = vunpack.c.l.b16 %v3414
      %v4259 = vunpack.c.h.b16 %v3414
      %v4260 = vunpack.c.l.b16 %v3415
      %v4261 = vunpack.c.h.b16 %v3415
      %v4262 = vunpack.c.l.b16 %v3416
      %v4263 = vunpack.c.h.b16 %v3416
      %v4264 = vunpack.c.l.b16 %v3417
      %v4265 = vunpack.c.h.b16 %v3417
      %v4266 = vunpack.c.l.b16 %v3418
      %v4267 = vunpack.c.h.b16 %v3418
      %v4268 = vunpack.c.l.b16 %v3419
      %v4269 = vunpack.c.h.b16 %v3419
      %v4270 = vunpack.c.l.b16 %v3420
      %v4271 = vunpack.c.h.b16 %v3420
      %v4272 = vunpack.c.l.b16 %v3421
      %v4273 = vunpack.c.h.b16 %v3421
      %v4274 = vunpack.c.l.b16 %v3422
      %v4275 = vunpack.c.h.b16 %v3422
      %v4276 = vunpack.c.l.b16 %v3423
      %v4277 = vunpack.c.h.b16 %v3423
      %v4278 = vunpack.c.l.b16 %v3424
      %v4279 = vunpack.c.h.b16 %v3424
      %v4280 = vunpack.c.l.b16 %v3425
      %v4281 = vunpack.c.h.b16 %v3425
      %v4282 = vunpack.c.l.b16 %v3426
      %v4283 = vunpack.c.h.b16 %v3426
      %v4284 = vunpack.c.l.b16 %v3427
      %v4285 = vunpack.c.h.b16 %v3427
      %v4286 = vunpack.c.l.b16 %v3428
      %v4287 = vunpack.c.h.b16 %v3428
      %v4288 = vunpack.c.l.b16 %v3429
      %v4289 = vunpack.c.h.b16 %v3429
      %v4290 = vunpack.c.l.b16 %v3430
      %v4291 = vunpack.c.h.b16 %v3430
      %v4292 = vunpack.c.l.b16 %v3431
      %v4293 = vunpack.c.h.b16 %v3431
      %v4294 = vunpack.c.l.b16 %v3432
      %v4295 = vunpack.c.h.b16 %v3432
      %v4296 = vunpack.c.l.b16 %v3433
      %v4297 = vunpack.c.h.b16 %v3433
      %v4298 = vunpack.c.l.b16 %v3434
      %v4299 = vunpack.c.h.b16 %v3434
      %v4300 = vunpack.c.l.b16 %v3435
      %v4301 = vunpack.c.h.b16 %v3435
      %v4302 = vunpack.c.l.b16 %v3436
      %v4303 = vunpack.c.h.b16 %v3436
      %v4304 = vunpack.c.l.b16 %v3437
      %v4305 = vunpack.c.h.b16 %v3437
      %v4306 = vunpack.c.l.b16 %v3438
      %v4307 = vunpack.c.h.b16 %v3438
      %v4308 = vunpack.c.l.b16 %v3439
      %v4309 = vunpack.c.h.b16 %v3439
      %v4310 = vunpack.c.l.b16 %v3440
      %v4311 = vunpack.c.h.b16 %v3440
      %v4312 = vunpack.c.l.b16 %v3441
      %v4313 = vunpack.c.h.b16 %v3441
      %v4314 = vunpack.c.l.b16 %v3442
      %v4315 = vunpack.c.h.b16 %v3442
      %v4316 = vunpack.c.l.b16 %v3443
      %v4317 = vunpack.c.h.b16 %v3443
      %v4318 = vunpack.c.l.b16 %v3444
      %v4319 = vunpack.c.h.b16 %v3444
      %v4320 = vunpack.c.l.b16 %v3445
      %v4321 = vunpack.c.h.b16 %v3445
      %v4322 = vunpack.c.l.b16 %v3446
      %v4323 = vunpack.c.h.b16 %v3446
      %v4324 = vunpack.c.l.b16 %v3447
      %v4325 = vunpack.c.h.b16 %v3447
      %v4326 = vunpack.c.l.b16 %v3448
      %v4327 = vunpack.c.h.b16 %v3448
      %v4328 = vunpack.c.l.b16 %v3449
      %v4329 = vunpack.c.h.b16 %v3449
      %v4330 = vunpack.c.l.b16 %v3450
      %v4331 = vunpack.c.h.b16 %v3450
      %v4332 = vunpack.c.l.b16 %v3451
      %v4333 = vunpack.c.h.b16 %v3451
      %v4334 = vunpack.c.l.b16 %v3452
      %v4335 = vunpack.c.h.b16 %v3452
      %v4336 = vunpack.c.l.b16 %v3453
      %v4337 = vunpack.c.h.b16 %v3453
      %v4338 = vunpack.c.l.b16 %v3454
      %v4339 = vunpack.c.h.b16 %v3454
      %v4340 = vunpack.c.l.b16 %v3455
      %v4341 = vunpack.c.h.b16 %v3455
      %v4342 = vunpack.c.l.b16 %v3456
      %v4343 = vunpack.c.h.b16 %v3456
      %v4344 = vunpack.c.l.b16 %v3457
      %v4345 = vunpack.c.h.b16 %v3457
      %v4346 = vunpack.c.l.b16 %v3458
      %v4347 = vunpack.c.h.b16 %v3458
      %v4348 = vunpack.c.l.b16 %v3459
      %v4349 = vunpack.c.h.b16 %v3459
      %v4350 = vunpack.c.l.b16 %v3460
      %v4351 = vunpack.c.h.b16 %v3460
      %v4352 = vunpack.c.l.b16 %v3461
      %v4353 = vunpack.c.h.b16 %v3461
      %v4354 = vunpack.c.l.b16 %v3462
      %v4355 = vunpack.c.h.b16 %v3462
      %v4356 = vunpack.c.l.b16 %v3463
      %v4357 = vunpack.c.h.b16 %v3463
      %v4358 = vunpack.c.l.b16 %v3464
      %v4359 = vunpack.c.h.b16 %v3464
      %v4360 = vunpack.c.l.b16 %v3465
      %v4361 = vunpack.c.h.b16 %v3465
      %v4362 = vunpack.c.l.b16 %v3466
      %v4363 = vunpack.c.h.b16 %v3466
      %v4364 = vunpack.c.l.b16 %v3467
      %v4365 = vunpack.c.h.b16 %v3467
      %v4366 = vunpack.c.l.b16 %v3468
      %v4367 = vunpack.c.h.b16 %v3468
      %v4368 = vunpack.c.l.b16 %v3469
      %v4369 = vunpack.c.h.b16 %v3469
      %v4370 = vunpack.c.l.b16 %v3470
      %v4371 = vunpack.c.h.b16 %v3470
      %v4372 = vunpack.c.l.b16 %v3471
      %v4373 = vunpack.c.h.b16 %v3471
      %v4374 = vunpack.c.l.b16 %v3472
      %v4375 = vunpack.c.h.b16 %v3472
      %v4376 = vunpack.c.l.b16 %v3473
      %v4377 = vunpack.c.h.b16 %v3473
      %v4378 = vunpack.c.l.b16 %v3474
      %v4379 = vunpack.c.h.b16 %v3474
      %v4380 = vunpack.c.l.b16 %v3475
      %v4381 = vunpack.c.h.b16 %v3475
      %v4382 = vunpack.c.l.b16 %v3476
      %v4383 = vunpack.c.h.b16 %v3476
      %v4384 = vunpack.c.l.b16 %v3477
      %v4385 = vunpack.c.h.b16 %v3477
      %v4386 = vunpack.c.l.b16 %v3478
      %v4387 = vunpack.c.h.b16 %v3478
      %v4388 = vunpack.c.l.b16 %v3479
      %v4389 = vunpack.c.h.b16 %v3479
      %v4390 = vunpack.c.l.b16 %v3480
      %v4391 = vunpack.c.h.b16 %v3480
      %v4392 = vunpack.c.l.b16 %v3481
      %v4393 = vunpack.c.h.b16 %v3481
      %v4394 = vunpack.c.l.b16 %v3482
      %v4395 = vunpack.c.h.b16 %v3482
      %v4396 = vunpack.c.l.b16 %v3483
      %v4397 = vunpack.c.h.b16 %v3483
      %v4398 = vunpack.c.l.b16 %v3484
      %v4399 = vunpack.c.h.b16 %v3484
      %v4400 = vunpack.c.l.b16 %v3485
      %v4401 = vunpack.c.h.b16 %v3485
      %v4402 = vunpack.c.l.b16 %v3486
      %v4403 = vunpack.c.h.b16 %v3486
      %v4404 = vunpack.c.l.b16 %v3487
      %v4405 = vunpack.c.h.b16 %v3487
      %v4406 = vunpack.c.l.b16 %v3488
      %v4407 = vunpack.c.h.b16 %v3488
      %v4408 = vunpack.c.l.b16 %v3489
      %v4409 = vunpack.c.h.b16 %v3489
      %v4410 = vunpack.c.l.b16 %v3490
      %v4411 = vunpack.c.h.b16 %v3490
      %v4412 = vunpack.c.l.b16 %v3491
      %v4413 = vunpack.c.h.b16 %v3491
      %v4414 = vunpack.c.l.b16 %v3492
      %v4415 = vunpack.c.h.b16 %v3492
      %v4416 = vunpack.c.l.b16 %v3493
      %v4417 = vunpack.c.h.b16 %v3493
      %v4418 = vunpack.c.l.b16 %v3494
      %v4419 = vunpack.c.h.b16 %v3494
      %v4420 = vunpack.c.l.b16 %v3495
      %v4421 = vunpack.c.h.b16 %v3495
      %v4422 = vunpack.c.l.b16 %v3496
      %v4423 = vunpack.c.h.b16 %v3496
      %v4424 = vunpack.c.l.b16 %v3497
      %v4425 = vunpack.c.h.b16 %v3497
      %v4426 = vunpack.c.l.b16 %v3498
      %v4427 = vunpack.c.h.b16 %v3498
      %v4428 = vunpack.c.l.b16 %v3499
      %v4429 = vunpack.c.h.b16 %v3499
      %v4430 = vunpack.c.l.b16 %v3500
      %v4431 = vunpack.c.h.b16 %v3500
      %v4432 = vunpack.c.l.b16 %v3501
      %v4433 = vunpack.c.h.b16 %v3501
      %v4434 = vunpack.c.l.b16 %v3502
      %v4435 = vunpack.c.h.b16 %v3502
      %v4436 = vunpack.c.l.b16 %v3503
      %v4437 = vunpack.c.h.b16 %v3503
      %v4438 = vunpack.c.l.b16 %v3504
      %v4439 = vunpack.c.h.b16 %v3504
      %v4440 = vunpack.c.l.b16 %v3505
      %v4441 = vunpack.c.h.b16 %v3505
      %v4442 = vunpack.c.l.b16 %v3506
      %v4443 = vunpack.c.h.b16 %v3506
      %v4444 = vunpack.c.l.b16 %v3507
      %v4445 = vunpack.c.h.b16 %v3507
      %v4446 = vunpack.c.l.b16 %v3508
      %v4447 = vunpack.c.h.b16 %v3508
      %v4448 = vunpack.c.l.b16 %v3509
      %v4449 = vunpack.c.h.b16 %v3509
      %v4450 = vunpack.c.l.b16 %v3510
      %v4451 = vunpack.c.h.b16 %v3510
      %v4452 = vunpack.c.l.b16 %v3511
      %v4453 = vunpack.c.h.b16 %v3511
      %v4454 = vunpack.c.l.b16 %v3512
      %v4455 = vunpack.c.h.b16 %v3512
      %v4456 = vunpack.c.l.b16 %v3513
      %v4457 = vunpack.c.h.b16 %v3513
      %v4458 = vunpack.c.l.b16 %v3514
      %v4459 = vunpack.c.h.b16 %v3514
      %v4460 = vunpack.c.l.b16 %v3515
      %v4461 = vunpack.c.h.b16 %v3515
      %v4462 = vunpack.c.l.b16 %v3516
      %v4463 = vunpack.c.h.b16 %v3516
      %v4464 = vunpack.c.l.b16 %v3517
      %v4465 = vunpack.c.h.b16 %v3517
      %v4466 = vunpack.c.l.b16 %v3518
      %v4467 = vunpack.c.h.b16 %v3518
      %v4468 = vunpack.c.l.b16 %v3519
      %v4469 = vunpack.c.h.b16 %v3519
      %v4470 = vunpack.c.l.b16 %v3520
      %v4471 = vunpack.c.h.b16 %v3520
      %v4472 = vunpack.c.l.b16 %v3521
      %v4473 = vunpack.c.h.b16 %v3521
      %v4474 = vunpack.c.l.b16 %v3522
      %v4475 = vunpack.c.h.b16 %v3522
      %v4476 = vunpack.c.l.b16 %v3523
      %v4477 = vunpack.c.h.b16 %v3523
      %v4478 = vunpack.c.l.b16 %v3524
      %v4479 = vunpack.c.h.b16 %v3524
      %v4480 = vunpack.c.l.b16 %v3525
      %v4481 = vunpack.c.h.b16 %v3525
      %v4482 = vunpack.c.l.b16 %v3526
      %v4483 = vunpack.c.h.b16 %v3526
      %v4484 = vunpack.c.l.b16 %v3527
      %v4485 = vunpack.c.h.b16 %v3527
      %v4486 = vunpack.c.l.b16 %v3528
      %v4487 = vunpack.c.h.b16 %v3528
      %v4488 = vunpack.c.l.b16 %v3529
      %v4489 = vunpack.c.h.b16 %v3529
      %v4490 = vunpack.c.l.b16 %v3530
      %v4491 = vunpack.c.h.b16 %v3530
      %v4492 = vunpack.c.l.b16 %v3531
      %v4493 = vunpack.c.h.b16 %v3531
      %v4494 = vunpack.c.l.b16 %v3532
      %v4495 = vunpack.c.h.b16 %v3532
      %v4496 = vunpack.c.l.b16 %v3533
      %v4497 = vunpack.c.h.b16 %v3533
      %v4498 = vunpack.c.l.b16 %v3534
      %v4499 = vunpack.c.h.b16 %v3534
      %v4500 = vunpack.c.l.b16 %v3535
      %v4501 = vunpack.c.h.b16 %v3535
      %v4502 = vunpack.c.l.b16 %v3536
      %v4503 = vunpack.c.h.b16 %v3536
      %v4504 = vunpack.c.l.b16 %v3537
      %v4505 = vunpack.c.h.b16 %v3537
      %v4506 = vunpack.c.l.b16 %v3538
      %v4507 = vunpack.c.h.b16 %v3538
      %v4508 = vunpack.c.l.b16 %v3539
      %v4509 = vunpack.c.h.b16 %v3539
      %v4510 = vunpack.c.l.b16 %v3540
      %v4511 = vunpack.c.h.b16 %v3540
      %v4512 = vunpack.c.l.b16 %v3541
      %v4513 = vunpack.c.h.b16 %v3541
      %v4514 = vunpack.c.l.b16 %v3542
      %v4515 = vunpack.c.h.b16 %v3542
      %v4516 = vunpack.c.l.b16 %v3543
      %v4517 = vunpack.c.h.b16 %v3543
      %v4518 = vunpack.c.l.b16 %v3544
      %v4519 = vunpack.c.h.b16 %v3544
      %v4520 = vunpack.c.l.b16 %v3545
      %v4521 = vunpack.c.h.b16 %v3545
      %v4522 = vunpack.c.l.b16 %v3546
      %v4523 = vunpack.c.h.b16 %v3546
      %v4524 = vunpack.c.l.b16 %v3547
      %v4525 = vunpack.c.h.b16 %v3547
      %v4526 = vunpack.c.l.b16 %v3548
      %v4527 = vunpack.c.h.b16 %v3548
      %v4528 = vunpack.c.l.b16 %v3549
      %v4529 = vunpack.c.h.b16 %v3549
      %v4530 = vunpack.c.l.b16 %v3550
      %v4531 = vunpack.c.h.b16 %v3550
      %v4532 = vunpack.c.l.b16 %v3551
      %v4533 = vunpack.c.h.b16 %v3551
      %v4534 = vunpack.c.l.b16 %v3552
      %v4535 = vunpack.c.h.b16 %v3552
      %v4536 = vunpack.c.l.b16 %v3553
      %v4537 = vunpack.c.h.b16 %v3553
      %v4538 = vunpack.c.l.b16 %v3554
      %v4539 = vunpack.c.h.b16 %v3554
      %v4540 = vunpack.c.l.b16 %v3555
      %v4541 = vunpack.c.h.b16 %v3555
      %v4542 = vunpack.c.l.b16 %v3556
      %v4543 = vunpack.c.h.b16 %v3556
      %v4544 = vunpack.c.l.b16 %v3557
      %v4545 = vunpack.c.h.b16 %v3557
      %v4546 = vunpack.c.l.b16 %v3558
      %v4547 = vunpack.c.h.b16 %v3558
      %v4548 = vunpack.c.l.b16 %v3559
      %v4549 = vunpack.c.h.b16 %v3559
      %v4550 = vunpack.c.l.b16 %v3560
      %v4551 = vunpack.c.h.b16 %v3560
      %v4552 = vunpack.c.l.b16 %v3561
      %v4553 = vunpack.c.h.b16 %v3561
      %v4554 = vunpack.c.l.b16 %v3562
      %v4555 = vunpack.c.h.b16 %v3562
      %v4556 = vunpack.c.l.b16 %v3563
      %v4557 = vunpack.c.h.b16 %v3563
      %v4558 = vunpack.c.l.b16 %v3564
      %v4559 = vunpack.c.h.b16 %v3564
      %v4560 = vunpack.c.l.b16 %v3565
      %v4561 = vunpack.c.h.b16 %v3565
      %v4562 = vunpack.c.l.b16 %v3566
      %v4563 = vunpack.c.h.b16 %v3566
      %v4564 = vunpack.c.l.b16 %v3567
      %v4565 = vunpack.c.h.b16 %v3567
      %v4566 = vunpack.c.l.b16 %v3568
      %v4567 = vunpack.c.h.b16 %v3568
      %v4568 = vunpack.c.l.b16 %v3569
      %v4569 = vunpack.c.h.b16 %v3569
      %v4570 = vunpack.c.l.b16 %v3570
      %v4571 = vunpack.c.h.b16 %v3570
      %v4572 = vunpack.c.l.b16 %v3571
      %v4573 = vunpack.c.h.b16 %v3571
      %v4574 = vunpack.c.l.b16 %v3572
      %v4575 = vunpack.c.h.b16 %v3572
      %v4576 = vunpack.c.l.b16 %v3573
      %v4577 = vunpack.c.h.b16 %v3573
      %v4578 = vunpack.c.l.b16 %v3574
      %v4579 = vunpack.c.h.b16 %v3574
      %v4580 = vunpack.c.l.b16 %v3575
      %v4581 = vunpack.c.h.b16 %v3575
      %v4582 = vunpack.c.l.b16 %v3576
      %v4583 = vunpack.c.h.b16 %v3576
      %v4584 = vunpack.c.l.b16 %v3577
      %v4585 = vunpack.c.h.b16 %v3577
      %v4586 = vunpack.c.l.b16 %v3578
      %v4587 = vunpack.c.h.b16 %v3578
      %v4588 = vunpack.c.l.b16 %v3579
      %v4589 = vunpack.c.h.b16 %v3579
      %v4590 = vunpack.c.l.b16 %v3580
      %v4591 = vunpack.c.h.b16 %v3580
      %v4592 = vunpack.c.l.b16 %v3581
      %v4593 = vunpack.c.h.b16 %v3581
      %v4594 = vunpack.c.l.b16 %v3582
      %v4595 = vunpack.c.h.b16 %v3582
      %v4596 = vunpack.c.l.b16 %v3583
      %v4597 = vunpack.c.h.b16 %v3583
      %v4598 = vunpack.c.l.b16 %v3584
      %v4599 = vunpack.c.h.b16 %v3584
      %v4600 = vunpack.c.l.b16 %v3585
      %v4601 = vunpack.c.h.b16 %v3585
      %v4602 = vunpack.c.l.b16 %v3586
      %v4603 = vunpack.c.h.b16 %v3586
      %v4604 = vunpack.c.l.b16 %v3587
      %v4605 = vunpack.c.h.b16 %v3587
      %v4606 = vunpack.c.l.b16 %v3588
      %v4607 = vunpack.c.h.b16 %v3588
      %v4608 = vunpack.c.l.b16 %v3589
      %v4609 = vunpack.c.h.b16 %v3589
      %v4610 = vunpack.c.l.b16 %v3590
      %v4611 = vunpack.c.h.b16 %v3590
      %v4612 = vunpack.c.l.b16 %v3591
      %v4613 = vunpack.c.h.b16 %v3591
      %v4614 = vunpack.c.l.b16 %v3592
      %v4615 = vunpack.c.h.b16 %v3592
      %v4616 = vunpack.c.l.b16 %v3593
      %v4617 = vunpack.c.h.b16 %v3593
      %v4618 = vunpack.c.l.b16 %v3594
      %v4619 = vunpack.c.h.b16 %v3594
      %v4620 = vunpack.c.l.b16 %v3595
      %v4621 = vunpack.c.h.b16 %v3595
      %v4622 = vunpack.c.l.b16 %v3596
      %v4623 = vunpack.c.h.b16 %v3596
      %v4624 = vunpack.c.l.b16 %v3597
      %v4625 = vunpack.c.h.b16 %v3597
      %v4626 = vunpack.c.l.b16 %v3598
      %v4627 = vunpack.c.h.b16 %v3598
      %v4628 = vunpack.c.l.b16 %v3599
      %v4629 = vunpack.c.h.b16 %v3599
      %v4630 = vunpack.c.l.b16 %v3600
      %v4631 = vunpack.c.h.b16 %v3600
      %v4632 = vunpack.c.l.b16 %v3601
      %v4633 = vunpack.c.h.b16 %v3601
      %v4634 = vunpack.c.l.b16 %v3602
      %v4635 = vunpack.c.h.b16 %v3602
      %v4636 = vunpack.c.l.b16 %v3603
      %v4637 = vunpack.c.h.b16 %v3603
      %v4638 = vunpack.c.l.b16 %v3604
      %v4639 = vunpack.c.h.b16 %v3604
      %v4640 = vunpack.c.l.b16 %v3605
      %v4641 = vunpack.c.h.b16 %v3605
      %v4642 = vunpack.c.l.b16 %v3606
      %v4643 = vunpack.c.h.b16 %v3606
      %v4644 = vunpack.c.l.b16 %v3607
      %v4645 = vunpack.c.h.b16 %v3607
      %v4646 = vunpack.c.l.b16 %v3608
      %v4647 = vunpack.c.h.b16 %v3608
      %v4648 = vunpack.c.l.b16 %v3609
      %v4649 = vunpack.c.h.b16 %v3609
      %v4650 = vunpack.c.l.b16 %v3610
      %v4651 = vunpack.c.h.b16 %v3610
      %v4652 = vunpack.c.l.b16 %v3611
      %v4653 = vunpack.c.h.b16 %v3611
      %v4654 = vunpack.c.l.b16 %v3612
      %v4655 = vunpack.c.h.b16 %v3612
      %v4656 = vunpack.c.l.b16 %v3613
      %v4657 = vunpack.c.h.b16 %v3613
      %v4658 = vunpack.c.l.b16 %v3614
      %v4659 = vunpack.c.h.b16 %v3614
      %v4660 = vunpack.c.l.b16 %v3615
      %v4661 = vunpack.c.h.b16 %v3615
      %v4662 = vunpack.c.l.b16 %v3616
      %v4663 = vunpack.c.h.b16 %v3616
      %v4664 = vunpack.c.l.b16 %v3617
      %v4665 = vunpack.c.h.b16 %v3617
      %v4666 = vunpack.c.l.b16 %v3618
      %v4667 = vunpack.c.h.b16 %v3618
      %v4668 = vunpack.c.l.b16 %v3619
      %v4669 = vunpack.c.h.b16 %v3619
      %v4670 = vunpack.c.l.b16 %v3620
      %v4671 = vunpack.c.h.b16 %v3620
      %v4672 = vunpack.c.l.b16 %v3621
      %v4673 = vunpack.c.h.b16 %v3621
      %v4674 = vunpack.c.l.b16 %v3622
      %v4675 = vunpack.c.h.b16 %v3622
      %v4676 = vunpack.c.l.b16 %v3623
      %v4677 = vunpack.c.h.b16 %v3623
      %v4678 = vunpack.c.l.b16 %v3624
      %v4679 = vunpack.c.h.b16 %v3624
      %v4680 = vunpack.c.l.b16 %v3625
      %v4681 = vunpack.c.h.b16 %v3625
      %v4682 = vunpack.c.l.b16 %v3626
      %v4683 = vunpack.c.h.b16 %v3626
      %v4684 = vunpack.c.l.b16 %v3627
      %v4685 = vunpack.c.h.b16 %v3627
      %v4686 = vunpack.c.l.b16 %v3628
      %v4687 = vunpack.c.h.b16 %v3628
      %v4688 = vunpack.c.l.b16 %v3629
      %v4689 = vunpack.c.h.b16 %v3629
      %v4690 = vunpack.c.l.b16 %v3630
      %v4691 = vunpack.c.h.b16 %v3630
      %v4692 = vunpack.c.l.b16 %v3631
      %v4693 = vunpack.c.h.b16 %v3631
      %v4694 = vunpack.c.l.b16 %v3632
      %v4695 = vunpack.c.h.b16 %v3632
      %v4696 = vunpack.c.l.b16 %v3633
      %v4697 = vunpack.c.h.b16 %v3633
      %v4698 = vunpack.c.l.b16 %v3634
      %v4699 = vunpack.c.h.b16 %v3634
      %v4700 = vunpack.c.l.b16 %v3635
      %v4701 = vunpack.c.h.b16 %v3635
      %v4702 = vunpack.c.l.b16 %v3636
      %v4703 = vunpack.c.h.b16 %v3636
      %v4704 = vunpack.c.l.b16 %v3637
      %v4705 = vunpack.c.h.b16 %v3637
      %v4706 = vunpack.c.l.b16 %v3638
      %v4707 = vunpack.c.h.b16 %v3638
      %v4708 = vunpack.c.l.b16 %v3639
      %v4709 = vunpack.c.h.b16 %v3639
      %v4710 = vunpack.c.l.b16 %v3640
      %v4711 = vunpack.c.h.b16 %v3640
      %v4712 = vunpack.c.l.b16 %v3641
      %v4713 = vunpack.c.h.b16 %v3641
      %v4714 = vunpack.c.l.b16 %v3642
      %v4715 = vunpack.c.h.b16 %v3642
      %v4716 = vunpack.c.l.b16 %v3643
      %v4717 = vunpack.c.h.b16 %v3643
      %v4718 = vunpack.c.l.b16 %v3644
      %v4719 = vunpack.c.h.b16 %v3644
      %v4720 = vunpack.c.l.b16 %v3645
      %v4721 = vunpack.c.h.b16 %v3645
      %v4722 = vunpack.c.l.b16 %v3646
      %v4723 = vunpack.c.h.b16 %v3646
      %v4724 = vunpack.c.l.b16 %v3647
      %v4725 = vunpack.c.h.b16 %v3647
      %v4726 = vunpack.c.l.b16 %v3648
      %v4727 = vunpack.c.h.b16 %v3648
      %v4728 = vunpack.c.l.b16 %v3649
      %v4729 = vunpack.c.h.b16 %v3649
      %v4730 = vunpack.c.l.b16 %v3650
      %v4731 = vunpack.c.h.b16 %v3650
      %v4732 = vunpack.c.l.b16 %v3651
      %v4733 = vunpack.c.h.b16 %v3651
      %v4734 = vunpack.c.l.b16 %v3652
      %v4735 = vunpack.c.h.b16 %v3652
      %v4736 = vunpack.c.l.b16 %v3653
      %v4737 = vunpack.c.h.b16 %v3653
      %v4738 = vunpack.c.l.b16 %v3654
      %v4739 = vunpack.c.h.b16 %v3654
      %v4740 = vunpack.c.l.b16 %v3655
      %v4741 = vunpack.c.h.b16 %v3655
      %v4742 = vunpack.c.l.b16 %v3656
      %v4743 = vunpack.c.h.b16 %v3656
      %v4744 = vunpack.c.l.b16 %v3657
      %v4745 = vunpack.c.h.b16 %v3657
      %v4746 = vunpack.c.l.b16 %v3658
      %v4747 = vunpack.c.h.b16 %v3658
      %v4748 = vunpack.c.l.b16 %v3659
      %v4749 = vunpack.c.h.b16 %v3659
      %v4750 = vunpack.c.l.b16 %v3660
      %v4751 = vunpack.c.h.b16 %v3660
      %v4752 = vunpack.c.l.b16 %v3661
      %v4753 = vunpack.c.h.b16 %v3661
      %v4754 = vunpack.c.l.b16 %v3662
      %v4755 = vunpack.c.h.b16 %v3662
      %v4756 = vunpack.c.l.b16 %v3663
      %v4757 = vunpack.c.h.b16 %v3663
      %v4758 = vunpack.c.l.b16 %v3664
      %v4759 = vunpack.c.h.b16 %v3664
      %v4760 = vunpack.c.l.b16 %v3665
      %v4761 = vunpack.c.h.b16 %v3665
      %v4762 = vunpack.c.l.b16 %v3666
      %v4763 = vunpack.c.h.b16 %v3666
      %v4764 = vunpack.c.l.b16 %v3667
      %v4765 = vunpack.c.h.b16 %v3667
      %v4766 = vunpack.c.l.b16 %v3668
      %v4767 = vunpack.c.h.b16 %v3668
      %v4768 = vunpack.c.l.b16 %v3669
      %v4769 = vunpack.c.h.b16 %v3669
      %v4770 = vunpack.c.l.b16 %v3670
      %v4771 = vunpack.c.h.b16 %v3670
      %v4772 = vunpack.c.l.b16 %v3671
      %v4773 = vunpack.c.h.b16 %v3671
      %v4774 = vunpack.c.l.b16 %v3672
      %v4775 = vunpack.c.h.b16 %v3672
      %v4776 = vunpack.c.l.b16 %v3673
      %v4777 = vunpack.c.h.b16 %v3673
      %v4778 = vunpack.c.l.b16 %v3674
      %v4779 = vunpack.c.h.b16 %v3674
      %v4780 = vunpack.c.l.b16 %v3675
      %v4781 = vunpack.c.h.b16 %v3675
      %v4782 = vunpack.c.l.b16 %v3676
      %v4783 = vunpack.c.h.b16 %v3676
      %v4784 = vunpack.c.l.b16 %v3677
      %v4785 = vunpack.c.h.b16 %v3677
      %v4786 = vunpack.c.l.b16 %v3678
      %v4787 = vunpack.c.h.b16 %v3678
      %v4788 = vunpack.c.l.b16 %v3679
      %v4789 = vunpack.c.h.b16 %v3679
      %v4790 = vunpack.c.l.b16 %v3680
      %v4791 = vunpack.c.h.b16 %v3680
      %v4792 = vunpack.c.l.b16 %v3681
      %v4793 = vunpack.c.h.b16 %v3681
      %v4794 = vunpack.c.l.b16 %v3682
      %v4795 = vunpack.c.h.b16 %v3682
      %v4796 = vunpack.c.l.b16 %v3683
      %v4797 = vunpack.c.h.b16 %v3683
      %v4798 = vunpack.c.l.b16 %v3684
      %v4799 = vunpack.c.h.b16 %v3684
      %v4800 = vunpack.c.l.b16 %v3685
      %v4801 = vunpack.c.h.b16 %v3685
      %v4802 = vunpack.c.l.b16 %v3686
      %v4803 = vunpack.c.h.b16 %v3686
      %v4804 = vunpack.c.l.b16 %v3687
      %v4805 = vunpack.c.h.b16 %v3687
      %v4806 = vunpack.c.l.b16 %v3688
      %v4807 = vunpack.c.h.b16 %v3688
      %v4808 = vunpack.c.l.b16 %v3689
      %v4809 = vunpack.c.h.b16 %v3689
      %v4810 = vunpack.c.l.b16 %v3690
      %v4811 = vunpack.c.h.b16 %v3690
      %v4812 = vunpack.c.l.b16 %v3691
      %v4813 = vunpack.c.h.b16 %v3691
      %v4814 = vunpack.c.l.b16 %v3692
      %v4815 = vunpack.c.h.b16 %v3692
      %v4816 = vunpack.c.l.b16 %v3693
      %v4817 = vunpack.c.h.b16 %v3693
      %v4818 = vunpack.c.l.b16 %v3694
      %v4819 = vunpack.c.h.b16 %v3694
      %v4820 = vunpack.c.l.b16 %v3695
      %v4821 = vunpack.c.h.b16 %v3695
      %v4822 = vunpack.c.l.b16 %v3696
      %v4823 = vunpack.c.h.b16 %v3696
      %v4824 = vunpack.c.l.b16 %v3697
      %v4825 = vunpack.c.h.b16 %v3697
      %v4826 = vunpack.c.l.b16 %v3698
      %v4827 = vunpack.c.h.b16 %v3698
      %v4828 = vunpack.c.l.b16 %v3699
      %v4829 = vunpack.c.h.b16 %v3699
      %v4830 = vunpack.c.l.b16 %v3700
      %v4831 = vunpack.c.h.b16 %v3700
      %v4832 = vunpack.c.l.b16 %v3701
      %v4833 = vunpack.c.h.b16 %v3701
      %v4834 = vunpack.c.l.b16 %v3702
      %v4835 = vunpack.c.h.b16 %v3702
      %v4836 = vunpack.c.l.b16 %v3703
      %v4837 = vunpack.c.h.b16 %v3703
      %v4838 = vunpack.c.l.b16 %v3704
      %v4839 = vunpack.c.h.b16 %v3704
      %v4840 = vunpack.c.l.b16 %v3705
      %v4841 = vunpack.c.h.b16 %v3705
      %v4842 = vunpack.c.l.b16 %v3706
      %v4843 = vunpack.c.h.b16 %v3706
      %v4844 = vunpack.c.l.b16 %v3707
      %v4845 = vunpack.c.h.b16 %v3707
      %v4846 = vunpack.c.l.b16 %v3708
      %v4847 = vunpack.c.h.b16 %v3708
      %v4848 = vunpack.c.l.b16 %v3709
      %v4849 = vunpack.c.h.b16 %v3709
      %v4850 = vunpack.c.l.b16 %v3710
      %v4851 = vunpack.c.h.b16 %v3710
      %v4852 = vunpack.c.l.b16 %v3711
      %v4853 = vunpack.c.h.b16 %v3711
      %v4854 = vunpack.c.l.b16 %v3712
      %v4855 = vunpack.c.h.b16 %v3712
      %v4856 = vunpack.c.l.b16 %v3713
      %v4857 = vunpack.c.h.b16 %v3713
      %v4858 = vunpack.c.l.b16 %v3714
      %v4859 = vunpack.c.h.b16 %v3714
      %v4860 = vunpack.c.l.b16 %v3715
      %v4861 = vunpack.c.h.b16 %v3715
      %v4862 = vunpack.c.l.b16 %v3716
      %v4863 = vunpack.c.h.b16 %v3716
      %v4864 = vunpack.c.l.b16 %v3717
      %v4865 = vunpack.c.h.b16 %v3717
      %v4866 = vunpack.c.l.b16 %v3718
      %v4867 = vunpack.c.h.b16 %v3718
      %v4868 = vunpack.c.l.b16 %v3719
      %v4869 = vunpack.c.h.b16 %v3719
      %v4870 = vunpack.c.l.b16 %v3720
      %v4871 = vunpack.c.h.b16 %v3720
      %v4872 = vunpack.c.l.b16 %v3721
      %v4873 = vunpack.c.h.b16 %v3721
      %v4874 = vunpack.c.l.b16 %v3722
      %v4875 = vunpack.c.h.b16 %v3722
      %v4876 = vunpack.c.l.b16 %v3723
      %v4877 = vunpack.c.h.b16 %v3723
      %v4878 = vunpack.c.l.b16 %v3724
      %v4879 = vunpack.c.h.b16 %v3724
      %v4880 = vunpack.c.l.b16 %v3725
      %v4881 = vunpack.c.h.b16 %v3725
      %v4882 = vunpack.c.l.b16 %v3726
      %v4883 = vunpack.c.h.b16 %v3726
      %v4884 = vunpack.c.l.b16 %v3727
      %v4885 = vunpack.c.h.b16 %v3727
      %v4886 = vunpack.c.l.b16 %v3728
      %v4887 = vunpack.c.h.b16 %v3728
      %v4888 = vunpack.c.l.b16 %v3729
      %v4889 = vunpack.c.h.b16 %v3729
      %v4890 = vunpack.c.l.b16 %v3730
      %v4891 = vunpack.c.h.b16 %v3730
      %v4892 = vunpack.c.l.b16 %v3731
      %v4893 = vunpack.c.h.b16 %v3731
      %v4894 = vunpack.c.l.b16 %v3732
      %v4895 = vunpack.c.h.b16 %v3732
      %v4896 = vunpack.c.l.b16 %v3733
      %v4897 = vunpack.c.h.b16 %v3733
      %v4898 = vunpack.c.l.b16 %v3734
      %v4899 = vunpack.c.h.b16 %v3734
      %v4900 = vunpack.c.l.b16 %v3735
      %v4901 = vunpack.c.h.b16 %v3735
      %v4902 = vunpack.c.l.b16 %v3736
      %v4903 = vunpack.c.h.b16 %v3736
      %v4904 = vunpack.c.l.b16 %v3737
      %v4905 = vunpack.c.h.b16 %v3737
      %v4906 = vunpack.c.l.b16 %v3738
      %v4907 = vunpack.c.h.b16 %v3738
      %v4908 = vunpack.c.l.b16 %v3739
      %v4909 = vunpack.c.h.b16 %v3739
      %v4910 = vunpack.c.l.b16 %v3740
      %v4911 = vunpack.c.h.b16 %v3740
      %v4912 = vunpack.c.l.b16 %v3741
      %v4913 = vunpack.c.h.b16 %v3741
      %v4914 = vunpack.c.l.b16 %v3742
      %v4915 = vunpack.c.h.b16 %v3742
      %v4916 = vpack.c.b16 %v4152, %v4148
      %v4917 = vpack.c.b16 %v4153, %v4149
      %v4918 = vpack.c.b16 %v4154, %v4150
      %v4919 = vpack.c.b16 %v4155, %v4151
      %v4920 = vpack.c.b16 %v4160, %v4156
      %v4921 = vpack.c.b16 %v4161, %v4157
      %v4922 = vpack.c.b16 %v4162, %v4158
      %v4923 = vpack.c.b16 %v4163, %v4159
      %v4924 = vpack.c.b16 %v4168, %v4164
      %v4925 = vpack.c.b16 %v4169, %v4165
      %v4926 = vpack.c.b16 %v4170, %v4166
      %v4927 = vpack.c.b16 %v4171, %v4167
      %v4928 = vpack.c.b16 %v4176, %v4172
      %v4929 = vpack.c.b16 %v4177, %v4173
      %v4930 = vpack.c.b16 %v4178, %v4174
      %v4931 = vpack.c.b16 %v4179, %v4175
      %v4932 = vpack.c.b16 %v4184, %v4180
      %v4933 = vpack.c.b16 %v4185, %v4181
      %v4934 = vpack.c.b16 %v4186, %v4182
      %v4935 = vpack.c.b16 %v4187, %v4183
      %v4936 = vpack.c.b16 %v4192, %v4188
      %v4937 = vpack.c.b16 %v4193, %v4189
      %v4938 = vpack.c.b16 %v4194, %v4190
      %v4939 = vpack.c.b16 %v4195, %v4191
      %v4940 = vpack.c.b16 %v4200, %v4196
      %v4941 = vpack.c.b16 %v4201, %v4197
      %v4942 = vpack.c.b16 %v4202, %v4198
      %v4943 = vpack.c.b16 %v4203, %v4199
      %v4944 = vpack.c.b16 %v4208, %v4204
      %v4945 = vpack.c.b16 %v4209, %v4205
      %v4946 = vpack.c.b16 %v4210, %v4206
      %v4947 = vpack.c.b16 %v4211, %v4207
      %v4948 = vpack.c.b16 %v4216, %v4212
      %v4949 = vpack.c.b16 %v4217, %v4213
      %v4950 = vpack.c.b16 %v4218, %v4214
      %v4951 = vpack.c.b16 %v4219, %v4215
      %v4952 = vpack.c.b16 %v4224, %v4220
      %v4953 = vpack.c.b16 %v4225, %v4221
      %v4954 = vpack.c.b16 %v4226, %v4222
      %v4955 = vpack.c.b16 %v4227, %v4223
      %v4956 = vpack.c.b16 %v4232, %v4228
      %v4957 = vpack.c.b16 %v4233, %v4229
      %v4958 = vpack.c.b16 %v4234, %v4230
      %v4959 = vpack.c.b16 %v4235, %v4231
      %v4960 = vpack.c.b16 %v4240, %v4236
      %v4961 = vpack.c.b16 %v4241, %v4237
      %v4962 = vpack.c.b16 %v4242, %v4238
      %v4963 = vpack.c.b16 %v4243, %v4239
      %v4964 = vpack.c.b16 %v4248, %v4244
      %v4965 = vpack.c.b16 %v4249, %v4245
      %v4966 = vpack.c.b16 %v4250, %v4246
      %v4967 = vpack.c.b16 %v4251, %v4247
      %v4968 = vpack.c.b16 %v4256, %v4252
      %v4969 = vpack.c.b16 %v4257, %v4253
      %v4970 = vpack.c.b16 %v4258, %v4254
      %v4971 = vpack.c.b16 %v4259, %v4255
      %v4972 = vpack.c.b16 %v4264, %v4260
      %v4973 = vpack.c.b16 %v4265, %v4261
      %v4974 = vpack.c.b16 %v4266, %v4262
      %v4975 = vpack.c.b16 %v4267, %v4263
      %v4976 = vpack.c.b16 %v4272, %v4268
      %v4977 = vpack.c.b16 %v4273, %v4269
      %v4978 = vpack.c.b16 %v4274, %v4270
      %v4979 = vpack.c.b16 %v4275, %v4271
      %v4980 = vpack.c.b16 %v4280, %v4276
      %v4981 = vpack.c.b16 %v4281, %v4277
      %v4982 = vpack.c.b16 %v4282, %v4278
      %v4983 = vpack.c.b16 %v4283, %v4279
      %v4984 = vpack.c.b16 %v4288, %v4284
      %v4985 = vpack.c.b16 %v4289, %v4285
      %v4986 = vpack.c.b16 %v4290, %v4286
      %v4987 = vpack.c.b16 %v4291, %v4287
      %v4988 = vpack.c.b16 %v4296, %v4292
      %v4989 = vpack.c.b16 %v4297, %v4293
      %v4990 = vpack.c.b16 %v4298, %v4294
      %v4991 = vpack.c.b16 %v4299, %v4295
      %v4992 = vpack.c.b16 %v4304, %v4300
      %v4993 = vpack.c.b16 %v4305, %v4301
      %v4994 = vpack.c.b16 %v4306, %v4302
      %v4995 = vpack.c.b16 %v4307, %v4303
      %v4996 = vpack.c.b16 %v4312, %v4308
      %v4997 = vpack.c.b16 %v4313, %v4309
      %v4998 = vpack.c.b16 %v4314, %v4310
      %v4999 = vpack.c.b16 %v4315, %v4311
      %v5000 = vpack.c.b16 %v4320, %v4316
      %v5001 = vpack.c.b16 %v4321, %v4317
      %v5002 = vpack.c.b16 %v4322, %v4318
      %v5003 = vpack.c.b16 %v4323, %v4319
      %v5004 = vpack.c.b16 %v4328, %v4324
      %v5005 = vpack.c.b16 %v4329, %v4325
      %v5006 = vpack.c.b16 %v4330, %v4326
      %v5007 = vpack.c.b16 %v4331, %v4327
      %v5008 = vpack.c.b16 %v4336, %v4332
      %v5009 = vpack.c.b16 %v4337, %v4333
      %v5010 = vpack.c.b16 %v4338, %v4334
      %v5011 = vpack.c.b16 %v4339, %v4335
      %v5012 = vpack.c.b16 %v4344, %v4340
      %v5013 = vpack.c.b16 %v4345, %v4341
      %v5014 = vpack.c.b16 %v4346, %v4342
      %v5015 = vpack.c.b16 %v4347, %v4343
      %v5016 = vpack.c.b16 %v4352, %v4348
      %v5017 = vpack.c.b16 %v4353, %v4349
      %v5018 = vpack.c.b16 %v4354, %v4350
      %v5019 = vpack.c.b16 %v4355, %v4351
      %v5020 = vpack.c.b16 %v4360, %v4356
      %v5021 = vpack.c.b16 %v4361, %v4357
      %v5022 = vpack.c.b16 %v4362, %v4358
      %v5023 = vpack.c.b16 %v4363, %v4359
      %v5024 = vpack.c.b16 %v4368, %v4364
      %v5025 = vpack.c.b16 %v4369, %v4365
      %v5026 = vpack.c.b16 %v4370, %v4366
      %v5027 = vpack.c.b16 %v4371, %v4367
      %v5028 = vpack.c.b16 %v4376, %v4372
      %v5029 = vpack.c.b16 %v4377, %v4373
      %v5030 = vpack.c.b16 %v4378, %v4374
      %v5031 = vpack.c.b16 %v4379, %v4375
      %v5032 = vpack.c.b16 %v4384, %v4380
      %v5033 = vpack.c.b16 %v4385, %v4381
      %v5034 = vpack.c.b16 %v4386, %v4382
      %v5035 = vpack.c.b16 %v4387, %v4383
      %v5036 = vpack.c.b16 %v4392, %v4388
      %v5037 = vpack.c.b16 %v4393, %v4389
      %v5038 = vpack.c.b16 %v4394, %v4390
      %v5039 = vpack.c.b16 %v4395, %v4391
      %v5040 = vpack.c.b16 %v4400, %v4396
      %v5041 = vpack.c.b16 %v4401, %v4397
      %v5042 = vpack.c.b16 %v4402, %v4398
      %v5043 = vpack.c.b16 %v4403, %v4399
      %v5044 = vpack.c.b16 %v4408, %v4404
      %v5045 = vpack.c.b16 %v4409, %v4405
      %v5046 = vpack.c.b16 %v4410, %v4406
      %v5047 = vpack.c.b16 %v4411, %v4407
      %v5048 = vpack.c.b16 %v4416, %v4412
      %v5049 = vpack.c.b16 %v4417, %v4413
      %v5050 = vpack.c.b16 %v4418, %v4414
      %v5051 = vpack.c.b16 %v4419, %v4415
      %v5052 = vpack.c.b16 %v4424, %v4420
      %v5053 = vpack.c.b16 %v4425, %v4421
      %v5054 = vpack.c.b16 %v4426, %v4422
      %v5055 = vpack.c.b16 %v4427, %v4423
      %v5056 = vpack.c.b16 %v4432, %v4428
      %v5057 = vpack.c.b16 %v4433, %v4429
      %v5058 = vpack.c.b16 %v4434, %v4430
      %v5059 = vpack.c.b16 %v4435, %v4431
      %v5060 = vpack.c.b16 %v4440, %v4436
      %v5061 = vpack.c.b16 %v4441, %v4437
      %v5062 = vpack.c.b16 %v4442, %v4438
      %v5063 = vpack.c.b16 %v4443, %v4439
      %v5064 = vpack.c.b16 %v4448, %v4444
      %v5065 = vpack.c.b16 %v4449, %v4445
      %v5066 = vpack.c.b16 %v4450, %v4446
      %v5067 = vpack.c.b16 %v4451, %v4447
      %v5068 = vpack.c.b16 %v4456, %v4452
      %v5069 = vpack.c.b16 %v4457, %v4453
      %v5070 = vpack.c.b16 %v4458, %v4454
      %v5071 = vpack.c.b16 %v4459, %v4455
      %v5072 = vpack.c.b16 %v4464, %v4460
      %v5073 = vpack.c.b16 %v4465, %v4461
      %v5074 = vpack.c.b16 %v4466, %v4462
      %v5075 = vpack.c.b16 %v4467, %v4463
      %v5076 = vpack.c.b16 %v4472, %v4468
      %v5077 = vpack.c.b16 %v4473, %v4469
      %v5078 = vpack.c.b16 %v4474, %v4470
      %v5079 = vpack.c.b16 %v4475, %v4471
      %v5080 = vpack.c.b16 %v4480, %v4476
      %v5081 = vpack.c.b16 %v4481, %v4477
      %v5082 = vpack.c.b16 %v4482, %v4478
      %v5083 = vpack.c.b16 %v4483, %v4479
      %v5084 = vpack.c.b16 %v4488, %v4484
      %v5085 = vpack.c.b16 %v4489, %v4485
      %v5086 = vpack.c.b16 %v4490, %v4486
      %v5087 = vpack.c.b16 %v4491, %v4487
      %v5088 = vpack.c.b16 %v4496, %v4492
      %v5089 = vpack.c.b16 %v4497, %v4493
      %v5090 = vpack.c.b16 %v4498, %v4494
      %v5091 = vpack.c.b16 %v4499, %v4495
      %v5092 = vpack.c.b16 %v4504, %v4500
      %v5093 = vpack.c.b16 %v4505, %v4501
      %v5094 = vpack.c.b16 %v4506, %v4502
      %v5095 = vpack.c.b16 %v4507, %v4503
      %v5096 = vpack.c.b16 %v4512, %v4508
      %v5097 = vpack.c.b16 %v4513, %v4509
      %v5098 = vpack.c.b16 %v4514, %v4510
      %v5099 = vpack.c.b16 %v4515, %v4511
      %v5100 = vpack.c.b16 %v4520, %v4516
      %v5101 = vpack.c.b16 %v4521, %v4517
      %v5102 = vpack.c.b16 %v4522, %v4518
      %v5103 = vpack.c.b16 %v4523, %v4519
      %v5104 = vpack.c.b16 %v4528, %v4524
      %v5105 = vpack.c.b16 %v4529, %v4525
      %v5106 = vpack.c.b16 %v4530, %v4526
      %v5107 = vpack.c.b16 %v4531, %v4527
      %v5108 = vpack.c.b16 %v4536, %v4532
      %v5109 = vpack.c.b16 %v4537, %v4533
      %v5110 = vpack.c.b16 %v4538, %v4534
      %v5111 = vpack.c.b16 %v4539, %v4535
      %v5112 = vpack.c.b16 %v4544, %v4540
      %v5113 = vpack.c.b16 %v4545, %v4541
      %v5114 = vpack.c.b16 %v4546, %v4542
      %v5115 = vpack.c.b16 %v4547, %v4543
      %v5116 = vpack.c.b16 %v4552, %v4548
      %v5117 = vpack.c.b16 %v4553, %v4549
      %v5118 = vpack.c.b16 %v4554, %v4550
      %v5119 = vpack.c.b16 %v4555, %v4551
      %v5120 = vpack.c.b16 %v4560, %v4556
      %v5121 = vpack.c.b16 %v4561, %v4557
      %v5122 = vpack.c.b16 %v4562, %v4558
      %v5123 = vpack.c.b16 %v4563, %v4559
      %v5124 = vpack.c.b16 %v4568, %v4564
      %v5125 = vpack.c.b16 %v4569, %v4565
      %v5126 = vpack.c.b16 %v4570, %v4566
      %v5127 = vpack.c.b16 %v4571, %v4567
      %v5128 = vpack.c.b16 %v4576, %v4572
      %v5129 = vpack.c.b16 %v4577, %v4573
      %v5130 = vpack.c.b16 %v4578, %v4574
      %v5131 = vpack.c.b16 %v4579, %v4575
      %v5132 = vpack.c.b16 %v4584, %v4580
      %v5133 = vpack.c.b16 %v4585, %v4581
      %v5134 = vpack.c.b16 %v4586, %v4582
      %v5135 = vpack.c.b16 %v4587, %v4583
      %v5136 = vpack.c.b16 %v4592, %v4588
      %v5137 = vpack.c.b16 %v4593, %v4589
      %v5138 = vpack.c.b16 %v4594, %v4590
      %v5139 = vpack.c.b16 %v4595, %v4591
      %v5140 = vpack.c.b16 %v4600, %v4596
      %v5141 = vpack.c.b16 %v4601, %v4597
      %v5142 = vpack.c.b16 %v4602, %v4598
      %v5143 = vpack.c.b16 %v4603, %v4599
      %v5144 = vpack.c.b16 %v4608, %v4604
      %v5145 = vpack.c.b16 %v4609, %v4605
      %v5146 = vpack.c.b16 %v4610, %v4606
      %v5147 = vpack.c.b16 %v4611, %v4607
      %v5148 = vpack.c.b16 %v4616, %v4612
      %v5149 = vpack.c.b16 %v4617, %v4613
      %v5150 = vpack.c.b16 %v4618, %v4614
      %v5151 = vpack.c.b16 %v4619, %v4615
      %v5152 = vpack.c.b16 %v4624, %v4620
      %v5153 = vpack.c.b16 %v4625, %v4621
      %v5154 = vpack.c.b16 %v4626, %v4622
      %v5155 = vpack.c.b16 %v4627, %v4623
      %v5156 = vpack.c.b16 %v4632, %v4628
      %v5157 = vpack.c.b16 %v4633, %v4629
      %v5158 = vpack.c.b16 %v4634, %v4630
      %v5159 = vpack.c.b16 %v4635, %v4631
      %v5160 = vpack.c.b16 %v4640, %v4636
      %v5161 = vpack.c.b16 %v4641, %v4637
      %v5162 = vpack.c.b16 %v4642, %v4638
      %v5163 = vpack.c.b16 %v4643, %v4639
      %v5164 = vpack.c.b16 %v4648, %v4644
      %v5165 = vpack.c.b16 %v4649, %v4645
      %v5166 = vpack.c.b16 %v4650, %v4646
      %v5167 = vpack.c.b16 %v4651, %v4647
      %v5168 = vpack.c.b16 %v4656, %v4652
      %v5169 = vpack.c.b16 %v4657, %v4653
      %v5170 = vpack.c.b16 %v4658, %v4654
      %v5171 = vpack.c.b16 %v4659, %v4655
      %v5172 = vpack.c.b16 %v4664, %v4660
      %v5173 = vpack.c.b16 %v4665, %v4661
      %v5174 = vpack.c.b16 %v4666, %v4662
      %v5175 = vpack.c.b16 %v4667, %v4663
      %v5176 = vpack.c.b16 %v4672, %v4668
      %v5177 = vpack.c.b16 %v4673, %v4669
      %v5178 = vpack.c.b16 %v4674, %v4670
      %v5179 = vpack.c.b16 %v4675, %v4671
      %v5180 = vpack.c.b16 %v4680, %v4676
      %v5181 = vpack.c.b16 %v4681, %v4677
      %v5182 = vpack.c.b16 %v4682, %v4678
      %v5183 = vpack.c.b16 %v4683, %v4679
      %v5184 = vpack.c.b16 %v4688, %v4684
      %v5185 = vpack.c.b16 %v4689, %v4685
      %v5186 = vpack.c.b16 %v4690, %v4686
      %v5187 = vpack.c.b16 %v4691, %v4687
      %v5188 = vpack.c.b16 %v4696, %v4692
      %v5189 = vpack.c.b16 %v4697, %v4693
      %v5190 = vpack.c.b16 %v4698, %v4694
      %v5191 = vpack.c.b16 %v4699, %v4695
      %v5192 = vpack.c.b16 %v4704, %v4700
      %v5193 = vpack.c.b16 %v4705, %v4701
      %v5194 = vpack.c.b16 %v4706, %v4702
      %v5195 = vpack.c.b16 %v4707, %v4703
      %v5196 = vpack.c.b16 %v4712, %v4708
      %v5197 = vpack.c.b16 %v4713, %v4709
      %v5198 = vpack.c.b16 %v4714, %v4710
      %v5199 = vpack.c.b16 %v4715, %v4711
      %v5200 = vpack.c.b16 %v4720, %v4716
      %v5201 = vpack.c.b16 %v4721, %v4717
      %v5202 = vpack.c.b16 %v4722, %v4718
      %v5203 = vpack.c.b16 %v4723, %v4719
      %v5204 = vpack.c.b16 %v4728, %v4724
      %v5205 = vpack.c.b16 %v4729, %v4725
      %v5206 = vpack.c.b16 %v4730, %v4726
      %v5207 = vpack.c.b16 %v4731, %v4727
      %v5208 = vpack.c.b16 %v4736, %v4732
      %v5209 = vpack.c.b16 %v4737, %v4733
      %v5210 = vpack.c.b16 %v4738, %v4734
      %v5211 = vpack.c.b16 %v4739, %v4735
      %v5212 = vpack.c.b16 %v4744, %v4740
      %v5213 = vpack.c.b16 %v4745, %v4741
      %v5214 = vpack.c.b16 %v4746, %v4742
      %v5215 = vpack.c.b16 %v4747, %v4743
      %v5216 = vpack.c.b16 %v4752, %v4748
      %v5217 = vpack.c.b16 %v4753, %v4749
      %v5218 = vpack.c.b16 %v4754, %v4750
      %v5219 = vpack.c.b16 %v4755, %v4751
      %v5220 = vpack.c.b16 %v4760, %v4756
      %v5221 = vpack.c.b16 %v4761, %v4757
      %v5222 = vpack.c.b16 %v4762, %v4758
      %v5223 = vpack.c.b16 %v4763, %v4759
      %v5224 = vpack.c.b16 %v4768, %v4764
      %v5225 = vpack.c.b16 %v4769, %v4765
      %v5226 = vpack.c.b16 %v4770, %v4766
      %v5227 = vpack.c.b16 %v4771, %v4767
      %v5228 = vpack.c.b16 %v4776, %v4772
      %v5229 = vpack.c.b16 %v4777, %v4773
      %v5230 = vpack.c.b16 %v4778, %v4774
      %v5231 = vpack.c.b16 %v4779, %v4775
      %v5232 = vpack.c.b16 %v4784, %v4780
      %v5233 = vpack.c.b16 %v4785, %v4781
      %v5234 = vpack.c.b16 %v4786, %v4782
      %v5235 = vpack.c.b16 %v4787, %v4783
      %v5236 = vpack.c.b16 %v4792, %v4788
      %v5237 = vpack.c.b16 %v4793, %v4789
      %v5238 = vpack.c.b16 %v4794, %v4790
      %v5239 = vpack.c.b16 %v4795, %v4791
      %v5240 = vpack.c.b16 %v4800, %v4796
      %v5241 = vpack.c.b16 %v4801, %v4797
      %v5242 = vpack.c.b16 %v4802, %v4798
      %v5243 = vpack.c.b16 %v4803, %v4799
      %v5244 = vpack.c.b16 %v4808, %v4804
      %v5245 = vpack.c.b16 %v4809, %v4805
      %v5246 = vpack.c.b16 %v4810, %v4806
      %v5247 = vpack.c.b16 %v4811, %v4807
      %v5248 = vpack.c.b16 %v4816, %v4812
      %v5249 = vpack.c.b16 %v4817, %v4813
      %v5250 = vpack.c.b16 %v4818, %v4814
      %v5251 = vpack.c.b16 %v4819, %v4815
      %v5252 = vpack.c.b16 %v4824, %v4820
      %v5253 = vpack.c.b16 %v4825, %v4821
      %v5254 = vpack.c.b16 %v4826, %v4822
      %v5255 = vpack.c.b16 %v4827, %v4823
      %v5256 = vpack.c.b16 %v4832, %v4828
      %v5257 = vpack.c.b16 %v4833, %v4829
      %v5258 = vpack.c.b16 %v4834, %v4830
      %v5259 = vpack.c.b16 %v4835, %v4831
      %v5260 = vpack.c.b16 %v4840, %v4836
      %v5261 = vpack.c.b16 %v4841, %v4837
      %v5262 = vpack.c.b16 %v4842, %v4838
      %v5263 = vpack.c.b16 %v4843, %v4839
      %v5264 = vpack.c.b16 %v4848, %v4844
      %v5265 = vpack.c.b16 %v4849, %v4845
      %v5266 = vpack.c.b16 %v4850, %v4846
      %v5267 = vpack.c.b16 %v4851, %v4847
      %v5268 = vpack.c.b16 %v4856, %v4852
      %v5269 = vpack.c.b16 %v4857, %v4853
      %v5270 = vpack.c.b16 %v4858, %v4854
      %v5271 = vpack.c.b16 %v4859, %v4855
      %v5272 = vpack.c.b16 %v4864, %v4860
      %v5273 = vpack.c.b16 %v4865, %v4861
      %v5274 = vpack.c.b16 %v4866, %v4862
      %v5275 = vpack.c.b16 %v4867, %v4863
      %v5276 = vpack.c.b16 %v4872, %v4868
      %v5277 = vpack.c.b16 %v4873, %v4869
      %v5278 = vpack.c.b16 %v4874, %v4870
      %v5279 = vpack.c.b16 %v4875, %v4871
      %v5280 = vpack.c.b16 %v4880, %v4876
      %v5281 = vpack.c.b16 %v4881, %v4877
      %v5282 = vpack.c.b16 %v4882, %v4878
      %v5283 = vpack.c.b16 %v4883, %v4879
      %v5284 = vpack.c.b16 %v4888, %v4884
      %v5285 = vpack.c.b16 %v4889, %v4885
      %v5286 = vpack.c.b16 %v4890, %v4886
      %v5287 = vpack.c.b16 %v4891, %v4887
      %v5288 = vpack.c.b16 %v4896, %v4892
      %v5289 = vpack.c.b16 %v4897, %v4893
      %v5290 = vpack.c.b16 %v4898, %v4894
      %v5291 = vpack.c.b16 %v4899, %v4895
      %v5292 = vpack.c.b16 %v4904, %v4900
      %v5293 = vpack.c.b16 %v4905, %v4901
      %v5294 = vpack.c.b16 %v4906, %v4902
      %v5295 = vpack.c.b16 %v4907, %v4903
      %v5296 = vpack.c.b16 %v4912, %v4908
      %v5297 = vpack.c.b16 %v4913, %v4909
      %v5298 = vpack.c.b16 %v4914, %v4910
      %v5299 = vpack.c.b16 %v4915, %v4911
      %5684 = vmatprep.subr.bf16.mxu0 %v4917
      %5685 = vmatpush1.bf16.msra.mxu0 %v4916
      %5686 = vmatprep.subr.bf16.mxu0 %v4921
      %5687 = vmatpush1.bf16.msra.mxu0 %v4920
      %5688 = vmatprep.subr.bf16.mxu0 %v4925
      %5689 = vmatpush1.bf16.msra.mxu0 %v4924
      %5690 = vmatprep.subr.bf16.mxu0 %v4929
      %5691 = vmatpush1.bf16.msra.mxu0 %v4928
      %5692 = vmatprep.subr.bf16.mxu0 %v4933
      %5693 = vmatpush1.bf16.msra.mxu0 %v4932
      %5694 = vmatprep.subr.bf16.mxu0 %v4937
      %5695 = vmatpush1.bf16.msra.mxu0 %v4936
      %5696 = vmatprep.subr.bf16.mxu0 %v4941
      %5697 = vmatpush1.bf16.msra.mxu0 %v4940
      %5698 = vmatprep.subr.bf16.mxu0 %v4945
      %5699 = vmatpush1.bf16.msra.mxu0 %v4944
      %5700 = vmatprep.subr.bf16.mxu0 %v4949
      %5701 = vmatpush1.bf16.msra.mxu0 %v4948
      %5702 = vmatprep.subr.bf16.mxu0 %v4953
      %5703 = vmatpush1.bf16.msra.mxu0 %v4952
      %5704 = vmatprep.subr.bf16.mxu0 %v4957
      %5705 = vmatpush1.bf16.msra.mxu0 %v4956
      %5706 = vmatprep.subr.bf16.mxu0 %v4961
      %5707 = vmatpush1.bf16.msra.mxu0 %v4960
      %5708 = vmatprep.subr.bf16.mxu0 %v4965
      %5709 = vmatpush1.bf16.msra.mxu0 %v4964
      %5710 = vmatprep.subr.bf16.mxu0 %v4969
      %5711 = vmatpush1.bf16.msra.mxu0 %v4968
      %5712 = vmatprep.subr.bf16.mxu0 %v4973
      %5713 = vmatpush1.bf16.msra.mxu0 %v4972
      %5714 = vmatprep.subr.bf16.mxu0 %v4977
      %5715 = vmatpush1.bf16.msra.mxu0 %v4976
      %5716 = vmatprep.mubr.bf16.mxu0 %v3348
      %5717 = vmatmul.mubr.bf16.gmra.mrb[0].mxu0 %v3347
      %v5718 = vpop.f32.mrb[0].mxu0
      %v5719 = vadd.f32 %v3747, %v5718
      %v5720 = vpop.f32.mrb[0].mxu0
      %v5721 = vadd.f32 %v3751, %v5720
      %v5722 = vpop.f32.mrb[0].mxu0
      %v5723 = vadd.f32 %v3747, %v5722
      %v5724 = vpop.f32.mrb[0].mxu0
      %v5725 = vadd.f32 %v3751, %v5724
      %5726 = vdwg.mxu0
      %5727 = vmatprep.subr.bf16.mxu0 %v4981
      %5728 = vmatpush1.bf16.msra.mxu0 %v4980
      %5729 = vmatprep.subr.bf16.mxu0 %v4985
      %5730 = vmatpush1.bf16.msra.mxu0 %v4984
      %5731 = vmatprep.subr.bf16.mxu0 %v4989
      %5732 = vmatpush1.bf16.msra.mxu0 %v4988
      %5733 = vmatprep.subr.bf16.mxu0 %v4993
      %5734 = vmatpush1.bf16.msra.mxu0 %v4992
      %5735 = vmatprep.subr.bf16.mxu0 %v4997
      %5736 = vmatpush1.bf16.msra.mxu0 %v4996
      %5737 = vmatprep.subr.bf16.mxu0 %v5001
      %5738 = vmatpush1.bf16.msra.mxu0 %v5000
      %5739 = vmatprep.subr.bf16.mxu0 %v5005
      %5740 = vmatpush1.bf16.msra.mxu0 %v5004
      %5741 = vmatprep.subr.bf16.mxu0 %v5009
      %5742 = vmatpush1.bf16.msra.mxu0 %v5008
      %5743 = vmatprep.subr.bf16.mxu0 %v5013
      %5744 = vmatpush1.bf16.msra.mxu0 %v5012
      %5745 = vmatprep.subr.bf16.mxu0 %v5017
      %5746 = vmatpush1.bf16.msra.mxu0 %v5016
      %5747 = vmatprep.subr.bf16.mxu0 %v5021
      %5748 = vmatpush1.bf16.msra.mxu0 %v5020
      %5749 = vmatprep.subr.bf16.mxu0 %v5025
      %5750 = vmatpush1.bf16.msra.mxu0 %v5024
      %5751 = vmatprep.subr.bf16.mxu0 %v5029
      %5752 = vmatpush1.bf16.msra.mxu0 %v5028
      %5753 = vmatprep.subr.bf16.mxu0 %v5033
      %5754 = vmatpush1.bf16.msra.mxu0 %v5032
      %5755 = vmatprep.subr.bf16.mxu0 %v5037
      %5756 = vmatpush1.bf16.msra.mxu0 %v5036
      %5757 = vmatprep.subr.bf16.mxu0 %v5041
      %5758 = vmatpush1.bf16.msra.mxu0 %v5040
      %5759 = vmatprep.mubr.bf16.mxu0 %v3350
      %5760 = vmatmul.mubr.bf16.gmra.mrb[0].mxu0 %v3349
      %v5761 = vpop.f32.mrb[0].mxu0
      %v5762 = vadd.f32 %v5719, %v5761
      %v5763 = vpop.f32.mrb[0].mxu0
      %v5764 = vadd.f32 %v5721, %v5763
      %v5765 = vpop.f32.mrb[0].mxu0
      %v5766 = vadd.f32 %v5723, %v5765
      %v5767 = vpop.f32.mrb[0].mxu0
      %v5768 = vadd.f32 %v5725, %v5767
      %5769 = vdwg.mxu0
      %5770 = vmatprep.subr.bf16.mxu0 %v5045
      %5771 = vmatpush1.bf16.msra.mxu0 %v5044
      %5772 = vmatprep.subr.bf16.mxu0 %v5049
      %5773 = vmatpush1.bf16.msra.mxu0 %v5048
      %5774 = vmatprep.subr.bf16.mxu0 %v5053
      %5775 = vmatpush1.bf16.msra.mxu0 %v5052
      %5776 = vmatprep.subr.bf16.mxu0 %v5057
      %5777 = vmatpush1.bf16.msra.mxu0 %v5056
      %5778 = vmatprep.subr.bf16.mxu0 %v5061
      %5779 = vmatpush1.bf16.msra.mxu0 %v5060
      %5780 = vmatprep.subr.bf16.mxu0 %v5065
      %5781 = vmatpush1.bf16.msra.mxu0 %v5064
      %5782 = vmatprep.subr.bf16.mxu0 %v5069
      %5783 = vmatpush1.bf16.msra.mxu0 %v5068
      %5784 = vmatprep.subr.bf16.mxu0 %v5073
      %5785 = vmatpush1.bf16.msra.mxu0 %v5072
      %5786 = vmatprep.subr.bf16.mxu0 %v5077
      %5787 = vmatpush1.bf16.msra.mxu0 %v5076
      %5788 = vmatprep.subr.bf16.mxu0 %v5081
      %5789 = vmatpush1.bf16.msra.mxu0 %v5080
      %5790 = vmatprep.subr.bf16.mxu0 %v5085
      %5791 = vmatpush1.bf16.msra.mxu0 %v5084
      %5792 = vmatprep.subr.bf16.mxu0 %v5089
      %5793 = vmatpush1.bf16.msra.mxu0 %v5088
      %5794 = vmatprep.subr.bf16.mxu0 %v5093
      %5795 = vmatpush1.bf16.msra.mxu0 %v5092
      %5796 = vmatprep.subr.bf16.mxu0 %v5097
      %5797 = vmatpush1.bf16.msra.mxu0 %v5096
      %5798 = vmatprep.subr.bf16.mxu0 %v5101
      %5799 = vmatpush1.bf16.msra.mxu0 %v5100
      %5800 = vmatprep.subr.bf16.mxu0 %v5105
      %5801 = vmatpush1.bf16.msra.mxu0 %v5104
      %5802 = vmatprep.mubr.bf16.mxu0 %v3352
      %5803 = vmatmul.mubr.bf16.gmra.mrb[0].mxu0 %v3351
      %v5804 = vpop.f32.mrb[0].mxu0
      %v5805 = vadd.f32 %v5762, %v5804
      %v5806 = vpop.f32.mrb[0].mxu0
      %v5807 = vadd.f32 %v5764, %v5806
      %v5808 = vpop.f32.mrb[0].mxu0
      %v5809 = vadd.f32 %v5766, %v5808
      %v5810 = vpop.f32.mrb[0].mxu0
      %v5811 = vadd.f32 %v5768, %v5810
      %5812 = vdwg.mxu0
      %5813 = vmatprep.subr.bf16.mxu0 %v5109
      %5814 = vmatpush1.bf16.msra.mxu0 %v5108
      %5815 = vmatprep.subr.bf16.mxu0 %v5113
      %5816 = vmatpush1.bf16.msra.mxu0 %v5112
      %5817 = vmatprep.subr.bf16.mxu0 %v5117
      %5818 = vmatpush1.bf16.msra.mxu0 %v5116
      %5819 = vmatprep.subr.bf16.mxu0 %v5121
      %5820 = vmatpush1.bf16.msra.mxu0 %v5120
      %5821 = vmatprep.subr.bf16.mxu0 %v5125
      %5822 = vmatpush1.bf16.msra.mxu0 %v5124
      %5823 = vmatprep.subr.bf16.mxu0 %v5129
      %5824 = vmatpush1.bf16.msra.mxu0 %v5128
      %5825 = vmatprep.subr.bf16.mxu0 %v5133
      %5826 = vmatpush1.bf16.msra.mxu0 %v5132
      %5827 = vmatprep.subr.bf16.mxu0 %v5137
      %5828 = vmatpush1.bf16.msra.mxu0 %v5136
      %5829 = vmatprep.subr.bf16.mxu0 %v5141
      %5830 = vmatpush1.bf16.msra.mxu0 %v5140
      %5831 = vmatprep.subr.bf16.mxu0 %v5145
      %5832 = vmatpush1.bf16.msra.mxu0 %v5144
      %5833 = vmatprep.subr.bf16.mxu0 %v5149
      %5834 = vmatpush1.bf16.msra.mxu0 %v5148
      %5835 = vmatprep.subr.bf16.mxu0 %v5153
      %5836 = vmatpush1.bf16.msra.mxu0 %v5152
      %5837 = vmatprep.subr.bf16.mxu0 %v5157
      %5838 = vmatpush1.bf16.msra.mxu0 %v5156
      %5839 = vmatprep.subr.bf16.mxu0 %v5161
      %5840 = vmatpush1.bf16.msra.mxu0 %v5160
      %5841 = vmatprep.subr.bf16.mxu0 %v5165
      %5842 = vmatpush1.bf16.msra.mxu0 %v5164
      %5843 = vmatprep.subr.bf16.mxu0 %v5169
      %5844 = vmatpush1.bf16.msra.mxu0 %v5168
      %5845 = vmatprep.mubr.bf16.mxu0 %v3354
      %5846 = vmatmul.mubr.bf16.gmra.mrb[0].mxu0 %v3353
      %v5847 = vpop.f32.mrb[0].mxu0
      %v5848 = vadd.f32 %v5805, %v5847
      %v5849 = vpop.f32.mrb[0].mxu0
      %v5850 = vadd.f32 %v5807, %v5849
      %v5851 = vpop.f32.mrb[0].mxu0
      %v5852 = vadd.f32 %v5809, %v5851
      %v5853 = vpop.f32.mrb[0].mxu0
      %v5854 = vadd.f32 %v5811, %v5853
      %5855 = vdwg.mxu0
      %5856 = vmatprep.subr.bf16.mxu0 %v5173
      %5857 = vmatpush1.bf16.msra.mxu0 %v5172
      %5858 = vmatprep.subr.bf16.mxu0 %v5177
      %5859 = vmatpush1.bf16.msra.mxu0 %v5176
      %5860 = vmatprep.subr.bf16.mxu0 %v5181
      %5861 = vmatpush1.bf16.msra.mxu0 %v5180
      %5862 = vmatprep.subr.bf16.mxu0 %v5185
      %5863 = vmatpush1.bf16.msra.mxu0 %v5184
      %5864 = vmatprep.subr.bf16.mxu0 %v5189
      %5865 = vmatpush1.bf16.msra.mxu0 %v5188
      %5866 = vmatprep.subr.bf16.mxu0 %v5193
      %5867 = vmatpush1.bf16.msra.mxu0 %v5192
      %5868 = vmatprep.subr.bf16.mxu0 %v5197
      %5869 = vmatpush1.bf16.msra.mxu0 %v5196
      %5870 = vmatprep.subr.bf16.mxu0 %v5201
      %5871 = vmatpush1.bf16.msra.mxu0 %v5200
      %5872 = vmatprep.subr.bf16.mxu0 %v5205
      %5873 = vmatpush1.bf16.msra.mxu0 %v5204
      %5874 = vmatprep.subr.bf16.mxu0 %v5209
      %5875 = vmatpush1.bf16.msra.mxu0 %v5208
      %5876 = vmatprep.subr.bf16.mxu0 %v5213
      %5877 = vmatpush1.bf16.msra.mxu0 %v5212
      %5878 = vmatprep.subr.bf16.mxu0 %v5217
      %5879 = vmatpush1.bf16.msra.mxu0 %v5216
      %5880 = vmatprep.subr.bf16.mxu0 %v5221
      %5881 = vmatpush1.bf16.msra.mxu0 %v5220
      %5882 = vmatprep.subr.bf16.mxu0 %v5225
      %5883 = vmatpush1.bf16.msra.mxu0 %v5224
      %5884 = vmatprep.subr.bf16.mxu0 %v5229
      %5885 = vmatpush1.bf16.msra.mxu0 %v5228
      %5886 = vmatprep.subr.bf16.mxu0 %v5233
      %5887 = vmatpush1.bf16.msra.mxu0 %v5232
      %5888 = vmatprep.mubr.bf16.mxu0 %v3356
      %5889 = vmatmul.mubr.bf16.gmra.mrb[0].mxu0 %v3355
      %v5890 = vpop.f32.mrb[0].mxu0
      %v5891 = vadd.f32 %v5848, %v5890
      %v5892 = vpop.f32.mrb[0].mxu0
      %v5893 = vadd.f32 %v5850, %v5892
      %v5894 = vpop.f32.mrb[0].mxu0
      %v5895 = vadd.f32 %v5852, %v5894
      %v5896 = vpop.f32.mrb[0].mxu0
      %v5897 = vadd.f32 %v5854, %v5896
      %5898 = vdwg.mxu0
      %5899 = vmatprep.subr.bf16.mxu0 %v5237
      %5900 = vmatpush1.bf16.msra.mxu0 %v5236
      %5901 = vmatprep.subr.bf16.mxu0 %v5241
      %5902 = vmatpush1.bf16.msra.mxu0 %v5240
      %5903 = vmatprep.subr.bf16.mxu0 %v5245
      %5904 = vmatpush1.bf16.msra.mxu0 %v5244
      %5905 = vmatprep.subr.bf16.mxu0 %v5249
      %5906 = vmatpush1.bf16.msra.mxu0 %v5248
      %5907 = vmatprep.subr.bf16.mxu0 %v5253
      %5908 = vmatpush1.bf16.msra.mxu0 %v5252
      %5909 = vmatprep.subr.bf16.mxu0 %v5257
      %5910 = vmatpush1.bf16.msra.mxu0 %v5256
      %5911 = vmatprep.subr.bf16.mxu0 %v5261
      %5912 = vmatpush1.bf16.msra.mxu0 %v5260
      %5913 = vmatprep.subr.bf16.mxu0 %v5265
      %5914 = vmatpush1.bf16.msra.mxu0 %v5264
      %5915 = vmatprep.subr.bf16.mxu0 %v5269
      %5916 = vmatpush1.bf16.msra.mxu0 %v5268
      %5917 = vmatprep.subr.bf16.mxu0 %v5273
      %5918 = vmatpush1.bf16.msra.mxu0 %v5272
      %5919 = vmatprep.subr.bf16.mxu0 %v5277
      %5920 = vmatpush1.bf16.msra.mxu0 %v5276
      %5921 = vmatprep.subr.bf16.mxu0 %v5281
      %5922 = vmatpush1.bf16.msra.mxu0 %v5280
      %5923 = vmatprep.subr.bf16.mxu0 %v5285
      %5924 = vmatpush1.bf16.msra.mxu0 %v5284
      %5925 = vmatprep.subr.bf16.mxu0 %v5289
      %5926 = vmatpush1.bf16.msra.mxu0 %v5288
      %5927 = vmatprep.subr.bf16.mxu0 %v5293
      %5928 = vmatpush1.bf16.msra.mxu0 %v5292
      %5929 = vmatprep.subr.bf16.mxu0 %v5297
      %5930 = vmatpush1.bf16.msra.mxu0 %v5296
      %5931 = vmatprep.mubr.bf16.mxu0 %v3358
      %5932 = vmatmul.mubr.bf16.gmra.mrb[0].mxu0 %v3357
      %v5933 = vpop.f32.mrb[0].mxu0
      %v5934 = vadd.f32 %v5891, %v5933
      %v5935 = vpop.f32.mrb[0].mxu0
      %v5936 = vadd.f32 %v5893, %v5935
      %v5937 = vpop.f32.mrb[0].mxu0
      %v5938 = vadd.f32 %v5895, %v5937
      %v5939 = vpop.f32.mrb[0].mxu0
      %v5940 = vadd.f32 %v5897, %v5939
      %5941 = vdwg.mxu0
      %5942 = vmatprep.subr.bf16.mxu0 %v4919
      %5943 = vmatpush1.bf16.msra.mxu0 %v4918
      %5944 = vmatprep.subr.bf16.mxu0 %v4923
      %5945 = vmatpush1.bf16.msra.mxu0 %v4922
      %5946 = vmatprep.subr.bf16.mxu0 %v4927
      %5947 = vmatpush1.bf16.msra.mxu0 %v4926
      %5948 = vmatprep.subr.bf16.mxu0 %v4931
      %5949 = vmatpush1.bf16.msra.mxu0 %v4930
      %5950 = vmatprep.subr.bf16.mxu0 %v4935
      %5951 = vmatpush1.bf16.msra.mxu0 %v4934
      %5952 = vmatprep.subr.bf16.mxu0 %v4939
      %5953 = vmatpush1.bf16.msra.mxu0 %v4938
      %5954 = vmatprep.subr.bf16.mxu0 %v4943
      %5955 = vmatpush1.bf16.msra.mxu0 %v4942
      %5956 = vmatprep.subr.bf16.mxu0 %v4947
      %5957 = vmatpush1.bf16.msra.mxu0 %v4946
      %5958 = vmatprep.subr.bf16.mxu0 %v4951
      %5959 = vmatpush1.bf16.msra.mxu0 %v4950
      %5960 = vmatprep.subr.bf16.mxu0 %v4955
      %5961 = vmatpush1.bf16.msra.mxu0 %v4954
      %5962 = vmatprep.subr.bf16.mxu0 %v4959
      %5963 = vmatpush1.bf16.msra.mxu0 %v4958
      %5964 = vmatprep.subr.bf16.mxu0 %v4963
      %5965 = vmatpush1.bf16.msra.mxu0 %v4962
      %5966 = vmatprep.subr.bf16.mxu0 %v4967
      %5967 = vmatpush1.bf16.msra.mxu0 %v4966
      %5968 = vmatprep.subr.bf16.mxu0 %v4971
      %5969 = vmatpush1.bf16.msra.mxu0 %v4970
      %5970 = vmatprep.subr.bf16.mxu0 %v4975
      %5971 = vmatpush1.bf16.msra.mxu0 %v4974
      %5972 = vmatprep.subr.bf16.mxu0 %v4979
      %5973 = vmatpush1.bf16.msra.mxu0 %v4978
      %5974 = vmatprep.mubr.bf16.mxu0 %v3348
      %5975 = vmatmul.mubr.bf16.gmra.mrb[0].mxu0 %v3347
      %v5976 = vpop.f32.mrb[0].mxu0
      %v5977 = vadd.f32 %v3755, %v5976
      %v5978 = vpop.f32.mrb[0].mxu0
      %v5979 = vadd.f32 %v3759, %v5978
      %v5980 = vpop.f32.mrb[0].mxu0
      %v5981 = vadd.f32 %v3755, %v5980
      %v5982 = vpop.f32.mrb[0].mxu0
      %v5983 = vadd.f32 %v3759, %v5982
      %5984 = vdwg.mxu0
      %5985 = vmatprep.subr.bf16.mxu0 %v4983
      %5986 = vmatpush1.bf16.msra.mxu0 %v4982
      %5987 = vmatprep.subr.bf16.mxu0 %v4987
      %5988 = vmatpush1.bf16.msra.mxu0 %v4986
      %5989 = vmatprep.subr.bf16.mxu0 %v4991
      %5990 = vmatpush1.bf16.msra.mxu0 %v4990
      %5991 = vmatprep.subr.bf16.mxu0 %v4995
      %5992 = vmatpush1.bf16.msra.mxu0 %v4994
      %5993 = vmatprep.subr.bf16.mxu0 %v4999
      %5994 = vmatpush1.bf16.msra.mxu0 %v4998
      %5995 = vmatprep.subr.bf16.mxu0 %v5003
      %5996 = vmatpush1.bf16.msra.mxu0 %v5002
      %5997 = vmatprep.subr.bf16.mxu0 %v5007
      %5998 = vmatpush1.bf16.msra.mxu0 %v5006
      %5999 = vmatprep.subr.bf16.mxu0 %v5011
      %6000 = vmatpush1.bf16.msra.mxu0 %v5010
      %6001 = vmatprep.subr.bf16.mxu0 %v5015
      %6002 = vmatpush1.bf16.msra.mxu0 %v5014
      %6003 = vmatprep.subr.bf16.mxu0 %v5019
      %6004 = vmatpush1.bf16.msra.mxu0 %v5018
      %6005 = vmatprep.subr.bf16.mxu0 %v5023
      %6006 = vmatpush1.bf16.msra.mxu0 %v5022
      %6007 = vmatprep.subr.bf16.mxu0 %v5027
      %6008 = vmatpush1.bf16.msra.mxu0 %v5026
      %6009 = vmatprep.subr.bf16.mxu0 %v5031
      %6010 = vmatpush1.bf16.msra.mxu0 %v5030
      %6011 = vmatprep.subr.bf16.mxu0 %v5035
      %6012 = vmatpush1.bf16.msra.mxu0 %v5034
      %6013 = vmatprep.subr.bf16.mxu0 %v5039
      %6014 = vmatpush1.bf16.msra.mxu0 %v5038
      %6015 = vmatprep.subr.bf16.mxu0 %v5043
      %6016 = vmatpush1.bf16.msra.mxu0 %v5042
      %6017 = vmatprep.mubr.bf16.mxu0 %v3350
      %6018 = vmatmul.mubr.bf16.gmra.mrb[0].mxu0 %v3349
      %v6019 = vpop.f32.mrb[0].mxu0
      %v6020 = vadd.f32 %v5977, %v6019
      %v6021 = vpop.f32.mrb[0].mxu0
      %v6022 = vadd.f32 %v5979, %v6021
      %v6023 = vpop.f32.mrb[0].mxu0
      %v6024 = vadd.f32 %v5981, %v6023
      %v6025 = vpop.f32.mrb[0].mxu0
      %v6026 = vadd.f32 %v5983, %v6025
      %6027 = vdwg.mxu0
      %6028 = vmatprep.subr.bf16.mxu0 %v5047
      %6029 = vmatpush1.bf16.msra.mxu0 %v5046
      %6030 = vmatprep.subr.bf16.mxu0 %v5051
      %6031 = vmatpush1.bf16.msra.mxu0 %v5050
      %6032 = vmatprep.subr.bf16.mxu0 %v5055
      %6033 = vmatpush1.bf16.msra.mxu0 %v5054
      %6034 = vmatprep.subr.bf16.mxu0 %v5059
      %6035 = vmatpush1.bf16.msra.mxu0 %v5058
      %6036 = vmatprep.subr.bf16.mxu0 %v5063
      %6037 = vmatpush1.bf16.msra.mxu0 %v5062
      %6038 = vmatprep.subr.bf16.mxu0 %v5067
      %6039 = vmatpush1.bf16.msra.mxu0 %v5066
      %6040 = vmatprep.subr.bf16.mxu0 %v5071
      %6041 = vmatpush1.bf16.msra.mxu0 %v5070
      %6042 = vmatprep.subr.bf16.mxu0 %v5075
      %6043 = vmatpush1.bf16.msra.mxu0 %v5074
      %6044 = vmatprep.subr.bf16.mxu0 %v5079
      %6045 = vmatpush1.bf16.msra.mxu0 %v5078
      %6046 = vmatprep.subr.bf16.mxu0 %v5083
      %6047 = vmatpush1.bf16.msra.mxu0 %v5082
      %6048 = vmatprep.subr.bf16.mxu0 %v5087
      %6049 = vmatpush1.bf16.msra.mxu0 %v5086
      %6050 = vmatprep.subr.bf16.mxu0 %v5091
      %6051 = vmatpush1.bf16.msra.mxu0 %v5090
      %6052 = vmatprep.subr.bf16.mxu0 %v5095
      %6053 = vmatpush1.bf16.msra.mxu0 %v5094
      %6054 = vmatprep.subr.bf16.mxu0 %v5099
      %6055 = vmatpush1.bf16.msra.mxu0 %v5098
      %6056 = vmatprep.subr.bf16.mxu0 %v5103
      %6057 = vmatpush1.bf16.msra.mxu0 %v5102
      %6058 = vmatprep.subr.bf16.mxu0 %v5107
      %6059 = vmatpush1.bf16.msra.mxu0 %v5106
      %6060 = vmatprep.mubr.bf16.mxu0 %v3352
      %6061 = vmatmul.mubr.bf16.gmra.mrb[0].mxu0 %v3351
      %v6062 = vpop.f32.mrb[0].mxu0
      %v6063 = vadd.f32 %v6020, %v6062
      %v6064 = vpop.f32.mrb[0].mxu0
      %v6065 = vadd.f32 %v6022, %v6064
      %v6066 = vpop.f32.mrb[0].mxu0
      %v6067 = vadd.f32 %v6024, %v6066
      %v6068 = vpop.f32.mrb[0].mxu0
      %v6069 = vadd.f32 %v6026, %v6068
      %6070 = vdwg.mxu0
      %6071 = vmatprep.subr.bf16.mxu0 %v5111
      %6072 = vmatpush1.bf16.msra.mxu0 %v5110
      %6073 = vmatprep.subr.bf16.mxu0 %v5115
      %6074 = vmatpush1.bf16.msra.mxu0 %v5114
      %6075 = vmatprep.subr.bf16.mxu0 %v5119
      %6076 = vmatpush1.bf16.msra.mxu0 %v5118
      %6077 = vmatprep.subr.bf16.mxu0 %v5123
      %6078 = vmatpush1.bf16.msra.mxu0 %v5122
      %6079 = vmatprep.subr.bf16.mxu0 %v5127
      %6080 = vmatpush1.bf16.msra.mxu0 %v5126
      %6081 = vmatprep.subr.bf16.mxu0 %v5131
      %6082 = vmatpush1.bf16.msra.mxu0 %v5130
      %6083 = vmatprep.subr.bf16.mxu0 %v5135
      %6084 = vmatpush1.bf16.msra.mxu0 %v5134
      %6085 = vmatprep.subr.bf16.mxu0 %v5139
      %6086 = vmatpush1.bf16.msra.mxu0 %v5138
      %6087 = vmatprep.subr.bf16.mxu0 %v5143
      %6088 = vmatpush1.bf16.msra.mxu0 %v5142
      %6089 = vmatprep.subr.bf16.mxu0 %v5147
      %6090 = vmatpush1.bf16.msra.mxu0 %v5146
      %6091 = vmatprep.subr.bf16.mxu0 %v5151
      %6092 = vmatpush1.bf16.msra.mxu0 %v5150
      %6093 = vmatprep.subr.bf16.mxu0 %v5155
      %6094 = vmatpush1.bf16.msra.mxu0 %v5154
      %6095 = vmatprep.subr.bf16.mxu0 %v5159
      %6096 = vmatpush1.bf16.msra.mxu0 %v5158
      %6097 = vmatprep.subr.bf16.mxu0 %v5163
      %6098 = vmatpush1.bf16.msra.mxu0 %v5162
      %6099 = vmatprep.subr.bf16.mxu0 %v5167
      %6100 = vmatpush1.bf16.msra.mxu0 %v5166
      %6101 = vmatprep.subr.bf16.mxu0 %v5171
      %6102 = vmatpush1.bf16.msra.mxu0 %v5170
      %6103 = vmatprep.mubr.bf16.mxu0 %v3354
      %6104 = vmatmul.mubr.bf16.gmra.mrb[0].mxu0 %v3353
      %v6105 = vpop.f32.mrb[0].mxu0
      %v6106 = vadd.f32 %v6063, %v6105
      %v6107 = vpop.f32.mrb[0].mxu0
      %v6108 = vadd.f32 %v6065, %v6107
      %v6109 = vpop.f32.mrb[0].mxu0
      %v6110 = vadd.f32 %v6067, %v6109
      %v6111 = vpop.f32.mrb[0].mxu0
      %v6112 = vadd.f32 %v6069, %v6111
      %6113 = vdwg.mxu0
      %6114 = vmatprep.subr.bf16.mxu0 %v5175
      %6115 = vmatpush1.bf16.msra.mxu0 %v5174
      %6116 = vmatprep.subr.bf16.mxu0 %v5179
      %6117 = vmatpush1.bf16.msra.mxu0 %v5178
      %6118 = vmatprep.subr.bf16.mxu0 %v5183
      %6119 = vmatpush1.bf16.msra.mxu0 %v5182
      %6120 = vmatprep.subr.bf16.mxu0 %v5187
      %6121 = vmatpush1.bf16.msra.mxu0 %v5186
      %6122 = vmatprep.subr.bf16.mxu0 %v5191
      %6123 = vmatpush1.bf16.msra.mxu0 %v5190
      %6124 = vmatprep.subr.bf16.mxu0 %v5195
      %6125 = vmatpush1.bf16.msra.mxu0 %v5194
      %6126 = vmatprep.subr.bf16.mxu0 %v5199
      %6127 = vmatpush1.bf16.msra.mxu0 %v5198
      %6128 = vmatprep.subr.bf16.mxu0 %v5203
      %6129 = vmatpush1.bf16.msra.mxu0 %v5202
      %6130 = vmatprep.subr.bf16.mxu0 %v5207
      %6131 = vmatpush1.bf16.msra.mxu0 %v5206
      %6132 = vmatprep.subr.bf16.mxu0 %v5211
      %6133 = vmatpush1.bf16.msra.mxu0 %v5210
      %6134 = vmatprep.subr.bf16.mxu0 %v5215
      %6135 = vmatpush1.bf16.msra.mxu0 %v5214
      %6136 = vmatprep.subr.bf16.mxu0 %v5219
      %6137 = vmatpush1.bf16.msra.mxu0 %v5218
      %6138 = vmatprep.subr.bf16.mxu0 %v5223
      %6139 = vmatpush1.bf16.msra.mxu0 %v5222
      %6140 = vmatprep.subr.bf16.mxu0 %v5227
      %6141 = vmatpush1.bf16.msra.mxu0 %v5226
      %6142 = vmatprep.subr.bf16.mxu0 %v5231
      %6143 = vmatpush1.bf16.msra.mxu0 %v5230
      %6144 = vmatprep.subr.bf16.mxu0 %v5235
      %6145 = vmatpush1.bf16.msra.mxu0 %v5234
      %6146 = vmatprep.mubr.bf16.mxu0 %v3356
      %6147 = vmatmul.mubr.bf16.gmra.mrb[0].mxu0 %v3355
      %v6148 = vpop.f32.mrb[0].mxu0
      %v6149 = vadd.f32 %v6106, %v6148
      %v6150 = vpop.f32.mrb[0].mxu0
      %v6151 = vadd.f32 %v6108, %v6150
      %v6152 = vpop.f32.mrb[0].mxu0
      %v6153 = vadd.f32 %v6110, %v6152
      %v6154 = vpop.f32.mrb[0].mxu0
      %v6155 = vadd.f32 %v6112, %v6154
      %6156 = vdwg.mxu0
      %6157 = vmatprep.subr.bf16.mxu0 %v5239
      %6158 = vmatpush1.bf16.msra.mxu0 %v5238
      %6159 = vmatprep.subr.bf16.mxu0 %v5243
      %6160 = vmatpush1.bf16.msra.mxu0 %v5242
      %6161 = vmatprep.subr.bf16.mxu0 %v5247
      %6162 = vmatpush1.bf16.msra.mxu0 %v5246
      %6163 = vmatprep.subr.bf16.mxu0 %v5251
      %6164 = vmatpush1.bf16.msra.mxu0 %v5250
      %6165 = vmatprep.subr.bf16.mxu0 %v5255
      %6166 = vmatpush1.bf16.msra.mxu0 %v5254
      %6167 = vmatprep.subr.bf16.mxu0 %v5259
      %6168 = vmatpush1.bf16.msra.mxu0 %v5258
      %6169 = vmatprep.subr.bf16.mxu0 %v5263
      %6170 = vmatpush1.bf16.msra.mxu0 %v5262
      %6171 = vmatprep.subr.bf16.mxu0 %v5267
      %6172 = vmatpush1.bf16.msra.mxu0 %v5266
      %6173 = vmatprep.subr.bf16.mxu0 %v5271
      %6174 = vmatpush1.bf16.msra.mxu0 %v5270
      %6175 = vmatprep.subr.bf16.mxu0 %v5275
      %6176 = vmatpush1.bf16.msra.mxu0 %v5274
      %6177 = vmatprep.subr.bf16.mxu0 %v5279
      %6178 = vmatpush1.bf16.msra.mxu0 %v5278
      %6179 = vmatprep.subr.bf16.mxu0 %v5283
      %6180 = vmatpush1.bf16.msra.mxu0 %v5282
      %6181 = vmatprep.subr.bf16.mxu0 %v5287
      %6182 = vmatpush1.bf16.msra.mxu0 %v5286
      %6183 = vmatprep.subr.bf16.mxu0 %v5291
      %6184 = vmatpush1.bf16.msra.mxu0 %v5290
      %6185 = vmatprep.subr.bf16.mxu0 %v5295
      %6186 = vmatpush1.bf16.msra.mxu0 %v5294
      %6187 = vmatprep.subr.bf16.mxu0 %v5299
      %6188 = vmatpush1.bf16.msra.mxu0 %v5298
      %6189 = vmatprep.mubr.bf16.mxu0 %v3358
      %6190 = vmatmul.mubr.bf16.gmra.mrb[0].mxu0 %v3357
      %v6191 = vpop.f32.mrb[0].mxu0
      %v6192 = vadd.f32 %v6149, %v6191
      %v6193 = vpop.f32.mrb[0].mxu0
      %v6194 = vadd.f32 %v6151, %v6193
      %v6195 = vpop.f32.mrb[0].mxu0
      %v6196 = vadd.f32 %v6153, %v6195
      %v6197 = vpop.f32.mrb[0].mxu0
      %v6198 = vadd.f32 %v6155, %v6197
      %6199 = vdwg.mxu0
      %v6200 = vadd.f32 %v5934, %v5938
      %v6201 = vrot.slane %v6200, 4
      %v6202 = vadd.f32 %v6200, %v6201
      %v6203 = vrot.slane %v6202, 2
      %v6204 = vadd.f32 %v6202, %v6203
      %v6205 = vrot.slane %v6204, 1
      %v6206 = vadd.f32 %v6204, %v6205
      %v6207 = vadd.f32 %v5936, %v5940
      %v6208 = vrot.slane %v6207, 4
      %v6209 = vadd.f32 %v6207, %v6208
      %v6210 = vrot.slane %v6209, 2
      %v6211 = vadd.f32 %v6209, %v6210
      %v6212 = vrot.slane %v6211, 1
      %v6213 = vadd.f32 %v6211, %v6212
      %v6214 = vadd.f32 %v6192, %v6196
      %v6215 = vrot.slane %v6214, 4
      %v6216 = vadd.f32 %v6214, %v6215
      %v6217 = vrot.slane %v6216, 2
      %v6218 = vadd.f32 %v6216, %v6217
      %v6219 = vrot.slane %v6218, 1
      %v6220 = vadd.f32 %v6218, %v6219
      %v6221 = vadd.f32 %v6194, %v6198
      %v6222 = vrot.slane %v6221, 4
      %v6223 = vadd.f32 %v6221, %v6222
      %v6224 = vrot.slane %v6223, 2
      %v6225 = vadd.f32 %v6223, %v6224
      %v6226 = vrot.slane %v6225, 1
      %v6227 = vadd.f32 %v6225, %v6226
      %v6228 = vmul.f32 %v6206, 0.00390625
      %v6229 = vmul.f32 %v6213, 0.00390625
      %v6230 = vmul.f32 %v6220, 0.00390625
      %v6231 = vmul.f32 %v6227, 0.00390625
      %v6232 = vld [vmem:[%s5] sm:$0xff]
      %v6233 = vld [vmem:[%s5 + $0x8] sm:$0xff]
      %v6234 = vld [vmem:[%s5 + $0x10] sm:$0xff]
      %v6235 = vld [vmem:[%s5 + $0x18] sm:$0xff]
      %v6236 = vld [vmem:[%s5 + $0x20] sm:$0xff]
      %v6237 = vld [vmem:[%s5 + $0x28] sm:$0xff]
      %v6238 = vld [vmem:[%s5 + $0x30] sm:$0xff]
      %v6239 = vld [vmem:[%s5 + $0x38] sm:$0xff]
      %v6240 = vld [vmem:[%s5 + $0x40] sm:$0xff]
      %v6241 = vld [vmem:[%s5 + $0x48] sm:$0xff]
      %v6242 = vld [vmem:[%s5 + $0x50] sm:$0xff]
      %v6243 = vld [vmem:[%s5 + $0x58] sm:$0xff]
      %v6244 = vld [vmem:[%s5 + $0x60] sm:$0xff]
      %v6245 = vld [vmem:[%s5 + $0x68] sm:$0xff]
      %v6246 = vld [vmem:[%s5 + $0x70] sm:$0xff]
      %v6247 = vld [vmem:[%s5 + $0x78] sm:$0xff]
      %v6248 = vld [vmem:[%s5 + $0x80] sm:$0xff]
      %v6249 = vld [vmem:[%s5 + $0x88] sm:$0xff]
      %v6250 = vld [vmem:[%s5 + $0x90] sm:$0xff]
      %v6251 = vld [vmem:[%s5 + $0x98] sm:$0xff]
      %v6252 = vld [vmem:[%s5 + $0xa0] sm:$0xff]
      %v6253 = vld [vmem:[%s5 + $0xa8] sm:$0xff]
      %v6254 = vld [vmem:[%s5 + $0xb0] sm:$0xff]
      %v6255 = vld [vmem:[%s5 + $0xb8] sm:$0xff]
      %v6256 = vld [vmem:[%s5 + $0xc0] sm:$0xff]
      %v6257 = vld [vmem:[%s5 + $0xc8] sm:$0xff]
      %v6258 = vld [vmem:[%s5 + $0xd0] sm:$0xff]
      %v6259 = vld [vmem:[%s5 + $0xd8] sm:$0xff]
      %v6260 = vld [vmem:[%s5 + $0xe0] sm:$0xff]
      %v6261 = vld [vmem:[%s5 + $0xe8] sm:$0xff]
      %v6262 = vld [vmem:[%s5 + $0xf0] sm:$0xff]
      %v6263 = vld [vmem:[%s5 + $0xf8] sm:$0xff]
      %v6264 = vld [vmem:[%s5 + $0x100] sm:$0xff]
      %v6265 = vld [vmem:[%s5 + $0x108] sm:$0xff]
      %v6266 = vld [vmem:[%s5 + $0x110] sm:$0xff]
      %v6267 = vld [vmem:[%s5 + $0x118] sm:$0xff]
      %v6268 = vld [vmem:[%s5 + $0x120] sm:$0xff]
      %v6269 = vld [vmem:[%s5 + $0x128] sm:$0xff]
      %v6270 = vld [vmem:[%s5 + $0x130] sm:$0xff]
      %v6271 = vld [vmem:[%s5 + $0x138] sm:$0xff]
      %v6272 = vld [vmem:[%s5 + $0x140] sm:$0xff]
      %v6273 = vld [vmem:[%s5 + $0x148] sm:$0xff]
      %v6274 = vld [vmem:[%s5 + $0x150] sm:$0xff]
      %v6275 = vld [vmem:[%s5 + $0x158] sm:$0xff]
      %v6276 = vld [vmem:[%s5 + $0x160] sm:$0xff]
      %v6277 = vld [vmem:[%s5 + $0x168] sm:$0xff]
      %v6278 = vld [vmem:[%s5 + $0x170] sm:$0xff]
      %v6279 = vld [vmem:[%s5 + $0x178] sm:$0xff]
      %v6280 = vld [vmem:[%s5 + $0x180] sm:$0xff]
      %v6281 = vld [vmem:[%s5 + $0x188] sm:$0xff]
      %v6282 = vld [vmem:[%s5 + $0x190] sm:$0xff]
      %v6283 = vld [vmem:[%s5 + $0x198] sm:$0xff]
      %v6284 = vld [vmem:[%s5 + $0x1a0] sm:$0xff]
      %v6285 = vld [vmem:[%s5 + $0x1a8] sm:$0xff]
      %v6286 = vld [vmem:[%s5 + $0x1b0] sm:$0xff]
      %v6287 = vld [vmem:[%s5 + $0x1b8] sm:$0xff]
      %v6288 = vld [vmem:[%s5 + $0x1c0] sm:$0xff]
      %v6289 = vld [vmem:[%s5 + $0x1c8] sm:$0xff]
      %v6290 = vld [vmem:[%s5 + $0x1d0] sm:$0xff]
      %v6291 = vld [vmem:[%s5 + $0x1d8] sm:$0xff]
      %v6292 = vld [vmem:[%s5 + $0x1e0] sm:$0xff]
      %v6293 = vld [vmem:[%s5 + $0x1e8] sm:$0xff]
      %v6294 = vld [vmem:[%s5 + $0x1f0] sm:$0xff]
      %v6295 = vld [vmem:[%s5 + $0x1f8] sm:$0xff]
      %v6296 = vld [vmem:[%s6] sm:$0x1]
      %6297 = vmatprep.subr.mxu0 0.0
      %6298 = vmatpush1.msra.mxu0 %v6232
      %6299 = vmatprep.subr.mxu0 0.0
      %6300 = vmatpush1.msra.mxu0 %v6233
      %6301 = vmatprep.subr.mxu0 0.0
      %6302 = vmatpush1.msra.mxu0 %v6234
      %6303 = vmatprep.subr.mxu0 0.0
      %6304 = vmatpush1.msra.mxu0 %v6235
      %6305 = vmatprep.subr.mxu0 0.0
      %6306 = vmatpush1.msra.mxu0 %v6236
      %6307 = vmatprep.subr.mxu0 0.0
      %6308 = vmatpush1.msra.mxu0 %v6237
      %6309 = vmatprep.subr.mxu0 0.0
      %6310 = vmatpush1.msra.mxu0 %v6238
      %6311 = vmatprep.subr.mxu0 0.0
      %6312 = vmatpush1.msra.mxu0 %v6239
      %6313 = vmatprep.subr.mxu0 0.0
      %6314 = vmatpush1.msra.mxu0 %v6240
      %6315 = vmatprep.subr.mxu0 0.0
      %6316 = vmatpush1.msra.mxu0 %v6241
      %6317 = vmatprep.subr.mxu0 0.0
      %6318 = vmatpush1.msra.mxu0 %v6242
      %6319 = vmatprep.subr.mxu0 0.0
      %6320 = vmatpush1.msra.mxu0 %v6243
      %6321 = vmatprep.subr.mxu0 0.0
      %6322 = vmatpush1.msra.mxu0 %v6244
      %6323 = vmatprep.subr.mxu0 0.0
      %6324 = vmatpush1.msra.mxu0 %v6245
      %6325 = vmatprep.subr.mxu0 0.0
      %6326 = vmatpush1.msra.mxu0 %v6246
      %6327 = vmatprep.subr.mxu0 0.0
      %6328 = vmatpush1.msra.mxu0 %v6247
      %6329 = vmatprep.subr.mxu0 0.0
      %6330 = vmatpush1.msra.mxu0 %v6248
      %6331 = vmatprep.subr.mxu0 0.0
      %6332 = vmatpush1.msra.mxu0 %v6249
      %6333 = vmatprep.subr.mxu0 0.0
      %6334 = vmatpush1.msra.mxu0 %v6250
      %6335 = vmatprep.subr.mxu0 0.0
      %6336 = vmatpush1.msra.mxu0 %v6251
      %6337 = vmatprep.subr.mxu0 0.0
      %6338 = vmatpush1.msra.mxu0 %v6252
      %6339 = vmatprep.subr.mxu0 0.0
      %6340 = vmatpush1.msra.mxu0 %v6253
      %6341 = vmatprep.subr.mxu0 0.0
      %6342 = vmatpush1.msra.mxu0 %v6254
      %6343 = vmatprep.subr.mxu0 0.0
      %6344 = vmatpush1.msra.mxu0 %v6255
      %6345 = vmatprep.subr.mxu0 0.0
      %6346 = vmatpush1.msra.mxu0 %v6256
      %6347 = vmatprep.subr.mxu0 0.0
      %6348 = vmatpush1.msra.mxu0 %v6257
      %6349 = vmatprep.subr.mxu0 0.0
      %6350 = vmatpush1.msra.mxu0 %v6258
      %6351 = vmatprep.subr.mxu0 0.0
      %6352 = vmatpush1.msra.mxu0 %v6259
      %6353 = vmatprep.subr.mxu0 0.0
      %6354 = vmatpush1.msra.mxu0 %v6260
      %6355 = vmatprep.subr.mxu0 0.0
      %6356 = vmatpush1.msra.mxu0 %v6261
      %6357 = vmatprep.subr.mxu0 0.0
      %6358 = vmatpush1.msra.mxu0 %v6262
      %6359 = vmatprep.subr.mxu0 0.0
      %6360 = vmatpush1.msra.mxu0 %v6263
      %6361 = vmatprep.mubr.f32.mxu0 %v6229
      %6362 = vmatmul.mubr.f32.gmra.mrb[0].mxu0 %v6228
      %v6363 = vpop.f32.mrb[0].mxu0
      %v6364 = vadd.f32 %v6296, %v6363
      %v6365 = vpop.f32.mrb[0].mxu0
      %6366 = vdwg.mxu0
      %6367 = vmatprep.subr.mxu0 0.0
      %6368 = vmatpush1.msra.mxu0 %v6264
      %6369 = vmatprep.subr.mxu0 0.0
      %6370 = vmatpush1.msra.mxu0 %v6265
      %6371 = vmatprep.subr.mxu0 0.0
      %6372 = vmatpush1.msra.mxu0 %v6266
      %6373 = vmatprep.subr.mxu0 0.0
      %6374 = vmatpush1.msra.mxu0 %v6267
      %6375 = vmatprep.subr.mxu0 0.0
      %6376 = vmatpush1.msra.mxu0 %v6268
      %6377 = vmatprep.subr.mxu0 0.0
      %6378 = vmatpush1.msra.mxu0 %v6269
      %6379 = vmatprep.subr.mxu0 0.0
      %6380 = vmatpush1.msra.mxu0 %v6270
      %6381 = vmatprep.subr.mxu0 0.0
      %6382 = vmatpush1.msra.mxu0 %v6271
      %6383 = vmatprep.subr.mxu0 0.0
      %6384 = vmatpush1.msra.mxu0 %v6272
      %6385 = vmatprep.subr.mxu0 0.0
      %6386 = vmatpush1.msra.mxu0 %v6273
      %6387 = vmatprep.subr.mxu0 0.0
      %6388 = vmatpush1.msra.mxu0 %v6274
      %6389 = vmatprep.subr.mxu0 0.0
      %6390 = vmatpush1.msra.mxu0 %v6275
      %6391 = vmatprep.subr.mxu0 0.0
      %6392 = vmatpush1.msra.mxu0 %v6276
      %6393 = vmatprep.subr.mxu0 0.0
      %6394 = vmatpush1.msra.mxu0 %v6277
      %6395 = vmatprep.subr.mxu0 0.0
      %6396 = vmatpush1.msra.mxu0 %v6278
      %6397 = vmatprep.subr.mxu0 0.0
      %6398 = vmatpush1.msra.mxu0 %v6279
      %6399 = vmatprep.subr.mxu0 0.0
      %6400 = vmatpush1.msra.mxu0 %v6280
      %6401 = vmatprep.subr.mxu0 0.0
      %6402 = vmatpush1.msra.mxu0 %v6281
      %6403 = vmatprep.subr.mxu0 0.0
      %6404 = vmatpush1.msra.mxu0 %v6282
      %6405 = vmatprep.subr.mxu0 0.0
      %6406 = vmatpush1.msra.mxu0 %v6283
      %6407 = vmatprep.subr.mxu0 0.0
      %6408 = vmatpush1.msra.mxu0 %v6284
      %6409 = vmatprep.subr.mxu0 0.0
      %6410 = vmatpush1.msra.mxu0 %v6285
      %6411 = vmatprep.subr.mxu0 0.0
      %6412 = vmatpush1.msra.mxu0 %v6286
      %6413 = vmatprep.subr.mxu0 0.0
      %6414 = vmatpush1.msra.mxu0 %v6287
      %6415 = vmatprep.subr.mxu0 0.0
      %6416 = vmatpush1.msra.mxu0 %v6288
      %6417 = vmatprep.subr.mxu0 0.0
      %6418 = vmatpush1.msra.mxu0 %v6289
      %6419 = vmatprep.subr.mxu0 0.0
      %6420 = vmatpush1.msra.mxu0 %v6290
      %6421 = vmatprep.subr.mxu0 0.0
      %6422 = vmatpush1.msra.mxu0 %v6291
      %6423 = vmatprep.subr.mxu0 0.0
      %6424 = vmatpush1.msra.mxu0 %v6292
      %6425 = vmatprep.subr.mxu0 0.0
      %6426 = vmatpush1.msra.mxu0 %v6293
      %6427 = vmatprep.subr.mxu0 0.0
      %6428 = vmatpush1.msra.mxu0 %v6294
      %6429 = vmatprep.subr.mxu0 0.0
      %6430 = vmatpush1.msra.mxu0 %v6295
      %6431 = vmatprep.mubr.f32.mxu0 %v6231
      %6432 = vmatmul.mubr.f32.gmra.mrb[0].mxu0 %v6230
      %v6433 = vpop.f32.mrb[0].mxu0
      %v6434 = vadd.f32 %v6364, %v6433
      %v6435 = vpop.f32.mrb[0].mxu0
      %6436 = vdwg.mxu0
      %v6437 = vmax.f32 %v6434, 0.0
      %v6438 = vld [vmem:[%s7] sm:$0xff]
      %v6439 = vld [vmem:[%s7 + $0x8] sm:$0xff]
      %v6440 = vld [vmem:[%s7 + $0x10] sm:$0xff]
      %v6441 = vld [vmem:[%s7 + $0x18] sm:$0xff]
      %v6442 = vld [vmem:[%s8] sm:$0xf]
      %v6444 = vlaneseq
      %v6445 = vshrl.u32 %v6444, 7
      %v6446 = vsub.s32 0, %v6445
      %v6447 = vrot.slane %v6442, %v6446
      %v6448 = vlaneseq
      %v6449 = vshrl.u32 %v6448, 7
      %v6450 = vsub.s32 1, %v6449
      %v6451 = vrot.slane %v6442, %v6450
      %v6452 = vlaneseq
      %v6453 = vshrl.u32 %v6452, 7
      %v6454 = vsub.s32 2, %v6453
      %v6455 = vrot.slane %v6442, %v6454
      %v6456 = vlaneseq
      %v6457 = vshrl.u32 %v6456, 7
      %v6458 = vsub.s32 3, %v6457
      %v6459 = vrot.slane %v6442, %v6458
      %vm6464 = vcmask 64512
      %v6466 = vsel %vm6464, %v6437, 0
      %6468 = vmatprep.subr.mxu0 %v6439
      %6469 = vmatpush1.msra.mxu0 %v6438
      %6470 = vmatprep.subr.mxu0 0.0
      %6471 = vmatpush1.msra.mxu0 0.0
      %6472 = vmatprep.subr.mxu0 0.0
      %6473 = vmatpush1.msra.mxu0 0.0
      %6474 = vmatprep.subr.mxu0 0.0
      %6475 = vmatpush1.msra.mxu0 0.0
      %6476 = vmatprep.subr.mxu0 0.0
      %6477 = vmatpush1.msra.mxu0 0.0
      %6478 = vmatprep.subr.mxu0 0.0
      %6479 = vmatpush1.msra.mxu0 0.0
      %6480 = vmatprep.subr.mxu0 0.0
      %6481 = vmatpush1.msra.mxu0 0.0
      %6482 = vmatprep.subr.mxu0 0.0
      %6483 = vmatpush1.msra.mxu0 0.0
      %6484 = vmatprep.subr.mxu0 0.0
      %6485 = vmatpush1.msra.mxu0 0.0
      %6486 = vmatprep.subr.mxu0 0.0
      %6487 = vmatpush1.msra.mxu0 0.0
      %6488 = vmatprep.subr.mxu0 0.0
      %6489 = vmatpush1.msra.mxu0 0.0
      %6490 = vmatprep.subr.mxu0 0.0
      %6491 = vmatpush1.msra.mxu0 0.0
      %6492 = vmatprep.subr.mxu0 0.0
      %6493 = vmatpush1.msra.mxu0 0.0
      %6494 = vmatprep.subr.mxu0 0.0
      %6495 = vmatpush1.msra.mxu0 0.0
      %6496 = vmatprep.subr.mxu0 0.0
      %6497 = vmatpush1.msra.mxu0 0.0
      %6498 = vmatprep.subr.mxu0 0.0
      %6499 = vmatpush1.msra.mxu0 0.0
      %6500 = vmatprep.subr.mxu0 0.0
      %6501 = vmatpush1.msra.mxu0 0.0
      %6502 = vmatprep.subr.mxu0 0.0
      %6503 = vmatpush1.msra.mxu0 0.0
      %6504 = vmatprep.subr.mxu0 0.0
      %6505 = vmatpush1.msra.mxu0 0.0
      %6506 = vmatprep.subr.mxu0 0.0
      %6507 = vmatpush1.msra.mxu0 0.0
      %6508 = vmatprep.subr.mxu0 0.0
      %6509 = vmatpush1.msra.mxu0 0.0
      %6510 = vmatprep.subr.mxu0 0.0
      %6511 = vmatpush1.msra.mxu0 0.0
      %6512 = vmatprep.subr.mxu0 0.0
      %6513 = vmatpush1.msra.mxu0 0.0
      %6514 = vmatprep.subr.mxu0 0.0
      %6515 = vmatpush1.msra.mxu0 0.0
      %6516 = vmatprep.subr.mxu0 0.0
      %6517 = vmatpush1.msra.mxu0 0.0
      %6518 = vmatprep.subr.mxu0 0.0
      %6519 = vmatpush1.msra.mxu0 0.0
      %6520 = vmatprep.subr.mxu0 0.0
      %6521 = vmatpush1.msra.mxu0 0.0
      %6522 = vmatprep.subr.mxu0 0.0
      %6523 = vmatpush1.msra.mxu0 0.0
      %6524 = vmatprep.subr.mxu0 0.0
      %6525 = vmatpush1.msra.mxu0 0.0
      %6526 = vmatprep.subr.mxu0 0.0
      %6527 = vmatpush1.msra.mxu0 0.0
      %6528 = vmatprep.subr.mxu0 0.0
      %6529 = vmatpush1.msra.mxu0 0.0
      %6530 = vmatprep.subr.mxu0 0.0
      %6531 = vmatpush1.msra.mxu0 0.0
      %6532 = vmatprep.mubr.f32.mxu0 0.0
      %6533 = vmatmul.mubr.f32.gmra.mrb[0].mxu0 %v6466
      %v6534 = vpop.f32.mrb[0].mxu0
      %v6535 = vadd.f32 %v6447, %v6534
      %v6536 = vpop.f32.mrb[0].mxu0
      %v6537 = vadd.f32 %v6451, %v6536
      %6538 = vdwg.mxu0
      %6539 = vmatprep.subr.mxu0 %v6441
      %6540 = vmatpush1.msra.mxu0 %v6440
      %6541 = vmatprep.subr.mxu0 0.0
      %6542 = vmatpush1.msra.mxu0 0.0
      %6543 = vmatprep.subr.mxu0 0.0
      %6544 = vmatpush1.msra.mxu0 0.0
      %6545 = vmatprep.subr.mxu0 0.0
      %6546 = vmatpush1.msra.mxu0 0.0
      %6547 = vmatprep.subr.mxu0 0.0
      %6548 = vmatpush1.msra.mxu0 0.0
      %6549 = vmatprep.subr.mxu0 0.0
      %6550 = vmatpush1.msra.mxu0 0.0
      %6551 = vmatprep.subr.mxu0 0.0
      %6552 = vmatpush1.msra.mxu0 0.0
      %6553 = vmatprep.subr.mxu0 0.0
      %6554 = vmatpush1.msra.mxu0 0.0
      %6555 = vmatprep.subr.mxu0 0.0
      %6556 = vmatpush1.msra.mxu0 0.0
      %6557 = vmatprep.subr.mxu0 0.0
      %6558 = vmatpush1.msra.mxu0 0.0
      %6559 = vmatprep.subr.mxu0 0.0
      %6560 = vmatpush1.msra.mxu0 0.0
      %6561 = vmatprep.subr.mxu0 0.0
      %6562 = vmatpush1.msra.mxu0 0.0
      %6563 = vmatprep.subr.mxu0 0.0
      %6564 = vmatpush1.msra.mxu0 0.0
      %6565 = vmatprep.subr.mxu0 0.0
      %6566 = vmatpush1.msra.mxu0 0.0
      %6567 = vmatprep.subr.mxu0 0.0
      %6568 = vmatpush1.msra.mxu0 0.0
      %6569 = vmatprep.subr.mxu0 0.0
      %6570 = vmatpush1.msra.mxu0 0.0
      %6571 = vmatprep.subr.mxu0 0.0
      %6572 = vmatpush1.msra.mxu0 0.0
      %6573 = vmatprep.subr.mxu0 0.0
      %6574 = vmatpush1.msra.mxu0 0.0
      %6575 = vmatprep.subr.mxu0 0.0
      %6576 = vmatpush1.msra.mxu0 0.0
      %6577 = vmatprep.subr.mxu0 0.0
      %6578 = vmatpush1.msra.mxu0 0.0
      %6579 = vmatprep.subr.mxu0 0.0
      %6580 = vmatpush1.msra.mxu0 0.0
      %6581 = vmatprep.subr.mxu0 0.0
      %6582 = vmatpush1.msra.mxu0 0.0
      %6583 = vmatprep.subr.mxu0 0.0
      %6584 = vmatpush1.msra.mxu0 0.0
      %6585 = vmatprep.subr.mxu0 0.0
      %6586 = vmatpush1.msra.mxu0 0.0
      %6587 = vmatprep.subr.mxu0 0.0
      %6588 = vmatpush1.msra.mxu0 0.0
      %6589 = vmatprep.subr.mxu0 0.0
      %6590 = vmatpush1.msra.mxu0 0.0
      %6591 = vmatprep.subr.mxu0 0.0
      %6592 = vmatpush1.msra.mxu0 0.0
      %6593 = vmatprep.subr.mxu0 0.0
      %6594 = vmatpush1.msra.mxu0 0.0
      %6595 = vmatprep.subr.mxu0 0.0
      %6596 = vmatpush1.msra.mxu0 0.0
      %6597 = vmatprep.subr.mxu0 0.0
      %6598 = vmatpush1.msra.mxu0 0.0
      %6599 = vmatprep.subr.mxu0 0.0
      %6600 = vmatpush1.msra.mxu0 0.0
      %6601 = vmatprep.subr.mxu0 0.0
      %6602 = vmatpush1.msra.mxu0 0.0
      %6603 = vmatprep.mubr.f32.mxu0 0.0
      %6604 = vmatmul.mubr.f32.gmra.mrb[0].mxu0 %v6466
      %v6605 = vpop.f32.mrb[0].mxu0
      %v6606 = vadd.f32 %v6455, %v6605
      %v6607 = vpop.f32.mrb[0].mxu0
      %v6608 = vadd.f32 %v6459, %v6607
      %6609 = vdwg.mxu0
      %v6610 = vxor.u32 %v6535, 2147483648
      %v6611 = vxor.u32 %v6537, 2147483648
      %v6612 = vxor.u32 %v6606, 2147483648
      %v6613 = vxor.u32 %v6608, 2147483648
      %v6614 = vmul.f32 %v6610, 1.442695
      %v6615 = vpow.pop %v6614
      %v6616 = vmul.f32 %v6611, 1.442695
      %v6617 = vpow.pop %v6616
      %v6618 = vmul.f32 %v6612, 1.442695
      %v6619 = vpow.pop %v6618
      %v6620 = vmul.f32 %v6613, 1.442695
      %v6621 = vpow.pop %v6620
      %v6622 = vadd.f32 %v6615, 1.0
      %v6623 = vadd.f32 %v6617, 1.0
      %v6624 = vadd.f32 %v6619, 1.0
      %v6625 = vadd.f32 %v6621, 1.0
      %v6626 = vrcp.pop %v6622
      %v6627 = vmul.f32 1.0, %v6626
      %v6628 = vrcp.pop %v6623
      %v6629 = vmul.f32 1.0, %v6628
      %v6630 = vrcp.pop %v6624
      %v6631 = vmul.f32 1.0, %v6630
      %v6632 = vrcp.pop %v6625
      %v6633 = vmul.f32 1.0, %v6632
      %v6634 = vlaneseq
      %v6635 = vshrl.u32 %v6634, 7
      %v6636 = vsub.s32 0, %v6635
      %v6637 = vrot.slane %v6627, %v6636
      %v6638 = vlaneseq
      %v6639 = vshrl.u32 %v6638, 7
      %v6640 = vsub.s32 0, %v6639
      %v6641 = vrot.slane %v6629, %v6640
      %v6642 = vlaneseq
      %v6643 = vshrl.u32 %v6642, 7
      %v6644 = vsub.s32 0, %v6643
      %v6645 = vrot.slane %v6631, %v6644
      %v6646 = vlaneseq
      %v6647 = vshrl.u32 %v6646, 7
      %v6648 = vsub.s32 0, %v6647
      %v6649 = vrot.slane %v6633, %v6648
      %v6650 = vmul.f32 %v5934, %v6637
      %v6651 = vmul.f32 %v5936, %v6641
      %v6652 = vmul.f32 %v6192, %v6645
      %v6653 = vmul.f32 %v6194, %v6649
      %v6654 = vmul.f32 %v5938, %v6637
      %v6655 = vmul.f32 %v5940, %v6641
      %v6656 = vmul.f32 %v6196, %v6645
      %v6657 = vmul.f32 %v6198, %v6649
      %v6658 = vadd.f32 %v6650, %v334
      %v6659 = vadd.f32 %v6651, %v335
      %v6660 = vadd.f32 %v6652, %v336
      %v6661 = vadd.f32 %v6653, %v337
      %v6662 = vadd.f32 %v6654, %v338
      %v6663 = vadd.f32 %v6655, %v339
      %v6664 = vadd.f32 %v6656, %v340
      %v6665 = vadd.f32 %v6657, %v341
      %6666 = vst [vmem:[%s332] sm:$0xff] %v6658
      %6667 = vst [vmem:[%s332 + $0x8] sm:$0xff] %v6659
      %6668 = vst [vmem:[%s332 + $0x10] sm:$0xff] %v6660
      %6669 = vst [vmem:[%s332 + $0x18] sm:$0xff] %v6661
      %6670 = vst [vmem:[%s332 + $0x20] sm:$0xff] %v6662
      %6671 = vst [vmem:[%s332 + $0x28] sm:$0xff] %v6663
      %6672 = vst [vmem:[%s332 + $0x30] sm:$0xff] %v6664
      %6673 = vst [vmem:[%s332 + $0x38] sm:$0xff] %v6665
      %p6674 = scmp.lt.s32.totalorder %s20, 1
      %s6675 = scalar_select %p6674, %s20, 1
      %s6676 = smul.addr %s6675, 8
      %s6677 = smul.addr %s6676, 8
      %s6678 = scalar_lea.vmem %s9, %s6677
      // Predicated region
      $region57: #{rcab_forward.1} parent=55 // pred_check
        %p6679 = pneg %p232
      $region58: #{rcab_forward.1} parent=55 // pred_check_branch
        %6681 = sbr.rel (%p6679) target = $region60
      $region59: #{rcab_forward.1} parent=55 // pred_region
        _
      $region60: #{rcab_forward.1} parent=55 // pred_fallthru
        _
    $region56: #{rcab_forward.1} parent=5 // pred_fallthru
      _
    %p6682 = scmp.le.s32.totalorder 2, %s15
    // Predicated region
    $region61: #{rcab_forward.1} parent=5 // pred_check
      %p6683 = pneg %p6682
    $region62: #{rcab_forward.1} parent=5 // pred_check_branch
      %6685 = sbr.rel (%p6683) target = $region64
    $region63: #{rcab_forward.1} parent=5 // pred_region
      %s6686 = ssub.s32 %s15, 2
      // Predicated region
      $region65: #{rcab_forward.1} parent=63 // pred_check
        %p6687 = pneg %p238
      $region66: #{rcab_forward.1} parent=63 // pred_check_branch
        %6689 = sbr.rel (%p6687) target = $region68
      $region67: #{rcab_forward.1} parent=63 // pred_region
        %p6690 = scmp.lt.s32.totalorder %s21, 1
        %s6691 = scalar_select %p6690, %s21, 1
        %s6692 = smul.addr %s6691, 8
        %s6693 = smul.addr %s6692, 8
        %s6694 = scalar_lea.vmem %s9, %s6693
      $region68: #{rcab_forward.1} parent=63 // pred_fallthru
        _
    $region64: #{rcab_forward.1} parent=5 // pred_fallthru
      _
  $region6: #{rcab_forward.1} parent=0 // loop_footer
    %s19 = sadd.s32 1, %s15
  $region7: #{rcab_forward.1} parent=0 // loop_footer_branch
    %14 = sbr.rel target = $region3
  $region8: #{rcab_forward.1} parent=0 // loop_exit
    _

// kernel: tile.44
$region0: #{tile.44}
  %s0 = inlined_call_operand.vmem [shape: f32[8,16,32], index: 0, kind: input, shape index: {}]
  %s1 = inlined_call_operand.vmem [shape: f32[8,512], index: 1, kind: output, shape index: {}]
  %v2 = vld [vmem:[%s0] ss:$4 sm:$0xff]
  %vm3 = vcmask 261120
  %4 = vst.msk [vmem:[%s1] ss:$8 sm:$0xf] %vm3, %v2
  %s5 = scalar_lea.vmem %s1, 4294967265
  %6 = vst.msk [vmem:[%s5] ss:$8 sm:$0xf0] %vm3, %v2
  %s7 = scalar_lea.vmem %s0, 32
  %v8 = vld [vmem:[%s7] ss:$4 sm:$0xff]
  %vm9 = vcmask 261120
  %s10 = scalar_lea.vmem %s1, 2
  %11 = vst.msk [vmem:[%s10] ss:$8 sm:$0xf] %vm9, %v8
  %s12 = scalar_lea.vmem %s1, 4294967267
  %13 = vst.msk [vmem:[%s12] ss:$8 sm:$0xf0] %vm9, %v8
  %s14 = scalar_lea.vmem %s0, 64
  %v15 = vld [vmem:[%s14] ss:$4 sm:$0xff]
  %vm16 = vcmask 261120
  %s17 = scalar_lea.vmem %s1, 4
  %18 = vst.msk [vmem:[%s17] ss:$8 sm:$0xf] %vm16, %v15
  %s19 = scalar_lea.vmem %s1, 4294967269
  %20 = vst.msk [vmem:[%s19] ss:$8 sm:$0xf0] %vm16, %v15
  %s21 = scalar_lea.vmem %s0, 96
  %v22 = vld [vmem:[%s21] ss:$4 sm:$0xff]
  %vm23 = vcmask 261120
  %s24 = scalar_lea.vmem %s1, 6
  %25 = vst.msk [vmem:[%s24] ss:$8 sm:$0xf] %vm23, %v22
  %s26 = scalar_lea.vmem %s1, 4294967271
  %27 = vst.msk [vmem:[%s26] ss:$8 sm:$0xf0] %vm23, %v22
  %s28 = scalar_lea.vmem %s0, 3
  %s29 = smov 3
  %v30 = vld [vmem:[%s28] ss:$16 sm:%s29]
  %s31 = scalar_lea.vmem %s0, 3
  %s32 = smov 12
  %v33 = vld [vmem:[%s31] ss:$16 sm:%s32]
  %vm34 = vcmask 1043458
  %v35 = vsel %vm34, %v33, %v30
  %s36 = scalar_lea.vmem %s0, 3
  %s37 = smov 48
  %v38 = vld [vmem:[%s36] ss:$16 sm:%s37]
  %vm39 = vcmask 1045508
  %v40 = vsel %vm39, %v38, %v35
  %s41 = scalar_lea.vmem %s0, 3
  %s42 = smov 192
  %v43 = vld [vmem:[%s41] ss:$16 sm:%s42]
  %vm44 = vcmask 1047558
  %v45 = vsel %vm44, %v43, %v40
  %46 = vrot.lane.b32.xlu0 %v45, 96
  %v47 = vpop.permute.xlu0 %46
  %vm48 = vcmask 1048320
  %49 = vst.msk [vmem:[%s1] sm:$0xff] %vm48, %v47
  %s50 = scalar_lea.vmem %s0, 7
  %s51 = smov 3
  %v52 = vld [vmem:[%s50] ss:$16 sm:%s51]
  %s53 = scalar_lea.vmem %s0, 7
  %s54 = smov 12
  %v55 = vld [vmem:[%s53] ss:$16 sm:%s54]
  %vm56 = vcmask 1043458
  %v57 = vsel %vm56, %v55, %v52
  %s58 = scalar_lea.vmem %s0, 7
  %s59 = smov 48
  %v60 = vld [vmem:[%s58] ss:$16 sm:%s59]
  %vm61 = vcmask 1045508
  %v62 = vsel %vm61, %v60, %v57
  %s63 = scalar_lea.vmem %s0, 7
  %s64 = smov 192
  %v65 = vld [vmem:[%s63] ss:$16 sm:%s64]
  %vm66 = vcmask 1047558
  %v67 = vsel %vm66, %v65, %v62
  %68 = vrot.lane.b32.xlu0 %v67, 96
  %v69 = vpop.permute.xlu0 %68
  %vm70 = vcmask 1048320
  %s71 = scalar_lea.vmem %s1, 8
  %72 = vst.msk [vmem:[%s71] sm:$0xff] %vm70, %v69
  %s73 = scalar_lea.vmem %s0, 11
  %s74 = smov 3
  %v75 = vld [vmem:[%s73] ss:$16 sm:%s74]
  %s76 = scalar_lea.vmem %s0, 11
  %s77 = smov 12
  %v78 = vld [vmem:[%s76] ss:$16 sm:%s77]
  %vm79 = vcmask 1043458
  %v80 = vsel %vm79, %v78, %v75
  %s81 = scalar_lea.vmem %s0, 11
  %s82 = smov 48
  %v83 = vld [vmem:[%s81] ss:$16 sm:%s82]
  %vm84 = vcmask 1045508
  %v85 = vsel %vm84, %v83, %v80
  %s86 = scalar_lea.vmem %s0, 11
  %s87 = smov 192
  %v88 = vld [vmem:[%s86] ss:$16 sm:%s87]
  %vm89 = vcmask 1047558
  %v90 = vsel %vm89, %v88, %v85
  %91 = vrot.lane.b32.xlu0 %v90, 96
  %v92 = vpop.permute.xlu0 %91
  %vm93 = vcmask 1048320
  %s94 = scalar_lea.vmem %s1, 16
  %95 = vst.msk [vmem:[%s94] sm:$0xff] %vm93, %v92
  %s96 = scalar_lea.vmem %s0, 15
  %s97 = smov 3
  %v98 = vld [vmem:[%s96] ss:$16 sm:%s97]
  %s99 = scalar_lea.vmem %s0, 15
  %s100 = smov 12
  %v101 = vld [vmem:[%s99] ss:$16 sm:%s100]
  %vm102 = vcmask 1043458
  %v103 = vsel %vm102, %v101, %v98
  %s104 = scalar_lea.vmem %s0, 15
  %s105 = smov 48
  %v106 = vld [vmem:[%s104] ss:$16 sm:%s105]
  %vm107 = vcmask 1045508
  %v108 = vsel %vm107, %v106, %v103
  %s109 = scalar_lea.vmem %s0, 15
  %s110 = smov 192
  %v111 = vld [vmem:[%s109] ss:$16 sm:%s110]
  %vm112 = vcmask 1047558
  %v113 = vsel %vm112, %v111, %v108
  %114 = vrot.lane.b32.xlu0 %v113, 96
  %v115 = vpop.permute.xlu0 %114
  %vm116 = vcmask 1048320
  %s117 = scalar_lea.vmem %s1, 24
  %118 = vst.msk [vmem:[%s117] sm:$0xff] %vm116, %v115
  %s119 = scalar_lea.vmem %s0, 2
  %s120 = smov 3
  %v121 = vld [vmem:[%s119] ss:$16 sm:%s120]
  %s122 = scalar_lea.vmem %s0, 2
  %s123 = smov 12
  %v124 = vld [vmem:[%s122] ss:$16 sm:%s123]
  %vm125 = vcmask 1043458
  %v126 = vsel %vm125, %v124, %v121
  %s127 = scalar_lea.vmem %s0, 2
  %s128 = smov 48
  %v129 = vld [vmem:[%s127] ss:$16 sm:%s128]
  %vm130 = vcmask 1045508
  %v131 = vsel %vm130, %v129, %v126
  %s132 = scalar_lea.vmem %s0, 2
  %s133 = smov 192
  %v134 = vld [vmem:[%s132] ss:$16 sm:%s133]
  %vm135 = vcmask 1047558
  %v136 = vsel %vm135, %v134, %v131
  %137 = vrot.lane.b32.xlu0 %v136, 64
  %v138 = vpop.permute.xlu0 %137
  %vm139 = vcmask 785920
  %140 = vst.msk [vmem:[%s1] sm:$0xff] %vm139, %v138
  %s141 = scalar_lea.vmem %s0, 6
  %s142 = smov 3
  %v143 = vld [vmem:[%s141] ss:$16 sm:%s142]
  %s144 = scalar_lea.vmem %s0, 6
  %s145 = smov 12
  %v146 = vld [vmem:[%s144] ss:$16 sm:%s145]
  %vm147 = vcmask 1043458
  %v148 = vsel %vm147, %v146, %v143
  %s149 = scalar_lea.vmem %s0, 6
  %s150 = smov 48
  %v151 = vld [vmem:[%s149] ss:$16 sm:%s150]
  %vm152 = vcmask 1045508
  %v153 = vsel %vm152, %v151, %v148
  %s154 = scalar_lea.vmem %s0, 6
  %s155 = smov 192
  %v156 = vld [vmem:[%s154] ss:$16 sm:%s155]
  %vm157 = vcmask 1047558
  %v158 = vsel %vm157, %v156, %v153
  %159 = vrot.lane.b32.xlu0 %v158, 64
  %v160 = vpop.permute.xlu0 %159
  %vm161 = vcmask 785920
  %s162 = scalar_lea.vmem %s1, 8
  %163 = vst.msk [vmem:[%s162] sm:$0xff] %vm161, %v160
  %s164 = scalar_lea.vmem %s0, 10
  %s165 = smov 3
  %v166 = vld [vmem:[%s164] ss:$16 sm:%s165]
  %s167 = scalar_lea.vmem %s0, 10
  %s168 = smov 12
  %v169 = vld [vmem:[%s167] ss:$16 sm:%s168]
  %vm170 = vcmask 1043458
  %v171 = vsel %vm170, %v169, %v166
  %s172 = scalar_lea.vmem %s0, 10
  %s173 = smov 48
  %v174 = vld [vmem:[%s172] ss:$16 sm:%s173]
  %vm175 = vcmask 1045508
  %v176 = vsel %vm175, %v174, %v171
  %s177 = scalar_lea.vmem %s0, 10
  %s178 = smov 192
  %v179 = vld [vmem:[%s177] ss:$16 sm:%s178]
  %vm180 = vcmask 1047558
  %v181 = vsel %vm180, %v179, %v176
  %182 = vrot.lane.b32.xlu0 %v181, 64
  %v183 = vpop.permute.xlu0 %182
  %vm184 = vcmask 785920
  %s185 = scalar_lea.vmem %s1, 16
  %186 = vst.msk [vmem:[%s185] sm:$0xff] %vm184, %v183
  %s187 = scalar_lea.vmem %s0, 14
  %s188 = smov 3
  %v189 = vld [vmem:[%s187] ss:$16 sm:%s188]
  %s190 = scalar_lea.vmem %s0, 14
  %s191 = smov 12
  %v192 = vld [vmem:[%s190] ss:$16 sm:%s191]
  %vm193 = vcmask 1043458
  %v194 = vsel %vm193, %v192, %v189
  %s195 = scalar_lea.vmem %s0, 14
  %s196 = smov 48
  %v197 = vld [vmem:[%s195] ss:$16 sm:%s196]
  %vm198 = vcmask 1045508
  %v199 = vsel %vm198, %v197, %v194
  %s200 = scalar_lea.vmem %s0, 14
  %s201 = smov 192
  %v202 = vld [vmem:[%s200] ss:$16 sm:%s201]
  %vm203 = vcmask 1047558
  %v204 = vsel %vm203, %v202, %v199
  %205 = vrot.lane.b32.xlu0 %v204, 64
  %v206 = vpop.permute.xlu0 %205
  %vm207 = vcmask 785920
  %s208 = scalar_lea.vmem %s1, 24
  %209 = vst.msk [vmem:[%s208] sm:$0xff] %vm207, %v206
  %s210 = scalar_lea.vmem %s0, 1
  %s211 = smov 3
  %v212 = vld [vmem:[%s210] ss:$16 sm:%s211]
  %s213 = scalar_lea.vmem %s0, 1
  %s214 = smov 12
  %v215 = vld [vmem:[%s213] ss:$16 sm:%s214]
  %vm216 = vcmask 1043458
  %v217 = vsel %vm216, %v215, %v212
  %s218 = scalar_lea.vmem %s0, 1
  %s219 = smov 48
  %v220 = vld [vmem:[%s218] ss:$16 sm:%s219]
  %vm221 = vcmask 1045508
  %v222 = vsel %vm221, %v220, %v217
  %s223 = scalar_lea.vmem %s0, 1
  %s224 = smov 192
  %v225 = vld [vmem:[%s223] ss:$16 sm:%s224]
  %vm226 = vcmask 1047558
  %v227 = vsel %vm226, %v225, %v222
  %228 = vrot.lane.b32.xlu0 %v227, 32
  %v229 = vpop.permute.xlu0 %228
  %vm230 = vcmask 523520
  %231 = vst.msk [vmem:[%s1] sm:$0xff] %vm230, %v229
  %s232 = scalar_lea.vmem %s0, 5
  %s233 = smov 3
  %v234 = vld [vmem:[%s232] ss:$16 sm:%s233]
  %s235 = scalar_lea.vmem %s0, 5
  %s236 = smov 12
  %v237 = vld [vmem:[%s235] ss:$16 sm:%s236]
  %vm238 = vcmask 1043458
  %v239 = vsel %vm238, %v237, %v234
  %s240 = scalar_lea.vmem %s0, 5
  %s241 = smov 48
  %v242 = vld [vmem:[%s240] ss:$16 sm:%s241]
  %vm243 = vcmask 1045508
  %v244 = vsel %vm243, %v242, %v239
  %s245 = scalar_lea.vmem %s0, 5
  %s246 = smov 192
  %v247 = vld [vmem:[%s245] ss:$16 sm:%s246]
  %vm248 = vcmask 1047558
  %v249 = vsel %vm248, %v247, %v244
  %250 = vrot.lane.b32.xlu0 %v249, 32
  %v251 = vpop.permute.xlu0 %250
  %vm252 = vcmask 523520
  %s253 = scalar_lea.vmem %s1, 8
  %254 = vst.msk [vmem:[%s253] sm:$0xff] %vm252, %v251
  %s255 = scalar_lea.vmem %s0, 9
  %s256 = smov 3
  %v257 = vld [vmem:[%s255] ss:$16 sm:%s256]
  %s258 = scalar_lea.vmem %s0, 9
  %s259 = smov 12
  %v260 = vld [vmem:[%s258] ss:$16 sm:%s259]
  %vm261 = vcmask 1043458
  %v262 = vsel %vm261, %v260, %v257
  %s263 = scalar_lea.vmem %s0, 9
  %s264 = smov 48
  %v265 = vld [vmem:[%s263] ss:$16 sm:%s264]
  %vm266 = vcmask 1045508
  %v267 = vsel %vm266, %v265, %v262
  %s268 = scalar_lea.vmem %s0, 9
  %s269 = smov 192
  %v270 = vld [vmem:[%s268] ss:$16 sm:%s269]
  %vm271 = vcmask 1047558
  %v272 = vsel %vm271, %v270, %v267
  %273 = vrot.lane.b32.xlu0 %v272, 32
  %v274 = vpop.permute.xlu0 %273
  %vm275 = vcmask 523520
  %s276 = scalar_lea.vmem %s1, 16
  %277 = vst.msk [vmem:[%s276] sm:$0xff] %vm275, %v274
  %s278 = scalar_lea.vmem %s0, 13
  %s279 = smov 3
  %v280 = vld [vmem:[%s278] ss:$16 sm:%s279]
  %s281 = scalar_lea.vmem %s0, 13
  %s282 = smov 12
  %v283 = vld [vmem:[%s281] ss:$16 sm:%s282]
  %vm284 = vcmask 1043458
  %v285 = vsel %vm284, %v283, %v280
  %s286 = scalar_lea.vmem %s0, 13
  %s287 = smov 48
  %v288 = vld [vmem:[%s286] ss:$16 sm:%s287]
  %vm289 = vcmask 1045508
  %v290 = vsel %vm289, %v288, %v285
  %s291 = scalar_lea.vmem %s0, 13
  %s292 = smov 192
  %v293 = vld [vmem:[%s291] ss:$16 sm:%s292]
  %vm294 = vcmask 1047558
  %v295 = vsel %vm294, %v293, %v290
  %296 = vrot.lane.b32.xlu0 %v295, 32
  %v297 = vpop.permute.xlu0 %296
  %vm298 = vcmask 523520
  %s299 = scalar_lea.vmem %s1, 24
  %300 = vst.msk [vmem:[%s299] sm:$0xff] %vm298, %v297

// kernel: rcab_forward.1
$region0: #{rcab_forward.1}
  #allocation0 [shape = 'u32[]', space=smem, size = 0x4, offset = 0x4, fixed_abs, tag = 'smem constant byte address 0x4 - core index']
  #allocation1 [shape = 'u32[144,128]{1,0:T(1,128)}', space=vmem, size = 0x12000, scoped, tag = 'internal scratch']
  #allocation2 [shape = 'bf16[16,1536]{1,0:T(16,128)(2,1)}', space=vmem, size = 0xc000, scoped, tag = 'scratch operand']
  %s0 = inlined_call_operand.vmem [shape: f32[2,16,512], index: 0, kind: input, shape index: {}]
  %s1 = inlined_call_operand.vmem [shape: bf16[1536,512], index: 1, kind: input, shape index: {}]
  %s2 = inlined_call_operand.vmem [shape: f32[1,512], index: 2, kind: input, shape index: {}]
  %s3 = inlined_call_operand.vmem [shape: bf16[1536,512], index: 3, kind: input, shape index: {}]
  %s4 = inlined_call_operand.vmem [shape: f32[1,512], index: 4, kind: input, shape index: {}]
  %s5 = inlined_call_operand.vmem [shape: f32[512,8], index: 5, kind: input, shape index: {}]
  %s6 = inlined_call_operand.vmem [shape: f32[1,8], index: 6, kind: input, shape index: {}]
  %s7 = inlined_call_operand.vmem [shape: f32[8,512], index: 7, kind: input, shape index: {}]
  %s8 = inlined_call_operand.vmem [shape: f32[1,512], index: 8, kind: input, shape index: {}]
  %s9 = inlined_call_operand.vmem [shape: f32[2,16,512], index: 9, kind: output, shape index: {}]
  %s10 = sld [smem:[#allocation0]]
  $region69: #{rcab_forward.1} parent=0
    _
  %s12 = ssub.s32 1, %s10
  %s13 = scalar_select 0, %s12, %s10
  loop: start=0, step=1, limit=4
  $region2: #{rcab_forward.1} parent=0 // loop_pre_header
    _
  $region3: #{rcab_forward.1} parent=0 // loop_header
    %s15 = sphi 0, %s19
    %p16 = scmp.ge.s32.totalorder %s15, 4
    %s25 = sphi 0, %s27
    %s28 = sphi 0, %s25
    %s29 = sphi 0, %s28
    %s45 = sphi 0, %s29
    %s49 = sphi 0, %s49
    %s51 = sphi 0, %s49
    %s52 = sphi 0, %s51
    %s66 = sphi 0, %s52
    %s70 = sphi 0, %s70
    %s72 = sphi 0, %s70
    %s73 = sphi 0, %s72
    %s87 = sphi 0, %s73
    %s91 = sphi 0, %s91
    %s93 = sphi 0, %s91
    %s94 = sphi 0, %s93
    %s108 = sphi 0, %s94
    %s112 = sphi 0, %s112
    %s114 = sphi 0, %s112
    %s115 = sphi 0, %s114
    %s129 = sphi 0, %s115
    %s133 = sphi 0, %s133
    %s135 = sphi 0, %s133
    %s136 = sphi 0, %s135
    %s150 = sphi 0, %s136
    %s154 = sphi 0, %s154
    %s156 = sphi 0, %s154
    %s157 = sphi 0, %s156
    %s171 = sphi 0, %s157
    %s175 = sphi 0, %s175
    %s177 = sphi 0, %s175
    %s178 = sphi 0, %s177
    %s192 = sphi 0, %s178
    %s196 = sphi 0, %s196
    %s198 = sphi 0, %s196
    %s199 = sphi 0, %s198
    %s213 = sphi 0, %s199
    %s219 = sphi 0, %s221
    %s222 = sphi 0, %s219
    %s223 = sphi 0, %s222
    %s239 = sphi 0, %s223
  $region4: #{rcab_forward.1} parent=0 // loop_header_branch
    %18 = sbr.rel (%p16) target = $region8
  $region5: #{rcab_forward.1} parent=0 // loop_body
    %s20 = ssub.s32 %s15, 1
    %s21 = ssub.s32 %s15, 2
    %s22 = sadd.s32 %s15, 1
    %s23 = ssub.s32 %s15, %s22
    %p24 = scmp.eq.s32.totalorder %s23, 0
    %s26 = sadd.s32 %s25, 1
    %s27 = scalar_select %p24, %s25, %s26
    %p30 = pneg %p24
    %p31 = scmp.eq.s32.totalorder %s15, 1
    %p32 = por %p30, %p31
    %p33 = scmp.ne.s32.totalorder %s25, %s28
    %p34 = scmp.eq.s32.totalorder %s15, 0
    %p35 = por %p33, %p34
    %p36 = scmp.ne.s32.totalorder %s25, %s28
    %p37 = scmp.eq.s32.totalorder %s20, 1
    %p38 = por %p36, %p37
    %p39 = scmp.ne.s32.totalorder %s28, %s29
    %p40 = scmp.eq.s32.totalorder %s20, 0
    %p41 = por %p39, %p40
    %p42 = scmp.ne.s32.totalorder %s28, %s29
    %p43 = scmp.eq.s32.totalorder %s21, 1
    %p44 = por %p42, %p43
    %p46 = scmp.ne.s32.totalorder %s29, %s45
    %p47 = scmp.eq.s32.totalorder %s21, 0
    %p48 = por %p46, %p47
    %s50 = sadd.s32 %s49, 1
    %p53 = scmp.eq.s32.totalorder %s15, 1
    %p54 = scmp.ne.s32.totalorder %s49, %s51
    %p55 = scmp.eq.s32.totalorder %s15, 0
    %p56 = por %p54, %p55
    %p57 = scmp.ne.s32.totalorder %s49, %s51
    %p58 = scmp.eq.s32.totalorder %s20, 1
    %p59 = por %p57, %p58
    %p60 = scmp.ne.s32.totalorder %s51, %s52
    %p61 = scmp.eq.s32.totalorder %s20, 0
    %p62 = por %p60, %p61
    %p63 = scmp.ne.s32.totalorder %s51, %s52
    %p64 = scmp.eq.s32.totalorder %s21, 1
    %p65 = por %p63, %p64
    %p67 = scmp.ne.s32.totalorder %s52, %s66
    %p68 = scmp.eq.s32.totalorder %s21, 0
    %p69 = por %p67, %p68
    %s71 = sadd.s32 %s70, 1
    %p74 = scmp.eq.s32.totalorder %s15, 1
    %p75 = scmp.ne.s32.totalorder %s70, %s72
    %p76 = scmp.eq.s32.totalorder %s15, 0
    %p77 = por %p75, %p76
    %p78 = scmp.ne.s32.totalorder %s70, %s72
    %p79 = scmp.eq.s32.totalorder %s20, 1
    %p80 = por %p78, %p79
    %p81 = scmp.ne.s32.totalorder %s72, %s73
    %p82 = scmp.eq.s32.totalorder %s20, 0
    %p83 = por %p81, %p82
    %p84 = scmp.ne.s32.totalorder %s72, %s73
    %p85 = scmp.eq.s32.totalorder %s21, 1
    %p86 = por %p84, %p85
    %p88 = scmp.ne.s32.totalorder %s73, %s87
    %p89 = scmp.eq.s32.totalorder %s21, 0
    %p90 = por %p88, %p89
    %s92 = sadd.s32 %s91, 1
    %p95 = scmp.eq.s32.totalorder %s15, 1
    %p96 = scmp.ne.s32.totalorder %s91, %s93
    %p97 = scmp.eq.s32.totalorder %s15, 0
    %p98 = por %p96, %p97
    %p99 = scmp.ne.s32.totalorder %s91, %s93
    %p100 = scmp.eq.s32.totalorder %s20, 1
    %p101 = por %p99, %p100
    %p102 = scmp.ne.s32.totalorder %s93, %s94
    %p103 = scmp.eq.s32.totalorder %s20, 0
    %p104 = por %p102, %p103
    %p105 = scmp.ne.s32.totalorder %s93, %s94
    %p106 = scmp.eq.s32.totalorder %s21, 1
    %p107 = por %p105, %p106
    %p109 = scmp.ne.s32.totalorder %s94, %s108
    %p110 = scmp.eq.s32.totalorder %s21, 0
    %p111 = por %p109, %p110
    %s113 = sadd.s32 %s112, 1
    %p116 = scmp.eq.s32.totalorder %s15, 1
    %p117 = scmp.ne.s32.totalorder %s112, %s114
    %p118 = scmp.eq.s32.totalorder %s15, 0
    %p119 = por %p117, %p118
    %p120 = scmp.ne.s32.totalorder %s112, %s114
    %p121 = scmp.eq.s32.totalorder %s20, 1
    %p122 = por %p120, %p121
    %p123 = scmp.ne.s32.totalorder %s114, %s115
    %p124 = scmp.eq.s32.totalorder %s20, 0
    %p125 = por %p123, %p124
    %p126 = scmp.ne.s32.totalorder %s114, %s115
    %p127 = scmp.eq.s32.totalorder %s21, 1
    %p128 = por %p126, %p127
    %p130 = scmp.ne.s32.totalorder %s115, %s129
    %p131 = scmp.eq.s32.totalorder %s21, 0
    %p132 = por %p130, %p131
    %s134 = sadd.s32 %s133, 1
    %p137 = scmp.eq.s32.totalorder %s15, 1
    %p138 = scmp.ne.s32.totalorder %s133, %s135
    %p139 = scmp.eq.s32.totalorder %s15, 0
    %p140 = por %p138, %p139
    %p141 = scmp.ne.s32.totalorder %s133, %s135
    %p142 = scmp.eq.s32.totalorder %s20, 1
    %p143 = por %p141, %p142
    %p144 = scmp.ne.s32.totalorder %s135, %s136
    %p145 = scmp.eq.s32.totalorder %s20, 0
    %p146 = por %p144, %p145
    %p147 = scmp.ne.s32.totalorder %s135, %s136
    %p148 = scmp.eq.s32.totalorder %s21, 1
    %p149 = por %p147, %p148
    %p151 = scmp.ne.s32.totalorder %s136, %s150
    %p152 = scmp.eq.s32.totalorder %s21, 0
    %p153 = por %p151, %p152
    %s155 = sadd.s32 %s154, 1
    %p158 = scmp.eq.s32.totalorder %s15, 1
    %p159 = scmp.ne.s32.totalorder %s154, %s156
    %p160 = scmp.eq.s32.totalorder %s15, 0
    %p161 = por %p159, %p160
    %p162 = scmp.ne.s32.totalorder %s154, %s156
    %p163 = scmp.eq.s32.totalorder %s20, 1
    %p164 = por %p162, %p163
    %p165 = scmp.ne.s32.totalorder %s156, %s157
    %p166 = scmp.eq.s32.totalorder %s20, 0
    %p167 = por %p165, %p166
    %p168 = scmp.ne.s32.totalorder %s156, %s157
    %p169 = scmp.eq.s32.totalorder %s21, 1
    %p170 = por %p168, %p169
    %p172 = scmp.ne.s32.totalorder %s157, %s171
    %p173 = scmp.eq.s32.totalorder %s21, 0
    %p174 = por %p172, %p173
    %s176 = sadd.s32 %s175, 1
    %p179 = scmp.eq.s32.totalorder %s15, 1
    %p180 = scmp.ne.s32.totalorder %s175, %s177
    %p181 = scmp.eq.s32.totalorder %s15, 0
    %p182 = por %p180, %p181
    %p183 = scmp.ne.s32.totalorder %s175, %s177
    %p184 = scmp.eq.s32.totalorder %s20, 1
    %p185 = por %p183, %p184
    %p186 = scmp.ne.s32.totalorder %s177, %s178
    %p187 = scmp.eq.s32.totalorder %s20, 0
    %p188 = por %p186, %p187
    %p189 = scmp.ne.s32.totalorder %s177, %s178
    %p190 = scmp.eq.s32.totalorder %s21, 1
    %p191 = por %p189, %p190
    %p193 = scmp.ne.s32.totalorder %s178, %s192
    %p194 = scmp.eq.s32.totalorder %s21, 0
    %p195 = por %p193, %p194
    %s197 = sadd.s32 %s196, 1
    %p200 = scmp.eq.s32.totalorder %s15, 1
    %p201 = scmp.ne.s32.totalorder %s196, %s198
    %p202 = scmp.eq.s32.totalorder %s15, 0
    %p203 = por %p201, %p202
    %p204 = scmp.ne.s32.totalorder %s196, %s198
    %p205 = scmp.eq.s32.totalorder %s20, 1
    %p206 = por %p204, %p205
    %p207 = scmp.ne.s32.totalorder %s198, %s199
    %p208 = scmp.eq.s32.totalorder %s20, 0
    %p209 = por %p207, %p208
    %p210 = scmp.ne.s32.totalorder %s198, %s199
    %p211 = scmp.eq.s32.totalorder %s21, 1
    %p212 = por %p210, %p211
    %p214 = scmp.ne.s32.totalorder %s199, %s213
    %p215 = scmp.eq.s32.totalorder %s21, 0
    %p216 = por %p214, %p215
    %s217 = ssub.s32 %s15, %s22
    %p218 = scmp.eq.s32.totalorder %s217, 0
    %s220 = sadd.s32 %s219, 1
    %s221 = scalar_select %p218, %s219, %s220
    %p224 = pneg %p218
    %p225 = scmp.eq.s32.totalorder %s15, 1
    %p226 = por %p224, %p225
    %p227 = scmp.ne.s32.totalorder %s219, %s222
    %p228 = scmp.eq.s32.totalorder %s15, 0
    %p229 = por %p227, %p228
    %p230 = scmp.ne.s32.totalorder %s219, %s222
    %p231 = scmp.eq.s32.totalorder %s20, 1
    %p232 = por %p230, %p231
    %p233 = scmp.ne.s32.totalorder %s222, %s223
    %p234 = scmp.eq.s32.totalorder %s20, 0
    %p235 = por %p233, %p234
    %p236 = scmp.ne.s32.totalorder %s222, %s223
    %p237 = scmp.eq.s32.totalorder %s21, 1
    %p238 = por %p236, %p237
    %p240 = scmp.ne.s32.totalorder %s223, %s239
    %p241 = scmp.eq.s32.totalorder %s21, 0
    %p242 = por %p240, %p241
    %p243 = scmp.le.s32.totalorder 1, %s15
    %p244 = scmp.lt.s32.totalorder %s15, 3
    %p245 = pnand %p243, %p244
    %p246 = pneg %p245
    // Predicated region
    $region9: #{rcab_forward.1} parent=5 // pred_check
      _
    $region10: #{rcab_forward.1} parent=5 // pred_check_branch
      %248 = sbr.rel (%p245) target = $region12
    $region11: #{rcab_forward.1} parent=5 // pred_region
      %s249 = ssub.s32 %s15, 1
      // Predicated region
      $region13: #{rcab_forward.1} parent=11 // pred_check
        %p250 = pneg %p62
      $region14: #{rcab_forward.1} parent=11 // pred_check_branch
        %252 = sbr.rel (%p250) target = $region16
      $region15: #{rcab_forward.1} parent=11 // pred_region
        _
      $region16: #{rcab_forward.1} parent=11 // pred_fallthru
        _
      // Predicated region
      $region17: #{rcab_forward.1} parent=11 // pred_check
        %p253 = pneg %p83
      $region18: #{rcab_forward.1} parent=11 // pred_check_branch
        %255 = sbr.rel (%p253) target = $region20
      $region19: #{rcab_forward.1} parent=11 // pred_region
        _
      $region20: #{rcab_forward.1} parent=11 // pred_fallthru
        _
      // Predicated region
      $region21: #{rcab_forward.1} parent=11 // pred_check
        %p256 = pneg %p104
      $region22: #{rcab_forward.1} parent=11 // pred_check_branch
        %258 = sbr.rel (%p256) target = $region24
      $region23: #{rcab_forward.1} parent=11 // pred_region
        _
      $region24: #{rcab_forward.1} parent=11 // pred_fallthru
        _
      // Predicated region
      $region25: #{rcab_forward.1} parent=11 // pred_check
        %p259 = pneg %p125
      $region26: #{rcab_forward.1} parent=11 // pred_check_branch
        %261 = sbr.rel (%p259) target = $region28
      $region27: #{rcab_forward.1} parent=11 // pred_region
        _
      $region28: #{rcab_forward.1} parent=11 // pred_fallthru
        _
      // Predicated region
      $region29: #{rcab_forward.1} parent=11 // pred_check
        %p262 = pneg %p146
      $region30: #{rcab_forward.1} parent=11 // pred_check_branch
        %264 = sbr.rel (%p262) target = $region32
      $region31: #{rcab_forward.1} parent=11 // pred_region
        _
      $region32: #{rcab_forward.1} parent=11 // pred_fallthru
        _
      // Predicated region
      $region33: #{rcab_forward.1} parent=11 // pred_check
        %p265 = pneg %p167
      $region34: #{rcab_forward.1} parent=11 // pred_check_branch
        %267 = sbr.rel (%p265) target = $region36
      $region35: #{rcab_forward.1} parent=11 // pred_region
        _
      $region36: #{rcab_forward.1} parent=11 // pred_fallthru
        _
      // Predicated region
      $region37: #{rcab_forward.1} parent=11 // pred_check
        %p268 = pneg %p188
      $region38: #{rcab_forward.1} parent=11 // pred_check_branch
        %270 = sbr.rel (%p268) target = $region40
      $region39: #{rcab_forward.1} parent=11 // pred_region
        _
      $region40: #{rcab_forward.1} parent=11 // pred_fallthru
        _
      // Predicated region
      $region41: #{rcab_forward.1} parent=11 // pred_check
        %p271 = pneg %p209
      $region42: #{rcab_forward.1} parent=11 // pred_check_branch
        %273 = sbr.rel (%p271) target = $region44
      $region43: #{rcab_forward.1} parent=11 // pred_region
        _
      $region44: #{rcab_forward.1} parent=11 // pred_fallthru
        _
    $region12: #{rcab_forward.1} parent=5 // pred_fallthru
      _
    %p274 = scmp.lt.s32.totalorder %s15, 2
    // Predicated region
    $region45: #{rcab_forward.1} parent=5 // pred_check
      %p275 = pneg %p274
    $region46: #{rcab_forward.1} parent=5 // pred_check_branch
      %277 = sbr.rel (%p275) target = $region48
    $region47: #{rcab_forward.1} parent=5 // pred_region
      // Predicated region
      $region49: #{rcab_forward.1} parent=47 // pred_check
        %p278 = pneg %p35
      $region50: #{rcab_forward.1} parent=47 // pred_check_branch
        %280 = sbr.rel (%p278) target = $region52
      $region51: #{rcab_forward.1} parent=47 // pred_region
        %p281 = scmp.lt.s32.totalorder %s15, 1
        %s282 = scalar_select %p281, %s15, 1
        %s283 = smul.addr %s282, 8
        %s284 = smul.addr %s283, 8
        %s285 = scalar_lea.vmem %s0, %s284
      $region52: #{rcab_forward.1} parent=47 // pred_fallthru
        _
    $region48: #{rcab_forward.1} parent=5 // pred_fallthru
      _
    %p286 = scmp.le.s32.totalorder 1, %s15
    %p287 = scmp.lt.s32.totalorder %s15, 3
    %p288 = pnand %p286, %p287
    %p289 = pneg %p288
    // Predicated region
    $region53: #{rcab_forward.1} parent=5 // pred_check
      _
    $region54: #{rcab_forward.1} parent=5 // pred_check_branch
      %291 = sbr.rel (%p288) target = $region56
    $region55: #{rcab_forward.1} parent=5 // pred_region
      %s292 = ssub.s32 %s15, 1
      %p293 = scmp.lt.s32.totalorder %s20, 1
      %s294 = scalar_select %p293, %s20, 1
      %s295 = smul.addr %s294, 8
      %s296 = smul.addr %s295, 8
      %s297 = scalar_lea.vmem %s0, %s296
      %p298 = pneg %p41
      %p299 = pneg %p38
      %p300 = pneg %p62
      %p301 = pneg %p59
      %p302 = pneg %p83
      %p303 = pneg %p80
      %p304 = pneg %p104
      %p305 = pneg %p101
      %p306 = pneg %p125
      %p307 = pneg %p122
      %p308 = pneg %p146
      %p309 = pneg %p143
      %p310 = pneg %p167
      %p311 = pneg %p164
      %p312 = pneg %p188
      %p313 = pneg %p185
      %p314 = pneg %p209
      %p315 = pneg %p206
      %p316 = pneg %p235
      %p317 = pneg %p232
      %p318 = scmp.lt.s32.totalorder %s20, 1
      %s319 = scalar_select %p318, %s20, 1
      %s320 = smul.addr %s319, 8
      %s321 = smul.addr %s320, 8
      %s322 = scalar_lea.vmem %s9, %s321
      %p323 = scmp.lt.s32.totalorder %s20, 1
      %s324 = scalar_select %p323, %s20, 1
      %s325 = smul.addr %s324, 8
      %s326 = smul.addr %s325, 8
      %s327 = scalar_lea.vmem %s0, %s326
      %p328 = scmp.lt.s32.totalorder %s20, 1
      %s329 = scalar_select %p328, %s20, 1
      %s330 = smul.addr %s329, 8
      %s331 = smul.addr %s330, 8
      %s332 = scalar_lea.vmem %s9, %s331
      %v334 = vld [vmem:[%s327] sm:$0xff]
      %v335 = vld [vmem:[%s327 + $0x8] sm:$0xff]
      %v336 = vld [vmem:[%s327 + $0x10] sm:$0xff]
      %v337 = vld [vmem:[%s327 + $0x18] sm:$0xff]
      %v338 = vld [vmem:[%s327 + $0x20] sm:$0xff]
      %v339 = vld [vmem:[%s327 + $0x28] sm:$0xff]
      %v340 = vld [vmem:[%s327 + $0x30] sm:$0xff]
      %v341 = vld [vmem:[%s327 + $0x38] sm:$0xff]
      %v342 = vpack.c.bf16 %v338, %v334
      %v343 = vpack.c.bf16 %v339, %v335
      %v344 = vpack.c.bf16 %v340, %v336
      %v345 = vpack.c.bf16 %v341, %v337
      %v347 = vshrl.u32 %v342, 16
      %v349 = vrot.slane %v347, 7
      %v350 = vshll.u32 %v342, 16
      %v352 = vor.u32 %v349, %v350
      %v354 = vshrl.u32 %v343, 16
      %v356 = vrot.slane %v354, 7
      %v357 = vshll.u32 %v343, 16
      %v359 = vor.u32 %v356, %v357
      %v361 = vshrl.u32 %v344, 16
      %v363 = vrot.slane %v361, 7
      %v364 = vshll.u32 %v344, 16
      %v366 = vor.u32 %v363, %v364
      %v368 = vshrl.u32 %v345, 16
      %v370 = vrot.slane %v368, 7
      %v371 = vshll.u32 %v345, 16
      %v373 = vor.u32 %v370, %v371
      %vm378 = vcmask 1040384
      %vm379 = vsmask.f32 256
      %vm380 = vmand %vm378, %vm379
      %v381 = vsel %vm380, 0, %v352
      %v382 = vsel %vm380, 0, %v359
      %v383 = vsel %vm380, 0, %v366
      %v384 = vsel %vm380, 0, %v373
      %v385 = vrot.slane %v350, 1
      %v386 = vor.u32 %v347, %v385
      %v387 = vrot.slane %v357, 1
      %v388 = vor.u32 %v354, %v387
      %v389 = vrot.slane %v364, 1
      %v390 = vor.u32 %v361, %v389
      %v391 = vrot.slane %v371, 1
      %v392 = vor.u32 %v368, %v391
      %vm397 = vcmask 1047552
      %vm398 = vsmask.f32 7424
      %vm399 = vmand %vm397, %vm398
      %v400 = vsel %vm399, %v386, 0
      %v401 = vsel %vm399, %v388, 0
      %v402 = vsel %vm399, %v390, 0
      %v403 = vsel %vm399, %v392, 0
      %404 = vst [vmem:[#allocation2] sm:$0xff] %v381
      %405 = vst [vmem:[#allocation2 + $0x8] sm:$0xff] %v382
      %406 = vst [vmem:[#allocation2 + $0x10] sm:$0xff] %v383
      %407 = vst [vmem:[#allocation2 + $0x18] sm:$0xff] %v384
      %408 = vst [vmem:[#allocation2 + $0x20] sm:$0xff] %v342
      %409 = vst [vmem:[#allocation2 + $0x28] sm:$0xff] %v343
      %410 = vst [vmem:[#allocation2 + $0x30] sm:$0xff] %v344
      %411 = vst [vmem:[#allocation2 + $0x38] sm:$0xff] %v345
      %412 = vst [vmem:[#allocation2 + $0x40] sm:$0xff] %v400
      %413 = vst [vmem:[#allocation2 + $0x48] sm:$0xff] %v401
      %414 = vst [vmem:[#allocation2 + $0x50] sm:$0xff] %v402
      %415 = vst [vmem:[#allocation2 + $0x58] sm:$0xff] %v403
      %v416 = vld [vmem:[%s2] sm:$0xf]
      %v417 = vld [vmem:[#allocation2] sm:$0xff]
      %v418 = vld [vmem:[#allocation2 + $0x8] sm:$0xff]
      %v419 = vld [vmem:[#allocation2 + $0x10] sm:$0xff]
      %v420 = vld [vmem:[#allocation2 + $0x18] sm:$0xff]
      %v421 = vld [vmem:[#allocation2 + $0x20] sm:$0xff]
      %v422 = vld [vmem:[#allocation2 + $0x28] sm:$0xff]
      %v423 = vld [vmem:[#allocation2 + $0x30] sm:$0xff]
      %v424 = vld [vmem:[#allocation2 + $0x38] sm:$0xff]
      %v425 = vld [vmem:[#allocation2 + $0x40] sm:$0xff]
      %v426 = vld [vmem:[#allocation2 + $0x48] sm:$0xff]
      %v427 = vld [vmem:[#allocation2 + $0x50] sm:$0xff]
      %v428 = vld [vmem:[#allocation2 + $0x58] sm:$0xff]
      %v429 = vld [vmem:[%s1] sm:$0xff]
      %v430 = vld [vmem:[%s1 + $0x8] sm:$0xff]
      %v431 = vld [vmem:[%s1 + $0x10] sm:$0xff]
      %v432 = vld [vmem:[%s1 + $0x18] sm:$0xff]
      %v433 = vld [vmem:[%s1 + $0x20] sm:$0xff]
      %v434 = vld [vmem:[%s1 + $0x28] sm:$0xff]
      %v435 = vld [vmem:[%s1 + $0x30] sm:$0xff]
      %v436 = vld [vmem:[%s1 + $0x38] sm:$0xff]
      %v437 = vld [vmem:[%s1 + $0x40] sm:$0xff]
      %v438 = vld [vmem:[%s1 + $0x48] sm:$0xff]
      %v439 = vld [vmem:[%s1 + $0x50] sm:$0xff]
      %v440 = vld [vmem:[%s1 + $0x58] sm:$0xff]
      %v441 = vld [vmem:[%s1 + $0x60] sm:$0xff]
      %v442 = vld [vmem:[%s1 + $0x68] sm:$0xff]
      %v443 = vld [vmem:[%s1 + $0x70] sm:$0xff]
      %v444 = vld [vmem:[%s1 + $0x78] sm:$0xff]
      %v445 = vld [vmem:[%s1 + $0x80] sm:$0xff]
      %v446 = vld [vmem:[%s1 + $0x88] sm:$0xff]
      %v447 = vld [vmem:[%s1 + $0x90] sm:$0xff]
      %v448 = vld [vmem:[%s1 + $0x98] sm:$0xff]
      %v449 = vld [vmem:[%s1 + $0xa0] sm:$0xff]
      %v450 = vld [vmem:[%s1 + $0xa8] sm:$0xff]
      %v451 = vld [vmem:[%s1 + $0xb0] sm:$0xff]
      %v452 = vld [vmem:[%s1 + $0xb8] sm:$0xff]
      %v453 = vld [vmem:[%s1 + $0xc0] sm:$0xff]
      %v454 = vld [vmem:[%s1 + $0xc8] sm:$0xff]
      %v455 = vld [vmem:[%s1 + $0xd0] sm:$0xff]
      %v456 = vld [vmem:[%s1 + $0xd8] sm:$0xff]
      %v457 = vld [vmem:[%s1 + $0xe0] sm:$0xff]
      %v458 = vld [vmem:[%s1 + $0xe8] sm:$0xff]
      %v459 = vld [vmem:[%s1 + $0xf0] sm:$0xff]
      %v460 = vld [vmem:[%s1 + $0xf8] sm:$0xff]
      %v461 = vld [vmem:[%s1 + $0x100] sm:$0xff]
      %v462 = vld [vmem:[%s1 + $0x108] sm:$0xff]
      %v463 = vld [vmem:[%s1 + $0x110] sm:$0xff]
      %v464 = vld [vmem:[%s1 + $0x118] sm:$0xff]
      %v465 = vld [vmem:[%s1 + $0x120] sm:$0xff]
      %v466 = vld [vmem:[%s1 + $0x128] sm:$0xff]
      %v467 = vld [vmem:[%s1 + $0x130] sm:$0xff]
      %v468 = vld [vmem:[%s1 + $0x138] sm:$0xff]
      %v469 = vld [vmem:[%s1 + $0x140] sm:$0xff]
      %v470 = vld [vmem:[%s1 + $0x148] sm:$0xff]
      %v471 = vld [vmem:[%s1 + $0x150] sm:$0xff]
      %v472 = vld [vmem:[%s1 + $0x158] sm:$0xff]
      %v473 = vld [vmem:[%s1 + $0x160] sm:$0xff]
      %v474 = vld [vmem:[%s1 + $0x168] sm:$0xff]
      %v475 = vld [vmem:[%s1 + $0x170] sm:$0xff]
      %v476 = vld [vmem:[%s1 + $0x178] sm:$0xff]
      %v477 = vld [vmem:[%s1 + $0x180] sm:$0xff]
      %v478 = vld [vmem:[%s1 + $0x188] sm:$0xff]
      %v479 = vld [vmem:[%s1 + $0x190] sm:$0xff]
      %v480 = vld [vmem:[%s1 + $0x198] sm:$0xff]
      %v481 = vld [vmem:[%s1 + $0x1a0] sm:$0xff]
      %v482 = vld [vmem:[%s1 + $0x1a8] sm:$0xff]
      %v483 = vld [vmem:[%s1 + $0x1b0] sm:$0xff]
      %v484 = vld [vmem:[%s1 + $0x1b8] sm:$0xff]
      %v485 = vld [vmem:[%s1 + $0x1c0] sm:$0xff]
      %v486 = vld [vmem:[%s1 + $0x1c8] sm:$0xff]
      %v487 = vld [vmem:[%s1 + $0x1d0] sm:$0xff]
      %v488 = vld [vmem:[%s1 + $0x1d8] sm:$0xff]
      %v489 = vld [vmem:[%s1 + $0x1e0] sm:$0xff]
      %v490 = vld [vmem:[%s1 + $0x1e8] sm:$0xff]
      %v491 = vld [vmem:[%s1 + $0x1f0] sm:$0xff]
      %v492 = vld [vmem:[%s1 + $0x1f8] sm:$0xff]
      %v493 = vld [vmem:[%s1 + $0x200] sm:$0xff]
      %v494 = vld [vmem:[%s1 + $0x208] sm:$0xff]
      %v495 = vld [vmem:[%s1 + $0x210] sm:$0xff]
      %v496 = vld [vmem:[%s1 + $0x218] sm:$0xff]
      %v497 = vld [vmem:[%s1 + $0x220] sm:$0xff]
      %v498 = vld [vmem:[%s1 + $0x228] sm:$0xff]
      %v499 = vld [vmem:[%s1 + $0x230] sm:$0xff]
      %v500 = vld [vmem:[%s1 + $0x238] sm:$0xff]
      %v501 = vld [vmem:[%s1 + $0x240] sm:$0xff]
      %v502 = vld [vmem:[%s1 + $0x248] sm:$0xff]
      %v503 = vld [vmem:[%s1 + $0x250] sm:$0xff]
      %v504 = vld [vmem:[%s1 + $0x258] sm:$0xff]
      %v505 = vld [vmem:[%s1 + $0x260] sm:$0xff]
      %v506 = vld [vmem:[%s1 + $0x268] sm:$0xff]
      %v507 = vld [vmem:[%s1 + $0x270] sm:$0xff]
      %v508 = vld [vmem:[%s1 + $0x278] sm:$0xff]
      %v509 = vld [vmem:[%s1 + $0x280] sm:$0xff]
      %v510 = vld [vmem:[%s1 + $0x288] sm:$0xff]
      %v511 = vld [vmem:[%s1 + $0x290] sm:$0xff]
      %v512 = vld [vmem:[%s1 + $0x298] sm:$0xff]
      %v513 = vld [vmem:[%s1 + $0x2a0] sm:$0xff]
      %v514 = vld [vmem:[%s1 + $0x2a8] sm:$0xff]
      %v515 = vld [vmem:[%s1 + $0x2b0] sm:$0xff]
      %v516 = vld [vmem:[%s1 + $0x2b8] sm:$0xff]
      %v517 = vld [vmem:[%s1 + $0x2c0] sm:$0xff]
      %v518 = vld [vmem:[%s1 + $0x2c8] sm:$0xff]
      %v519 = vld [vmem:[%s1 + $0x2d0] sm:$0xff]
      %v520 = vld [vmem:[%s1 + $0x2d8] sm:$0xff]
      %v521 = vld [vmem:[%s1 + $0x2e0] sm:$0xff]
      %v522 = vld [vmem:[%s1 + $0x2e8] sm:$0xff]
      %v523 = vld [vmem:[%s1 + $0x2f0] sm:$0xff]
      %v524 = vld [vmem:[%s1 + $0x2f8] sm:$0xff]
      %v525 = vld [vmem:[%s1 + $0x300] sm:$0xff]
      %v526 = vld [vmem:[%s1 + $0x308] sm:$0xff]
      %v527 = vld [vmem:[%s1 + $0x310] sm:$0xff]
      %v528 = vld [vmem:[%s1 + $0x318] sm:$0xff]
      %v529 = vld [vmem:[%s1 + $0x320] sm:$0xff]
      %v530 = vld [vmem:[%s1 + $0x328] sm:$0xff]
      %v531 = vld [vmem:[%s1 + $0x330] sm:$0xff]
      %v532 = vld [vmem:[%s1 + $0x338] sm:$0xff]
      %v533 = vld [vmem:[%s1 + $0x340] sm:$0xff]
      %v534 = vld [vmem:[%s1 + $0x348] sm:$0xff]
      %v535 = vld [vmem:[%s1 + $0x350] sm:$0xff]
      %v536 = vld [vmem:[%s1 + $0x358] sm:$0xff]
      %v537 = vld [vmem:[%s1 + $0x360] sm:$0xff]
      %v538 = vld [vmem:[%s1 + $0x368] sm:$0xff]
      %v539 = vld [vmem:[%s1 + $0x370] sm:$0xff]
      %v540 = vld [vmem:[%s1 + $0x378] sm:$0xff]
      %v541 = vld [vmem:[%s1 + $0x380] sm:$0xff]
      %v542 = vld [vmem:[%s1 + $0x388] sm:$0xff]
      %v543 = vld [vmem:[%s1 + $0x390] sm:$0xff]
      %v544 = vld [vmem:[%s1 + $0x398] sm:$0xff]
      %v545 = vld [vmem:[%s1 + $0x3a0] sm:$0xff]
      %v546 = vld [vmem:[%s1 + $0x3a8] sm:$0xff]
      %v547 = vld [vmem:[%s1 + $0x3b0] sm:$0xff]
      %v548 = vld [vmem:[%s1 + $0x3b8] sm:$0xff]
      %v549 = vld [vmem:[%s1 + $0x3c0] sm:$0xff]
      %v550 = vld [vmem:[%s1 + $0x3c8] sm:$0xff]
      %v551 = vld [vmem:[%s1 + $0x3d0] sm:$0xff]
      %v552 = vld [vmem:[%s1 + $0x3d8] sm:$0xff]
      %v553 = vld [vmem:[%s1 + $0x3e0] sm:$0xff]
      %v554 = vld [vmem:[%s1 + $0x3e8] sm:$0xff]
      %v555 = vld [vmem:[%s1 + $0x3f0] sm:$0xff]
      %v556 = vld [vmem:[%s1 + $0x3f8] sm:$0xff]
      %v557 = vld [vmem:[%s1 + $0x400] sm:$0xff]
      %v558 = vld [vmem:[%s1 + $0x408] sm:$0xff]
      %v559 = vld [vmem:[%s1 + $0x410] sm:$0xff]
      %v560 = vld [vmem:[%s1 + $0x418] sm:$0xff]
      %v561 = vld [vmem:[%s1 + $0x420] sm:$0xff]
      %v562 = vld [vmem:[%s1 + $0x428] sm:$0xff]
      %v563 = vld [vmem:[%s1 + $0x430] sm:$0xff]
      %v564 = vld [vmem:[%s1 + $0x438] sm:$0xff]
      %v565 = vld [vmem:[%s1 + $0x440] sm:$0xff]
      %v566 = vld [vmem:[%s1 + $0x448] sm:$0xff]
      %v567 = vld [vmem:[%s1 + $0x450] sm:$0xff]
      %v568 = vld [vmem:[%s1 + $0x458] sm:$0xff]
      %v569 = vld [vmem:[%s1 + $0x460] sm:$0xff]
      %v570 = vld [vmem:[%s1 + $0x468] sm:$0xff]
      %v571 = vld [vmem:[%s1 + $0x470] sm:$0xff]
      %v572 = vld [vmem:[%s1 + $0x478] sm:$0xff]
      %v573 = vld [vmem:[%s1 + $0x480] sm:$0xff]
      %v574 = vld [vmem:[%s1 + $0x488] sm:$0xff]
      %v575 = vld [vmem:[%s1 + $0x490] sm:$0xff]
      %v576 = vld [vmem:[%s1 + $0x498] sm:$0xff]
      %v577 = vld [vmem:[%s1 + $0x4a0] sm:$0xff]
      %v578 = vld [vmem:[%s1 + $0x4a8] sm:$0xff]
      %v579 = vld [vmem:[%s1 + $0x4b0] sm:$0xff]
      %v580 = vld [vmem:[%s1 + $0x4b8] sm:$0xff]
      %v581 = vld [vmem:[%s1 + $0x4c0] sm:$0xff]
      %v582 = vld [vmem:[%s1 + $0x4c8] sm:$0xff]
      %v583 = vld [vmem:[%s1 + $0x4d0] sm:$0xff]
      %v584 = vld [vmem:[%s1 + $0x4d8] sm:$0xff]
      %v585 = vld [vmem:[%s1 + $0x4e0] sm:$0xff]
      %v586 = vld [vmem:[%s1 + $0x4e8] sm:$0xff]
      %v587 = vld [vmem:[%s1 + $0x4f0] sm:$0xff]
      %v588 = vld [vmem:[%s1 + $0x4f8] sm:$0xff]
      %v589 = vld [vmem:[%s1 + $0x500] sm:$0xff]
      %v590 = vld [vmem:[%s1 + $0x508] sm:$0xff]
      %v591 = vld [vmem:[%s1 + $0x510] sm:$0xff]
      %v592 = vld [vmem:[%s1 + $0x518] sm:$0xff]
      %v593 = vld [vmem:[%s1 + $0x520] sm:$0xff]
      %v594 = vld [vmem:[%s1 + $0x528] sm:$0xff]
      %v595 = vld [vmem:[%s1 + $0x530] sm:$0xff]
      %v596 = vld [vmem:[%s1 + $0x538] sm:$0xff]
      %v597 = vld [vmem:[%s1 + $0x540] sm:$0xff]
      %v598 = vld [vmem:[%s1 + $0x548] sm:$0xff]
      %v599 = vld [vmem:[%s1 + $0x550] sm:$0xff]
      %v600 = vld [vmem:[%s1 + $0x558] sm:$0xff]
      %v601 = vld [vmem:[%s1 + $0x560] sm:$0xff]
      %v602 = vld [vmem:[%s1 + $0x568] sm:$0xff]
      %v603 = vld [vmem:[%s1 + $0x570] sm:$0xff]
      %v604 = vld [vmem:[%s1 + $0x578] sm:$0xff]
      %v605 = vld [vmem:[%s1 + $0x580] sm:$0xff]
      %v606 = vld [vmem:[%s1 + $0x588] sm:$0xff]
      %v607 = vld [vmem:[%s1 + $0x590] sm:$0xff]
      %v608 = vld [vmem:[%s1 + $0x598] sm:$0xff]
      %v609 = vld [vmem:[%s1 + $0x5a0] sm:$0xff]
      %v610 = vld [vmem:[%s1 + $0x5a8] sm:$0xff]
      %v611 = vld [vmem:[%s1 + $0x5b0] sm:$0xff]
      %v612 = vld [vmem:[%s1 + $0x5b8] sm:$0xff]
      %v613 = vld [vmem:[%s1 + $0x5c0] sm:$0xff]
      %v614 = vld [vmem:[%s1 + $0x5c8] sm:$0xff]
      %v615 = vld [vmem:[%s1 + $0x5d0] sm:$0xff]
      %v616 = vld [vmem:[%s1 + $0x5d8] sm:$0xff]
      %v617 = vld [vmem:[%s1 + $0x5e0] sm:$0xff]
      %v618 = vld [vmem:[%s1 + $0x5e8] sm:$0xff]
      %v619 = vld [vmem:[%s1 + $0x5f0] sm:$0xff]
      %v620 = vld [vmem:[%s1 + $0x5f8] sm:$0xff]
      %v621 = vld [vmem:[%s1 + $0x600] sm:$0xff]
      %v622 = vld [vmem:[%s1 + $0x608] sm:$0xff]
      %v623 = vld [vmem:[%s1 + $0x610] sm:$0xff]
      %v624 = vld [vmem:[%s1 + $0x618] sm:$0xff]
      %v625 = vld [vmem:[%s1 + $0x620] sm:$0xff]
      %v626 = vld [vmem:[%s1 + $0x628] sm:$0xff]
      %v627 = vld [vmem:[%s1 + $0x630] sm:$0xff]
      %v628 = vld [vmem:[%s1 + $0x638] sm:$0xff]
      %v629 = vld [vmem:[%s1 + $0x640] sm:$0xff]
      %v630 = vld [vmem:[%s1 + $0x648] sm:$0xff]
      %v631 = vld [vmem:[%s1 + $0x650] sm:$0xff]
      %v632 = vld [vmem:[%s1 + $0x658] sm:$0xff]
      %v633 = vld [vmem:[%s1 + $0x660] sm:$0xff]
      %v634 = vld [vmem:[%s1 + $0x668] sm:$0xff]
      %v635 = vld [vmem:[%s1 + $0x670] sm:$0xff]
      %v636 = vld [vmem:[%s1 + $0x678] sm:$0xff]
      %v637 = vld [vmem:[%s1 + $0x680] sm:$0xff]
      %v638 = vld [vmem:[%s1 + $0x688] sm:$0xff]
      %v639 = vld [vmem:[%s1 + $0x690] sm:$0xff]
      %v640 = vld [vmem:[%s1 + $0x698] sm:$0xff]
      %v641 = vld [vmem:[%s1 + $0x6a0] sm:$0xff]
      %v642 = vld [vmem:[%s1 + $0x6a8] sm:$0xff]
      %v643 = vld [vmem:[%s1 + $0x6b0] sm:$0xff]
      %v644 = vld [vmem:[%s1 + $0x6b8] sm:$0xff]
      %v645 = vld [vmem:[%s1 + $0x6c0] sm:$0xff]
      %v646 = vld [vmem:[%s1 + $0x6c8] sm:$0xff]
      %v647 = vld [vmem:[%s1 + $0x6d0] sm:$0xff]
      %v648 = vld [vmem:[%s1 + $0x6d8] sm:$0xff]
      %v649 = vld [vmem:[%s1 + $0x6e0] sm:$0xff]
      %v650 = vld [vmem:[%s1 + $0x6e8] sm:$0xff]
      %v651 = vld [vmem:[%s1 + $0x6f0] sm:$0xff]
      %v652 = vld [vmem:[%s1 + $0x6f8] sm:$0xff]
      %v653 = vld [vmem:[%s1 + $0x700] sm:$0xff]
      %v654 = vld [vmem:[%s1 + $0x708] sm:$0xff]
      %v655 = vld [vmem:[%s1 + $0x710] sm:$0xff]
      %v656 = vld [vmem:[%s1 + $0x718] sm:$0xff]
      %v657 = vld [vmem:[%s1 + $0x720] sm:$0xff]
      %v658 = vld [vmem:[%s1 + $0x728] sm:$0xff]
      %v659 = vld [vmem:[%s1 + $0x730] sm:$0xff]
      %v660 = vld [vmem:[%s1 + $0x738] sm:$0xff]
      %v661 = vld [vmem:[%s1 + $0x740] sm:$0xff]
      %v662 = vld [vmem:[%s1 + $0x748] sm:$0xff]
      %v663 = vld [vmem:[%s1 + $0x750] sm:$0xff]
      %v664 = vld [vmem:[%s1 + $0x758] sm:$0xff]
      %v665 = vld [vmem:[%s1 + $0x760] sm:$0xff]
      %v666 = vld [vmem:[%s1 + $0x768] sm:$0xff]
      %v667 = vld [vmem:[%s1 + $0x770] sm:$0xff]
      %v668 = vld [vmem:[%s1 + $0x778] sm:$0xff]
      %v669 = vld [vmem:[%s1 + $0x780] sm:$0xff]
      %v670 = vld [vmem:[%s1 + $0x788] sm:$0xff]
      %v671 = vld [vmem:[%s1 + $0x790] sm:$0xff]
      %v672 = vld [vmem:[%s1 + $0x798] sm:$0xff]
      %v673 = vld [vmem:[%s1 + $0x7a0] sm:$0xff]
      %v674 = vld [vmem:[%s1 + $0x7a8] sm:$0xff]
      %v675 = vld [vmem:[%s1 + $0x7b0] sm:$0xff]
      %v676 = vld [vmem:[%s1 + $0x7b8] sm:$0xff]
      %v677 = vld [vmem:[%s1 + $0x7c0] sm:$0xff]
      %v678 = vld [vmem:[%s1 + $0x7c8] sm:$0xff]
      %v679 = vld [vmem:[%s1 + $0x7d0] sm:$0xff]
      %v680 = vld [vmem:[%s1 + $0x7d8] sm:$0xff]
      %v681 = vld [vmem:[%s1 + $0x7e0] sm:$0xff]
      %v682 = vld [vmem:[%s1 + $0x7e8] sm:$0xff]
      %v683 = vld [vmem:[%s1 + $0x7f0] sm:$0xff]
      %v684 = vld [vmem:[%s1 + $0x7f8] sm:$0xff]
      %v685 = vld [vmem:[%s1 + $0x800] sm:$0xff]
      %v686 = vld [vmem:[%s1 + $0x808] sm:$0xff]
      %v687 = vld [vmem:[%s1 + $0x810] sm:$0xff]
      %v688 = vld [vmem:[%s1 + $0x818] sm:$0xff]
      %v689 = vld [vmem:[%s1 + $0x820] sm:$0xff]
      %v690 = vld [vmem:[%s1 + $0x828] sm:$0xff]
      %v691 = vld [vmem:[%s1 + $0x830] sm:$0xff]
      %v692 = vld [vmem:[%s1 + $0x838] sm:$0xff]
      %v693 = vld [vmem:[%s1 + $0x840] sm:$0xff]
      %v694 = vld [vmem:[%s1 + $0x848] sm:$0xff]
      %v695 = vld [vmem:[%s1 + $0x850] sm:$0xff]
      %v696 = vld [vmem:[%s1 + $0x858] sm:$0xff]
      %v697 = vld [vmem:[%s1 + $0x860] sm:$0xff]
      %v698 = vld [vmem:[%s1 + $0x868] sm:$0xff]
      %v699 = vld [vmem:[%s1 + $0x870] sm:$0xff]
      %v700 = vld [vmem:[%s1 + $0x878] sm:$0xff]
      %v701 = vld [vmem:[%s1 + $0x880] sm:$0xff]
      %v702 = vld [vmem:[%s1 + $0x888] sm:$0xff]
      %v703 = vld [vmem:[%s1 + $0x890] sm:$0xff]
      %v704 = vld [vmem:[%s1 + $0x898] sm:$0xff]
      %v705 = vld [vmem:[%s1 + $0x8a0] sm:$0xff]
      %v706 = vld [vmem:[%s1 + $0x8a8] sm:$0xff]
      %v707 = vld [vmem:[%s1 + $0x8b0] sm:$0xff]
      %v708 = vld [vmem:[%s1 + $0x8b8] sm:$0xff]
      %v709 = vld [vmem:[%s1 + $0x8c0] sm:$0xff]
      %v710 = vld [vmem:[%s1 + $0x8c8] sm:$0xff]
      %v711 = vld [vmem:[%s1 + $0x8d0] sm:$0xff]
      %v712 = vld [vmem:[%s1 + $0x8d8] sm:$0xff]
      %v713 = vld [vmem:[%s1 + $0x8e0] sm:$0xff]
      %v714 = vld [vmem:[%s1 + $0x8e8] sm:$0xff]
      %v715 = vld [vmem:[%s1 + $0x8f0] sm:$0xff]
      %v716 = vld [vmem:[%s1 + $0x8f8] sm:$0xff]
      %v717 = vld [vmem:[%s1 + $0x900] sm:$0xff]
      %v718 = vld [vmem:[%s1 + $0x908] sm:$0xff]
      %v719 = vld [vmem:[%s1 + $0x910] sm:$0xff]
      %v720 = vld [vmem:[%s1 + $0x918] sm:$0xff]
      %v721 = vld [vmem:[%s1 + $0x920] sm:$0xff]
      %v722 = vld [vmem:[%s1 + $0x928] sm:$0xff]
      %v723 = vld [vmem:[%s1 + $0x930] sm:$0xff]
      %v724 = vld [vmem:[%s1 + $0x938] sm:$0xff]
      %v725 = vld [vmem:[%s1 + $0x940] sm:$0xff]
      %v726 = vld [vmem:[%s1 + $0x948] sm:$0xff]
      %v727 = vld [vmem:[%s1 + $0x950] sm:$0xff]
      %v728 = vld [vmem:[%s1 + $0x958] sm:$0xff]
      %v729 = vld [vmem:[%s1 + $0x960] sm:$0xff]
      %v730 = vld [vmem:[%s1 + $0x968] sm:$0xff]
      %v731 = vld [vmem:[%s1 + $0x970] sm:$0xff]
      %v732 = vld [vmem:[%s1 + $0x978] sm:$0xff]
      %v733 = vld [vmem:[%s1 + $0x980] sm:$0xff]
      %v734 = vld [vmem:[%s1 + $0x988] sm:$0xff]
      %v735 = vld [vmem:[%s1 + $0x990] sm:$0xff]
      %v736 = vld [vmem:[%s1 + $0x998] sm:$0xff]
      %v737 = vld [vmem:[%s1 + $0x9a0] sm:$0xff]
      %v738 = vld [vmem:[%s1 + $0x9a8] sm:$0xff]
      %v739 = vld [vmem:[%s1 + $0x9b0] sm:$0xff]
      %v740 = vld [vmem:[%s1 + $0x9b8] sm:$0xff]
      %v741 = vld [vmem:[%s1 + $0x9c0] sm:$0xff]
      %v742 = vld [vmem:[%s1 + $0x9c8] sm:$0xff]
      %v743 = vld [vmem:[%s1 + $0x9d0] sm:$0xff]
      %v744 = vld [vmem:[%s1 + $0x9d8] sm:$0xff]
      %v745 = vld [vmem:[%s1 + $0x9e0] sm:$0xff]
      %v746 = vld [vmem:[%s1 + $0x9e8] sm:$0xff]
      %v747 = vld [vmem:[%s1 + $0x9f0] sm:$0xff]
      %v748 = vld [vmem:[%s1 + $0x9f8] sm:$0xff]
      %v749 = vld [vmem:[%s1 + $0xa00] sm:$0xff]
      %v750 = vld [vmem:[%s1 + $0xa08] sm:$0xff]
      %v751 = vld [vmem:[%s1 + $0xa10] sm:$0xff]
      %v752 = vld [vmem:[%s1 + $0xa18] sm:$0xff]
      %v753 = vld [vmem:[%s1 + $0xa20] sm:$0xff]
      %v754 = vld [vmem:[%s1 + $0xa28] sm:$0xff]
      %v755 = vld [vmem:[%s1 + $0xa30] sm:$0xff]
      %v756 = vld [vmem:[%s1 + $0xa38] sm:$0xff]
      %v757 = vld [vmem:[%s1 + $0xa40] sm:$0xff]
      %v758 = vld [vmem:[%s1 + $0xa48] sm:$0xff]
      %v759 = vld [vmem:[%s1 + $0xa50] sm:$0xff]
      %v760 = vld [vmem:[%s1 + $0xa58] sm:$0xff]
      %v761 = vld [vmem:[%s1 + $0xa60] sm:$0xff]
      %v762 = vld [vmem:[%s1 + $0xa68] sm:$0xff]
      %v763 = vld [vmem:[%s1 + $0xa70] sm:$0xff]
      %v764 = vld [vmem:[%s1 + $0xa78] sm:$0xff]
      %v765 = vld [vmem:[%s1 + $0xa80] sm:$0xff]
      %v766 = vld [vmem:[%s1 + $0xa88] sm:$0xff]
      %v767 = vld [vmem:[%s1 + $0xa90] sm:$0xff]
      %v768 = vld [vmem:[%s1 + $0xa98] sm:$0xff]
      %v769 = vld [vmem:[%s1 + $0xaa0] sm:$0xff]
      %v770 = vld [vmem:[%s1 + $0xaa8] sm:$0xff]
      %v771 = vld [vmem:[%s1 + $0xab0] sm:$0xff]
      %v772 = vld [vmem:[%s1 + $0xab8] sm:$0xff]
      %v773 = vld [vmem:[%s1 + $0xac0] sm:$0xff]
      %v774 = vld [vmem:[%s1 + $0xac8] sm:$0xff]
      %v775 = vld [vmem:[%s1 + $0xad0] sm:$0xff]
      %v776 = vld [vmem:[%s1 + $0xad8] sm:$0xff]
      %v777 = vld [vmem:[%s1 + $0xae0] sm:$0xff]
      %v778 = vld [vmem:[%s1 + $0xae8] sm:$0xff]
      %v779 = vld [vmem:[%s1 + $0xaf0] sm:$0xff]
      %v780 = vld [vmem:[%s1 + $0xaf8] sm:$0xff]
      %v781 = vld [vmem:[%s1 + $0xb00] sm:$0xff]
      %v782 = vld [vmem:[%s1 + $0xb08] sm:$0xff]
      %v783 = vld [vmem:[%s1 + $0xb10] sm:$0xff]
      %v784 = vld [vmem:[%s1 + $0xb18] sm:$0xff]
      %v785 = vld [vmem:[%s1 + $0xb20] sm:$0xff]
      %v786 = vld [vmem:[%s1 + $0xb28] sm:$0xff]
      %v787 = vld [vmem:[%s1 + $0xb30] sm:$0xff]
      %v788 = vld [vmem:[%s1 + $0xb38] sm:$0xff]
      %v789 = vld [vmem:[%s1 + $0xb40] sm:$0xff]
      %v790 = vld [vmem:[%s1 + $0xb48] sm:$0xff]
      %v791 = vld [vmem:[%s1 + $0xb50] sm:$0xff]
      %v792 = vld [vmem:[%s1 + $0xb58] sm:$0xff]
      %v793 = vld [vmem:[%s1 + $0xb60] sm:$0xff]
      %v794 = vld [vmem:[%s1 + $0xb68] sm:$0xff]
      %v795 = vld [vmem:[%s1 + $0xb70] sm:$0xff]
      %v796 = vld [vmem:[%s1 + $0xb78] sm:$0xff]
      %v797 = vld [vmem:[%s1 + $0xb80] sm:$0xff]
      %v798 = vld [vmem:[%s1 + $0xb88] sm:$0xff]
      %v799 = vld [vmem:[%s1 + $0xb90] sm:$0xff]
      %v800 = vld [vmem:[%s1 + $0xb98] sm:$0xff]
      %v801 = vld [vmem:[%s1 + $0xba0] sm:$0xff]
      %v802 = vld [vmem:[%s1 + $0xba8] sm:$0xff]
      %v803 = vld [vmem:[%s1 + $0xbb0] sm:$0xff]
      %v804 = vld [vmem:[%s1 + $0xbb8] sm:$0xff]
      %v805 = vld [vmem:[%s1 + $0xbc0] sm:$0xff]
      %v806 = vld [vmem:[%s1 + $0xbc8] sm:$0xff]
      %v807 = vld [vmem:[%s1 + $0xbd0] sm:$0xff]
      %v808 = vld [vmem:[%s1 + $0xbd8] sm:$0xff]
      %v809 = vld [vmem:[%s1 + $0xbe0] sm:$0xff]
      %v810 = vld [vmem:[%s1 + $0xbe8] sm:$0xff]
      %v811 = vld [vmem:[%s1 + $0xbf0] sm:$0xff]
      %v812 = vld [vmem:[%s1 + $0xbf8] sm:$0xff]
      %v814 = vlaneseq
      %v815 = vshrl.u32 %v814, 7
      %v816 = vsub.s32 0, %v815
      %v817 = vrot.slane %v416, %v816
      %v818 = vlaneseq
      %v819 = vshrl.u32 %v818, 7
      %v820 = vsub.s32 1, %v819
      %v821 = vrot.slane %v416, %v820
      %v822 = vlaneseq
      %v823 = vshrl.u32 %v822, 7
      %v824 = vsub.s32 2, %v823
      %v825 = vrot.slane %v416, %v824
      %v826 = vlaneseq
      %v827 = vshrl.u32 %v826, 7
      %v828 = vsub.s32 3, %v827
      %v829 = vrot.slane %v416, %v828
      %v1218 = vunpack.c.l.b16 %v429
      %v1219 = vunpack.c.h.b16 %v429
      %v1220 = vunpack.c.l.b16 %v430
      %v1221 = vunpack.c.h.b16 %v430
      %v1222 = vunpack.c.l.b16 %v431
      %v1223 = vunpack.c.h.b16 %v431
      %v1224 = vunpack.c.l.b16 %v432
      %v1225 = vunpack.c.h.b16 %v432
      %v1226 = vunpack.c.l.b16 %v433
      %v1227 = vunpack.c.h.b16 %v433
      %v1228 = vunpack.c.l.b16 %v434
      %v1229 = vunpack.c.h.b16 %v434
      %v1230 = vunpack.c.l.b16 %v435
      %v1231 = vunpack.c.h.b16 %v435
      %v1232 = vunpack.c.l.b16 %v436
      %v1233 = vunpack.c.h.b16 %v436
      %v1234 = vunpack.c.l.b16 %v437
      %v1235 = vunpack.c.h.b16 %v437
      %v1236 = vunpack.c.l.b16 %v438
      %v1237 = vunpack.c.h.b16 %v438
      %v1238 = vunpack.c.l.b16 %v439
      %v1239 = vunpack.c.h.b16 %v439
      %v1240 = vunpack.c.l.b16 %v440
      %v1241 = vunpack.c.h.b16 %v440
      %v1242 = vunpack.c.l.b16 %v441
      %v1243 = vunpack.c.h.b16 %v441
      %v1244 = vunpack.c.l.b16 %v442
      %v1245 = vunpack.c.h.b16 %v442
      %v1246 = vunpack.c.l.b16 %v443
      %v1247 = vunpack.c.h.b16 %v443
      %v1248 = vunpack.c.l.b16 %v444
      %v1249 = vunpack.c.h.b16 %v444
      %v1250 = vunpack.c.l.b16 %v445
      %v1251 = vunpack.c.h.b16 %v445
      %v1252 = vunpack.c.l.b16 %v446
      %v1253 = vunpack.c.h.b16 %v446
      %v1254 = vunpack.c.l.b16 %v447
      %v1255 = vunpack.c.h.b16 %v447
      %v1256 = vunpack.c.l.b16 %v448
      %v1257 = vunpack.c.h.b16 %v448
      %v1258 = vunpack.c.l.b16 %v449
      %v1259 = vunpack.c.h.b16 %v449
      %v1260 = vunpack.c.l.b16 %v450
      %v1261 = vunpack.c.h.b16 %v450
      %v1262 = vunpack.c.l.b16 %v451
      %v1263 = vunpack.c.h.b16 %v451
      %v1264 = vunpack.c.l.b16 %v452
      %v1265 = vunpack.c.h.b16 %v452
      %v1266 = vunpack.c.l.b16 %v453
      %v1267 = vunpack.c.h.b16 %v453
      %v1268 = vunpack.c.l.b16 %v454
      %v1269 = vunpack.c.h.b16 %v454
      %v1270 = vunpack.c.l.b16 %v455
      %v1271 = vunpack.c.h.b16 %v455
      %v1272 = vunpack.c.l.b16 %v456
      %v1273 = vunpack.c.h.b16 %v456
      %v1274 = vunpack.c.l.b16 %v457
      %v1275 = vunpack.c.h.b16 %v457
      %v1276 = vunpack.c.l.b16 %v458
      %v1277 = vunpack.c.h.b16 %v458
      %v1278 = vunpack.c.l.b16 %v459
      %v1279 = vunpack.c.h.b16 %v459
      %v1280 = vunpack.c.l.b16 %v460
      %v1281 = vunpack.c.h.b16 %v460
      %v1282 = vunpack.c.l.b16 %v461
      %v1283 = vunpack.c.h.b16 %v461
      %v1284 = vunpack.c.l.b16 %v462
      %v1285 = vunpack.c.h.b16 %v462
      %v1286 = vunpack.c.l.b16 %v463
      %v1287 = vunpack.c.h.b16 %v463
      %v1288 = vunpack.c.l.b16 %v464
      %v1289 = vunpack.c.h.b16 %v464
      %v1290 = vunpack.c.l.b16 %v465
      %v1291 = vunpack.c.h.b16 %v465
      %v1292 = vunpack.c.l.b16 %v466
      %v1293 = vunpack.c.h.b16 %v466
      %v1294 = vunpack.c.l.b16 %v467
      %v1295 = vunpack.c.h.b16 %v467
      %v1296 = vunpack.c.l.b16 %v468
      %v1297 = vunpack.c.h.b16 %v468
      %v1298 = vunpack.c.l.b16 %v469
      %v1299 = vunpack.c.h.b16 %v469
      %v1300 = vunpack.c.l.b16 %v470
      %v1301 = vunpack.c.h.b16 %v470
      %v1302 = vunpack.c.l.b16 %v471
      %v1303 = vunpack.c.h.b16 %v471
      %v1304 = vunpack.c.l.b16 %v472
      %v1305 = vunpack.c.h.b16 %v472
      %v1306 = vunpack.c.l.b16 %v473
      %v1307 = vunpack.c.h.b16 %v473
      %v1308 = vunpack.c.l.b16 %v474
      %v1309 = vunpack.c.h.b16 %v474
      %v1310 = vunpack.c.l.b16 %v475
      %v1311 = vunpack.c.h.b16 %v475
      %v1312 = vunpack.c.l.b16 %v476
      %v1313 = vunpack.c.h.b16 %v476
      %v1314 = vunpack.c.l.b16 %v477
      %v1315 = vunpack.c.h.b16 %v477
      %v1316 = vunpack.c.l.b16 %v478
      %v1317 = vunpack.c.h.b16 %v478
      %v1318 = vunpack.c.l.b16 %v479
      %v1319 = vunpack.c.h.b16 %v479
      %v1320 = vunpack.c.l.b16 %v480
      %v1321 = vunpack.c.h.b16 %v480
      %v1322 = vunpack.c.l.b16 %v481
      %v1323 = vunpack.c.h.b16 %v481
      %v1324 = vunpack.c.l.b16 %v482
      %v1325 = vunpack.c.h.b16 %v482
      %v1326 = vunpack.c.l.b16 %v483
      %v1327 = vunpack.c.h.b16 %v483
      %v1328 = vunpack.c.l.b16 %v484
      %v1329 = vunpack.c.h.b16 %v484
      %v1330 = vunpack.c.l.b16 %v485
      %v1331 = vunpack.c.h.b16 %v485
      %v1332 = vunpack.c.l.b16 %v486
      %v1333 = vunpack.c.h.b16 %v486
      %v1334 = vunpack.c.l.b16 %v487
      %v1335 = vunpack.c.h.b16 %v487
      %v1336 = vunpack.c.l.b16 %v488
      %v1337 = vunpack.c.h.b16 %v488
      %v1338 = vunpack.c.l.b16 %v489
      %v1339 = vunpack.c.h.b16 %v489
      %v1340 = vunpack.c.l.b16 %v490
      %v1341 = vunpack.c.h.b16 %v490
      %v1342 = vunpack.c.l.b16 %v491
      %v1343 = vunpack.c.h.b16 %v491
      %v1344 = vunpack.c.l.b16 %v492
      %v1345 = vunpack.c.h.b16 %v492
      %v1346 = vunpack.c.l.b16 %v493
      %v1347 = vunpack.c.h.b16 %v493
      %v1348 = vunpack.c.l.b16 %v494
      %v1349 = vunpack.c.h.b16 %v494
      %v1350 = vunpack.c.l.b16 %v495
      %v1351 = vunpack.c.h.b16 %v495
      %v1352 = vunpack.c.l.b16 %v496
      %v1353 = vunpack.c.h.b16 %v496
      %v1354 = vunpack.c.l.b16 %v497
      %v1355 = vunpack.c.h.b16 %v497
      %v1356 = vunpack.c.l.b16 %v498
      %v1357 = vunpack.c.h.b16 %v498
      %v1358 = vunpack.c.l.b16 %v499
      %v1359 = vunpack.c.h.b16 %v499
      %v1360 = vunpack.c.l.b16 %v500
      %v1361 = vunpack.c.h.b16 %v500
      %v1362 = vunpack.c.l.b16 %v501
      %v1363 = vunpack.c.h.b16 %v501
      %v1364 = vunpack.c.l.b16 %v502
      %v1365 = vunpack.c.h.b16 %v502
      %v1366 = vunpack.c.l.b16 %v503
      %v1367 = vunpack.c.h.b16 %v503
      %v1368 = vunpack.c.l.b16 %v504
      %v1369 = vunpack.c.h.b16 %v504
      %v1370 = vunpack.c.l.b16 %v505
      %v1371 = vunpack.c.h.b16 %v505
      %v1372 = vunpack.c.l.b16 %v506
      %v1373 = vunpack.c.h.b16 %v506
      %v1374 = vunpack.c.l.b16 %v507
      %v1375 = vunpack.c.h.b16 %v507
      %v1376 = vunpack.c.l.b16 %v508
      %v1377 = vunpack.c.h.b16 %v508
      %v1378 = vunpack.c.l.b16 %v509
      %v1379 = vunpack.c.h.b16 %v509
      %v1380 = vunpack.c.l.b16 %v510
      %v1381 = vunpack.c.h.b16 %v510
      %v1382 = vunpack.c.l.b16 %v511
      %v1383 = vunpack.c.h.b16 %v511
      %v1384 = vunpack.c.l.b16 %v512
      %v1385 = vunpack.c.h.b16 %v512
      %v1386 = vunpack.c.l.b16 %v513
      %v1387 = vunpack.c.h.b16 %v513
      %v1388 = vunpack.c.l.b16 %v514
      %v1389 = vunpack.c.h.b16 %v514
      %v1390 = vunpack.c.l.b16 %v515
      %v1391 = vunpack.c.h.b16 %v515
      %v1392 = vunpack.c.l.b16 %v516
      %v1393 = vunpack.c.h.b16 %v516
      %v1394 = vunpack.c.l.b16 %v517
      %v1395 = vunpack.c.h.b16 %v517
      %v1396 = vunpack.c.l.b16 %v518
      %v1397 = vunpack.c.h.b16 %v518
      %v1398 = vunpack.c.l.b16 %v519
      %v1399 = vunpack.c.h.b16 %v519
      %v1400 = vunpack.c.l.b16 %v520
      %v1401 = vunpack.c.h.b16 %v520
      %v1402 = vunpack.c.l.b16 %v521
      %v1403 = vunpack.c.h.b16 %v521
      %v1404 = vunpack.c.l.b16 %v522
      %v1405 = vunpack.c.h.b16 %v522
      %v1406 = vunpack.c.l.b16 %v523
      %v1407 = vunpack.c.h.b16 %v523
      %v1408 = vunpack.c.l.b16 %v524
      %v1409 = vunpack.c.h.b16 %v524
      %v1410 = vunpack.c.l.b16 %v525
      %v1411 = vunpack.c.h.b16 %v525
      %v1412 = vunpack.c.l.b16 %v526
      %v1413 = vunpack.c.h.b16 %v526
      %v1414 = vunpack.c.l.b16 %v527
      %v1415 = vunpack.c.h.b16 %v527
      %v1416 = vunpack.c.l.b16 %v528
      %v1417 = vunpack.c.h.b16 %v528
      %v1418 = vunpack.c.l.b16 %v529
      %v1419 = vunpack.c.h.b16 %v529
      %v1420 = vunpack.c.l.b16 %v530
      %v1421 = vunpack.c.h.b16 %v530
      %v1422 = vunpack.c.l.b16 %v531
      %v1423 = vunpack.c.h.b16 %v531
      %v1424 = vunpack.c.l.b16 %v532
      %v1425 = vunpack.c.h.b16 %v532
      %v1426 = vunpack.c.l.b16 %v533
      %v1427 = vunpack.c.h.b16 %v533
      %v1428 = vunpack.c.l.b16 %v534
      %v1429 = vunpack.c.h.b16 %v534
      %v1430 = vunpack.c.l.b16 %v535
      %v1431 = vunpack.c.h.b16 %v535
      %v1432 = vunpack.c.l.b16 %v536
      %v1433 = vunpack.c.h.b16 %v536
      %v1434 = vunpack.c.l.b16 %v537
      %v1435 = vunpack.c.h.b16 %v537
      %v1436 = vunpack.c.l.b16 %v538
      %v1437 = vunpack.c.h.b16 %v538
      %v1438 = vunpack.c.l.b16 %v539
      %v1439 = vunpack.c.h.b16 %v539
      %v1440 = vunpack.c.l.b16 %v540
      %v1441 = vunpack.c.h.b16 %v540
      %v1442 = vunpack.c.l.b16 %v541
      %v1443 = vunpack.c.h.b16 %v541
      %v1444 = vunpack.c.l.b16 %v542
      %v1445 = vunpack.c.h.b16 %v542
      %v1446 = vunpack.c.l.b16 %v543
      %v1447 = vunpack.c.h.b16 %v543
      %v1448 = vunpack.c.l.b16 %v544
      %v1449 = vunpack.c.h.b16 %v544
      %v1450 = vunpack.c.l.b16 %v545
      %v1451 = vunpack.c.h.b16 %v545
      %v1452 = vunpack.c.l.b16 %v546
      %v1453 = vunpack.c.h.b16 %v546
      %v1454 = vunpack.c.l.b16 %v547
      %v1455 = vunpack.c.h.b16 %v547
      %v1456 = vunpack.c.l.b16 %v548
      %v1457 = vunpack.c.h.b16 %v548
      %v1458 = vunpack.c.l.b16 %v549
      %v1459 = vunpack.c.h.b16 %v549
      %v1460 = vunpack.c.l.b16 %v550
      %v1461 = vunpack.c.h.b16 %v550
      %v1462 = vunpack.c.l.b16 %v551
      %v1463 = vunpack.c.h.b16 %v551
      %v1464 = vunpack.c.l.b16 %v552
      %v1465 = vunpack.c.h.b16 %v552
      %v1466 = vunpack.c.l.b16 %v553
      %v1467 = vunpack.c.h.b16 %v553
      %v1468 = vunpack.c.l.b16 %v554
      %v1469 = vunpack.c.h.b16 %v554
      %v1470 = vunpack.c.l.b16 %v555
      %v1471 = vunpack.c.h.b16 %v555
      %v1472 = vunpack.c.l.b16 %v556
      %v1473 = vunpack.c.h.b16 %v556
      %v1474 = vunpack.c.l.b16 %v557
      %v1475 = vunpack.c.h.b16 %v557
      %v1476 = vunpack.c.l.b16 %v558
      %v1477 = vunpack.c.h.b16 %v558
      %v1478 = vunpack.c.l.b16 %v559
      %v1479 = vunpack.c.h.b16 %v559
      %v1480 = vunpack.c.l.b16 %v560
      %v1481 = vunpack.c.h.b16 %v560
      %v1482 = vunpack.c.l.b16 %v561
      %v1483 = vunpack.c.h.b16 %v561
      %v1484 = vunpack.c.l.b16 %v562
      %v1485 = vunpack.c.h.b16 %v562
      %v1486 = vunpack.c.l.b16 %v563
      %v1487 = vunpack.c.h.b16 %v563
      %v1488 = vunpack.c.l.b16 %v564
      %v1489 = vunpack.c.h.b16 %v564
      %v1490 = vunpack.c.l.b16 %v565
      %v1491 = vunpack.c.h.b16 %v565
      %v1492 = vunpack.c.l.b16 %v566
      %v1493 = vunpack.c.h.b16 %v566
      %v1494 = vunpack.c.l.b16 %v567
      %v1495 = vunpack.c.h.b16 %v567
      %v1496 = vunpack.c.l.b16 %v568
      %v1497 = vunpack.c.h.b16 %v568
      %v1498 = vunpack.c.l.b16 %v569
      %v1499 = vunpack.c.h.b16 %v569
      %v1500 = vunpack.c.l.b16 %v570
      %v1501 = vunpack.c.h.b16 %v570
      %v1502 = vunpack.c.l.b16 %v571
      %v1503 = vunpack.c.h.b16 %v571
      %v1504 = vunpack.c.l.b16 %v572
      %v1505 = vunpack.c.h.b16 %v572
      %v1506 = vunpack.c.l.b16 %v573
      %v1507 = vunpack.c.h.b16 %v573
      %v1508 = vunpack.c.l.b16 %v574
      %v1509 = vunpack.c.h.b16 %v574
      %v1510 = vunpack.c.l.b16 %v575
      %v1511 = vunpack.c.h.b16 %v575
      %v1512 = vunpack.c.l.b16 %v576
      %v1513 = vunpack.c.h.b16 %v576
      %v1514 = vunpack.c.l.b16 %v577
      %v1515 = vunpack.c.h.b16 %v577
      %v1516 = vunpack.c.l.b16 %v578
      %v1517 = vunpack.c.h.b16 %v578
      %v1518 = vunpack.c.l.b16 %v579
      %v1519 = vunpack.c.h.b16 %v579
      %v1520 = vunpack.c.l.b16 %v580
      %v1521 = vunpack.c.h.b16 %v580
      %v1522 = vunpack.c.l.b16 %v581
      %v1523 = vunpack.c.h.b16 %v581
      %v1524 = vunpack.c.l.b16 %v582
      %v1525 = vunpack.c.h.b16 %v582
      %v1526 = vunpack.c.l.b16 %v583
      %v1527 = vunpack.c.h.b16 %v583
      %v1528 = vunpack.c.l.b16 %v584
      %v1529 = vunpack.c.h.b16 %v584
      %v1530 = vunpack.c.l.b16 %v585
      %v1531 = vunpack.c.h.b16 %v585
      %v1532 = vunpack.c.l.b16 %v586
      %v1533 = vunpack.c.h.b16 %v586
      %v1534 = vunpack.c.l.b16 %v587
      %v1535 = vunpack.c.h.b16 %v587
      %v1536 = vunpack.c.l.b16 %v588
      %v1537 = vunpack.c.h.b16 %v588
      %v1538 = vunpack.c.l.b16 %v589
      %v1539 = vunpack.c.h.b16 %v589
      %v1540 = vunpack.c.l.b16 %v590
      %v1541 = vunpack.c.h.b16 %v590
      %v1542 = vunpack.c.l.b16 %v591
      %v1543 = vunpack.c.h.b16 %v591
      %v1544 = vunpack.c.l.b16 %v592
      %v1545 = vunpack.c.h.b16 %v592
      %v1546 = vunpack.c.l.b16 %v593
      %v1547 = vunpack.c.h.b16 %v593
      %v1548 = vunpack.c.l.b16 %v594
      %v1549 = vunpack.c.h.b16 %v594
      %v1550 = vunpack.c.l.b16 %v595
      %v1551 = vunpack.c.h.b16 %v595
      %v1552 = vunpack.c.l.b16 %v596
      %v1553 = vunpack.c.h.b16 %v596
      %v1554 = vunpack.c.l.b16 %v597
      %v1555 = vunpack.c.h.b16 %v597
      %v1556 = vunpack.c.l.b16 %v598
      %v1557 = vunpack.c.h.b16 %v598
      %v1558 = vunpack.c.l.b16 %v599
      %v1559 = vunpack.c.h.b16 %v599
      %v1560 = vunpack.c.l.b16 %v600
      %v1561 = vunpack.c.h.b16 %v600
      %v1562 = vunpack.c.l.b16 %v601
      %v1563 = vunpack.c.h.b16 %v601
      %v1564 = vunpack.c.l.b16 %v602
      %v1565 = vunpack.c.h.b16 %v602
      %v1566 = vunpack.c.l.b16 %v603
      %v1567 = vunpack.c.h.b16 %v603
      %v1568 = vunpack.c.l.b16 %v604
      %v1569 = vunpack.c.h.b16 %v604
      %v1570 = vunpack.c.l.b16 %v605
      %v1571 = vunpack.c.h.b16 %v605
      %v1572 = vunpack.c.l.b16 %v606
      %v1573 = vunpack.c.h.b16 %v606
      %v1574 = vunpack.c.l.b16 %v607
      %v1575 = vunpack.c.h.b16 %v607
      %v1576 = vunpack.c.l.b16 %v608
      %v1577 = vunpack.c.h.b16 %v608
      %v1578 = vunpack.c.l.b16 %v609
      %v1579 = vunpack.c.h.b16 %v609
      %v1580 = vunpack.c.l.b16 %v610
      %v1581 = vunpack.c.h.b16 %v610
      %v1582 = vunpack.c.l.b16 %v611
      %v1583 = vunpack.c.h.b16 %v611
      %v1584 = vunpack.c.l.b16 %v612
      %v1585 = vunpack.c.h.b16 %v612
      %v1586 = vunpack.c.l.b16 %v613
      %v1587 = vunpack.c.h.b16 %v613
      %v1588 = vunpack.c.l.b16 %v614
      %v1589 = vunpack.c.h.b16 %v614
      %v1590 = vunpack.c.l.b16 %v615
      %v1591 = vunpack.c.h.b16 %v615
      %v1592 = vunpack.c.l.b16 %v616
      %v1593 = vunpack.c.h.b16 %v616
      %v1594 = vunpack.c.l.b16 %v617
      %v1595 = vunpack.c.h.b16 %v617
      %v1596 = vunpack.c.l.b16 %v618
      %v1597 = vunpack.c.h.b16 %v618
      %v1598 = vunpack.c.l.b16 %v619
      %v1599 = vunpack.c.h.b16 %v619
      %v1600 = vunpack.c.l.b16 %v620
      %v1601 = vunpack.c.h.b16 %v620
      %v1602 = vunpack.c.l.b16 %v621
      %v1603 = vunpack.c.h.b16 %v621
      %v1604 = vunpack.c.l.b16 %v622
      %v1605 = vunpack.c.h.b16 %v622
      %v1606 = vunpack.c.l.b16 %v623
      %v1607 = vunpack.c.h.b16 %v623
      %v1608 = vunpack.c.l.b16 %v624
      %v1609 = vunpack.c.h.b16 %v624
      %v1610 = vunpack.c.l.b16 %v625
      %v1611 = vunpack.c.h.b16 %v625
      %v1612 = vunpack.c.l.b16 %v626
      %v1613 = vunpack.c.h.b16 %v626
      %v1614 = vunpack.c.l.b16 %v627
      %v1615 = vunpack.c.h.b16 %v627
      %v1616 = vunpack.c.l.b16 %v628
      %v1617 = vunpack.c.h.b16 %v628
      %v1618 = vunpack.c.l.b16 %v629
      %v1619 = vunpack.c.h.b16 %v629
      %v1620 = vunpack.c.l.b16 %v630
      %v1621 = vunpack.c.h.b16 %v630
      %v1622 = vunpack.c.l.b16 %v631
      %v1623 = vunpack.c.h.b16 %v631
      %v1624 = vunpack.c.l.b16 %v632
      %v1625 = vunpack.c.h.b16 %v632
      %v1626 = vunpack.c.l.b16 %v633
      %v1627 = vunpack.c.h.b16 %v633
      %v1628 = vunpack.c.l.b16 %v634
      %v1629 = vunpack.c.h.b16 %v634
      %v1630 = vunpack.c.l.b16 %v635
      %v1631 = vunpack.c.h.b16 %v635
      %v1632 = vunpack.c.l.b16 %v636
      %v1633 = vunpack.c.h.b16 %v636
      %v1634 = vunpack.c.l.b16 %v637
      %v1635 = vunpack.c.h.b16 %v637
      %v1636 = vunpack.c.l.b16 %v638
      %v1637 = vunpack.c.h.b16 %v638
      %v1638 = vunpack.c.l.b16 %v639
      %v1639 = vunpack.c.h.b16 %v639
      %v1640 = vunpack.c.l.b16 %v640
      %v1641 = vunpack.c.h.b16 %v640
      %v1642 = vunpack.c.l.b16 %v641
      %v1643 = vunpack.c.h.b16 %v641
      %v1644 = vunpack.c.l.b16 %v642
      %v1645 = vunpack.c.h.b16 %v642
      %v1646 = vunpack.c.l.b16 %v643
      %v1647 = vunpack.c.h.b16 %v643
      %v1648 = vunpack.c.l.b16 %v644
      %v1649 = vunpack.c.h.b16 %v644
      %v1650 = vunpack.c.l.b16 %v645
      %v1651 = vunpack.c.h.b16 %v645
      %v1652 = vunpack.c.l.b16 %v646
      %v1653 = vunpack.c.h.b16 %v646
      %v1654 = vunpack.c.l.b16 %v647
      %v1655 = vunpack.c.h.b16 %v647
      %v1656 = vunpack.c.l.b16 %v648
      %v1657 = vunpack.c.h.b16 %v648
      %v1658 = vunpack.c.l.b16 %v649
      %v1659 = vunpack.c.h.b16 %v649
      %v1660 = vunpack.c.l.b16 %v650
      %v1661 = vunpack.c.h.b16 %v650
      %v1662 = vunpack.c.l.b16 %v651
      %v1663 = vunpack.c.h.b16 %v651
      %v1664 = vunpack.c.l.b16 %v652
      %v1665 = vunpack.c.h.b16 %v652
      %v1666 = vunpack.c.l.b16 %v653
      %v1667 = vunpack.c.h.b16 %v653
      %v1668 = vunpack.c.l.b16 %v654
      %v1669 = vunpack.c.h.b16 %v654
      %v1670 = vunpack.c.l.b16 %v655
      %v1671 = vunpack.c.h.b16 %v655
      %v1672 = vunpack.c.l.b16 %v656
      %v1673 = vunpack.c.h.b16 %v656
      %v1674 = vunpack.c.l.b16 %v657
      %v1675 = vunpack.c.h.b16 %v657
      %v1676 = vunpack.c.l.b16 %v658
      %v1677 = vunpack.c.h.b16 %v658
      %v1678 = vunpack.c.l.b16 %v659
      %v1679 = vunpack.c.h.b16 %v659
      %v1680 = vunpack.c.l.b16 %v660
      %v1681 = vunpack.c.h.b16 %v660
      %v1682 = vunpack.c.l.b16 %v661
      %v1683 = vunpack.c.h.b16 %v661
      %v1684 = vunpack.c.l.b16 %v662
      %v1685 = vunpack.c.h.b16 %v662
      %v1686 = vunpack.c.l.b16 %v663
      %v1687 = vunpack.c.h.b16 %v663
      %v1688 = vunpack.c.l.b16 %v664
      %v1689 = vunpack.c.h.b16 %v664
      %v1690 = vunpack.c.l.b16 %v665
      %v1691 = vunpack.c.h.b16 %v665
      %v1692 = vunpack.c.l.b16 %v666
      %v1693 = vunpack.c.h.b16 %v666
      %v1694 = vunpack.c.l.b16 %v667
      %v1695 = vunpack.c.h.b16 %v667
      %v1696 = vunpack.c.l.b16 %v668
      %v1697 = vunpack.c.h.b16 %v668
      %v1698 = vunpack.c.l.b16 %v669
      %v1699 = vunpack.c.h.b16 %v669
      %v1700 = vunpack.c.l.b16 %v670
      %v1701 = vunpack.c.h.b16 %v670
      %v1702 = vunpack.c.l.b16 %v671
      %v1703 = vunpack.c.h.b16 %v671
      %v1704 = vunpack.c.l.b16 %v672
      %v1705 = vunpack.c.h.b16 %v672
      %v1706 = vunpack.c.l.b16 %v673
      %v1707 = vunpack.c.h.b16 %v673
      %v1708 = vunpack.c.l.b16 %v674
      %v1709 = vunpack.c.h.b16 %v674
      %v1710 = vunpack.c.l.b16 %v675
      %v1711 = vunpack.c.h.b16 %v675
      %v1712 = vunpack.c.l.b16 %v676
      %v1713 = vunpack.c.h.b16 %v676
      %v1714 = vunpack.c.l.b16 %v677
      %v1715 = vunpack.c.h.b16 %v677
      %v1716 = vunpack.c.l.b16 %v678
      %v1717 = vunpack.c.h.b16 %v678
      %v1718 = vunpack.c.l.b16 %v679
      %v1719 = vunpack.c.h.b16 %v679
      %v1720 = vunpack.c.l.b16 %v680
      %v1721 = vunpack.c.h.b16 %v680
      %v1722 = vunpack.c.l.b16 %v681
      %v1723 = vunpack.c.h.b16 %v681
      %v1724 = vunpack.c.l.b16 %v682
      %v1725 = vunpack.c.h.b16 %v682
      %v1726 = vunpack.c.l.b16 %v683
      %v1727 = vunpack.c.h.b16 %v683
      %v1728 = vunpack.c.l.b16 %v684
      %v1729 = vunpack.c.h.b16 %v684
      %v1730 = vunpack.c.l.b16 %v685
      %v1731 = vunpack.c.h.b16 %v685
      %v1732 = vunpack.c.l.b16 %v686
      %v1733 = vunpack.c.h.b16 %v686
      %v1734 = vunpack.c.l.b16 %v687
      %v1735 = vunpack.c.h.b16 %v687
      %v1736 = vunpack.c.l.b16 %v688
      %v1737 = vunpack.c.h.b16 %v688
      %v1738 = vunpack.c.l.b16 %v689
      %v1739 = vunpack.c.h.b16 %v689
      %v1740 = vunpack.c.l.b16 %v690
      %v1741 = vunpack.c.h.b16 %v690
      %v1742 = vunpack.c.l.b16 %v691
      %v1743 = vunpack.c.h.b16 %v691
      %v1744 = vunpack.c.l.b16 %v692
      %v1745 = vunpack.c.h.b16 %v692
      %v1746 = vunpack.c.l.b16 %v693
      %v1747 = vunpack.c.h.b16 %v693
      %v1748 = vunpack.c.l.b16 %v694
      %v1749 = vunpack.c.h.b16 %v694
      %v1750 = vunpack.c.l.b16 %v695
      %v1751 = vunpack.c.h.b16 %v695
      %v1752 = vunpack.c.l.b16 %v696
      %v1753 = vunpack.c.h.b16 %v696
      %v1754 = vunpack.c.l.b16 %v697
      %v1755 = vunpack.c.h.b16 %v697
      %v1756 = vunpack.c.l.b16 %v698
      %v1757 = vunpack.c.h.b16 %v698
      %v1758 = vunpack.c.l.b16 %v699
      %v1759 = vunpack.c.h.b16 %v699
      %v1760 = vunpack.c.l.b16 %v700
      %v1761 = vunpack.c.h.b16 %v700
      %v1762 = vunpack.c.l.b16 %v701
      %v1763 = vunpack.c.h.b16 %v701
      %v1764 = vunpack.c.l.b16 %v702
      %v1765 = vunpack.c.h.b16 %v702
      %v1766 = vunpack.c.l.b16 %v703
      %v1767 = vunpack.c.h.b16 %v703
      %v1768 = vunpack.c.l.b16 %v704
      %v1769 = vunpack.c.h.b16 %v704
      %v1770 = vunpack.c.l.b16 %v705
      %v1771 = vunpack.c.h.b16 %v705
      %v1772 = vunpack.c.l.b16 %v706
      %v1773 = vunpack.c.h.b16 %v706
      %v1774 = vunpack.c.l.b16 %v707
      %v1775 = vunpack.c.h.b16 %v707
      %v1776 = vunpack.c.l.b16 %v708
      %v1777 = vunpack.c.h.b16 %v708
      %v1778 = vunpack.c.l.b16 %v709
      %v1779 = vunpack.c.h.b16 %v709
      %v1780 = vunpack.c.l.b16 %v710
      %v1781 = vunpack.c.h.b16 %v710
      %v1782 = vunpack.c.l.b16 %v711
      %v1783 = vunpack.c.h.b16 %v711
      %v1784 = vunpack.c.l.b16 %v712
      %v1785 = vunpack.c.h.b16 %v712
      %v1786 = vunpack.c.l.b16 %v713
      %v1787 = vunpack.c.h.b16 %v713
      %v1788 = vunpack.c.l.b16 %v714
      %v1789 = vunpack.c.h.b16 %v714
      %v1790 = vunpack.c.l.b16 %v715
      %v1791 = vunpack.c.h.b16 %v715
      %v1792 = vunpack.c.l.b16 %v716
      %v1793 = vunpack.c.h.b16 %v716
      %v1794 = vunpack.c.l.b16 %v717
      %v1795 = vunpack.c.h.b16 %v717
      %v1796 = vunpack.c.l.b16 %v718
      %v1797 = vunpack.c.h.b16 %v718
      %v1798 = vunpack.c.l.b16 %v719
      %v1799 = vunpack.c.h.b16 %v719
      %v1800 = vunpack.c.l.b16 %v720
      %v1801 = vunpack.c.h.b16 %v720
      %v1802 = vunpack.c.l.b16 %v721
      %v1803 = vunpack.c.h.b16 %v721
      %v1804 = vunpack.c.l.b16 %v722
      %v1805 = vunpack.c.h.b16 %v722
      %v1806 = vunpack.c.l.b16 %v723
      %v1807 = vunpack.c.h.b16 %v723
      %v1808 = vunpack.c.l.b16 %v724
      %v1809 = vunpack.c.h.b16 %v724
      %v1810 = vunpack.c.l.b16 %v725
      %v1811 = vunpack.c.h.b16 %v725
      %v1812 = vunpack.c.l.b16 %v726
      %v1813 = vunpack.c.h.b16 %v726
      %v1814 = vunpack.c.l.b16 %v727
      %v1815 = vunpack.c.h.b16 %v727
      %v1816 = vunpack.c.l.b16 %v728
      %v1817 = vunpack.c.h.b16 %v728
      %v1818 = vunpack.c.l.b16 %v729
      %v1819 = vunpack.c.h.b16 %v729
      %v1820 = vunpack.c.l.b16 %v730
      %v1821 = vunpack.c.h.b16 %v730
      %v1822 = vunpack.c.l.b16 %v731
      %v1823 = vunpack.c.h.b16 %v731
      %v1824 = vunpack.c.l.b16 %v732
      %v1825 = vunpack.c.h.b16 %v732
      %v1826 = vunpack.c.l.b16 %v733
      %v1827 = vunpack.c.h.b16 %v733
      %v1828 = vunpack.c.l.b16 %v734
      %v1829 = vunpack.c.h.b16 %v734
      %v1830 = vunpack.c.l.b16 %v735
      %v1831 = vunpack.c.h.b16 %v735
      %v1832 = vunpack.c.l.b16 %v736
      %v1833 = vunpack.c.h.b16 %v736
      %v1834 = vunpack.c.l.b16 %v737
      %v1835 = vunpack.c.h.b16 %v737
      %v1836 = vunpack.c.l.b16 %v738
      %v1837 = vunpack.c.h.b16 %v738
      %v1838 = vunpack.c.l.b16 %v739
      %v1839 = vunpack.c.h.b16 %v739
      %v1840 = vunpack.c.l.b16 %v740
      %v1841 = vunpack.c.h.b16 %v740
      %v1842 = vunpack.c.l.b16 %v741
      %v1843 = vunpack.c.h.b16 %v741
      %v1844 = vunpack.c.l.b16 %v742
      %v1845 = vunpack.c.h.b16 %v742
      %v1846 = vunpack.c.l.b16 %v743
      %v1847 = vunpack.c.h.b16 %v743
      %v1848 = vunpack.c.l.b16 %v744
      %v1849 = vunpack.c.h.b16 %v744
      %v1850 = vunpack.c.l.b16 %v745
      %v1851 = vunpack.c.h.b16 %v745
      %v1852 = vunpack.c.l.b16 %v746
      %v1853 = vunpack.c.h.b16 %v746
      %v1854 = vunpack.c.l.b16 %v747
      %v1855 = vunpack.c.h.b16 %v747
      %v1856 = vunpack.c.l.b16 %v748
      %v1857 = vunpack.c.h.b16 %v748
      %v1858 = vunpack.c.l.b16 %v749
      %v1859 = vunpack.c.h.b16 %v749
      %v1860 = vunpack.c.l.b16 %v750
      %v1861 = vunpack.c.h.b16 %v750
      %v1862 = vunpack.c.l.b16 %v751
      %v1863 = vunpack.c.h.b16 %v751
      %v1864 = vunpack.c.l.b16 %v752
      %v1865 = vunpack.c.h.b16 %v752
      %v1866 = vunpack.c.l.b16 %v753
      %v1867 = vunpack.c.h.b16 %v753
      %v1868 = vunpack.c.l.b16 %v754
      %v1869 = vunpack.c.h.b16 %v754
      %v1870 = vunpack.c.l.b16 %v755
      %v1871 = vunpack.c.h.b16 %v755
      %v1872 = vunpack.c.l.b16 %v756
      %v1873 = vunpack.c.h.b16 %v756
      %v1874 = vunpack.c.l.b16 %v757
      %v1875 = vunpack.c.h.b16 %v757
      %v1876 = vunpack.c.l.b16 %v758
      %v1877 = vunpack.c.h.b16 %v758
      %v1878 = vunpack.c.l.b16 %v759
      %v1879 = vunpack.c.h.b16 %v759
      %v1880 = vunpack.c.l.b16 %v760
      %v1881 = vunpack.c.h.b16 %v760
      %v1882 = vunpack.c.l.b16 %v761
      %v1883 = vunpack.c.h.b16 %v761
      %v1884 = vunpack.c.l.b16 %v762
      %v1885 = vunpack.c.h.b16 %v762
      %v1886 = vunpack.c.l.b16 %v763
      %v1887 = vunpack.c.h.b16 %v763
      %v1888 = vunpack.c.l.b16 %v764
      %v1889 = vunpack.c.h.b16 %v764
      %v1890 = vunpack.c.l.b16 %v765
      %v1891 = vunpack.c.h.b16 %v765
      %v1892 = vunpack.c.l.b16 %v766
      %v1893 = vunpack.c.h.b16 %v766
      %v1894 = vunpack.c.l.b16 %v767
      %v1895 = vunpack.c.h.b16 %v767
      %v1896 = vunpack.c.l.b16 %v768
      %v1897 = vunpack.c.h.b16 %v768
      %v1898 = vunpack.c.l.b16 %v769
      %v1899 = vunpack.c.h.b16 %v769
      %v1900 = vunpack.c.l.b16 %v770
      %v1901 = vunpack.c.h.b16 %v770
      %v1902 = vunpack.c.l.b16 %v771
      %v1903 = vunpack.c.h.b16 %v771
      %v1904 = vunpack.c.l.b16 %v772
      %v1905 = vunpack.c.h.b16 %v772
      %v1906 = vunpack.c.l.b16 %v773
      %v1907 = vunpack.c.h.b16 %v773
      %v1908 = vunpack.c.l.b16 %v774
      %v1909 = vunpack.c.h.b16 %v774
      %v1910 = vunpack.c.l.b16 %v775
      %v1911 = vunpack.c.h.b16 %v775
      %v1912 = vunpack.c.l.b16 %v776
      %v1913 = vunpack.c.h.b16 %v776
      %v1914 = vunpack.c.l.b16 %v777
      %v1915 = vunpack.c.h.b16 %v777
      %v1916 = vunpack.c.l.b16 %v778
      %v1917 = vunpack.c.h.b16 %v778
      %v1918 = vunpack.c.l.b16 %v779
      %v1919 = vunpack.c.h.b16 %v779
      %v1920 = vunpack.c.l.b16 %v780
      %v1921 = vunpack.c.h.b16 %v780
      %v1922 = vunpack.c.l.b16 %v781
      %v1923 = vunpack.c.h.b16 %v781
      %v1924 = vunpack.c.l.b16 %v782
      %v1925 = vunpack.c.h.b16 %v782
      %v1926 = vunpack.c.l.b16 %v783
      %v1927 = vunpack.c.h.b16 %v783
      %v1928 = vunpack.c.l.b16 %v784
      %v1929 = vunpack.c.h.b16 %v784
      %v1930 = vunpack.c.l.b16 %v785
      %v1931 = vunpack.c.h.b16 %v785
      %v1932 = vunpack.c.l.b16 %v786
      %v1933 = vunpack.c.h.b16 %v786
      %v1934 = vunpack.c.l.b16 %v787
      %v1935 = vunpack.c.h.b16 %v787
      %v1936 = vunpack.c.l.b16 %v788
      %v1937 = vunpack.c.h.b16 %v788
      %v1938 = vunpack.c.l.b16 %v789
      %v1939 = vunpack.c.h.b16 %v789
      %v1940 = vunpack.c.l.b16 %v790
      %v1941 = vunpack.c.h.b16 %v790
      %v1942 = vunpack.c.l.b16 %v791
      %v1943 = vunpack.c.h.b16 %v791
      %v1944 = vunpack.c.l.b16 %v792
      %v1945 = vunpack.c.h.b16 %v792
      %v1946 = vunpack.c.l.b16 %v793
      %v1947 = vunpack.c.h.b16 %v793
      %v1948 = vunpack.c.l.b16 %v794
      %v1949 = vunpack.c.h.b16 %v794
      %v1950 = vunpack.c.l.b16 %v795
      %v1951 = vunpack.c.h.b16 %v795
      %v1952 = vunpack.c.l.b16 %v796
      %v1953 = vunpack.c.h.b16 %v796
      %v1954 = vunpack.c.l.b16 %v797
      %v1955 = vunpack.c.h.b16 %v797
      %v1956 = vunpack.c.l.b16 %v798
      %v1957 = vunpack.c.h.b16 %v798
      %v1958 = vunpack.c.l.b16 %v799
      %v1959 = vunpack.c.h.b16 %v799
      %v1960 = vunpack.c.l.b16 %v800
      %v1961 = vunpack.c.h.b16 %v800
      %v1962 = vunpack.c.l.b16 %v801
      %v1963 = vunpack.c.h.b16 %v801
      %v1964 = vunpack.c.l.b16 %v802
      %v1965 = vunpack.c.h.b16 %v802
      %v1966 = vunpack.c.l.b16 %v803
      %v1967 = vunpack.c.h.b16 %v803
      %v1968 = vunpack.c.l.b16 %v804
      %v1969 = vunpack.c.h.b16 %v804
      %v1970 = vunpack.c.l.b16 %v805
      %v1971 = vunpack.c.h.b16 %v805
      %v1972 = vunpack.c.l.b16 %v806
      %v1973 = vunpack.c.h.b16 %v806
      %v1974 = vunpack.c.l.b16 %v807
      %v1975 = vunpack.c.h.b16 %v807
      %v1976 = vunpack.c.l.b16 %v808
      %v1977 = vunpack.c.h.b16 %v808
      %v1978 = vunpack.c.l.b16 %v809
      %v1979 = vunpack.c.h.b16 %v809
      %v1980 = vunpack.c.l.b16 %v810
      %v1981 = vunpack.c.h.b16 %v810
      %v1982 = vunpack.c.l.b16 %v811
      %v1983 = vunpack.c.h.b16 %v811
      %v1984 = vunpack.c.l.b16 %v812
      %v1985 = vunpack.c.h.b16 %v812
      %v1986 = vpack.c.b16 %v1222, %v1218
      %v1987 = vpack.c.b16 %v1223, %v1219
      %v1988 = vpack.c.b16 %v1224, %v1220
      %v1989 = vpack.c.b16 %v1225, %v1221
      %v1990 = vpack.c.b16 %v1230, %v1226
      %v1991 = vpack.c.b16 %v1231, %v1227
      %v1992 = vpack.c.b16 %v1232, %v1228
      %v1993 = vpack.c.b16 %v1233, %v1229
      %v1994 = vpack.c.b16 %v1238, %v1234
      %v1995 = vpack.c.b16 %v1239, %v1235
      %v1996 = vpack.c.b16 %v1240, %v1236
      %v1997 = vpack.c.b16 %v1241, %v1237
      %v1998 = vpack.c.b16 %v1246, %v1242
      %v1999 = vpack.c.b16 %v1247, %v1243
      %v2000 = vpack.c.b16 %v1248, %v1244
      %v2001 = vpack.c.b16 %v1249, %v1245
      %v2002 = vpack.c.b16 %v1254, %v1250
      %v2003 = vpack.c.b16 %v1255, %v1251
      %v2004 = vpack.c.b16 %v1256, %v1252
      %v2005 = vpack.c.b16 %v1257, %v1253
      %v2006 = vpack.c.b16 %v1262, %v1258
      %v2007 = vpack.c.b16 %v1263, %v1259
      %v2008 = vpack.c.b16 %v1264, %v1260
      %v2009 = vpack.c.b16 %v1265, %v1261
      %v2010 = vpack.c.b16 %v1270, %v1266
      %v2011 = vpack.c.b16 %v1271, %v1267
      %v2012 = vpack.c.b16 %v1272, %v1268
      %v2013 = vpack.c.b16 %v1273, %v1269
      %v2014 = vpack.c.b16 %v1278, %v1274
      %v2015 = vpack.c.b16 %v1279, %v1275
      %v2016 = vpack.c.b16 %v1280, %v1276
      %v2017 = vpack.c.b16 %v1281, %v1277
      %v2018 = vpack.c.b16 %v1286, %v1282
      %v2019 = vpack.c.b16 %v1287, %v1283
      %v2020 = vpack.c.b16 %v1288, %v1284
      %v2021 = vpack.c.b16 %v1289, %v1285
      %v2022 = vpack.c.b16 %v1294, %v1290
      %v2023 = vpack.c.b16 %v1295, %v1291
      %v2024 = vpack.c.b16 %v1296, %v1292
      %v2025 = vpack.c.b16 %v1297, %v1293
      %v2026 = vpack.c.b16 %v1302, %v1298
      %v2027 = vpack.c.b16 %v1303, %v1299
      %v2028 = vpack.c.b16 %v1304, %v1300
      %v2029 = vpack.c.b16 %v1305, %v1301
      %v2030 = vpack.c.b16 %v1310, %v1306
      %v2031 = vpack.c.b16 %v1311, %v1307
      %v2032 = vpack.c.b16 %v1312, %v1308
      %v2033 = vpack.c.b16 %v1313, %v1309
      %v2034 = vpack.c.b16 %v1318, %v1314
      %v2035 = vpack.c.b16 %v1319, %v1315
      %v2036 = vpack.c.b16 %v1320, %v1316
      %v2037 = vpack.c.b16 %v1321, %v1317
      %v2038 = vpack.c.b16 %v1326, %v1322
      %v2039 = vpack.c.b16 %v1327, %v1323
      %v2040 = vpack.c.b16 %v1328, %v1324
      %v2041 = vpack.c.b16 %v1329, %v1325
      %v2042 = vpack.c.b16 %v1334, %v1330
      %v2043 = vpack.c.b16 %v1335, %v1331
      %v2044 = vpack.c.b16 %v1336, %v1332
      %v2045 = vpack.c.b16 %v1337, %v1333
      %v2046 = vpack.c.b16 %v1342, %v1338
      %v2047 = vpack.c.b16 %v1343, %v1339
      %v2048 = vpack.c.b16 %v1344, %v1340
      %v2049 = vpack.c.b16 %v1345, %v1341
      %v2050 = vpack.c.b16 %v1350, %v1346
      %v2051 = vpack.c.b16 %v1351, %v1347
      %v2052 = vpack.c.b16 %v1352, %v1348
      %v2053 = vpack.c.b16 %v1353, %v1349
      %v2054 = vpack.c.b16 %v1358, %v1354
      %v2055 = vpack.c.b16 %v1359, %v1355
      %v2056 = vpack.c.b16 %v1360, %v1356
      %v2057 = vpack.c.b16 %v1361, %v1357
      %v2058 = vpack.c.b16 %v1366, %v1362
      %v2059 = vpack.c.b16 %v1367, %v1363
      %v2060 = vpack.c.b16 %v1368, %v1364
      %v2061 = vpack.c.b16 %v1369, %v1365
      %v2062 = vpack.c.b16 %v1374, %v1370
      %v2063 = vpack.c.b16 %v1375, %v1371
      %v2064 = vpack.c.b16 %v1376, %v1372
      %v2065 = vpack.c.b16 %v1377, %v1373
      %v2066 = vpack.c.b16 %v1382, %v1378
      %v2067 = vpack.c.b16 %v1383, %v1379
      %v2068 = vpack.c.b16 %v1384, %v1380
      %v2069 = vpack.c.b16 %v1385, %v1381
      %v2070 = vpack.c.b16 %v1390, %v1386
      %v2071 = vpack.c.b16 %v1391, %v1387
      %v2072 = vpack.c.b16 %v1392, %v1388
      %v2073 = vpack.c.b16 %v1393, %v1389
      %v2074 = vpack.c.b16 %v1398, %v1394
      %v2075 = vpack.c.b16 %v1399, %v1395
      %v2076 = vpack.c.b16 %v1400, %v1396
      %v2077 = vpack.c.b16 %v1401, %v1397
      %v2078 = vpack.c.b16 %v1406, %v1402
      %v2079 = vpack.c.b16 %v1407, %v1403
      %v2080 = vpack.c.b16 %v1408, %v1404
      %v2081 = vpack.c.b16 %v1409, %v1405
      %v2082 = vpack.c.b16 %v1414, %v1410
      %v2083 = vpack.c.b16 %v1415, %v1411
      %v2084 = vpack.c.b16 %v1416, %v1412
      %v2085 = vpack.c.b16 %v1417, %v1413
      %v2086 = vpack.c.b16 %v1422, %v1418
      %v2087 = vpack.c.b16 %v1423, %v1419
      %v2088 = vpack.c.b16 %v1424, %v1420
      %v2089 = vpack.c.b16 %v1425, %v1421
      %v2090 = vpack.c.b16 %v1430, %v1426
      %v2091 = vpack.c.b16 %v1431, %v1427
      %v2092 = vpack.c.b16 %v1432, %v1428
      %v2093 = vpack.c.b16 %v1433, %v1429
      %v2094 = vpack.c.b16 %v1438, %v1434
      %v2095 = vpack.c.b16 %v1439, %v1435
      %v2096 = vpack.c.b16 %v1440, %v1436
      %v2097 = vpack.c.b16 %v1441, %v1437
      %v2098 = vpack.c.b16 %v1446, %v1442
      %v2099 = vpack.c.b16 %v1447, %v1443
      %v2100 = vpack.c.b16 %v1448, %v1444
      %v2101 = vpack.c.b16 %v1449, %v1445
      %v2102 = vpack.c.b16 %v1454, %v1450
      %v2103 = vpack.c.b16 %v1455, %v1451
      %v2104 = vpack.c.b16 %v1456, %v1452
      %v2105 = vpack.c.b16 %v1457, %v1453
      %v2106 = vpack.c.b16 %v1462, %v1458
      %v2107 = vpack.c.b16 %v1463, %v1459
      %v2108 = vpack.c.b16 %v1464, %v1460
      %v2109 = vpack.c.b16 %v1465, %v1461
      %v2110 = vpack.c.b16 %v1470, %v1466
      %v2111 = vpack.c.b16 %v1471, %v1467
      %v2112 = vpack.c.b16 %v1472, %v1468
      %v2113 = vpack.c.b16 %v1473, %v1469
      %v2114 = vpack.c.b16 %v1478, %v1474
      %v2115 = vpack.c.b16 %v1479, %v1475
      %v2116 = vpack.c.b16 %v1480, %v1476
      %v2117 = vpack.c.b16 %v1481, %v1477
      %v2118 = vpack.c.b16 %v1486, %v1482
      %v2119 = vpack.c.b16 %v1487, %v1483
      %v2120 = vpack.c.b16 %v1488, %v1484
      %v2121 = vpack.c.b16 %v1489, %v1485
      %v2122 = vpack.c.b16 %v1494, %v1490
      %v2123 = vpack.c.b16 %v1495, %v1491
      %v2124 = vpack.c.b16 %v1496, %v1492
      %v2125 = vpack.c.b16 %v1497, %v1493
      %v2126 = vpack.c.b16 %v1502, %v1498
      %v2127 = vpack.c.b16 %v1503, %v1499
      %v2128 = vpack.c.b16 %v1504, %v1500
      %v2129 = vpack.c.b16 %v1505, %v1501
      %v2130 = vpack.c.b16 %v1510, %v1506
      %v2131 = vpack.c.b16 %v1511, %v1507
      %v2132 = vpack.c.b16 %v1512, %v1508
      %v2133 = vpack.c.b16 %v1513, %v1509
      %v2134 = vpack.c.b16 %v1518, %v1514
      %v2135 = vpack.c.b16 %v1519, %v1515
      %v2136 = vpack.c.b16 %v1520, %v1516
      %v2137 = vpack.c.b16 %v1521, %v1517
      %v2138 = vpack.c.b16 %v1526, %v1522
      %v2139 = vpack.c.b16 %v1527, %v1523
      %v2140 = vpack.c.b16 %v1528, %v1524
      %v2141 = vpack.c.b16 %v1529, %v1525
      %v2142 = vpack.c.b16 %v1534, %v1530
      %v2143 = vpack.c.b16 %v1535, %v1531
      %v2144 = vpack.c.b16 %v1536, %v1532
      %v2145 = vpack.c.b16 %v1537, %v1533
      %v2146 = vpack.c.b16 %v1542, %v1538
      %v2147 = vpack.c.b16 %v1543, %v1539
      %v2148 = vpack.c.b16 %v1544, %v1540
      %v2149 = vpack.c.b16 %v1545, %v1541
      %v2150 = vpack.c.b16 %v1550, %v1546
      %v2151 = vpack.c.b16 %v1551, %v1547
      %v2152 = vpack.c.b16 %v1552, %v1548
      %v2153 = vpack.c.b16 %v1553, %v1549
      %v2154 = vpack.c.b16 %v1558, %v1554
      %v2155 = vpack.c.b16 %v1559, %v1555
      %v2156 = vpack.c.b16 %v1560, %v1556
      %v2157 = vpack.c.b16 %v1561, %v1557
      %v2158 = vpack.c.b16 %v1566, %v1562
      %v2159 = vpack.c.b16 %v1567, %v1563
      %v2160 = vpack.c.b16 %v1568, %v1564
      %v2161 = vpack.c.b16 %v1569, %v1565
      %v2162 = vpack.c.b16 %v1574, %v1570
      %v2163 = vpack.c.b16 %v1575, %v1571
      %v2164 = vpack.c.b16 %v1576, %v1572
      %v2165 = vpack.c.b16 %v1577, %v1573
      %v2166 = vpack.c.b16 %v1582, %v1578
      %v2167 = vpack.c.b16 %v1583, %v1579
      %v2168 = vpack.c.b16 %v1584, %v1580
      %v2169 = vpack.c.b16 %v1585, %v1581
      %v2170 = vpack.c.b16 %v1590, %v1586
      %v2171 = vpack.c.b16 %v1591, %v1587
      %v2172 = vpack.c.b16 %v1592, %v1588
      %v2173 = vpack.c.b16 %v1593, %v1589
      %v2174 = vpack.c.b16 %v1598, %v1594
      %v2175 = vpack.c.b16 %v1599, %v1595
      %v2176 = vpack.c.b16 %v1600, %v1596
      %v2177 = vpack.c.b16 %v1601, %v1597
      %v2178 = vpack.c.b16 %v1606, %v1602
      %v2179 = vpack.c.b16 %v1607, %v1603
      %v2180 = vpack.c.b16 %v1608, %v1604
      %v2181 = vpack.c.b16 %v1609, %v1605
      %v2182 = vpack.c.b16 %v1614, %v1610
      %v2183 = vpack.c.b16 %v1615, %v1611
      %v2184 = vpack.c.b16 %v1616, %v1612
      %v2185 = vpack.c.b16 %v1617, %v1613
      %v2186 = vpack.c.b16 %v1622, %v1618
      %v2187 = vpack.c.b16 %v1623, %v1619
      %v2188 = vpack.c.b16 %v1624, %v1620
      %v2189 = vpack.c.b16 %v1625, %v1621
      %v2190 = vpack.c.b16 %v1630, %v1626
      %v2191 = vpack.c.b16 %v1631, %v1627
      %v2192 = vpack.c.b16 %v1632, %v1628
      %v2193 = vpack.c.b16 %v1633, %v1629
      %v2194 = vpack.c.b16 %v1638, %v1634
      %v2195 = vpack.c.b16 %v1639, %v1635
      %v2196 = vpack.c.b16 %v1640, %v1636
      %v2197 = vpack.c.b16 %v1641, %v1637
      %v2198 = vpack.c.b16 %v1646, %v1642
      %v2199 = vpack.c.b16 %v1647, %v1643
      %v2200 = vpack.c.b16 %v1648, %v1644
      %v2201 = vpack.c.b16 %v1649, %v1645
      %v2202 = vpack.c.b16 %v1654, %v1650
      %v2203 = vpack.c.b16 %v1655, %v1651
      %v2204 = vpack.c.b16 %v1656, %v1652
      %v2205 = vpack.c.b16 %v1657, %v1653
      %v2206 = vpack.c.b16 %v1662, %v1658
      %v2207 = vpack.c.b16 %v1663, %v1659
      %v2208 = vpack.c.b16 %v1664, %v1660
      %v2209 = vpack.c.b16 %v1665, %v1661
      %v2210 = vpack.c.b16 %v1670, %v1666
      %v2211 = vpack.c.b16 %v1671, %v1667
      %v2212 = vpack.c.b16 %v1672, %v1668
      %v2213 = vpack.c.b16 %v1673, %v1669
      %v2214 = vpack.c.b16 %v1678, %v1674
      %v2215 = vpack.c.b16 %v1679, %v1675
      %v2216 = vpack.c.b16 %v1680, %v1676
      %v2217 = vpack.c.b16 %v1681, %v1677
      %v2218 = vpack.c.b16 %v1686, %v1682
      %v2219 = vpack.c.b16 %v1687, %v1683
      %v2220 = vpack.c.b16 %v1688, %v1684
      %v2221 = vpack.c.b16 %v1689, %v1685
      %v2222 = vpack.c.b16 %v1694, %v1690
      %v2223 = vpack.c.b16 %v1695, %v1691
      %v2224 = vpack.c.b16 %v1696, %v1692
      %v2225 = vpack.c.b16 %v1697, %v1693
      %v2226 = vpack.c.b16 %v1702, %v1698
      %v2227 = vpack.c.b16 %v1703, %v1699
      %v2228 = vpack.c.b16 %v1704, %v1700
      %v2229 = vpack.c.b16 %v1705, %v1701
      %v2230 = vpack.c.b16 %v1710, %v1706
      %v2231 = vpack.c.b16 %v1711, %v1707
      %v2232 = vpack.c.b16 %v1712, %v1708
      %v2233 = vpack.c.b16 %v1713, %v1709
      %v2234 = vpack.c.b16 %v1718, %v1714
      %v2235 = vpack.c.b16 %v1719, %v1715
      %v2236 = vpack.c.b16 %v1720, %v1716
      %v2237 = vpack.c.b16 %v1721, %v1717
      %v2238 = vpack.c.b16 %v1726, %v1722
      %v2239 = vpack.c.b16 %v1727, %v1723
      %v2240 = vpack.c.b16 %v1728, %v1724
      %v2241 = vpack.c.b16 %v1729, %v1725
      %v2242 = vpack.c.b16 %v1734, %v1730
      %v2243 = vpack.c.b16 %v1735, %v1731
      %v2244 = vpack.c.b16 %v1736, %v1732
      %v2245 = vpack.c.b16 %v1737, %v1733
      %v2246 = vpack.c.b16 %v1742, %v1738
      %v2247 = vpack.c.b16 %v1743, %v1739
      %v2248 = vpack.c.b16 %v1744, %v1740
      %v2249 = vpack.c.b16 %v1745, %v1741
      %v2250 = vpack.c.b16 %v1750, %v1746
      %v2251 = vpack.c.b16 %v1751, %v1747
      %v2252 = vpack.c.b16 %v1752, %v1748
      %v2253 = vpack.c.b16 %v1753, %v1749
      %v2254 = vpack.c.b16 %v1758, %v1754
      %v2255 = vpack.c.b16 %v1759, %v1755
      %v2256 = vpack.c.b16 %v1760, %v1756
      %v2257 = vpack.c.b16 %v1761, %v1757
      %v2258 = vpack.c.b16 %v1766, %v1762
      %v2259 = vpack.c.b16 %v1767, %v1763
      %v2260 = vpack.c.b16 %v1768, %v1764
      %v2261 = vpack.c.b16 %v1769, %v1765
      %v2262 = vpack.c.b16 %v1774, %v1770
      %v2263 = vpack.c.b16 %v1775, %v1771
      %v2264 = vpack.c.b16 %v1776, %v1772
      %v2265 = vpack.c.b16 %v1777, %v1773
      %v2266 = vpack.c.b16 %v1782, %v1778
      %v2267 = vpack.c.b16 %v1783, %v1779
      %v2268 = vpack.c.b16 %v1784, %v1780
      %v2269 = vpack.c.b16 %v1785, %v1781
      %v2270 = vpack.c.b16 %v1790, %v1786
      %v2271 = vpack.c.b16 %v1791, %v1787
      %v2272 = vpack.c.b16 %v1792, %v1788
      %v2273 = vpack.c.b16 %v1793, %v1789
      %v2274 = vpack.c.b16 %v1798, %v1794
      %v2275 = vpack.c.b16 %v1799, %v1795
      %v2276 = vpack.c.b16 %v1800, %v1796
      %v2277 = vpack.c.b16 %v1801, %v1797
      %v2278 = vpack.c.b16 %v1806, %v1802
      %v2279 = vpack.c.b16 %v1807, %v1803
      %v2280 = vpack.c.b16 %v1808, %v1804
      %v2281 = vpack.c.b16 %v1809, %v1805
      %v2282 = vpack.c.b16 %v1814, %v1810
      %v2283 = vpack.c.b16 %v1815, %v1811
      %v2284 = vpack.c.b16 %v1816, %v1812
      %v2285 = vpack.c.b16 %v1817, %v1813
      %v2286 = vpack.c.b16 %v1822, %v1818
      %v2287 = vpack.c.b16 %v1823, %v1819
      %v2288 = vpack.c.b16 %v1824, %v1820
      %v2289 = vpack.c.b16 %v1825, %v1821
      %v2290 = vpack.c.b16 %v1830, %v1826
      %v2291 = vpack.c.b16 %v1831, %v1827
      %v2292 = vpack.c.b16 %v1832, %v1828
      %v2293 = vpack.c.b16 %v1833, %v1829
      %v2294 = vpack.c.b16 %v1838, %v1834
      %v2295 = vpack.c.b16 %v1839, %v1835
      %v2296 = vpack.c.b16 %v1840, %v1836
      %v2297 = vpack.c.b16 %v1841, %v1837
      %v2298 = vpack.c.b16 %v1846, %v1842
      %v2299 = vpack.c.b16 %v1847, %v1843
      %v2300 = vpack.c.b16 %v1848, %v1844
      %v2301 = vpack.c.b16 %v1849, %v1845
      %v2302 = vpack.c.b16 %v1854, %v1850
      %v2303 = vpack.c.b16 %v1855, %v1851
      %v2304 = vpack.c.b16 %v1856, %v1852
      %v2305 = vpack.c.b16 %v1857, %v1853
      %v2306 = vpack.c.b16 %v1862, %v1858
      %v2307 = vpack.c.b16 %v1863, %v1859
      %v2308 = vpack.c.b16 %v1864, %v1860
      %v2309 = vpack.c.b16 %v1865, %v1861
      %v2310 = vpack.c.b16 %v1870, %v1866
      %v2311 = vpack.c.b16 %v1871, %v1867
      %v2312 = vpack.c.b16 %v1872, %v1868
      %v2313 = vpack.c.b16 %v1873, %v1869
      %v2314 = vpack.c.b16 %v1878, %v1874
      %v2315 = vpack.c.b16 %v1879, %v1875
      %v2316 = vpack.c.b16 %v1880, %v1876
      %v2317 = vpack.c.b16 %v1881, %v1877
      %v2318 = vpack.c.b16 %v1886, %v1882
      %v2319 = vpack.c.b16 %v1887, %v1883
      %v2320 = vpack.c.b16 %v1888, %v1884
      %v2321 = vpack.c.b16 %v1889, %v1885
      %v2322 = vpack.c.b16 %v1894, %v1890
      %v2323 = vpack.c.b16 %v1895, %v1891
      %v2324 = vpack.c.b16 %v1896, %v1892
      %v2325 = vpack.c.b16 %v1897, %v1893
      %v2326 = vpack.c.b16 %v1902, %v1898
      %v2327 = vpack.c.b16 %v1903, %v1899
      %v2328 = vpack.c.b16 %v1904, %v1900
      %v2329 = vpack.c.b16 %v1905, %v1901
      %v2330 = vpack.c.b16 %v1910, %v1906
      %v2331 = vpack.c.b16 %v1911, %v1907
      %v2332 = vpack.c.b16 %v1912, %v1908
      %v2333 = vpack.c.b16 %v1913, %v1909
      %v2334 = vpack.c.b16 %v1918, %v1914
      %v2335 = vpack.c.b16 %v1919, %v1915
      %v2336 = vpack.c.b16 %v1920, %v1916
      %v2337 = vpack.c.b16 %v1921, %v1917
      %v2338 = vpack.c.b16 %v1926, %v1922
      %v2339 = vpack.c.b16 %v1927, %v1923
      %v2340 = vpack.c.b16 %v1928, %v1924
      %v2341 = vpack.c.b16 %v1929, %v1925
      %v2342 = vpack.c.b16 %v1934, %v1930
      %v2343 = vpack.c.b16 %v1935, %v1931
      %v2344 = vpack.c.b16 %v1936, %v1932
      %v2345 = vpack.c.b16 %v1937, %v1933
      %v2346 = vpack.c.b16 %v1942, %v1938
      %v2347 = vpack.c.b16 %v1943, %v1939
      %v2348 = vpack.c.b16 %v1944, %v1940
      %v2349 = vpack.c.b16 %v1945, %v1941
      %v2350 = vpack.c.b16 %v1950, %v1946
      %v2351 = vpack.c.b16 %v1951, %v1947
      %v2352 = vpack.c.b16 %v1952, %v1948
      %v2353 = vpack.c.b16 %v1953, %v1949
      %v2354 = vpack.c.b16 %v1958, %v1954
      %v2355 = vpack.c.b16 %v1959, %v1955
      %v2356 = vpack.c.b16 %v1960, %v1956
      %v2357 = vpack.c.b16 %v1961, %v1957
      %v2358 = vpack.c.b16 %v1966, %v1962
      %v2359 = vpack.c.b16 %v1967, %v1963
      %v2360 = vpack.c.b16 %v1968, %v1964
      %v2361 = vpack.c.b16 %v1969, %v1965
      %v2362 = vpack.c.b16 %v1974, %v1970
      %v2363 = vpack.c.b16 %v1975, %v1971
      %v2364 = vpack.c.b16 %v1976, %v1972
      %v2365 = vpack.c.b16 %v1977, %v1973
      %v2366 = vpack.c.b16 %v1982, %v1978
      %v2367 = vpack.c.b16 %v1983, %v1979
      %v2368 = vpack.c.b16 %v1984, %v1980
      %v2369 = vpack.c.b16 %v1985, %v1981
      %2754 = vmatprep.subr.bf16.mxu0 %v1987
      %2755 = vmatpush1.bf16.msra.mxu0 %v1986
      %2756 = vmatprep.subr.bf16.mxu0 %v1991
      %2757 = vmatpush1.bf16.msra.mxu0 %v1990
      %2758 = vmatprep.subr.bf16.mxu0 %v1995
      %2759 = vmatpush1.bf16.msra.mxu0 %v1994
      %2760 = vmatprep.subr.bf16.mxu0 %v1999
      %2761 = vmatpush1.bf16.msra.mxu0 %v1998
      %2762 = vmatprep.subr.bf16.mxu0 %v2003
      %2763 = vmatpush1.bf16.msra.mxu0 %v2002
      %2764 = vmatprep.subr.bf16.mxu0 %v2007
      %2765 = vmatpush1.bf16.msra.mxu0 %v2006
      %2766 = vmatprep.subr.bf16.mxu0 %v2011
      %2767 = vmatpush1.bf16.msra.mxu0 %v2010
      %2768 = vmatprep.subr.bf16.mxu0 %v2015
      %2769 = vmatpush1.bf16.msra.mxu0 %v2014
      %2770 = vmatprep.subr.bf16.mxu0 %v2019
      %2771 = vmatpush1.bf16.msra.mxu0 %v2018
      %2772 = vmatprep.subr.bf16.mxu0 %v2023
      %2773 = vmatpush1.bf16.msra.mxu0 %v2022
      %2774 = vmatprep.subr.bf16.mxu0 %v2027
      %2775 = vmatpush1.bf16.msra.mxu0 %v2026
      %2776 = vmatprep.subr.bf16.mxu0 %v2031
      %2777 = vmatpush1.bf16.msra.mxu0 %v2030
      %2778 = vmatprep.subr.bf16.mxu0 %v2035
      %2779 = vmatpush1.bf16.msra.mxu0 %v2034
      %2780 = vmatprep.subr.bf16.mxu0 %v2039
      %2781 = vmatpush1.bf16.msra.mxu0 %v2038
      %2782 = vmatprep.subr.bf16.mxu0 %v2043
      %2783 = vmatpush1.bf16.msra.mxu0 %v2042
      %2784 = vmatprep.subr.bf16.mxu0 %v2047
      %2785 = vmatpush1.bf16.msra.mxu0 %v2046
      %2786 = vmatprep.mubr.bf16.mxu0 %v418
      %2787 = vmatmul.mubr.bf16.gmra.mrb[0].mxu0 %v417
      %v2788 = vpop.f32.mrb[0].mxu0
      %v2789 = vadd.f32 %v817, %v2788
      %v2790 = vpop.f32.mrb[0].mxu0
      %v2791 = vadd.f32 %v821, %v2790
      %v2792 = vpop.f32.mrb[0].mxu0
      %v2793 = vadd.f32 %v817, %v2792
      %v2794 = vpop.f32.mrb[0].mxu0
      %v2795 = vadd.f32 %v821, %v2794
      %2796 = vdwg.mxu0
      %2797 = vmatprep.subr.bf16.mxu0 %v2051
      %2798 = vmatpush1.bf16.msra.mxu0 %v2050
      %2799 = vmatprep.subr.bf16.mxu0 %v2055
      %2800 = vmatpush1.bf16.msra.mxu0 %v2054
      %2801 = vmatprep.subr.bf16.mxu0 %v2059
      %2802 = vmatpush1.bf16.msra.mxu0 %v2058
      %2803 = vmatprep.subr.bf16.mxu0 %v2063
      %2804 = vmatpush1.bf16.msra.mxu0 %v2062
      %2805 = vmatprep.subr.bf16.mxu0 %v2067
      %2806 = vmatpush1.bf16.msra.mxu0 %v2066
      %2807 = vmatprep.subr.bf16.mxu0 %v2071
      %2808 = vmatpush1.bf16.msra.mxu0 %v2070
      %2809 = vmatprep.subr.bf16.mxu0 %v2075
      %2810 = vmatpush1.bf16.msra.mxu0 %v2074
      %2811 = vmatprep.subr.bf16.mxu0 %v2079
      %2812 = vmatpush1.bf16.msra.mxu0 %v2078
      %2813 = vmatprep.subr.bf16.mxu0 %v2083
      %2814 = vmatpush1.bf16.msra.mxu0 %v2082
      %2815 = vmatprep.subr.bf16.mxu0 %v2087
      %2816 = vmatpush1.bf16.msra.mxu0 %v2086
      %2817 = vmatprep.subr.bf16.mxu0 %v2091
      %2818 = vmatpush1.bf16.msra.mxu0 %v2090
      %2819 = vmatprep.subr.bf16.mxu0 %v2095
      %2820 = vmatpush1.bf16.msra.mxu0 %v2094
      %2821 = vmatprep.subr.bf16.mxu0 %v2099
      %2822 = vmatpush1.bf16.msra.mxu0 %v2098
      %2823 = vmatprep.subr.bf16.mxu0 %v2103
      %2824 = vmatpush1.bf16.msra.mxu0 %v2102
      %2825 = vmatprep.subr.bf16.mxu0 %v2107
      %2826 = vmatpush1.bf16.msra.mxu0 %v2106
      %2827 = vmatprep.subr.bf16.mxu0 %v2111
      %2828 = vmatpush1.bf16.msra.mxu0 %v2110
      %2829 = vmatprep.mubr.bf16.mxu0 %v420
      %2830 = vmatmul.mubr.bf16.gmra.mrb[0].mxu0 %v419
      %v2831 = vpop.f32.mrb[0].mxu0
      %v2832 = vadd.f32 %v2789, %v2831
      %v2833 = vpop.f32.mrb[0].mxu0
      %v2834 = vadd.f32 %v2791, %v2833
      %v2835 = vpop.f32.mrb[0].mxu0
      %v2836 = vadd.f32 %v2793, %v2835
      %v2837 = vpop.f32.mrb[0].mxu0
      %v2838 = vadd.f32 %v2795, %v2837
      %2839 = vdwg.mxu0
      %2840 = vmatprep.subr.bf16.mxu0 %v2115
      %2841 = vmatpush1.bf16.msra.mxu0 %v2114
      %2842 = vmatprep.subr.bf16.mxu0 %v2119
      %2843 = vmatpush1.bf16.msra.mxu0 %v2118
      %2844 = vmatprep.subr.bf16.mxu0 %v2123
      %2845 = vmatpush1.bf16.msra.mxu0 %v2122
      %2846 = vmatprep.subr.bf16.mxu0 %v2127
      %2847 = vmatpush1.bf16.msra.mxu0 %v2126
      %2848 = vmatprep.subr.bf16.mxu0 %v2131
      %2849 = vmatpush1.bf16.msra.mxu0 %v2130
      %2850 = vmatprep.subr.bf16.mxu0 %v2135
      %2851 = vmatpush1.bf16.msra.mxu0 %v2134
      %2852 = vmatprep.subr.bf16.mxu0 %v2139
      %2853 = vmatpush1.bf16.msra.mxu0 %v2138
      %2854 = vmatprep.subr.bf16.mxu0 %v2143
      %2855 = vmatpush1.bf16.msra.mxu0 %v2142
      %2856 = vmatprep.subr.bf16.mxu0 %v2147
      %2857 = vmatpush1.bf16.msra.mxu0 %v2146
      %2858 = vmatprep.subr.bf16.mxu0 %v2151
      %2859 = vmatpush1.bf16.msra.mxu0 %v2150
      %2860 = vmatprep.subr.bf16.mxu0 %v2155
      %2861 = vmatpush1.bf16.msra.mxu0 %v2154
      %2862 = vmatprep.subr.bf16.mxu0 %v2159
      %2863 = vmatpush1.bf16.msra.mxu0 %v2158
      %2864 = vmatprep.subr.bf16.mxu0 %v2163
      %2865 = vmatpush1.bf16.msra.mxu0 %v2162
      %2866 = vmatprep.subr.bf16.mxu0 %v2167
      %2867 = vmatpush1.bf16.msra.mxu0 %v2166
      %2868 = vmatprep.subr.bf16.mxu0 %v2171
      %2869 = vmatpush1.bf16.msra.mxu0 %v2170
      %2870 = vmatprep.subr.bf16.mxu0 %v2175
      %2871 = vmatpush1.bf16.msra.mxu0 %v2174
      %2872 = vmatprep.mubr.bf16.mxu0 %v422
      %2873 = vmatmul.mubr.bf16.gmra.mrb[0].mxu0 %v421
      %v2874 = vpop.f32.mrb[0].mxu0
      %v2875 = vadd.f32 %v2832, %v2874
      %v2876 = vpop.f32.mrb[0].mxu0
      %v2877 = vadd.f32 %v2834, %v2876
      %v2878 = vpop.f32.mrb[0].mxu0
      %v2879 = vadd.f32 %v2836, %v2878
      %v2880 = vpop.f32.mrb[0].mxu0
      %v2881 = vadd.f32 %v2838, %v2880
      %2882 = vdwg.mxu0
      %2883 = vmatprep.subr.bf16.mxu0 %v2179
      %2884 = vmatpush1.bf16.msra.mxu0 %v2178
      %2885 = vmatprep.subr.bf16.mxu0 %v2183
      %2886 = vmatpush1.bf16.msra.mxu0 %v2182
      %2887 = vmatprep.subr.bf16.mxu0 %v2187
      %2888 = vmatpush1.bf16.msra.mxu0 %v2186
      %2889 = vmatprep.subr.bf16.mxu0 %v2191
      %2890 = vmatpush1.bf16.msra.mxu0 %v2190
      %2891 = vmatprep.subr.bf16.mxu0 %v2195
      %2892 = vmatpush1.bf16.msra.mxu0 %v2194
      %2893 = vmatprep.subr.bf16.mxu0 %v2199
      %2894 = vmatpush1.bf16.msra.mxu0 %v2198
      %2895 = vmatprep.subr.bf16.mxu0 %v2203
      %2896 = vmatpush1.bf16.msra.mxu0 %v2202
      %2897 = vmatprep.subr.bf16.mxu0 %v2207
      %2898 = vmatpush1.bf16.msra.mxu0 %v2206
      %2899 = vmatprep.subr.bf16.mxu0 %v2211
      %2900 = vmatpush1.bf16.msra.mxu0 %v2210
      %2901 = vmatprep.subr.bf16.mxu0 %v2215
      %2902 = vmatpush1.bf16.msra.mxu0 %v2214
      %2903 = vmatprep.subr.bf16.mxu0 %v2219
      %2904 = vmatpush1.bf16.msra.mxu0 %v2218
      %2905 = vmatprep.subr.bf16.mxu0 %v2223
      %2906 = vmatpush1.bf16.msra.mxu0 %v2222
      %2907 = vmatprep.subr.bf16.mxu0 %v2227
      %2908 = vmatpush1.bf16.msra.mxu0 %v2226
      %2909 = vmatprep.subr.bf16.mxu0 %v2231
      %2910 = vmatpush1.bf16.msra.mxu0 %v2230
      %2911 = vmatprep.subr.bf16.mxu0 %v2235
      %2912 = vmatpush1.bf16.msra.mxu0 %v2234
      %2913 = vmatprep.subr.bf16.mxu0 %v2239
      %2914 = vmatpush1.bf16.msra.mxu0 %v2238
      %2915 = vmatprep.mubr.bf16.mxu0 %v424
      %2916 = vmatmul.mubr.bf16.gmra.mrb[0].mxu0 %v423
      %v2917 = vpop.f32.mrb[0].mxu0
      %v2918 = vadd.f32 %v2875, %v2917
      %v2919 = vpop.f32.mrb[0].mxu0
      %v2920 = vadd.f32 %v2877, %v2919
      %v2921 = vpop.f32.mrb[0].mxu0
      %v2922 = vadd.f32 %v2879, %v2921
      %v2923 = vpop.f32.mrb[0].mxu0
      %v2924 = vadd.f32 %v2881, %v2923
      %2925 = vdwg.mxu0
      %2926 = vmatprep.subr.bf16.mxu0 %v2243
      %2927 = vmatpush1.bf16.msra.mxu0 %v2242
      %2928 = vmatprep.subr.bf16.mxu0 %v2247
      %2929 = vmatpush1.bf16.msra.mxu0 %v2246
      %2930 = vmatprep.subr.bf16.mxu0 %v2251
      %2931 = vmatpush1.bf16.msra.mxu0 %v2250
      %2932 = vmatprep.subr.bf16.mxu0 %v2255
      %2933 = vmatpush1.bf16.msra.mxu0 %v2254
      %2934 = vmatprep.subr.bf16.mxu0 %v2259
      %2935 = vmatpush1.bf16.msra.mxu0 %v2258
      %2936 = vmatprep.subr.bf16.mxu0 %v2263
      %2937 = vmatpush1.bf16.msra.mxu0 %v2262
      %2938 = vmatprep.subr.bf16.mxu0 %v2267
      %2939 = vmatpush1.bf16.msra.mxu0 %v2266
      %2940 = vmatprep.subr.bf16.mxu0 %v2271
      %2941 = vmatpush1.bf16.msra.mxu0 %v2270
      %2942 = vmatprep.subr.bf16.mxu0 %v2275
      %2943 = vmatpush1.bf16.msra.mxu0 %v2274
      %2944 = vmatprep.subr.bf16.mxu0 %v2279
      %2945 = vmatpush1.bf16.msra.mxu0 %v2278
      %2946 = vmatprep.subr.bf16.mxu0 %v2283
      %2947 = vmatpush1.bf16.msra.mxu0 %v2282
      %2948 = vmatprep.subr.bf16.mxu0 %v2287
      %2949 = vmatpush1.bf16.msra.mxu0 %v2286
      %2950 = vmatprep.subr.bf16.mxu0 %v2291
      %2951 = vmatpush1.bf16.msra.mxu0 %v2290
      %2952 = vmatprep.subr.bf16.mxu0 %v2295
      %2953 = vmatpush1.bf16.msra.mxu0 %v2294
      %2954 = vmatprep.subr.bf16.mxu0 %v2299
      %2955 = vmatpush1.bf16.msra.mxu0 %v2298
      %2956 = vmatprep.subr.bf16.mxu0 %v2303
      %2957 = vmatpush1.bf16.msra.mxu0 %v2302
      %2958 = vmatprep.mubr.bf16.mxu0 %v426
      %2959 = vmatmul.mubr.bf16.gmra.mrb[0].mxu0 %v425
      %v2960 = vpop.f32.mrb[0].mxu0
      %v2961 = vadd.f32 %v2918, %v2960
      %v2962 = vpop.f32.mrb[0].mxu0
      %v2963 = vadd.f32 %v2920, %v2962
      %v2964 = vpop.f32.mrb[0].mxu0
      %v2965 = vadd.f32 %v2922, %v2964
      %v2966 = vpop.f32.mrb[0].mxu0
      %v2967 = vadd.f32 %v2924, %v2966
      %2968 = vdwg.mxu0
      %2969 = vmatprep.subr.bf16.mxu0 %v2307
      %2970 = vmatpush1.bf16.msra.mxu0 %v2306
      %2971 = vmatprep.subr.bf16.mxu0 %v2311
      %2972 = vmatpush1.bf16.msra.mxu0 %v2310
      %2973 = vmatprep.subr.bf16.mxu0 %v2315
      %2974 = vmatpush1.bf16.msra.mxu0 %v2314
      %2975 = vmatprep.subr.bf16.mxu0 %v2319
      %2976 = vmatpush1.bf16.msra.mxu0 %v2318
      %2977 = vmatprep.subr.bf16.mxu0 %v2323
      %2978 = vmatpush1.bf16.msra.mxu0 %v2322
      %2979 = vmatprep.subr.bf16.mxu0 %v2327
      %2980 = vmatpush1.bf16.msra.mxu0 %v2326
      %2981 = vmatprep.subr.bf16.mxu0 %v2331
      %2982 = vmatpush1.bf16.msra.mxu0 %v2330
      %2983 = vmatprep.subr.bf16.mxu0 %v2335
      %2984 = vmatpush1.bf16.msra.mxu0 %v2334
      %2985 = vmatprep.subr.bf16.mxu0 %v2339
      %2986 = vmatpush1.bf16.msra.mxu0 %v2338
      %2987 = vmatprep.subr.bf16.mxu0 %v2343
      %2988 = vmatpush1.bf16.msra.mxu0 %v2342
      %2989 = vmatprep.subr.bf16.mxu0 %v2347
      %2990 = vmatpush1.bf16.msra.mxu0 %v2346
      %2991 = vmatprep.subr.bf16.mxu0 %v2351
      %2992 = vmatpush1.bf16.msra.mxu0 %v2350
      %2993 = vmatprep.subr.bf16.mxu0 %v2355
      %2994 = vmatpush1.bf16.msra.mxu0 %v2354
      %2995 = vmatprep.subr.bf16.mxu0 %v2359
      %2996 = vmatpush1.bf16.msra.mxu0 %v2358
      %2997 = vmatprep.subr.bf16.mxu0 %v2363
      %2998 = vmatpush1.bf16.msra.mxu0 %v2362
      %2999 = vmatprep.subr.bf16.mxu0 %v2367
      %3000 = vmatpush1.bf16.msra.mxu0 %v2366
      %3001 = vmatprep.mubr.bf16.mxu0 %v428
      %3002 = vmatmul.mubr.bf16.gmra.mrb[0].mxu0 %v427
      %v3003 = vpop.f32.mrb[0].mxu0
      %v3004 = vadd.f32 %v2961, %v3003
      %v3005 = vpop.f32.mrb[0].mxu0
      %v3006 = vadd.f32 %v2963, %v3005
      %v3007 = vpop.f32.mrb[0].mxu0
      %v3008 = vadd.f32 %v2965, %v3007
      %v3009 = vpop.f32.mrb[0].mxu0
      %v3010 = vadd.f32 %v2967, %v3009
      %3011 = vdwg.mxu0
      %3012 = vmatprep.subr.bf16.mxu0 %v1989
      %3013 = vmatpush1.bf16.msra.mxu0 %v1988
      %3014 = vmatprep.subr.bf16.mxu0 %v1993
      %3015 = vmatpush1.bf16.msra.mxu0 %v1992
      %3016 = vmatprep.subr.bf16.mxu0 %v1997
      %3017 = vmatpush1.bf16.msra.mxu0 %v1996
      %3018 = vmatprep.subr.bf16.mxu0 %v2001
      %3019 = vmatpush1.bf16.msra.mxu0 %v2000
      %3020 = vmatprep.subr.bf16.mxu0 %v2005
      %3021 = vmatpush1.bf16.msra.mxu0 %v2004
      %3022 = vmatprep.subr.bf16.mxu0 %v2009
      %3023 = vmatpush1.bf16.msra.mxu0 %v2008
      %3024 = vmatprep.subr.bf16.mxu0 %v2013
      %3025 = vmatpush1.bf16.msra.mxu0 %v2012
      %3026 = vmatprep.subr.bf16.mxu0 %v2017
      %3027 = vmatpush1.bf16.msra.mxu0 %v2016
      %3028 = vmatprep.subr.bf16.mxu0 %v2021
      %3029 = vmatpush1.bf16.msra.mxu0 %v2020
      %3030 = vmatprep.subr.bf16.mxu0 %v2025
      %3031 = vmatpush1.bf16.msra.mxu0 %v2024
      %3032 = vmatprep.subr.bf16.mxu0 %v2029
      %3033 = vmatpush1.bf16.msra.mxu0 %v2028
      %3034 = vmatprep.subr.bf16.mxu0 %v2033
      %3035 = vmatpush1.bf16.msra.mxu0 %v2032
      %3036 = vmatprep.subr.bf16.mxu0 %v2037
      %3037 = vmatpush1.bf16.msra.mxu0 %v2036
      %3038 = vmatprep.subr.bf16.mxu0 %v2041
      %3039 = vmatpush1.bf16.msra.mxu0 %v2040
      %3040 = vmatprep.subr.bf16.mxu0 %v2045
      %3041 = vmatpush1.bf16.msra.mxu0 %v2044
      %3042 = vmatprep.subr.bf16.mxu0 %v2049
      %3043 = vmatpush1.bf16.msra.mxu0 %v2048
      %3044 = vmatprep.mubr.bf16.mxu0 %v418
      %3045 = vmatmul.mubr.bf16.gmra.mrb[0].mxu0 %v417
      %v3046 = vpop.f32.mrb[0].mxu0
      %v3047 = vadd.f32 %v825, %v3046
      %v3048 = vpop.f32.mrb[0].mxu0
      %v3049 = vadd.f32 %v829, %v3048
      %v3050 = vpop.f32.mrb[0].mxu0
      %v3051 = vadd.f32 %v825, %v3050
      %v3052 = vpop.f32.mrb[0].mxu0
      %v3053 = vadd.f32 %v829, %v3052
      %3054 = vdwg.mxu0
      %3055 = vmatprep.subr.bf16.mxu0 %v2053
      %3056 = vmatpush1.bf16.msra.mxu0 %v2052
      %3057 = vmatprep.subr.bf16.mxu0 %v2057
      %3058 = vmatpush1.bf16.msra.mxu0 %v2056
      %3059 = vmatprep.subr.bf16.mxu0 %v2061
      %3060 = vmatpush1.bf16.msra.mxu0 %v2060
      %3061 = vmatprep.subr.bf16.mxu0 %v2065
      %3062 = vmatpush1.bf16.msra.mxu0 %v2064
      %3063 = vmatprep.subr.bf16.mxu0 %v2069
      %3064 = vmatpush1.bf16.msra.mxu0 %v2068
      %3065 = vmatprep.subr.bf16.mxu0 %v2073
      %3066 = vmatpush1.bf16.msra.mxu0 %v2072
      %3067 = vmatprep.subr.bf16.mxu0 %v2077
      %3068 = vmatpush1.bf16.msra.mxu0 %v2076
      %3069 = vmatprep.subr.bf16.mxu0 %v2081
      %3070 = vmatpush1.bf16.msra.mxu0 %v2080
      %3071 = vmatprep.subr.bf16.mxu0 %v2085
      %3072 = vmatpush1.bf16.msra.mxu0 %v2084
      %3073 = vmatprep.subr.bf16.mxu0 %v2089
      %3074 = vmatpush1.bf16.msra.mxu0 %v2088
      %3075 = vmatprep.subr.bf16.mxu0 %v2093
      %3076 = vmatpush1.bf16.msra.mxu0 %v2092
      %3077 = vmatprep.subr.bf16.mxu0 %v2097
      %3078 = vmatpush1.bf16.msra.mxu0 %v2096
      %3079 = vmatprep.subr.bf16.mxu0 %v2101
      %3080 = vmatpush1.bf16.msra.mxu0 %v2100
      %3081 = vmatprep.subr.bf16.mxu0 %v2105
      %3082 = vmatpush1.bf16.msra.mxu0 %v2104
      %3083 = vmatprep.subr.bf16.mxu0 %v2109
      %3084 = vmatpush1.bf16.msra.mxu0 %v2108
      %3085 = vmatprep.subr.bf16.mxu0 %v2113
      %3086 = vmatpush1.bf16.msra.mxu0 %v2112
      %3087 = vmatprep.mubr.bf16.mxu0 %v420
      %3088 = vmatmul.mubr.bf16.gmra.mrb[0].mxu0 %v419
      %v3089 = vpop.f32.mrb[0].mxu0
      %v3090 = vadd.f32 %v3047, %v3089
      %v3091 = vpop.f32.mrb[0].mxu0
      %v3092 = vadd.f32 %v3049, %v3091
      %v3093 = vpop.f32.mrb[0].mxu0
      %v3094 = vadd.f32 %v3051, %v3093
      %v3095 = vpop.f32.mrb[0].mxu0
      %v3096 = vadd.f32 %v3053, %v3095
      %3097 = vdwg.mxu0
      %3098 = vmatprep.subr.bf16.mxu0 %v2117
      %3099 = vmatpush1.bf16.msra.mxu0 %v2116
      %3100 = vmatprep.subr.bf16.mxu0 %v2121
      %3101 = vmatpush1.bf16.msra.mxu0 %v2120
      %3102 = vmatprep.subr.bf16.mxu0 %v2125
      %3103 = vmatpush1.bf16.msra.mxu0 %v2124
      %3104 = vmatprep.subr.bf16.mxu0 %v2129
      %3105 = vmatpush1.bf16.msra.mxu0 %v2128
      %3106 = vmatprep.subr.bf16.mxu0 %v2133
      %3107 = vmatpush1.bf16.msra.mxu0 %v2132
      %3108 = vmatprep.subr.bf16.mxu0 %v2137
      %3109 = vmatpush1.bf16.msra.mxu0 %v2136
      %3110 = vmatprep.subr.bf16.mxu0 %v2141
      %3111 = vmatpush1.bf16.msra.mxu0 %v2140
      %3112 = vmatprep.subr.bf16.mxu0 %v2145
      %3113 = vmatpush1.bf16.msra.mxu0 %v2144
      %3114 = vmatprep.subr.bf16.mxu0 %v2149
      %3115 = vmatpush1.bf16.msra.mxu0 %v2148
      %3116 = vmatprep.subr.bf16.mxu0 %v2153
      %3117 = vmatpush1.bf16.msra.mxu0 %v2152
      %3118 = vmatprep.subr.bf16.mxu0 %v2157
      %3119 = vmatpush1.bf16.msra.mxu0 %v2156
      %3120 = vmatprep.subr.bf16.mxu0 %v2161
      %3121 = vmatpush1.bf16.msra.mxu0 %v2160
      %3122 = vmatprep.subr.bf16.mxu0 %v2165
      %3123 = vmatpush1.bf16.msra.mxu0 %v2164
      %3124 = vmatprep.subr.bf16.mxu0 %v2169
      %3125 = vmatpush1.bf16.msra.mxu0 %v2168
      %3126 = vmatprep.subr.bf16.mxu0 %v2173
      %3127 = vmatpush1.bf16.msra.mxu0 %v2172
      %3128 = vmatprep.subr.bf16.mxu0 %v2177
      %3129 = vmatpush1.bf16.msra.mxu0 %v2176
      %3130 = vmatprep.mubr.bf16.mxu0 %v422
      %3131 = vmatmul.mubr.bf16.gmra.mrb[0].mxu0 %v421
      %v3132 = vpop.f32.mrb[0].mxu0
      %v3133 = vadd.f32 %v3090, %v3132
      %v3134 = vpop.f32.mrb[0].mxu0
      %v3135 = vadd.f32 %v3092, %v3134
      %v3136 = vpop.f32.mrb[0].mxu0
      %v3137 = vadd.f32 %v3094, %v3136
      %v3138 = vpop.f32.mrb[0].mxu0
      %v3139 = vadd.f32 %v3096, %v3138
      %3140 = vdwg.mxu0
      %3141 = vmatprep.subr.bf16.mxu0 %v2181
      %3142 = vmatpush1.bf16.msra.mxu0 %v2180
      %3143 = vmatprep.subr.bf16.mxu0 %v2185
      %3144 = vmatpush1.bf16.msra.mxu0 %v2184
      %3145 = vmatprep.subr.bf16.mxu0 %v2189
      %3146 = vmatpush1.bf16.msra.mxu0 %v2188
      %3147 = vmatprep.subr.bf16.mxu0 %v2193
      %3148 = vmatpush1.bf16.msra.mxu0 %v2192
      %3149 = vmatprep.subr.bf16.mxu0 %v2197
      %3150 = vmatpush1.bf16.msra.mxu0 %v2196
      %3151 = vmatprep.subr.bf16.mxu0 %v2201
      %3152 = vmatpush1.bf16.msra.mxu0 %v2200
      %3153 = vmatprep.subr.bf16.mxu0 %v2205
      %3154 = vmatpush1.bf16.msra.mxu0 %v2204
      %3155 = vmatprep.subr.bf16.mxu0 %v2209
      %3156 = vmatpush1.bf16.msra.mxu0 %v2208
      %3157 = vmatprep.subr.bf16.mxu0 %v2213
      %3158 = vmatpush1.bf16.msra.mxu0 %v2212
      %3159 = vmatprep.subr.bf16.mxu0 %v2217
      %3160 = vmatpush1.bf16.msra.mxu0 %v2216
      %3161 = vmatprep.subr.bf16.mxu0 %v2221
      %3162 = vmatpush1.bf16.msra.mxu0 %v2220
      %3163 = vmatprep.subr.bf16.mxu0 %v2225
      %3164 = vmatpush1.bf16.msra.mxu0 %v2224
      %3165 = vmatprep.subr.bf16.mxu0 %v2229
      %3166 = vmatpush1.bf16.msra.mxu0 %v2228
      %3167 = vmatprep.subr.bf16.mxu0 %v2233
      %3168 = vmatpush1.bf16.msra.mxu0 %v2232
      %3169 = vmatprep.subr.bf16.mxu0 %v2237
      %3170 = vmatpush1.bf16.msra.mxu0 %v2236
      %3171 = vmatprep.subr.bf16.mxu0 %v2241
      %3172 = vmatpush1.bf16.msra.mxu0 %v2240
      %3173 = vmatprep.mubr.bf16.mxu0 %v424
      %3174 = vmatmul.mubr.bf16.gmra.mrb[0].mxu0 %v423
      %v3175 = vpop.f32.mrb[0].mxu0
      %v3176 = vadd.f32 %v3133, %v3175
      %v3177 = vpop.f32.mrb[0].mxu0
      %v3178 = vadd.f32 %v3135, %v3177
      %v3179 = vpop.f32.mrb[0].mxu0
      %v3180 = vadd.f32 %v3137, %v3179
      %v3181 = vpop.f32.mrb[0].mxu0
      %v3182 = vadd.f32 %v3139, %v3181
      %3183 = vdwg.mxu0
      %3184 = vmatprep.subr.bf16.mxu0 %v2245
      %3185 = vmatpush1.bf16.msra.mxu0 %v2244
      %3186 = vmatprep.subr.bf16.mxu0 %v2249
      %3187 = vmatpush1.bf16.msra.mxu0 %v2248
      %3188 = vmatprep.subr.bf16.mxu0 %v2253
      %3189 = vmatpush1.bf16.msra.mxu0 %v2252
      %3190 = vmatprep.subr.bf16.mxu0 %v2257
      %3191 = vmatpush1.bf16.msra.mxu0 %v2256
      %3192 = vmatprep.subr.bf16.mxu0 %v2261
      %3193 = vmatpush1.bf16.msra.mxu0 %v2260
      %3194 = vmatprep.subr.bf16.mxu0 %v2265
      %3195 = vmatpush1.bf16.msra.mxu0 %v2264
      %3196 = vmatprep.subr.bf16.mxu0 %v2269
      %3197 = vmatpush1.bf16.msra.mxu0 %v2268
      %3198 = vmatprep.subr.bf16.mxu0 %v2273
      %3199 = vmatpush1.bf16.msra.mxu0 %v2272
      %3200 = vmatprep.subr.bf16.mxu0 %v2277
      %3201 = vmatpush1.bf16.msra.mxu0 %v2276
      %3202 = vmatprep.subr.bf16.mxu0 %v2281
      %3203 = vmatpush1.bf16.msra.mxu0 %v2280
      %3204 = vmatprep.subr.bf16.mxu0 %v2285
      %3205 = vmatpush1.bf16.msra.mxu0 %v2284
      %3206 = vmatprep.subr.bf16.mxu0 %v2289
      %3207 = vmatpush1.bf16.msra.mxu0 %v2288
      %3208 = vmatprep.subr.bf16.mxu0 %v2293
      %3209 = vmatpush1.bf16.msra.mxu0 %v2292
      %3210 = vmatprep.subr.bf16.mxu0 %v2297
      %3211 = vmatpush1.bf16.msra.mxu0 %v2296
      %3212 = vmatprep.subr.bf16.mxu0 %v2301
      %3213 = vmatpush1.bf16.msra.mxu0 %v2300
      %3214 = vmatprep.subr.bf16.mxu0 %v2305
      %3215 = vmatpush1.bf16.msra.mxu0 %v2304
      %3216 = vmatprep.mubr.bf16.mxu0 %v426
      %3217 = vmatmul.mubr.bf16.gmra.mrb[0].mxu0 %v425
      %v3218 = vpop.f32.mrb[0].mxu0
      %v3219 = vadd.f32 %v3176, %v3218
      %v3220 = vpop.f32.mrb[0].mxu0
      %v3221 = vadd.f32 %v3178, %v3220
      %v3222 = vpop.f32.mrb[0].mxu0
      %v3223 = vadd.f32 %v3180, %v3222
      %v3224 = vpop.f32.mrb[0].mxu0
      %v3225 = vadd.f32 %v3182, %v3224
      %3226 = vdwg.mxu0
      %3227 = vmatprep.subr.bf16.mxu0 %v2309
      %3228 = vmatpush1.bf16.msra.mxu0 %v2308
      %3229 = vmatprep.subr.bf16.mxu0 %v2313
      %3230 = vmatpush1.bf16.msra.mxu0 %v2312
      %3231 = vmatprep.subr.bf16.mxu0 %v2317
      %3232 = vmatpush1.bf16.msra.mxu0 %v2316
      %3233 = vmatprep.subr.bf16.mxu0 %v2321
      %3234 = vmatpush1.bf16.msra.mxu0 %v2320
      %3235 = vmatprep.subr.bf16.mxu0 %v2325
      %3236 = vmatpush1.bf16.msra.mxu0 %v2324
      %3237 = vmatprep.subr.bf16.mxu0 %v2329
      %3238 = vmatpush1.bf16.msra.mxu0 %v2328
      %3239 = vmatprep.subr.bf16.mxu0 %v2333
      %3240 = vmatpush1.bf16.msra.mxu0 %v2332
      %3241 = vmatprep.subr.bf16.mxu0 %v2337
      %3242 = vmatpush1.bf16.msra.mxu0 %v2336
      %3243 = vmatprep.subr.bf16.mxu0 %v2341
      %3244 = vmatpush1.bf16.msra.mxu0 %v2340
      %3245 = vmatprep.subr.bf16.mxu0 %v2345
      %3246 = vmatpush1.bf16.msra.mxu0 %v2344
      %3247 = vmatprep.subr.bf16.mxu0 %v2349
      %3248 = vmatpush1.bf16.msra.mxu0 %v2348
      %3249 = vmatprep.subr.bf16.mxu0 %v2353
      %3250 = vmatpush1.bf16.msra.mxu0 %v2352
      %3251 = vmatprep.subr.bf16.mxu0 %v2357
      %3252 = vmatpush1.bf16.msra.mxu0 %v2356
      %3253 = vmatprep.subr.bf16.mxu0 %v2361
      %3254 = vmatpush1.bf16.msra.mxu0 %v2360
      %3255 = vmatprep.subr.bf16.mxu0 %v2365
      %3256 = vmatpush1.bf16.msra.mxu0 %v2364
      %3257 = vmatprep.subr.bf16.mxu0 %v2369
      %3258 = vmatpush1.bf16.msra.mxu0 %v2368
      %3259 = vmatprep.mubr.bf16.mxu0 %v428
      %3260 = vmatmul.mubr.bf16.gmra.mrb[0].mxu0 %v427
      %v3261 = vpop.f32.mrb[0].mxu0
      %v3262 = vadd.f32 %v3219, %v3261
      %v3263 = vpop.f32.mrb[0].mxu0
      %v3264 = vadd.f32 %v3221, %v3263
      %v3265 = vpop.f32.mrb[0].mxu0
      %v3266 = vadd.f32 %v3223, %v3265
      %v3267 = vpop.f32.mrb[0].mxu0
      %v3268 = vadd.f32 %v3225, %v3267
      %3269 = vdwg.mxu0
      %v3270 = vmax.f32 %v3004, 0.0
      %v3271 = vmax.f32 %v3006, 0.0
      %v3272 = vmax.f32 %v3262, 0.0
      %v3273 = vmax.f32 %v3264, 0.0
      %v3274 = vmax.f32 %v3008, 0.0
      %v3275 = vmax.f32 %v3010, 0.0
      %v3276 = vmax.f32 %v3266, 0.0
      %v3277 = vmax.f32 %v3268, 0.0
      %v3278 = vpack.c.bf16 %v3274, %v3270
      %v3279 = vpack.c.bf16 %v3275, %v3271
      %v3280 = vpack.c.bf16 %v3276, %v3272
      %v3281 = vpack.c.bf16 %v3277, %v3273
      %v3283 = vshrl.u32 %v3278, 16
      %v3285 = vrot.slane %v3283, 7
      %v3286 = vshll.u32 %v3278, 16
      %v3288 = vor.u32 %v3285, %v3286
      %v3290 = vshrl.u32 %v3279, 16
      %v3292 = vrot.slane %v3290, 7
      %v3293 = vshll.u32 %v3279, 16
      %v3295 = vor.u32 %v3292, %v3293
      %v3297 = vshrl.u32 %v3280, 16
      %v3299 = vrot.slane %v3297, 7
      %v3300 = vshll.u32 %v3280, 16
      %v3302 = vor.u32 %v3299, %v3300
      %v3304 = vshrl.u32 %v3281, 16
      %v3306 = vrot.slane %v3304, 7
      %v3307 = vshll.u32 %v3281, 16
      %v3309 = vor.u32 %v3306, %v3307
      %v3314 = vsel %vm380, 0, %v3288
      %v3315 = vsel %vm380, 0, %v3295
      %v3316 = vsel %vm380, 0, %v3302
      %v3317 = vsel %vm380, 0, %v3309
      %v3318 = vrot.slane %v3286, 1
      %v3319 = vor.u32 %v3283, %v3318
      %v3320 = vrot.slane %v3293, 1
      %v3321 = vor.u32 %v3290, %v3320
      %v3322 = vrot.slane %v3300, 1
      %v3323 = vor.u32 %v3297, %v3322
      %v3324 = vrot.slane %v3307, 1
      %v3325 = vor.u32 %v3304, %v3324
      %v3330 = vsel %vm399, %v3319, 0
      %v3331 = vsel %vm399, %v3321, 0
      %v3332 = vsel %vm399, %v3323, 0
      %v3333 = vsel %vm399, %v3325, 0
      %3334 = vst [vmem:[#allocation2] sm:$0xff] %v3314
      %3335 = vst [vmem:[#allocation2 + $0x8] sm:$0xff] %v3315
      %3336 = vst [vmem:[#allocation2 + $0x10] sm:$0xff] %v3316
      %3337 = vst [vmem:[#allocation2 + $0x18] sm:$0xff] %v3317
      %3338 = vst [vmem:[#allocation2 + $0x20] sm:$0xff] %v3278
      %3339 = vst [vmem:[#allocation2 + $0x28] sm:$0xff] %v3279
      %3340 = vst [vmem:[#allocation2 + $0x30] sm:$0xff] %v3280
      %3341 = vst [vmem:[#allocation2 + $0x38] sm:$0xff] %v3281
      %3342 = vst [vmem:[#allocation2 + $0x40] sm:$0xff] %v3330
      %3343 = vst [vmem:[#allocation2 + $0x48] sm:$0xff] %v3331
      %3344 = vst [vmem:[#allocation2 + $0x50] sm:$0xff] %v3332
      %3345 = vst [vmem:[#allocation2 + $0x58] sm:$0xff] %v3333
      %v3346 = vld [vmem:[%s4] sm:$0xf]
      %v3347 = vld [vmem:[#allocation2] sm:$0xff]
      %v3348 = vld [vmem:[#allocation2 + $0x8] sm:$0xff]
      %v3349 = vld [vmem:[#allocation2 + $0x10] sm:$0xff]
      %v3350 = vld [vmem:[#allocation2 + $0x18] sm:$0xff]
      %v3351 = vld [vmem:[#allocation2 + $0x20] sm:$0xff]
      %v3352 = vld [vmem:[#allocation2 + $0x28] sm:$0xff]
      %v3353 = vld [vmem:[#allocation2 + $0x30] sm:$0xff]
      %v3354 = vld [vmem:[#allocation2 + $0x38] sm:$0xff]
      %v3355 = vld [vmem:[#allocation2 + $0x40] sm:$0xff]
      %v3356 = vld [vmem:[#allocation2 + $0x48] sm:$0xff]
      %v3357 = vld [vmem:[#allocation2 + $0x50] sm:$0xff]
      %v3358 = vld [vmem:[#allocation2 + $0x58] sm:$0xff]
      %v3359 = vld [vmem:[%s3] sm:$0xff]
      %v3360 = vld [vmem:[%s3 + $0x8] sm:$0xff]
      %v3361 = vld [vmem:[%s3 + $0x10] sm:$0xff]
      %v3362 = vld [vmem:[%s3 + $0x18] sm:$0xff]
      %v3363 = vld [vmem:[%s3 + $0x20] sm:$0xff]
      %v3364 = vld [vmem:[%s3 + $0x28] sm:$0xff]
      %v3365 = vld [vmem:[%s3 + $0x30] sm:$0xff]
      %v3366 = vld [vmem:[%s3 + $0x38] sm:$0xff]
      %v3367 = vld [vmem:[%s3 + $0x40] sm:$0xff]
      %v3368 = vld [vmem:[%s3 + $0x48] sm:$0xff]
      %v3369 = vld [vmem:[%s3 + $0x50] sm:$0xff]
      %v3370 = vld [vmem:[%s3 + $0x58] sm:$0xff]
      %v3371 = vld [vmem:[%s3 + $0x60] sm:$0xff]
      %v3372 = vld [vmem:[%s3 + $0x68] sm:$0xff]
      %v3373 = vld [vmem:[%s3 + $0x70] sm:$0xff]
      %v3374 = vld [vmem:[%s3 + $0x78] sm:$0xff]
      %v3375 = vld [vmem:[%s3 + $0x80] sm:$0xff]
      %v3376 = vld [vmem:[%s3 + $0x88] sm:$0xff]
      %v3377 = vld [vmem:[%s3 + $0x90] sm:$0xff]
      %v3378 = vld [vmem:[%s3 + $0x98] sm:$0xff]
      %v3379 = vld [vmem:[%s3 + $0xa0] sm:$0xff]
      %v3380 = vld [vmem:[%s3 + $0xa8] sm:$0xff]
      %v3381 = vld [vmem:[%s3 + $0xb0] sm:$0xff]
      %v3382 = vld [vmem:[%s3 + $0xb8] sm:$0xff]
      %v3383 = vld [vmem:[%s3 + $0xc0] sm:$0xff]
      %v3384 = vld [vmem:[%s3 + $0xc8] sm:$0xff]
      %v3385 = vld [vmem:[%s3 + $0xd0] sm:$0xff]
      %v3386 = vld [vmem:[%s3 + $0xd8] sm:$0xff]
      %v3387 = vld [vmem:[%s3 + $0xe0] sm:$0xff]
      %v3388 = vld [vmem:[%s3 + $0xe8] sm:$0xff]
      %v3389 = vld [vmem:[%s3 + $0xf0] sm:$0xff]
      %v3390 = vld [vmem:[%s3 + $0xf8] sm:$0xff]
      %v3391 = vld [vmem:[%s3 + $0x100] sm:$0xff]
      %v3392 = vld [vmem:[%s3 + $0x108] sm:$0xff]
      %v3393 = vld [vmem:[%s3 + $0x110] sm:$0xff]
      %v3394 = vld [vmem:[%s3 + $0x118] sm:$0xff]
      %v3395 = vld [vmem:[%s3 + $0x120] sm:$0xff]
      %v3396 = vld [vmem:[%s3 + $0x128] sm:$0xff]
      %v3397 = vld [vmem:[%s3 + $0x130] sm:$0xff]
      %v3398 = vld [vmem:[%s3 + $0x138] sm:$0xff]
      %v3399 = vld [vmem:[%s3 + $0x140] sm:$0xff]
      %v3400 = vld [vmem:[%s3 + $0x148] sm:$0xff]
      %v3401 = vld [vmem:[%s3 + $0x150] sm:$0xff]
      %v3402 = vld [vmem:[%s3 + $0x158] sm:$0xff]
      %v3403 = vld [vmem:[%s3 + $0x160] sm:$0xff]
      %v3404 = vld [vmem:[%s3 + $0x168] sm:$0xff]
      %v3405 = vld [vmem:[%s3 + $0x170] sm:$0xff]
      %v3406 = vld [vmem:[%s3 + $0x178] sm:$0xff]
      %v3407 = vld [vmem:[%s3 + $0x180] sm:$0xff]
      %v3408 = vld [vmem:[%s3 + $0x188] sm:$0xff]
      %v3409 = vld [vmem:[%s3 + $0x190] sm:$0xff]
      %v3410 = vld [vmem:[%s3 + $0x198] sm:$0xff]
      %v3411 = vld [vmem:[%s3 + $0x1a0] sm:$0xff]
      %v3412 = vld [vmem:[%s3 + $0x1a8] sm:$0xff]
      %v3413 = vld [vmem:[%s3 + $0x1b0] sm:$0xff]
      %v3414 = vld [vmem:[%s3 + $0x1b8] sm:$0xff]
      %v3415 = vld [vmem:[%s3 + $0x1c0] sm:$0xff]
      %v3416 = vld [vmem:[%s3 + $0x1c8] sm:$0xff]
      %v3417 = vld [vmem:[%s3 + $0x1d0] sm:$0xff]
      %v3418 = vld [vmem:[%s3 + $0x1d8] sm:$0xff]
      %v3419 = vld [vmem:[%s3 + $0x1e0] sm:$0xff]
      %v3420 = vld [vmem:[%s3 + $0x1e8] sm:$0xff]
      %v3421 = vld [vmem:[%s3 + $0x1f0] sm:$0xff]
      %v3422 = vld [vmem:[%s3 + $0x1f8] sm:$0xff]
      %v3423 = vld [vmem:[%s3 + $0x200] sm:$0xff]
      %v3424 = vld [vmem:[%s3 + $0x208] sm:$0xff]
      %v3425 = vld [vmem:[%s3 + $0x210] sm:$0xff]
      %v3426 = vld [vmem:[%s3 + $0x218] sm:$0xff]
      %v3427 = vld [vmem:[%s3 + $0x220] sm:$0xff]
      %v3428 = vld [vmem:[%s3 + $0x228] sm:$0xff]
      %v3429 = vld [vmem:[%s3 + $0x230] sm:$0xff]
      %v3430 = vld [vmem:[%s3 + $0x238] sm:$0xff]
      %v3431 = vld [vmem:[%s3 + $0x240] sm:$0xff]
      %v3432 = vld [vmem:[%s3 + $0x248] sm:$0xff]
      %v3433 = vld [vmem:[%s3 + $0x250] sm:$0xff]
      %v3434 = vld [vmem:[%s3 + $0x258] sm:$0xff]
      %v3435 = vld [vmem:[%s3 + $0x260] sm:$0xff]
      %v3436 = vld [vmem:[%s3 + $0x268] sm:$0xff]
      %v3437 = vld [vmem:[%s3 + $0x270] sm:$0xff]
      %v3438 = vld [vmem:[%s3 + $0x278] sm:$0xff]
      %v3439 = vld [vmem:[%s3 + $0x280] sm:$0xff]
      %v3440 = vld [vmem:[%s3 + $0x288] sm:$0xff]
      %v3441 = vld [vmem:[%s3 + $0x290] sm:$0xff]
      %v3442 = vld [vmem:[%s3 + $0x298] sm:$0xff]
      %v3443 = vld [vmem:[%s3 + $0x2a0] sm:$0xff]
      %v3444 = vld [vmem:[%s3 + $0x2a8] sm:$0xff]
      %v3445 = vld [vmem:[%s3 + $0x2b0] sm:$0xff]
      %v3446 = vld [vmem:[%s3 + $0x2b8] sm:$0xff]
      %v3447 = vld [vmem:[%s3 + $0x2c0] sm:$0xff]
      %v3448 = vld [vmem:[%s3 + $0x2c8] sm:$0xff]
      %v3449 = vld [vmem:[%s3 + $0x2d0] sm:$0xff]
      %v3450 = vld [vmem:[%s3 + $0x2d8] sm:$0xff]
      %v3451 = vld [vmem:[%s3 + $0x2e0] sm:$0xff]
      %v3452 = vld [vmem:[%s3 + $0x2e8] sm:$0xff]
      %v3453 = vld [vmem:[%s3 + $0x2f0] sm:$0xff]
      %v3454 = vld [vmem:[%s3 + $0x2f8] sm:$0xff]
      %v3455 = vld [vmem:[%s3 + $0x300] sm:$0xff]
      %v3456 = vld [vmem:[%s3 + $0x308] sm:$0xff]
      %v3457 = vld [vmem:[%s3 + $0x310] sm:$0xff]
      %v3458 = vld [vmem:[%s3 + $0x318] sm:$0xff]
      %v3459 = vld [vmem:[%s3 + $0x320] sm:$0xff]
      %v3460 = vld [vmem:[%s3 + $0x328] sm:$0xff]
      %v3461 = vld [vmem:[%s3 + $0x330] sm:$0xff]
      %v3462 = vld [vmem:[%s3 + $0x338] sm:$0xff]
      %v3463 = vld [vmem:[%s3 + $0x340] sm:$0xff]
      %v3464 = vld [vmem:[%s3 + $0x348] sm:$0xff]
      %v3465 = vld [vmem:[%s3 + $0x350] sm:$0xff]
      %v3466 = vld [vmem:[%s3 + $0x358] sm:$0xff]
      %v3467 = vld [vmem:[%s3 + $0x360] sm:$0xff]
      %v3468 = vld [vmem:[%s3 + $0x368] sm:$0xff]
      %v3469 = vld [vmem:[%s3 + $0x370] sm:$0xff]
      %v3470 = vld [vmem:[%s3 + $0x378] sm:$0xff]
      %v3471 = vld [vmem:[%s3 + $0x380] sm:$0xff]
      %v3472 = vld [vmem:[%s3 + $0x388] sm:$0xff]
      %v3473 = vld [vmem:[%s3 + $0x390] sm:$0xff]
      %v3474 = vld [vmem:[%s3 + $0x398] sm:$0xff]
      %v3475 = vld [vmem:[%s3 + $0x3a0] sm:$0xff]
      %v3476 = vld [vmem:[%s3 + $0x3a8] sm:$0xff]
      %v3477 = vld [vmem:[%s3 + $0x3b0] sm:$0xff]
      %v3478 = vld [vmem:[%s3 + $0x3b8] sm:$0xff]
      %v3479 = vld [vmem:[%s3 + $0x3c0] sm:$0xff]
      %v3480 = vld [vmem:[%s3 + $0x3c8] sm:$0xff]
      %v3481 = vld [vmem:[%s3 + $0x3d0] sm:$0xff]
      %v3482 = vld [vmem:[%s3 + $0x3d8] sm:$0xff]
      %v3483 = vld [vmem:[%s3 + $0x3e0] sm:$0xff]
      %v3484 = vld [vmem:[%s3 + $0x3e8] sm:$0xff]
      %v3485 = vld [vmem:[%s3 + $0x3f0] sm:$0xff]
      %v3486 = vld [vmem:[%s3 + $0x3f8] sm:$0xff]
      %v3487 = vld [vmem:[%s3 + $0x400] sm:$0xff]
      %v3488 = vld [vmem:[%s3 + $0x408] sm:$0xff]
      %v3489 = vld [vmem:[%s3 + $0x410] sm:$0xff]
      %v3490 = vld [vmem:[%s3 + $0x418] sm:$0xff]
      %v3491 = vld [vmem:[%s3 + $0x420] sm:$0xff]
      %v3492 = vld [vmem:[%s3 + $0x428] sm:$0xff]
      %v3493 = vld [vmem:[%s3 + $0x430] sm:$0xff]
      %v3494 = vld [vmem:[%s3 + $0x438] sm:$0xff]
      %v3495 = vld [vmem:[%s3 + $0x440] sm:$0xff]
      %v3496 = vld [vmem:[%s3 + $0x448] sm:$0xff]
      %v3497 = vld [vmem:[%s3 + $0x450] sm:$0xff]
      %v3498 = vld [vmem:[%s3 + $0x458] sm:$0xff]
      %v3499 = vld [vmem:[%s3 + $0x460] sm:$0xff]
      %v3500 = vld [vmem:[%s3 + $0x468] sm:$0xff]
      %v3501 = vld [vmem:[%s3 + $0x470] sm:$0xff]
      %v3502 = vld [vmem:[%s3 + $0x478] sm:$0xff]
      %v3503 = vld [vmem:[%s3 + $0x480] sm:$0xff]
      %v3504 = vld [vmem:[%s3 + $0x488] sm:$0xff]
      %v3505 = vld [vmem:[%s3 + $0x490] sm:$0xff]
      %v3506 = vld [vmem:[%s3 + $0x498] sm:$0xff]
      %v3507 = vld [vmem:[%s3 + $0x4a0] sm:$0xff]
      %v3508 = vld [vmem:[%s3 + $0x4a8] sm:$0xff]
      %v3509 = vld [vmem:[%s3 + $0x4b0] sm:$0xff]
      %v3510 = vld [vmem:[%s3 + $0x4b8] sm:$0xff]
      %v3511 = vld [vmem:[%s3 + $0x4c0] sm:$0xff]
      %v3512 = vld [vmem:[%s3 + $0x4c8] sm:$0xff]
      %v3513 = vld [vmem:[%s3 + $0x4d0] sm:$0xff]
      %v3514 = vld [vmem:[%s3 + $0x4d8] sm:$0xff]
      %v3515 = vld [vmem:[%s3 + $0x4e0] sm:$0xff]
      %v3516 = vld [vmem:[%s3 + $0x4e8] sm:$0xff]
      %v3517 = vld [vmem:[%s3 + $0x4f0] sm:$0xff]
      %v3518 = vld [vmem:[%s3 + $0x4f8] sm:$0xff]
      %v3519 = vld [vmem:[%s3 + $0x500] sm:$0xff]
      %v3520 = vld [vmem:[%s3 + $0x508] sm:$0xff]
      %v3521 = vld [vmem:[%s3 + $0x510] sm:$0xff]
      %v3522 = vld [vmem:[%s3 + $0x518] sm:$0xff]
      %v3523 = vld [vmem:[%s3 + $0x520] sm:$0xff]
      %v3524 = vld [vmem:[%s3 + $0x528] sm:$0xff]
      %v3525 = vld [vmem:[%s3 + $0x530] sm:$0xff]
      %v3526 = vld [vmem:[%s3 + $0x538] sm:$0xff]
      %v3527 = vld [vmem:[%s3 + $0x540] sm:$0xff]
      %v3528 = vld [vmem:[%s3 + $0x548] sm:$0xff]
      %v3529 = vld [vmem:[%s3 + $0x550] sm:$0xff]
      %v3530 = vld [vmem:[%s3 + $0x558] sm:$0xff]
      %v3531 = vld [vmem:[%s3 + $0x560] sm:$0xff]
      %v3532 = vld [vmem:[%s3 + $0x568] sm:$0xff]
      %v3533 = vld [vmem:[%s3 + $0x570] sm:$0xff]
      %v3534 = vld [vmem:[%s3 + $0x578] sm:$0xff]
      %v3535 = vld [vmem:[%s3 + $0x580] sm:$0xff]
      %v3536 = vld [vmem:[%s3 + $0x588] sm:$0xff]
      %v3537 = vld [vmem:[%s3 + $0x590] sm:$0xff]
      %v3538 = vld [vmem:[%s3 + $0x598] sm:$0xff]
      %v3539 = vld [vmem:[%s3 + $0x5a0] sm:$0xff]
      %v3540 = vld [vmem:[%s3 + $0x5a8] sm:$0xff]
      %v3541 = vld [vmem:[%s3 + $0x5b0] sm:$0xff]
      %v3542 = vld [vmem:[%s3 + $0x5b8] sm:$0xff]
      %v3543 = vld [vmem:[%s3 + $0x5c0] sm:$0xff]
      %v3544 = vld [vmem:[%s3 + $0x5c8] sm:$0xff]
      %v3545 = vld [vmem:[%s3 + $0x5d0] sm:$0xff]
      %v3546 = vld [vmem:[%s3 + $0x5d8] sm:$0xff]
      %v3547 = vld [vmem:[%s3 + $0x5e0] sm:$0xff]
      %v3548 = vld [vmem:[%s3 + $0x5e8] sm:$0xff]
      %v3549 = vld [vmem:[%s3 + $0x5f0] sm:$0xff]
      %v3550 = vld [vmem:[%s3 + $0x5f8] sm:$0xff]
      %v3551 = vld [vmem:[%s3 + $0x600] sm:$0xff]
      %v3552 = vld [vmem:[%s3 + $0x608] sm:$0xff]
      %v3553 = vld [vmem:[%s3 + $0x610] sm:$0xff]
      %v3554 = vld [vmem:[%s3 + $0x618] sm:$0xff]
      %v3555 = vld [vmem:[%s3 + $0x620] sm:$0xff]
      %v3556 = vld [vmem:[%s3 + $0x628] sm:$0xff]
      %v3557 = vld [vmem:[%s3 + $0x630] sm:$0xff]
      %v3558 = vld [vmem:[%s3 + $0x638] sm:$0xff]
      %v3559 = vld [vmem:[%s3 + $0x640] sm:$0xff]
      %v3560 = vld [vmem:[%s3 + $0x648] sm:$0xff]
      %v3561 = vld [vmem:[%s3 + $0x650] sm:$0xff]
      %v3562 = vld [vmem:[%s3 + $0x658] sm:$0xff]
      %v3563 = vld [vmem:[%s3 + $0x660] sm:$0xff]
      %v3564 = vld [vmem:[%s3 + $0x668] sm:$0xff]
      %v3565 = vld [vmem:[%s3 + $0x670] sm:$0xff]
      %v3566 = vld [vmem:[%s3 + $0x678] sm:$0xff]
      %v3567 = vld [vmem:[%s3 + $0x680] sm:$0xff]
      %v3568 = vld [vmem:[%s3 + $0x688] sm:$0xff]
      %v3569 = vld [vmem:[%s3 + $0x690] sm:$0xff]
      %v3570 = vld [vmem:[%s3 + $0x698] sm:$0xff]
      %v3571 = vld [vmem:[%s3 + $0x6a0] sm:$0xff]
      %v3572 = vld [vmem:[%s3 + $0x6a8] sm:$0xff]
      %v3573 = vld [vmem:[%s3 + $0x6b0] sm:$0xff]
      %v3574 = vld [vmem:[%s3 + $0x6b8] sm:$0xff]
      %v3575 = vld [vmem:[%s3 + $0x6c0] sm:$0xff]
      %v3576 = vld [vmem:[%s3 + $0x6c8] sm:$0xff]
      %v3577 = vld [vmem:[%s3 + $0x6d0] sm:$0xff]
      %v3578 = vld [vmem:[%s3 + $0x6d8] sm:$0xff]
      %v3579 = vld [vmem:[%s3 + $0x6e0] sm:$0xff]
      %v3580 = vld [vmem:[%s3 + $0x6e8] sm:$0xff]
      %v3581 = vld [vmem:[%s3 + $0x6f0] sm:$0xff]
      %v3582 = vld [vmem:[%s3 + $0x6f8] sm:$0xff]
      %v3583 = vld [vmem:[%s3 + $0x700] sm:$0xff]
      %v3584 = vld [vmem:[%s3 + $0x708] sm:$0xff]
      %v3585 = vld [vmem:[%s3 + $0x710] sm:$0xff]
      %v3586 = vld [vmem:[%s3 + $0x718] sm:$0xff]
      %v3587 = vld [vmem:[%s3 + $0x720] sm:$0xff]
      %v3588 = vld [vmem:[%s3 + $0x728] sm:$0xff]
      %v3589 = vld [vmem:[%s3 + $0x730] sm:$0xff]
      %v3590 = vld [vmem:[%s3 + $0x738] sm:$0xff]
      %v3591 = vld [vmem:[%s3 + $0x740] sm:$0xff]
      %v3592 = vld [vmem:[%s3 + $0x748] sm:$0xff]
      %v3593 = vld [vmem:[%s3 + $0x750] sm:$0xff]
      %v3594 = vld [vmem:[%s3 + $0x758] sm:$0xff]
      %v3595 = vld [vmem:[%s3 + $0x760] sm:$0xff]
      %v3596 = vld [vmem:[%s3 + $0x768] sm:$0xff]
      %v3597 = vld [vmem:[%s3 + $0x770] sm:$0xff]
      %v3598 = vld [vmem:[%s3 + $0x778] sm:$0xff]
      %v3599 = vld [vmem:[%s3 + $0x780] sm:$0xff]
      %v3600 = vld [vmem:[%s3 + $0x788] sm:$0xff]
      %v3601 = vld [vmem:[%s3 + $0x790] sm:$0xff]
      %v3602 = vld [vmem:[%s3 + $0x798] sm:$0xff]
      %v3603 = vld [vmem:[%s3 + $0x7a0] sm:$0xff]
      %v3604 = vld [vmem:[%s3 + $0x7a8] sm:$0xff]
      %v3605 = vld [vmem:[%s3 + $0x7b0] sm:$0xff]
      %v3606 = vld [vmem:[%s3 + $0x7b8] sm:$0xff]
      %v3607 = vld [vmem:[%s3 + $0x7c0] sm:$0xff]
      %v3608 = vld [vmem:[%s3 + $0x7c8] sm:$0xff]
      %v3609 = vld [vmem:[%s3 + $0x7d0] sm:$0xff]
      %v3610 = vld [vmem:[%s3 + $0x7d8] sm:$0xff]
      %v3611 = vld [vmem:[%s3 + $0x7e0] sm:$0xff]
      %v3612 = vld [vmem:[%s3 + $0x7e8] sm:$0xff]
      %v3613 = vld [vmem:[%s3 + $0x7f0] sm:$0xff]
      %v3614 = vld [vmem:[%s3 + $0x7f8] sm:$0xff]
      %v3615 = vld [vmem:[%s3 + $0x800] sm:$0xff]
      %v3616 = vld [vmem:[%s3 + $0x808] sm:$0xff]
      %v3617 = vld [vmem:[%s3 + $0x810] sm:$0xff]
      %v3618 = vld [vmem:[%s3 + $0x818] sm:$0xff]
      %v3619 = vld [vmem:[%s3 + $0x820] sm:$0xff]
      %v3620 = vld [vmem:[%s3 + $0x828] sm:$0xff]
      %v3621 = vld [vmem:[%s3 + $0x830] sm:$0xff]
      %v3622 = vld [vmem:[%s3 + $0x838] sm:$0xff]
      %v3623 = vld [vmem:[%s3 + $0x840] sm:$0xff]
      %v3624 = vld [vmem:[%s3 + $0x848] sm:$0xff]
      %v3625 = vld [vmem:[%s3 + $0x850] sm:$0xff]
      %v3626 = vld [vmem:[%s3 + $0x858] sm:$0xff]
      %v3627 = vld [vmem:[%s3 + $0x860] sm:$0xff]
      %v3628 = vld [vmem:[%s3 + $0x868] sm:$0xff]
      %v3629 = vld [vmem:[%s3 + $0x870] sm:$0xff]
      %v3630 = vld [vmem:[%s3 + $0x878] sm:$0xff]
      %v3631 = vld [vmem:[%s3 + $0x880] sm:$0xff]
      %v3632 = vld [vmem:[%s3 + $0x888] sm:$0xff]
      %v3633 = vld [vmem:[%s3 + $0x890] sm:$0xff]
      %v3634 = vld [vmem:[%s3 + $0x898] sm:$0xff]
      %v3635 = vld [vmem:[%s3 + $0x8a0] sm:$0xff]
      %v3636 = vld [vmem:[%s3 + $0x8a8] sm:$0xff]
      %v3637 = vld [vmem:[%s3 + $0x8b0] sm:$0xff]
      %v3638 = vld [vmem:[%s3 + $0x8b8] sm:$0xff]
      %v3639 = vld [vmem:[%s3 + $0x8c0] sm:$0xff]
      %v3640 = vld [vmem:[%s3 + $0x8c8] sm:$0xff]
      %v3641 = vld [vmem:[%s3 + $0x8d0] sm:$0xff]
      %v3642 = vld [vmem:[%s3 + $0x8d8] sm:$0xff]
      %v3643 = vld [vmem:[%s3 + $0x8e0] sm:$0xff]
      %v3644 = vld [vmem:[%s3 + $0x8e8] sm:$0xff]
      %v3645 = vld [vmem:[%s3 + $0x8f0] sm:$0xff]
      %v3646 = vld [vmem:[%s3 + $0x8f8] sm:$0xff]
      %v3647 = vld [vmem:[%s3 + $0x900] sm:$0xff]
      %v3648 = vld [vmem:[%s3 + $0x908] sm:$0xff]
      %v3649 = vld [vmem:[%s3 + $0x910] sm:$0xff]
      %v3650 = vld [vmem:[%s3 + $0x918] sm:$0xff]
      %v3651 = vld [vmem:[%s3 + $0x920] sm:$0xff]
      %v3652 = vld [vmem:[%s3 + $0x928] sm:$0xff]
      %v3653 = vld [vmem:[%s3 + $0x930] sm:$0xff]
      %v3654 = vld [vmem:[%s3 + $0x938] sm:$0xff]
      %v3655 = vld [vmem:[%s3 + $0x940] sm:$0xff]
      %v3656 = vld [vmem:[%s3 + $0x948] sm:$0xff]
      %v3657 = vld [vmem:[%s3 + $0x950] sm:$0xff]
      %v3658 = vld [vmem:[%s3 + $0x958] sm:$0xff]
      %v3659 = vld [vmem:[%s3 + $0x960] sm:$0xff]
      %v3660 = vld [vmem:[%s3 + $0x968] sm:$0xff]
      %v3661 = vld [vmem:[%s3 + $0x970] sm:$0xff]
      %v3662 = vld [vmem:[%s3 + $0x978] sm:$0xff]
      %v3663 = vld [vmem:[%s3 + $0x980] sm:$0xff]
      %v3664 = vld [vmem:[%s3 + $0x988] sm:$0xff]
      %v3665 = vld [vmem:[%s3 + $0x990] sm:$0xff]
      %v3666 = vld [vmem:[%s3 + $0x998] sm:$0xff]
      %v3667 = vld [vmem:[%s3 + $0x9a0] sm:$0xff]
      %v3668 = vld [vmem:[%s3 + $0x9a8] sm:$0xff]
      %v3669 = vld [vmem:[%s3 + $0x9b0] sm:$0xff]
      %v3670 = vld [vmem:[%s3 + $0x9b8] sm:$0xff]
      %v3671 = vld [vmem:[%s3 + $0x9c0] sm:$0xff]
      %v3672 = vld [vmem:[%s3 + $0x9c8] sm:$0xff]
      %v3673 = vld [vmem:[%s3 + $0x9d0] sm:$0xff]
      %v3674 = vld [vmem:[%s3 + $0x9d8] sm:$0xff]
      %v3675 = vld [vmem:[%s3 + $0x9e0] sm:$0xff]
      %v3676 = vld [vmem:[%s3 + $0x9e8] sm:$0xff]
      %v3677 = vld [vmem:[%s3 + $0x9f0] sm:$0xff]
      %v3678 = vld [vmem:[%s3 + $0x9f8] sm:$0xff]
      %v3679 = vld [vmem:[%s3 + $0xa00] sm:$0xff]
      %v3680 = vld [vmem:[%s3 + $0xa08] sm:$0xff]
      %v3681 = vld [vmem:[%s3 + $0xa10] sm:$0xff]
      %v3682 = vld [vmem:[%s3 + $0xa18] sm:$0xff]
      %v3683 = vld [vmem:[%s3 + $0xa20] sm:$0xff]
      %v3684 = vld [vmem:[%s3 + $0xa28] sm:$0xff]
      %v3685 = vld [vmem:[%s3 + $0xa30] sm:$0xff]
      %v3686 = vld [vmem:[%s3 + $0xa38] sm:$0xff]
      %v3687 = vld [vmem:[%s3 + $0xa40] sm:$0xff]
      %v3688 = vld [vmem:[%s3 + $0xa48] sm:$0xff]
      %v3689 = vld [vmem:[%s3 + $0xa50] sm:$0xff]
      %v3690 = vld [vmem:[%s3 + $0xa58] sm:$0xff]
      %v3691 = vld [vmem:[%s3 + $0xa60] sm:$0xff]
      %v3692 = vld [vmem:[%s3 + $0xa68] sm:$0xff]
      %v3693 = vld [vmem:[%s3 + $0xa70] sm:$0xff]
      %v3694 = vld [vmem:[%s3 + $0xa78] sm:$0xff]
      %v3695 = vld [vmem:[%s3 + $0xa80] sm:$0xff]
      %v3696 = vld [vmem:[%s3 + $0xa88] sm:$0xff]
      %v3697 = vld [vmem:[%s3 + $0xa90] sm:$0xff]
      %v3698 = vld [vmem:[%s3 + $0xa98] sm:$0xff]
      %v3699 = vld [vmem:[%s3 + $0xaa0] sm:$0xff]
      %v3700 = vld [vmem:[%s3 + $0xaa8] sm:$0xff]
      %v3701 = vld [vmem:[%s3 + $0xab0] sm:$0xff]
      %v3702 = vld [vmem:[%s3 + $0xab8] sm:$0xff]
      %v3703 = vld [vmem:[%s3 + $0xac0] sm:$0xff]
      %v3704 = vld [vmem:[%s3 + $0xac8] sm:$0xff]
      %v3705 = vld [vmem:[%s3 + $0xad0] sm:$0xff]
      %v3706 = vld [vmem:[%s3 + $0xad8] sm:$0xff]
      %v3707 = vld [vmem:[%s3 + $0xae0] sm:$0xff]
      %v3708 = vld [vmem:[%s3 + $0xae8] sm:$0xff]
      %v3709 = vld [vmem:[%s3 + $0xaf0] sm:$0xff]
      %v3710 = vld [vmem:[%s3 + $0xaf8] sm:$0xff]
      %v3711 = vld [vmem:[%s3 + $0xb00] sm:$0xff]
      %v3712 = vld [vmem:[%s3 + $0xb08] sm:$0xff]
      %v3713 = vld [vmem:[%s3 + $0xb10] sm:$0xff]
      %v3714 = vld [vmem:[%s3 + $0xb18] sm:$0xff]
      %v3715 = vld [vmem:[%s3 + $0xb20] sm:$0xff]
      %v3716 = vld [vmem:[%s3 + $0xb28] sm:$0xff]
      %v3717 = vld [vmem:[%s3 + $0xb30] sm:$0xff]
      %v3718 = vld [vmem:[%s3 + $0xb38] sm:$0xff]
      %v3719 = vld [vmem:[%s3 + $0xb40] sm:$0xff]
      %v3720 = vld [vmem:[%s3 + $0xb48] sm:$0xff]
      %v3721 = vld [vmem:[%s3 + $0xb50] sm:$0xff]
      %v3722 = vld [vmem:[%s3 + $0xb58] sm:$0xff]
      %v3723 = vld [vmem:[%s3 + $0xb60] sm:$0xff]
      %v3724 = vld [vmem:[%s3 + $0xb68] sm:$0xff]
      %v3725 = vld [vmem:[%s3 + $0xb70] sm:$0xff]
      %v3726 = vld [vmem:[%s3 + $0xb78] sm:$0xff]
      %v3727 = vld [vmem:[%s3 + $0xb80] sm:$0xff]
      %v3728 = vld [vmem:[%s3 + $0xb88] sm:$0xff]
      %v3729 = vld [vmem:[%s3 + $0xb90] sm:$0xff]
      %v3730 = vld [vmem:[%s3 + $0xb98] sm:$0xff]
      %v3731 = vld [vmem:[%s3 + $0xba0] sm:$0xff]
      %v3732 = vld [vmem:[%s3 + $0xba8] sm:$0xff]
      %v3733 = vld [vmem:[%s3 + $0xbb0] sm:$0xff]
      %v3734 = vld [vmem:[%s3 + $0xbb8] sm:$0xff]
      %v3735 = vld [vmem:[%s3 + $0xbc0] sm:$0xff]
      %v3736 = vld [vmem:[%s3 + $0xbc8] sm:$0xff]
      %v3737 = vld [vmem:[%s3 + $0xbd0] sm:$0xff]
      %v3738 = vld [vmem:[%s3 + $0xbd8] sm:$0xff]
      %v3739 = vld [vmem:[%s3 + $0xbe0] sm:$0xff]
      %v3740 = vld [vmem:[%s3 + $0xbe8] sm:$0xff]
      %v3741 = vld [vmem:[%s3 + $0xbf0] sm:$0xff]
      %v3742 = vld [vmem:[%s3 + $0xbf8] sm:$0xff]
      %v3744 = vlaneseq
      %v3745 = vshrl.u32 %v3744, 7
      %v3746 = vsub.s32 0, %v3745
      %v3747 = vrot.slane %v3346, %v3746
      %v3748 = vlaneseq
      %v3749 = vshrl.u32 %v3748, 7
      %v3750 = vsub.s32 1, %v3749
      %v3751 = vrot.slane %v3346, %v3750
      %v3752 = vlaneseq
      %v3753 = vshrl.u32 %v3752, 7
      %v3754 = vsub.s32 2, %v3753
      %v3755 = vrot.slane %v3346, %v3754
      %v3756 = vlaneseq
      %v3757 = vshrl.u32 %v3756, 7
      %v3758 = vsub.s32 3, %v3757
      %v3759 = vrot.slane %v3346, %v3758
      %v4148 = vunpack.c.l.b16 %v3359
      %v4149 = vunpack.c.h.b16 %v3359
      %v4150 = vunpack.c.l.b16 %v3360
      %v4151 = vunpack.c.h.b16 %v3360
      %v4152 = vunpack.c.l.b16 %v3361
      %v4153 = vunpack.c.h.b16 %v3361
      %v4154 = vunpack.c.l.b16 %v3362
      %v4155 = vunpack.c.h.b16 %v3362
      %v4156 = vunpack.c.l.b16 %v3363
      %v4157 = vunpack.c.h.b16 %v3363
      %v4158 = vunpack.c.l.b16 %v3364
      %v4159 = vunpack.c.h.b16 %v3364
      %v4160 = vunpack.c.l.b16 %v3365
      %v4161 = vunpack.c.h.b16 %v3365
      %v4162 = vunpack.c.l.b16 %v3366
      %v4163 = vunpack.c.h.b16 %v3366
      %v4164 = vunpack.c.l.b16 %v3367
      %v4165 = vunpack.c.h.b16 %v3367
      %v4166 = vunpack.c.l.b16 %v3368
      %v4167 = vunpack.c.h.b16 %v3368
      %v4168 = vunpack.c.l.b16 %v3369
      %v4169 = vunpack.c.h.b16 %v3369
      %v4170 = vunpack.c.l.b16 %v3370
      %v4171 = vunpack.c.h.b16 %v3370
      %v4172 = vunpack.c.l.b16 %v3371
      %v4173 = vunpack.c.h.b16 %v3371
      %v4174 = vunpack.c.l.b16 %v3372
      %v4175 = vunpack.c.h.b16 %v3372
      %v4176 = vunpack.c.l.b16 %v3373
      %v4177 = vunpack.c.h.b16 %v3373
      %v4178 = vunpack.c.l.b16 %v3374
      %v4179 = vunpack.c.h.b16 %v3374
      %v4180 = vunpack.c.l.b16 %v3375
      %v4181 = vunpack.c.h.b16 %v3375
      %v4182 = vunpack.c.l.b16 %v3376
      %v4183 = vunpack.c.h.b16 %v3376
      %v4184 = vunpack.c.l.b16 %v3377
      %v4185 = vunpack.c.h.b16 %v3377
      %v4186 = vunpack.c.l.b16 %v3378
      %v4187 = vunpack.c.h.b16 %v3378
      %v4188 = vunpack.c.l.b16 %v3379
      %v4189 = vunpack.c.h.b16 %v3379
      %v4190 = vunpack.c.l.b16 %v3380
      %v4191 = vunpack.c.h.b16 %v3380
      %v4192 = vunpack.c.l.b16 %v3381
      %v4193 = vunpack.c.h.b16 %v3381
      %v4194 = vunpack.c.l.b16 %v3382
      %v4195 = vunpack.c.h.b16 %v3382
      %v4196 = vunpack.c.l.b16 %v3383
      %v4197 = vunpack.c.h.b16 %v3383
      %v4198 = vunpack.c.l.b16 %v3384
      %v4199 = vunpack.c.h.b16 %v3384
      %v4200 = vunpack.c.l.b16 %v3385
      %v4201 = vunpack.c.h.b16 %v3385
      %v4202 = vunpack.c.l.b16 %v3386
      %v4203 = vunpack.c.h.b16 %v3386
      %v4204 = vunpack.c.l.b16 %v3387
      %v4205 = vunpack.c.h.b16 %v3387
      %v4206 = vunpack.c.l.b16 %v3388
      %v4207 = vunpack.c.h.b16 %v3388
      %v4208 = vunpack.c.l.b16 %v3389
      %v4209 = vunpack.c.h.b16 %v3389
      %v4210 = vunpack.c.l.b16 %v3390
      %v4211 = vunpack.c.h.b16 %v3390
      %v4212 = vunpack.c.l.b16 %v3391
      %v4213 = vunpack.c.h.b16 %v3391
      %v4214 = vunpack.c.l.b16 %v3392
      %v4215 = vunpack.c.h.b16 %v3392
      %v4216 = vunpack.c.l.b16 %v3393
      %v4217 = vunpack.c.h.b16 %v3393
      %v4218 = vunpack.c.l.b16 %v3394
      %v4219 = vunpack.c.h.b16 %v3394
      %v4220 = vunpack.c.l.b16 %v3395
      %v4221 = vunpack.c.h.b16 %v3395
      %v4222 = vunpack.c.l.b16 %v3396
      %v4223 = vunpack.c.h.b16 %v3396
      %v4224 = vunpack.c.l.b16 %v3397
      %v4225 = vunpack.c.h.b16 %v3397
      %v4226 = vunpack.c.l.b16 %v3398
      %v4227 = vunpack.c.h.b16 %v3398
      %v4228 = vunpack.c.l.b16 %v3399
      %v4229 = vunpack.c.h.b16 %v3399
      %v4230 = vunpack.c.l.b16 %v3400
      %v4231 = vunpack.c.h.b16 %v3400
      %v4232 = vunpack.c.l.b16 %v3401
      %v4233 = vunpack.c.h.b16 %v3401
      %v4234 = vunpack.c.l.b16 %v3402
      %v4235 = vunpack.c.h.b16 %v3402
      %v4236 = vunpack.c.l.b16 %v3403
      %v4237 = vunpack.c.h.b16 %v3403
      %v4238 = vunpack.c.l.b16 %v3404
      %v4239 = vunpack.c.h.b16 %v3404
      %v4240 = vunpack.c.l.b16 %v3405
      %v4241 = vunpack.c.h.b16 %v3405
      %v4242 = vunpack.c.l.b16 %v3406
      %v4243 = vunpack.c.h.b16 %v3406
      %v4244 = vunpack.c.l.b16 %v3407
      %v4245 = vunpack.c.h.b16 %v3407
      %v4246 = vunpack.c.l.b16 %v3408
      %v4247 = vunpack.c.h.b16 %v3408
      %v4248 = vunpack.c.l.b16 %v3409
      %v4249 = vunpack.c.h.b16 %v3409
      %v4250 = vunpack.c.l.b16 %v3410
      %v4251 = vunpack.c.h.b16 %v3410
      %v4252 = vunpack.c.l.b16 %v3411
      %v4253 = vunpack.c.h.b16 %v3411
      %v4254 = vunpack.c.l.b16 %v3412
      %v4255 = vunpack.c.h.b16 %v3412
      %v4256 = vunpack.c.l.b16 %v3413
      %v4257 = vunpack.c.h.b16 %v3413
      %v4258 = vunpack.c.l.b16 %v3414
      %v4259 = vunpack.c.h.b16 %v3414
      %v4260 = vunpack.c.l.b16 %v3415
      %v4261 = vunpack.c.h.b16 %v3415
      %v4262 = vunpack.c.l.b16 %v3416
      %v4263 = vunpack.c.h.b16 %v3416
      %v4264 = vunpack.c.l.b16 %v3417
      %v4265 = vunpack.c.h.b16 %v3417
      %v4266 = vunpack.c.l.b16 %v3418
      %v4267 = vunpack.c.h.b16 %v3418
      %v4268 = vunpack.c.l.b16 %v3419
      %v4269 = vunpack.c.h.b16 %v3419
      %v4270 = vunpack.c.l.b16 %v3420
      %v4271 = vunpack.c.h.b16 %v3420
      %v4272 = vunpack.c.l.b16 %v3421
      %v4273 = vunpack.c.h.b16 %v3421
      %v4274 = vunpack.c.l.b16 %v3422
      %v4275 = vunpack.c.h.b16 %v3422
      %v4276 = vunpack.c.l.b16 %v3423
      %v4277 = vunpack.c.h.b16 %v3423
      %v4278 = vunpack.c.l.b16 %v3424
      %v4279 = vunpack.c.h.b16 %v3424
      %v4280 = vunpack.c.l.b16 %v3425
      %v4281 = vunpack.c.h.b16 %v3425
      %v4282 = vunpack.c.l.b16 %v3426
      %v4283 = vunpack.c.h.b16 %v3426
      %v4284 = vunpack.c.l.b16 %v3427
      %v4285 = vunpack.c.h.b16 %v3427
      %v4286 = vunpack.c.l.b16 %v3428
      %v4287 = vunpack.c.h.b16 %v3428
      %v4288 = vunpack.c.l.b16 %v3429
      %v4289 = vunpack.c.h.b16 %v3429
      %v4290 = vunpack.c.l.b16 %v3430
      %v4291 = vunpack.c.h.b16 %v3430
      %v4292 = vunpack.c.l.b16 %v3431
      %v4293 = vunpack.c.h.b16 %v3431
      %v4294 = vunpack.c.l.b16 %v3432
      %v4295 = vunpack.c.h.b16 %v3432
      %v4296 = vunpack.c.l.b16 %v3433
      %v4297 = vunpack.c.h.b16 %v3433
      %v4298 = vunpack.c.l.b16 %v3434
      %v4299 = vunpack.c.h.b16 %v3434
      %v4300 = vunpack.c.l.b16 %v3435
      %v4301 = vunpack.c.h.b16 %v3435
      %v4302 = vunpack.c.l.b16 %v3436
      %v4303 = vunpack.c.h.b16 %v3436
      %v4304 = vunpack.c.l.b16 %v3437
      %v4305 = vunpack.c.h.b16 %v3437
      %v4306 = vunpack.c.l.b16 %v3438
      %v4307 = vunpack.c.h.b16 %v3438
      %v4308 = vunpack.c.l.b16 %v3439
      %v4309 = vunpack.c.h.b16 %v3439
      %v4310 = vunpack.c.l.b16 %v3440
      %v4311 = vunpack.c.h.b16 %v3440
      %v4312 = vunpack.c.l.b16 %v3441
      %v4313 = vunpack.c.h.b16 %v3441
      %v4314 = vunpack.c.l.b16 %v3442
      %v4315 = vunpack.c.h.b16 %v3442
      %v4316 = vunpack.c.l.b16 %v3443
      %v4317 = vunpack.c.h.b16 %v3443
      %v4318 = vunpack.c.l.b16 %v3444
      %v4319 = vunpack.c.h.b16 %v3444
      %v4320 = vunpack.c.l.b16 %v3445
      %v4321 = vunpack.c.h.b16 %v3445
      %v4322 = vunpack.c.l.b16 %v3446
      %v4323 = vunpack.c.h.b16 %v3446
      %v4324 = vunpack.c.l.b16 %v3447
      %v4325 = vunpack.c.h.b16 %v3447
      %v4326 = vunpack.c.l.b16 %v3448
      %v4327 = vunpack.c.h.b16 %v3448
      %v4328 = vunpack.c.l.b16 %v3449
      %v4329 = vunpack.c.h.b16 %v3449
      %v4330 = vunpack.c.l.b16 %v3450
      %v4331 = vunpack.c.h.b16 %v3450
      %v4332 = vunpack.c.l.b16 %v3451
      %v4333 = vunpack.c.h.b16 %v3451
      %v4334 = vunpack.c.l.b16 %v3452
      %v4335 = vunpack.c.h.b16 %v3452
      %v4336 = vunpack.c.l.b16 %v3453
      %v4337 = vunpack.c.h.b16 %v3453
      %v4338 = vunpack.c.l.b16 %v3454
      %v4339 = vunpack.c.h.b16 %v3454
      %v4340 = vunpack.c.l.b16 %v3455
      %v4341 = vunpack.c.h.b16 %v3455
      %v4342 = vunpack.c.l.b16 %v3456
      %v4343 = vunpack.c.h.b16 %v3456
      %v4344 = vunpack.c.l.b16 %v3457
      %v4345 = vunpack.c.h.b16 %v3457
      %v4346 = vunpack.c.l.b16 %v3458
      %v4347 = vunpack.c.h.b16 %v3458
      %v4348 = vunpack.c.l.b16 %v3459
      %v4349 = vunpack.c.h.b16 %v3459
      %v4350 = vunpack.c.l.b16 %v3460
      %v4351 = vunpack.c.h.b16 %v3460
      %v4352 = vunpack.c.l.b16 %v3461
      %v4353 = vunpack.c.h.b16 %v3461
      %v4354 = vunpack.c.l.b16 %v3462
      %v4355 = vunpack.c.h.b16 %v3462
      %v4356 = vunpack.c.l.b16 %v3463
      %v4357 = vunpack.c.h.b16 %v3463
      %v4358 = vunpack.c.l.b16 %v3464
      %v4359 = vunpack.c.h.b16 %v3464
      %v4360 = vunpack.c.l.b16 %v3465
      %v4361 = vunpack.c.h.b16 %v3465
      %v4362 = vunpack.c.l.b16 %v3466
      %v4363 = vunpack.c.h.b16 %v3466
      %v4364 = vunpack.c.l.b16 %v3467
      %v4365 = vunpack.c.h.b16 %v3467
      %v4366 = vunpack.c.l.b16 %v3468
      %v4367 = vunpack.c.h.b16 %v3468
      %v4368 = vunpack.c.l.b16 %v3469
      %v4369 = vunpack.c.h.b16 %v3469
      %v4370 = vunpack.c.l.b16 %v3470
      %v4371 = vunpack.c.h.b16 %v3470
      %v4372 = vunpack.c.l.b16 %v3471
      %v4373 = vunpack.c.h.b16 %v3471
      %v4374 = vunpack.c.l.b16 %v3472
      %v4375 = vunpack.c.h.b16 %v3472
      %v4376 = vunpack.c.l.b16 %v3473
      %v4377 = vunpack.c.h.b16 %v3473
      %v4378 = vunpack.c.l.b16 %v3474
      %v4379 = vunpack.c.h.b16 %v3474
      %v4380 = vunpack.c.l.b16 %v3475
      %v4381 = vunpack.c.h.b16 %v3475
      %v4382 = vunpack.c.l.b16 %v3476
      %v4383 = vunpack.c.h.b16 %v3476
      %v4384 = vunpack.c.l.b16 %v3477
      %v4385 = vunpack.c.h.b16 %v3477
      %v4386 = vunpack.c.l.b16 %v3478
      %v4387 = vunpack.c.h.b16 %v3478
      %v4388 = vunpack.c.l.b16 %v3479
      %v4389 = vunpack.c.h.b16 %v3479
      %v4390 = vunpack.c.l.b16 %v3480
      %v4391 = vunpack.c.h.b16 %v3480
      %v4392 = vunpack.c.l.b16 %v3481
      %v4393 = vunpack.c.h.b16 %v3481
      %v4394 = vunpack.c.l.b16 %v3482
      %v4395 = vunpack.c.h.b16 %v3482
      %v4396 = vunpack.c.l.b16 %v3483
      %v4397 = vunpack.c.h.b16 %v3483
      %v4398 = vunpack.c.l.b16 %v3484
      %v4399 = vunpack.c.h.b16 %v3484
      %v4400 = vunpack.c.l.b16 %v3485
      %v4401 = vunpack.c.h.b16 %v3485
      %v4402 = vunpack.c.l.b16 %v3486
      %v4403 = vunpack.c.h.b16 %v3486
      %v4404 = vunpack.c.l.b16 %v3487
      %v4405 = vunpack.c.h.b16 %v3487
      %v4406 = vunpack.c.l.b16 %v3488
      %v4407 = vunpack.c.h.b16 %v3488
      %v4408 = vunpack.c.l.b16 %v3489
      %v4409 = vunpack.c.h.b16 %v3489
      %v4410 = vunpack.c.l.b16 %v3490
      %v4411 = vunpack.c.h.b16 %v3490
      %v4412 = vunpack.c.l.b16 %v3491
      %v4413 = vunpack.c.h.b16 %v3491
      %v4414 = vunpack.c.l.b16 %v3492
      %v4415 = vunpack.c.h.b16 %v3492
      %v4416 = vunpack.c.l.b16 %v3493
      %v4417 = vunpack.c.h.b16 %v3493
      %v4418 = vunpack.c.l.b16 %v3494
      %v4419 = vunpack.c.h.b16 %v3494
      %v4420 = vunpack.c.l.b16 %v3495
      %v4421 = vunpack.c.h.b16 %v3495
      %v4422 = vunpack.c.l.b16 %v3496
      %v4423 = vunpack.c.h.b16 %v3496
      %v4424 = vunpack.c.l.b16 %v3497
      %v4425 = vunpack.c.h.b16 %v3497
      %v4426 = vunpack.c.l.b16 %v3498
      %v4427 = vunpack.c.h.b16 %v3498
      %v4428 = vunpack.c.l.b16 %v3499
      %v4429 = vunpack.c.h.b16 %v3499
      %v4430 = vunpack.c.l.b16 %v3500
      %v4431 = vunpack.c.h.b16 %v3500
      %v4432 = vunpack.c.l.b16 %v3501
      %v4433 = vunpack.c.h.b16 %v3501
      %v4434 = vunpack.c.l.b16 %v3502
      %v4435 = vunpack.c.h.b16 %v3502
      %v4436 = vunpack.c.l.b16 %v3503
      %v4437 = vunpack.c.h.b16 %v3503
      %v4438 = vunpack.c.l.b16 %v3504
      %v4439 = vunpack.c.h.b16 %v3504
      %v4440 = vunpack.c.l.b16 %v3505
      %v4441 = vunpack.c.h.b16 %v3505
      %v4442 = vunpack.c.l.b16 %v3506
      %v4443 = vunpack.c.h.b16 %v3506
      %v4444 = vunpack.c.l.b16 %v3507
      %v4445 = vunpack.c.h.b16 %v3507
      %v4446 = vunpack.c.l.b16 %v3508
      %v4447 = vunpack.c.h.b16 %v3508
      %v4448 = vunpack.c.l.b16 %v3509
      %v4449 = vunpack.c.h.b16 %v3509
      %v4450 = vunpack.c.l.b16 %v3510
      %v4451 = vunpack.c.h.b16 %v3510
      %v4452 = vunpack.c.l.b16 %v3511
      %v4453 = vunpack.c.h.b16 %v3511
      %v4454 = vunpack.c.l.b16 %v3512
      %v4455 = vunpack.c.h.b16 %v3512
      %v4456 = vunpack.c.l.b16 %v3513
      %v4457 = vunpack.c.h.b16 %v3513
      %v4458 = vunpack.c.l.b16 %v3514
      %v4459 = vunpack.c.h.b16 %v3514
      %v4460 = vunpack.c.l.b16 %v3515
      %v4461 = vunpack.c.h.b16 %v3515
      %v4462 = vunpack.c.l.b16 %v3516
      %v4463 = vunpack.c.h.b16 %v3516
      %v4464 = vunpack.c.l.b16 %v3517
      %v4465 = vunpack.c.h.b16 %v3517
      %v4466 = vunpack.c.l.b16 %v3518
      %v4467 = vunpack.c.h.b16 %v3518
      %v4468 = vunpack.c.l.b16 %v3519
      %v4469 = vunpack.c.h.b16 %v3519
      %v4470 = vunpack.c.l.b16 %v3520
      %v4471 = vunpack.c.h.b16 %v3520
      %v4472 = vunpack.c.l.b16 %v3521
      %v4473 = vunpack.c.h.b16 %v3521
      %v4474 = vunpack.c.l.b16 %v3522
      %v4475 = vunpack.c.h.b16 %v3522
      %v4476 = vunpack.c.l.b16 %v3523
      %v4477 = vunpack.c.h.b16 %v3523
      %v4478 = vunpack.c.l.b16 %v3524
      %v4479 = vunpack.c.h.b16 %v3524
      %v4480 = vunpack.c.l.b16 %v3525
      %v4481 = vunpack.c.h.b16 %v3525
      %v4482 = vunpack.c.l.b16 %v3526
      %v4483 = vunpack.c.h.b16 %v3526
      %v4484 = vunpack.c.l.b16 %v3527
      %v4485 = vunpack.c.h.b16 %v3527
      %v4486 = vunpack.c.l.b16 %v3528
      %v4487 = vunpack.c.h.b16 %v3528
      %v4488 = vunpack.c.l.b16 %v3529
      %v4489 = vunpack.c.h.b16 %v3529
      %v4490 = vunpack.c.l.b16 %v3530
      %v4491 = vunpack.c.h.b16 %v3530
      %v4492 = vunpack.c.l.b16 %v3531
      %v4493 = vunpack.c.h.b16 %v3531
      %v4494 = vunpack.c.l.b16 %v3532
      %v4495 = vunpack.c.h.b16 %v3532
      %v4496 = vunpack.c.l.b16 %v3533
      %v4497 = vunpack.c.h.b16 %v3533
      %v4498 = vunpack.c.l.b16 %v3534
      %v4499 = vunpack.c.h.b16 %v3534
      %v4500 = vunpack.c.l.b16 %v3535
      %v4501 = vunpack.c.h.b16 %v3535
      %v4502 = vunpack.c.l.b16 %v3536
      %v4503 = vunpack.c.h.b16 %v3536
      %v4504 = vunpack.c.l.b16 %v3537
      %v4505 = vunpack.c.h.b16 %v3537
      %v4506 = vunpack.c.l.b16 %v3538
      %v4507 = vunpack.c.h.b16 %v3538
      %v4508 = vunpack.c.l.b16 %v3539
      %v4509 = vunpack.c.h.b16 %v3539
      %v4510 = vunpack.c.l.b16 %v3540
      %v4511 = vunpack.c.h.b16 %v3540
      %v4512 = vunpack.c.l.b16 %v3541
      %v4513 = vunpack.c.h.b16 %v3541
      %v4514 = vunpack.c.l.b16 %v3542
      %v4515 = vunpack.c.h.b16 %v3542
      %v4516 = vunpack.c.l.b16 %v3543
      %v4517 = vunpack.c.h.b16 %v3543
      %v4518 = vunpack.c.l.b16 %v3544
      %v4519 = vunpack.c.h.b16 %v3544
      %v4520 = vunpack.c.l.b16 %v3545
      %v4521 = vunpack.c.h.b16 %v3545
      %v4522 = vunpack.c.l.b16 %v3546
      %v4523 = vunpack.c.h.b16 %v3546
      %v4524 = vunpack.c.l.b16 %v3547
      %v4525 = vunpack.c.h.b16 %v3547
      %v4526 = vunpack.c.l.b16 %v3548
      %v4527 = vunpack.c.h.b16 %v3548
      %v4528 = vunpack.c.l.b16 %v3549
      %v4529 = vunpack.c.h.b16 %v3549
      %v4530 = vunpack.c.l.b16 %v3550
      %v4531 = vunpack.c.h.b16 %v3550
      %v4532 = vunpack.c.l.b16 %v3551
      %v4533 = vunpack.c.h.b16 %v3551
      %v4534 = vunpack.c.l.b16 %v3552
      %v4535 = vunpack.c.h.b16 %v3552
      %v4536 = vunpack.c.l.b16 %v3553
      %v4537 = vunpack.c.h.b16 %v3553
      %v4538 = vunpack.c.l.b16 %v3554
      %v4539 = vunpack.c.h.b16 %v3554
      %v4540 = vunpack.c.l.b16 %v3555
      %v4541 = vunpack.c.h.b16 %v3555
      %v4542 = vunpack.c.l.b16 %v3556
      %v4543 = vunpack.c.h.b16 %v3556
      %v4544 = vunpack.c.l.b16 %v3557
      %v4545 = vunpack.c.h.b16 %v3557
      %v4546 = vunpack.c.l.b16 %v3558
      %v4547 = vunpack.c.h.b16 %v3558
      %v4548 = vunpack.c.l.b16 %v3559
      %v4549 = vunpack.c.h.b16 %v3559
      %v4550 = vunpack.c.l.b16 %v3560
      %v4551 = vunpack.c.h.b16 %v3560
      %v4552 = vunpack.c.l.b16 %v3561
      %v4553 = vunpack.c.h.b16 %v3561
      %v4554 = vunpack.c.l.b16 %v3562
      %v4555 = vunpack.c.h.b16 %v3562
      %v4556 = vunpack.c.l.b16 %v3563
      %v4557 = vunpack.c.h.b16 %v3563
      %v4558 = vunpack.c.l.b16 %v3564
      %v4559 = vunpack.c.h.b16 %v3564
      %v4560 = vunpack.c.l.b16 %v3565
      %v4561 = vunpack.c.h.b16 %v3565
      %v4562 = vunpack.c.l.b16 %v3566
      %v4563 = vunpack.c.h.b16 %v3566
      %v4564 = vunpack.c.l.b16 %v3567
      %v4565 = vunpack.c.h.b16 %v3567
      %v4566 = vunpack.c.l.b16 %v3568
      %v4567 = vunpack.c.h.b16 %v3568
      %v4568 = vunpack.c.l.b16 %v3569
      %v4569 = vunpack.c.h.b16 %v3569
      %v4570 = vunpack.c.l.b16 %v3570
      %v4571 = vunpack.c.h.b16 %v3570
      %v4572 = vunpack.c.l.b16 %v3571
      %v4573 = vunpack.c.h.b16 %v3571
      %v4574 = vunpack.c.l.b16 %v3572
      %v4575 = vunpack.c.h.b16 %v3572
      %v4576 = vunpack.c.l.b16 %v3573
      %v4577 = vunpack.c.h.b16 %v3573
      %v4578 = vunpack.c.l.b16 %v3574
      %v4579 = vunpack.c.h.b16 %v3574
      %v4580 = vunpack.c.l.b16 %v3575
      %v4581 = vunpack.c.h.b16 %v3575
      %v4582 = vunpack.c.l.b16 %v3576
      %v4583 = vunpack.c.h.b16 %v3576
      %v4584 = vunpack.c.l.b16 %v3577
      %v4585 = vunpack.c.h.b16 %v3577
      %v4586 = vunpack.c.l.b16 %v3578
      %v4587 = vunpack.c.h.b16 %v3578
      %v4588 = vunpack.c.l.b16 %v3579
      %v4589 = vunpack.c.h.b16 %v3579
      %v4590 = vunpack.c.l.b16 %v3580
      %v4591 = vunpack.c.h.b16 %v3580
      %v4592 = vunpack.c.l.b16 %v3581
      %v4593 = vunpack.c.h.b16 %v3581
      %v4594 = vunpack.c.l.b16 %v3582
      %v4595 = vunpack.c.h.b16 %v3582
      %v4596 = vunpack.c.l.b16 %v3583
      %v4597 = vunpack.c.h.b16 %v3583
      %v4598 = vunpack.c.l.b16 %v3584
      %v4599 = vunpack.c.h.b16 %v3584
      %v4600 = vunpack.c.l.b16 %v3585
      %v4601 = vunpack.c.h.b16 %v3585
      %v4602 = vunpack.c.l.b16 %v3586
      %v4603 = vunpack.c.h.b16 %v3586
      %v4604 = vunpack.c.l.b16 %v3587
      %v4605 = vunpack.c.h.b16 %v3587
      %v4606 = vunpack.c.l.b16 %v3588
      %v4607 = vunpack.c.h.b16 %v3588
      %v4608 = vunpack.c.l.b16 %v3589
      %v4609 = vunpack.c.h.b16 %v3589
      %v4610 = vunpack.c.l.b16 %v3590
      %v4611 = vunpack.c.h.b16 %v3590
      %v4612 = vunpack.c.l.b16 %v3591
      %v4613 = vunpack.c.h.b16 %v3591
      %v4614 = vunpack.c.l.b16 %v3592
      %v4615 = vunpack.c.h.b16 %v3592
      %v4616 = vunpack.c.l.b16 %v3593
      %v4617 = vunpack.c.h.b16 %v3593
      %v4618 = vunpack.c.l.b16 %v3594
      %v4619 = vunpack.c.h.b16 %v3594
      %v4620 = vunpack.c.l.b16 %v3595
      %v4621 = vunpack.c.h.b16 %v3595
      %v4622 = vunpack.c.l.b16 %v3596
      %v4623 = vunpack.c.h.b16 %v3596
      %v4624 = vunpack.c.l.b16 %v3597
      %v4625 = vunpack.c.h.b16 %v3597
      %v4626 = vunpack.c.l.b16 %v3598
      %v4627 = vunpack.c.h.b16 %v3598
      %v4628 = vunpack.c.l.b16 %v3599
      %v4629 = vunpack.c.h.b16 %v3599
      %v4630 = vunpack.c.l.b16 %v3600
      %v4631 = vunpack.c.h.b16 %v3600
      %v4632 = vunpack.c.l.b16 %v3601
      %v4633 = vunpack.c.h.b16 %v3601
      %v4634 = vunpack.c.l.b16 %v3602
      %v4635 = vunpack.c.h.b16 %v3602
      %v4636 = vunpack.c.l.b16 %v3603
      %v4637 = vunpack.c.h.b16 %v3603
      %v4638 = vunpack.c.l.b16 %v3604
      %v4639 = vunpack.c.h.b16 %v3604
      %v4640 = vunpack.c.l.b16 %v3605
      %v4641 = vunpack.c.h.b16 %v3605
      %v4642 = vunpack.c.l.b16 %v3606
      %v4643 = vunpack.c.h.b16 %v3606
      %v4644 = vunpack.c.l.b16 %v3607
      %v4645 = vunpack.c.h.b16 %v3607
      %v4646 = vunpack.c.l.b16 %v3608
      %v4647 = vunpack.c.h.b16 %v3608
      %v4648 = vunpack.c.l.b16 %v3609
      %v4649 = vunpack.c.h.b16 %v3609
      %v4650 = vunpack.c.l.b16 %v3610
      %v4651 = vunpack.c.h.b16 %v3610
      %v4652 = vunpack.c.l.b16 %v3611
      %v4653 = vunpack.c.h.b16 %v3611
      %v4654 = vunpack.c.l.b16 %v3612
      %v4655 = vunpack.c.h.b16 %v3612
      %v4656 = vunpack.c.l.b16 %v3613
      %v4657 = vunpack.c.h.b16 %v3613
      %v4658 = vunpack.c.l.b16 %v3614
      %v4659 = vunpack.c.h.b16 %v3614
      %v4660 = vunpack.c.l.b16 %v3615
      %v4661 = vunpack.c.h.b16 %v3615
      %v4662 = vunpack.c.l.b16 %v3616
      %v4663 = vunpack.c.h.b16 %v3616
      %v4664 = vunpack.c.l.b16 %v3617
      %v4665 = vunpack.c.h.b16 %v3617
      %v4666 = vunpack.c.l.b16 %v3618
      %v4667 = vunpack.c.h.b16 %v3618
      %v4668 = vunpack.c.l.b16 %v3619
      %v4669 = vunpack.c.h.b16 %v3619
      %v4670 = vunpack.c.l.b16 %v3620
      %v4671 = vunpack.c.h.b16 %v3620
      %v4672 = vunpack.c.l.b16 %v3621
      %v4673 = vunpack.c.h.b16 %v3621
      %v4674 = vunpack.c.l.b16 %v3622
      %v4675 = vunpack.c.h.b16 %v3622
      %v4676 = vunpack.c.l.b16 %v3623
      %v4677 = vunpack.c.h.b16 %v3623
      %v4678 = vunpack.c.l.b16 %v3624
      %v4679 = vunpack.c.h.b16 %v3624
      %v4680 = vunpack.c.l.b16 %v3625
      %v4681 = vunpack.c.h.b16 %v3625
      %v4682 = vunpack.c.l.b16 %v3626
      %v4683 = vunpack.c.h.b16 %v3626
      %v4684 = vunpack.c.l.b16 %v3627
      %v4685 = vunpack.c.h.b16 %v3627
      %v4686 = vunpack.c.l.b16 %v3628
      %v4687 = vunpack.c.h.b16 %v3628
      %v4688 = vunpack.c.l.b16 %v3629
      %v4689 = vunpack.c.h.b16 %v3629
      %v4690 = vunpack.c.l.b16 %v3630
      %v4691 = vunpack.c.h.b16 %v3630
      %v4692 = vunpack.c.l.b16 %v3631
      %v4693 = vunpack.c.h.b16 %v3631
      %v4694 = vunpack.c.l.b16 %v3632
      %v4695 = vunpack.c.h.b16 %v3632
      %v4696 = vunpack.c.l.b16 %v3633
      %v4697 = vunpack.c.h.b16 %v3633
      %v4698 = vunpack.c.l.b16 %v3634
      %v4699 = vunpack.c.h.b16 %v3634
      %v4700 = vunpack.c.l.b16 %v3635
      %v4701 = vunpack.c.h.b16 %v3635
      %v4702 = vunpack.c.l.b16 %v3636
      %v4703 = vunpack.c.h.b16 %v3636
      %v4704 = vunpack.c.l.b16 %v3637
      %v4705 = vunpack.c.h.b16 %v3637
      %v4706 = vunpack.c.l.b16 %v3638
      %v4707 = vunpack.c.h.b16 %v3638
      %v4708 = vunpack.c.l.b16 %v3639
      %v4709 = vunpack.c.h.b16 %v3639
      %v4710 = vunpack.c.l.b16 %v3640
      %v4711 = vunpack.c.h.b16 %v3640
      %v4712 = vunpack.c.l.b16 %v3641
      %v4713 = vunpack.c.h.b16 %v3641
      %v4714 = vunpack.c.l.b16 %v3642
      %v4715 = vunpack.c.h.b16 %v3642
      %v4716 = vunpack.c.l.b16 %v3643
      %v4717 = vunpack.c.h.b16 %v3643
      %v4718 = vunpack.c.l.b16 %v3644
      %v4719 = vunpack.c.h.b16 %v3644
      %v4720 = vunpack.c.l.b16 %v3645
      %v4721 = vunpack.c.h.b16 %v3645
      %v4722 = vunpack.c.l.b16 %v3646
      %v4723 = vunpack.c.h.b16 %v3646
      %v4724 = vunpack.c.l.b16 %v3647
      %v4725 = vunpack.c.h.b16 %v3647
      %v4726 = vunpack.c.l.b16 %v3648
      %v4727 = vunpack.c.h.b16 %v3648
      %v4728 = vunpack.c.l.b16 %v3649
      %v4729 = vunpack.c.h.b16 %v3649
      %v4730 = vunpack.c.l.b16 %v3650
      %v4731 = vunpack.c.h.b16 %v3650
      %v4732 = vunpack.c.l.b16 %v3651
      %v4733 = vunpack.c.h.b16 %v3651
      %v4734 = vunpack.c.l.b16 %v3652
      %v4735 = vunpack.c.h.b16 %v3652
      %v4736 = vunpack.c.l.b16 %v3653
      %v4737 = vunpack.c.h.b16 %v3653
      %v4738 = vunpack.c.l.b16 %v3654
      %v4739 = vunpack.c.h.b16 %v3654
      %v4740 = vunpack.c.l.b16 %v3655
      %v4741 = vunpack.c.h.b16 %v3655
      %v4742 = vunpack.c.l.b16 %v3656
      %v4743 = vunpack.c.h.b16 %v3656
      %v4744 = vunpack.c.l.b16 %v3657
      %v4745 = vunpack.c.h.b16 %v3657
      %v4746 = vunpack.c.l.b16 %v3658
      %v4747 = vunpack.c.h.b16 %v3658
      %v4748 = vunpack.c.l.b16 %v3659
      %v4749 = vunpack.c.h.b16 %v3659
      %v4750 = vunpack.c.l.b16 %v3660
      %v4751 = vunpack.c.h.b16 %v3660
      %v4752 = vunpack.c.l.b16 %v3661
      %v4753 = vunpack.c.h.b16 %v3661
      %v4754 = vunpack.c.l.b16 %v3662
      %v4755 = vunpack.c.h.b16 %v3662
      %v4756 = vunpack.c.l.b16 %v3663
      %v4757 = vunpack.c.h.b16 %v3663
      %v4758 = vunpack.c.l.b16 %v3664
      %v4759 = vunpack.c.h.b16 %v3664
      %v4760 = vunpack.c.l.b16 %v3665
      %v4761 = vunpack.c.h.b16 %v3665
      %v4762 = vunpack.c.l.b16 %v3666
      %v4763 = vunpack.c.h.b16 %v3666
      %v4764 = vunpack.c.l.b16 %v3667
      %v4765 = vunpack.c.h.b16 %v3667
      %v4766 = vunpack.c.l.b16 %v3668
      %v4767 = vunpack.c.h.b16 %v3668
      %v4768 = vunpack.c.l.b16 %v3669
      %v4769 = vunpack.c.h.b16 %v3669
      %v4770 = vunpack.c.l.b16 %v3670
      %v4771 = vunpack.c.h.b16 %v3670
      %v4772 = vunpack.c.l.b16 %v3671
      %v4773 = vunpack.c.h.b16 %v3671
      %v4774 = vunpack.c.l.b16 %v3672
      %v4775 = vunpack.c.h.b16 %v3672
      %v4776 = vunpack.c.l.b16 %v3673
      %v4777 = vunpack.c.h.b16 %v3673
      %v4778 = vunpack.c.l.b16 %v3674
      %v4779 = vunpack.c.h.b16 %v3674
      %v4780 = vunpack.c.l.b16 %v3675
      %v4781 = vunpack.c.h.b16 %v3675
      %v4782 = vunpack.c.l.b16 %v3676
      %v4783 = vunpack.c.h.b16 %v3676
      %v4784 = vunpack.c.l.b16 %v3677
      %v4785 = vunpack.c.h.b16 %v3677
      %v4786 = vunpack.c.l.b16 %v3678
      %v4787 = vunpack.c.h.b16 %v3678
      %v4788 = vunpack.c.l.b16 %v3679
      %v4789 = vunpack.c.h.b16 %v3679
      %v4790 = vunpack.c.l.b16 %v3680
      %v4791 = vunpack.c.h.b16 %v3680
      %v4792 = vunpack.c.l.b16 %v3681
      %v4793 = vunpack.c.h.b16 %v3681
      %v4794 = vunpack.c.l.b16 %v3682
      %v4795 = vunpack.c.h.b16 %v3682
      %v4796 = vunpack.c.l.b16 %v3683
      %v4797 = vunpack.c.h.b16 %v3683
      %v4798 = vunpack.c.l.b16 %v3684
      %v4799 = vunpack.c.h.b16 %v3684
      %v4800 = vunpack.c.l.b16 %v3685
      %v4801 = vunpack.c.h.b16 %v3685
      %v4802 = vunpack.c.l.b16 %v3686
      %v4803 = vunpack.c.h.b16 %v3686
      %v4804 = vunpack.c.l.b16 %v3687
      %v4805 = vunpack.c.h.b16 %v3687
      %v4806 = vunpack.c.l.b16 %v3688
      %v4807 = vunpack.c.h.b16 %v3688
      %v4808 = vunpack.c.l.b16 %v3689
      %v4809 = vunpack.c.h.b16 %v3689
      %v4810 = vunpack.c.l.b16 %v3690
      %v4811 = vunpack.c.h.b16 %v3690
      %v4812 = vunpack.c.l.b16 %v3691
      %v4813 = vunpack.c.h.b16 %v3691
      %v4814 = vunpack.c.l.b16 %v3692
      %v4815 = vunpack.c.h.b16 %v3692
      %v4816 = vunpack.c.l.b16 %v3693
      %v4817 = vunpack.c.h.b16 %v3693
      %v4818 = vunpack.c.l.b16 %v3694
      %v4819 = vunpack.c.h.b16 %v3694
      %v4820 = vunpack.c.l.b16 %v3695
      %v4821 = vunpack.c.h.b16 %v3695
      %v4822 = vunpack.c.l.b16 %v3696
      %v4823 = vunpack.c.h.b16 %v3696
      %v4824 = vunpack.c.l.b16 %v3697
      %v4825 = vunpack.c.h.b16 %v3697
      %v4826 = vunpack.c.l.b16 %v3698
      %v4827 = vunpack.c.h.b16 %v3698
      %v4828 = vunpack.c.l.b16 %v3699
      %v4829 = vunpack.c.h.b16 %v3699
      %v4830 = vunpack.c.l.b16 %v3700
      %v4831 = vunpack.c.h.b16 %v3700
      %v4832 = vunpack.c.l.b16 %v3701
      %v4833 = vunpack.c.h.b16 %v3701
      %v4834 = vunpack.c.l.b16 %v3702
      %v4835 = vunpack.c.h.b16 %v3702
      %v4836 = vunpack.c.l.b16 %v3703
      %v4837 = vunpack.c.h.b16 %v3703
      %v4838 = vunpack.c.l.b16 %v3704
      %v4839 = vunpack.c.h.b16 %v3704
      %v4840 = vunpack.c.l.b16 %v3705
      %v4841 = vunpack.c.h.b16 %v3705
      %v4842 = vunpack.c.l.b16 %v3706
      %v4843 = vunpack.c.h.b16 %v3706
      %v4844 = vunpack.c.l.b16 %v3707
      %v4845 = vunpack.c.h.b16 %v3707
      %v4846 = vunpack.c.l.b16 %v3708
      %v4847 = vunpack.c.h.b16 %v3708
      %v4848 = vunpack.c.l.b16 %v3709
      %v4849 = vunpack.c.h.b16 %v3709
      %v4850 = vunpack.c.l.b16 %v3710
      %v4851 = vunpack.c.h.b16 %v3710
      %v4852 = vunpack.c.l.b16 %v3711
      %v4853 = vunpack.c.h.b16 %v3711
      %v4854 = vunpack.c.l.b16 %v3712
      %v4855 = vunpack.c.h.b16 %v3712
      %v4856 = vunpack.c.l.b16 %v3713
      %v4857 = vunpack.c.h.b16 %v3713
      %v4858 = vunpack.c.l.b16 %v3714
      %v4859 = vunpack.c.h.b16 %v3714
      %v4860 = vunpack.c.l.b16 %v3715
      %v4861 = vunpack.c.h.b16 %v3715
      %v4862 = vunpack.c.l.b16 %v3716
      %v4863 = vunpack.c.h.b16 %v3716
      %v4864 = vunpack.c.l.b16 %v3717
      %v4865 = vunpack.c.h.b16 %v3717
      %v4866 = vunpack.c.l.b16 %v3718
      %v4867 = vunpack.c.h.b16 %v3718
      %v4868 = vunpack.c.l.b16 %v3719
      %v4869 = vunpack.c.h.b16 %v3719
      %v4870 = vunpack.c.l.b16 %v3720
      %v4871 = vunpack.c.h.b16 %v3720
      %v4872 = vunpack.c.l.b16 %v3721
      %v4873 = vunpack.c.h.b16 %v3721
      %v4874 = vunpack.c.l.b16 %v3722
      %v4875 = vunpack.c.h.b16 %v3722
      %v4876 = vunpack.c.l.b16 %v3723
      %v4877 = vunpack.c.h.b16 %v3723
      %v4878 = vunpack.c.l.b16 %v3724
      %v4879 = vunpack.c.h.b16 %v3724
      %v4880 = vunpack.c.l.b16 %v3725
      %v4881 = vunpack.c.h.b16 %v3725
      %v4882 = vunpack.c.l.b16 %v3726
      %v4883 = vunpack.c.h.b16 %v3726
      %v4884 = vunpack.c.l.b16 %v3727
      %v4885 = vunpack.c.h.b16 %v3727
      %v4886 = vunpack.c.l.b16 %v3728
      %v4887 = vunpack.c.h.b16 %v3728
      %v4888 = vunpack.c.l.b16 %v3729
      %v4889 = vunpack.c.h.b16 %v3729
      %v4890 = vunpack.c.l.b16 %v3730
      %v4891 = vunpack.c.h.b16 %v3730
      %v4892 = vunpack.c.l.b16 %v3731
      %v4893 = vunpack.c.h.b16 %v3731
      %v4894 = vunpack.c.l.b16 %v3732
      %v4895 = vunpack.c.h.b16 %v3732
      %v4896 = vunpack.c.l.b16 %v3733
      %v4897 = vunpack.c.h.b16 %v3733
      %v4898 = vunpack.c.l.b16 %v3734
      %v4899 = vunpack.c.h.b16 %v3734
      %v4900 = vunpack.c.l.b16 %v3735
      %v4901 = vunpack.c.h.b16 %v3735
      %v4902 = vunpack.c.l.b16 %v3736
      %v4903 = vunpack.c.h.b16 %v3736
      %v4904 = vunpack.c.l.b16 %v3737
      %v4905 = vunpack.c.h.b16 %v3737
      %v4906 = vunpack.c.l.b16 %v3738
      %v4907 = vunpack.c.h.b16 %v3738
      %v4908 = vunpack.c.l.b16 %v3739
      %v4909 = vunpack.c.h.b16 %v3739
      %v4910 = vunpack.c.l.b16 %v3740
      %v4911 = vunpack.c.h.b16 %v3740
      %v4912 = vunpack.c.l.b16 %v3741
      %v4913 = vunpack.c.h.b16 %v3741
      %v4914 = vunpack.c.l.b16 %v3742
      %v4915 = vunpack.c.h.b16 %v3742
      %v4916 = vpack.c.b16 %v4152, %v4148
      %v4917 = vpack.c.b16 %v4153, %v4149
      %v4918 = vpack.c.b16 %v4154, %v4150
      %v4919 = vpack.c.b16 %v4155, %v4151
      %v4920 = vpack.c.b16 %v4160, %v4156
      %v4921 = vpack.c.b16 %v4161, %v4157
      %v4922 = vpack.c.b16 %v4162, %v4158
      %v4923 = vpack.c.b16 %v4163, %v4159
      %v4924 = vpack.c.b16 %v4168, %v4164
      %v4925 = vpack.c.b16 %v4169, %v4165
      %v4926 = vpack.c.b16 %v4170, %v4166
      %v4927 = vpack.c.b16 %v4171, %v4167
      %v4928 = vpack.c.b16 %v4176, %v4172
      %v4929 = vpack.c.b16 %v4177, %v4173
      %v4930 = vpack.c.b16 %v4178, %v4174
      %v4931 = vpack.c.b16 %v4179, %v4175
      %v4932 = vpack.c.b16 %v4184, %v4180
      %v4933 = vpack.c.b16 %v4185, %v4181
      %v4934 = vpack.c.b16 %v4186, %v4182
      %v4935 = vpack.c.b16 %v4187, %v4183
      %v4936 = vpack.c.b16 %v4192, %v4188
      %v4937 = vpack.c.b16 %v4193, %v4189
      %v4938 = vpack.c.b16 %v4194, %v4190
      %v4939 = vpack.c.b16 %v4195, %v4191
      %v4940 = vpack.c.b16 %v4200, %v4196
      %v4941 = vpack.c.b16 %v4201, %v4197
      %v4942 = vpack.c.b16 %v4202, %v4198
      %v4943 = vpack.c.b16 %v4203, %v4199
      %v4944 = vpack.c.b16 %v4208, %v4204
      %v4945 = vpack.c.b16 %v4209, %v4205
      %v4946 = vpack.c.b16 %v4210, %v4206
      %v4947 = vpack.c.b16 %v4211, %v4207
      %v4948 = vpack.c.b16 %v4216, %v4212
      %v4949 = vpack.c.b16 %v4217, %v4213
      %v4950 = vpack.c.b16 %v4218, %v4214
      %v4951 = vpack.c.b16 %v4219, %v4215
      %v4952 = vpack.c.b16 %v4224, %v4220
      %v4953 = vpack.c.b16 %v4225, %v4221
      %v4954 = vpack.c.b16 %v4226, %v4222
      %v4955 = vpack.c.b16 %v4227, %v4223
      %v4956 = vpack.c.b16 %v4232, %v4228
      %v4957 = vpack.c.b16 %v4233, %v4229
      %v4958 = vpack.c.b16 %v4234, %v4230
      %v4959 = vpack.c.b16 %v4235, %v4231
      %v4960 = vpack.c.b16 %v4240, %v4236
      %v4961 = vpack.c.b16 %v4241, %v4237
      %v4962 = vpack.c.b16 %v4242, %v4238
      %v4963 = vpack.c.b16 %v4243, %v4239
      %v4964 = vpack.c.b16 %v4248, %v4244
      %v4965 = vpack.c.b16 %v4249, %v4245
      %v4966 = vpack.c.b16 %v4250, %v4246
      %v4967 = vpack.c.b16 %v4251, %v4247
      %v4968 = vpack.c.b16 %v4256, %v4252
      %v4969 = vpack.c.b16 %v4257, %v4253
      %v4970 = vpack.c.b16 %v4258, %v4254
      %v4971 = vpack.c.b16 %v4259, %v4255
      %v4972 = vpack.c.b16 %v4264, %v4260
      %v4973 = vpack.c.b16 %v4265, %v4261
      %v4974 = vpack.c.b16 %v4266, %v4262
      %v4975 = vpack.c.b16 %v4267, %v4263
      %v4976 = vpack.c.b16 %v4272, %v4268
      %v4977 = vpack.c.b16 %v4273, %v4269
      %v4978 = vpack.c.b16 %v4274, %v4270
      %v4979 = vpack.c.b16 %v4275, %v4271
      %v4980 = vpack.c.b16 %v4280, %v4276
      %v4981 = vpack.c.b16 %v4281, %v4277
      %v4982 = vpack.c.b16 %v4282, %v4278
      %v4983 = vpack.c.b16 %v4283, %v4279
      %v4984 = vpack.c.b16 %v4288, %v4284
      %v4985 = vpack.c.b16 %v4289, %v4285
      %v4986 = vpack.c.b16 %v4290, %v4286
      %v4987 = vpack.c.b16 %v4291, %v4287
      %v4988 = vpack.c.b16 %v4296, %v4292
      %v4989 = vpack.c.b16 %v4297, %v4293
      %v4990 = vpack.c.b16 %v4298, %v4294
      %v4991 = vpack.c.b16 %v4299, %v4295
      %v4992 = vpack.c.b16 %v4304, %v4300
      %v4993 = vpack.c.b16 %v4305, %v4301
      %v4994 = vpack.c.b16 %v4306, %v4302
      %v4995 = vpack.c.b16 %v4307, %v4303
      %v4996 = vpack.c.b16 %v4312, %v4308
      %v4997 = vpack.c.b16 %v4313, %v4309
      %v4998 = vpack.c.b16 %v4314, %v4310
      %v4999 = vpack.c.b16 %v4315, %v4311
      %v5000 = vpack.c.b16 %v4320, %v4316
      %v5001 = vpack.c.b16 %v4321, %v4317
      %v5002 = vpack.c.b16 %v4322, %v4318
      %v5003 = vpack.c.b16 %v4323, %v4319
      %v5004 = vpack.c.b16 %v4328, %v4324
      %v5005 = vpack.c.b16 %v4329, %v4325
      %v5006 = vpack.c.b16 %v4330, %v4326
      %v5007 = vpack.c.b16 %v4331, %v4327
      %v5008 = vpack.c.b16 %v4336, %v4332
      %v5009 = vpack.c.b16 %v4337, %v4333
      %v5010 = vpack.c.b16 %v4338, %v4334
      %v5011 = vpack.c.b16 %v4339, %v4335
      %v5012 = vpack.c.b16 %v4344, %v4340
      %v5013 = vpack.c.b16 %v4345, %v4341
      %v5014 = vpack.c.b16 %v4346, %v4342
      %v5015 = vpack.c.b16 %v4347, %v4343
      %v5016 = vpack.c.b16 %v4352, %v4348
      %v5017 = vpack.c.b16 %v4353, %v4349
      %v5018 = vpack.c.b16 %v4354, %v4350
      %v5019 = vpack.c.b16 %v4355, %v4351
      %v5020 = vpack.c.b16 %v4360, %v4356
      %v5021 = vpack.c.b16 %v4361, %v4357
      %v5022 = vpack.c.b16 %v4362, %v4358
      %v5023 = vpack.c.b16 %v4363, %v4359
      %v5024 = vpack.c.b16 %v4368, %v4364
      %v5025 = vpack.c.b16 %v4369, %v4365
      %v5026 = vpack.c.b16 %v4370, %v4366
      %v5027 = vpack.c.b16 %v4371, %v4367
      %v5028 = vpack.c.b16 %v4376, %v4372
      %v5029 = vpack.c.b16 %v4377, %v4373
      %v5030 = vpack.c.b16 %v4378, %v4374
      %v5031 = vpack.c.b16 %v4379, %v4375
      %v5032 = vpack.c.b16 %v4384, %v4380
      %v5033 = vpack.c.b16 %v4385, %v4381
      %v5034 = vpack.c.b16 %v4386, %v4382
      %v5035 = vpack.c.b16 %v4387, %v4383
      %v5036 = vpack.c.b16 %v4392, %v4388
      %v5037 = vpack.c.b16 %v4393, %v4389
      %v5038 = vpack.c.b16 %v4394, %v4390
      %v5039 = vpack.c.b16 %v4395, %v4391
      %v5040 = vpack.c.b16 %v4400, %v4396
      %v5041 = vpack.c.b16 %v4401, %v4397
      %v5042 = vpack.c.b16 %v4402, %v4398
      %v5043 = vpack.c.b16 %v4403, %v4399
      %v5044 = vpack.c.b16 %v4408, %v4404
      %v5045 = vpack.c.b16 %v4409, %v4405
      %v5046 = vpack.c.b16 %v4410, %v4406
      %v5047 = vpack.c.b16 %v4411, %v4407
      %v5048 = vpack.c.b16 %v4416, %v4412
      %v5049 = vpack.c.b16 %v4417, %v4413
      %v5050 = vpack.c.b16 %v4418, %v4414
      %v5051 = vpack.c.b16 %v4419, %v4415
      %v5052 = vpack.c.b16 %v4424, %v4420
      %v5053 = vpack.c.b16 %v4425, %v4421
      %v5054 = vpack.c.b16 %v4426, %v4422
      %v5055 = vpack.c.b16 %v4427, %v4423
      %v5056 = vpack.c.b16 %v4432, %v4428
      %v5057 = vpack.c.b16 %v4433, %v4429
      %v5058 = vpack.c.b16 %v4434, %v4430
      %v5059 = vpack.c.b16 %v4435, %v4431
      %v5060 = vpack.c.b16 %v4440, %v4436
      %v5061 = vpack.c.b16 %v4441, %v4437
      %v5062 = vpack.c.b16 %v4442, %v4438
      %v5063 = vpack.c.b16 %v4443, %v4439
      %v5064 = vpack.c.b16 %v4448, %v4444
      %v5065 = vpack.c.b16 %v4449, %v4445
      %v5066 = vpack.c.b16 %v4450, %v4446
      %v5067 = vpack.c.b16 %v4451, %v4447
      %v5068 = vpack.c.b16 %v4456, %v4452
      %v5069 = vpack.c.b16 %v4457, %v4453
      %v5070 = vpack.c.b16 %v4458, %v4454
      %v5071 = vpack.c.b16 %v4459, %v4455
      %v5072 = vpack.c.b16 %v4464, %v4460
      %v5073 = vpack.c.b16 %v4465, %v4461
      %v5074 = vpack.c.b16 %v4466, %v4462
      %v5075 = vpack.c.b16 %v4467, %v4463
      %v5076 = vpack.c.b16 %v4472, %v4468
      %v5077 = vpack.c.b16 %v4473, %v4469
      %v5078 = vpack.c.b16 %v4474, %v4470
      %v5079 = vpack.c.b16 %v4475, %v4471
      %v5080 = vpack.c.b16 %v4480, %v4476
      %v5081 = vpack.c.b16 %v4481, %v4477
      %v5082 = vpack.c.b16 %v4482, %v4478
      %v5083 = vpack.c.b16 %v4483, %v4479
      %v5084 = vpack.c.b16 %v4488, %v4484
      %v5085 = vpack.c.b16 %v4489, %v4485
      %v5086 = vpack.c.b16 %v4490, %v4486
      %v5087 = vpack.c.b16 %v4491, %v4487
      %v5088 = vpack.c.b16 %v4496, %v4492
      %v5089 = vpack.c.b16 %v4497, %v4493
      %v5090 = vpack.c.b16 %v4498, %v4494
      %v5091 = vpack.c.b16 %v4499, %v4495
      %v5092 = vpack.c.b16 %v4504, %v4500
      %v5093 = vpack.c.b16 %v4505, %v4501
      %v5094 = vpack.c.b16 %v4506, %v4502
      %v5095 = vpack.c.b16 %v4507, %v4503
      %v5096 = vpack.c.b16 %v4512, %v4508
      %v5097 = vpack.c.b16 %v4513, %v4509
      %v5098 = vpack.c.b16 %v4514, %v4510
      %v5099 = vpack.c.b16 %v4515, %v4511
      %v5100 = vpack.c.b16 %v4520, %v4516
      %v5101 = vpack.c.b16 %v4521, %v4517
      %v5102 = vpack.c.b16 %v4522, %v4518
      %v5103 = vpack.c.b16 %v4523, %v4519
      %v5104 = vpack.c.b16 %v4528, %v4524
      %v5105 = vpack.c.b16 %v4529, %v4525
      %v5106 = vpack.c.b16 %v4530, %v4526
      %v5107 = vpack.c.b16 %v4531, %v4527
      %v5108 = vpack.c.b16 %v4536, %v4532
      %v5109 = vpack.c.b16 %v4537, %v4533
      %v5110 = vpack.c.b16 %v4538, %v4534
      %v5111 = vpack.c.b16 %v4539, %v4535
      %v5112 = vpack.c.b16 %v4544, %v4540
      %v5113 = vpack.c.b16 %v4545, %v4541
      %v5114 = vpack.c.b16 %v4546, %v4542
      %v5115 = vpack.c.b16 %v4547, %v4543
      %v5116 = vpack.c.b16 %v4552, %v4548
      %v5117 = vpack.c.b16 %v4553, %v4549
      %v5118 = vpack.c.b16 %v4554, %v4550
      %v5119 = vpack.c.b16 %v4555, %v4551
      %v5120 = vpack.c.b16 %v4560, %v4556
      %v5121 = vpack.c.b16 %v4561, %v4557
      %v5122 = vpack.c.b16 %v4562, %v4558
      %v5123 = vpack.c.b16 %v4563, %v4559
      %v5124 = vpack.c.b16 %v4568, %v4564
      %v5125 = vpack.c.b16 %v4569, %v4565
      %v5126 = vpack.c.b16 %v4570, %v4566
      %v5127 = vpack.c.b16 %v4571, %v4567
      %v5128 = vpack.c.b16 %v4576, %v4572
      %v5129 = vpack.c.b16 %v4577, %v4573
      %v5130 = vpack.c.b16 %v4578, %v4574
      %v5131 = vpack.c.b16 %v4579, %v4575
      %v5132 = vpack.c.b16 %v4584, %v4580
      %v5133 = vpack.c.b16 %v4585, %v4581
      %v5134 = vpack.c.b16 %v4586, %v4582
      %v5135 = vpack.c.b16 %v4587, %v4583
      %v5136 = vpack.c.b16 %v4592, %v4588
      %v5137 = vpack.c.b16 %v4593, %v4589
      %v5138 = vpack.c.b16 %v4594, %v4590
      %v5139 = vpack.c.b16 %v4595, %v4591
      %v5140 = vpack.c.b16 %v4600, %v4596
      %v5141 = vpack.c.b16 %v4601, %v4597
      %v5142 = vpack.c.b16 %v4602, %v4598
      %v5143 = vpack.c.b16 %v4603, %v4599
      %v5144 = vpack.c.b16 %v4608, %v4604
      %v5145 = vpack.c.b16 %v4609, %v4605
      %v5146 = vpack.c.b16 %v4610, %v4606
      %v5147 = vpack.c.b16 %v4611, %v4607
      %v5148 = vpack.c.b16 %v4616, %v4612
      %v5149 = vpack.c.b16 %v4617, %v4613
      %v5150 = vpack.c.b16 %v4618, %v4614
      %v5151 = vpack.c.b16 %v4619, %v4615
      %v5152 = vpack.c.b16 %v4624, %v4620
      %v5153 = vpack.c.b16 %v4625, %v4621
      %v5154 = vpack.c.b16 %v4626, %v4622
      %v5155 = vpack.c.b16 %v4627, %v4623
      %v5156 = vpack.c.b16 %v4632, %v4628
      %v5157 = vpack.c.b16 %v4633, %v4629
      %v5158 = vpack.c.b16 %v4634, %v4630
      %v5159 = vpack.c.b16 %v4635, %v4631
      %v5160 = vpack.c.b16 %v4640, %v4636
      %v5161 = vpack.c.b16 %v4641, %v4637
      %v5162 = vpack.c.b16 %v4642, %v4638
      %v5163 = vpack.c.b16 %v4643, %v4639
      %v5164 = vpack.c.b16 %v4648, %v4644
      %v5165 = vpack.c.b16 %v4649, %v4645
      %v5166 = vpack.c.b16 %v4650, %v4646
      %v5167 = vpack.c.b16 %v4651, %v4647
      %v5168 = vpack.c.b16 %v4656, %v4652
      %v5169 = vpack.c.b16 %v4657, %v4653
      %v5170 = vpack.c.b16 %v4658, %v4654
      %v5171 = vpack.c.b16 %v4659, %v4655
      %v5172 = vpack.c.b16 %v4664, %v4660
      %v5173 = vpack.c.b16 %v4665, %v4661
      %v5174 = vpack.c.b16 %v4666, %v4662
      %v5175 = vpack.c.b16 %v4667, %v4663
      %v5176 = vpack.c.b16 %v4672, %v4668
      %v5177 = vpack.c.b16 %v4673, %v4669
      %v5178 = vpack.c.b16 %v4674, %v4670
      %v5179 = vpack.c.b16 %v4675, %v4671
      %v5180 = vpack.c.b16 %v4680, %v4676
      %v5181 = vpack.c.b16 %v4681, %v4677
      %v5182 = vpack.c.b16 %v4682, %v4678
      %v5183 = vpack.c.b16 %v4683, %v4679
      %v5184 = vpack.c.b16 %v4688, %v4684
      %v5185 = vpack.c.b16 %v4689, %v4685
      %v5186 = vpack.c.b16 %v4690, %v4686
      %v5187 = vpack.c.b16 %v4691, %v4687
      %v5188 = vpack.c.b16 %v4696, %v4692
      %v5189 = vpack.c.b16 %v4697, %v4693
      %v5190 = vpack.c.b16 %v4698, %v4694
      %v5191 = vpack.c.b16 %v4699, %v4695
      %v5192 = vpack.c.b16 %v4704, %v4700
      %v5193 = vpack.c.b16 %v4705, %v4701
      %v5194 = vpack.c.b16 %v4706, %v4702
      %v5195 = vpack.c.b16 %v4707, %v4703
      %v5196 = vpack.c.b16 %v4712, %v4708
      %v5197 = vpack.c.b16 %v4713, %v4709
      %v5198 = vpack.c.b16 %v4714, %v4710
      %v5199 = vpack.c.b16 %v4715, %v4711
      %v5200 = vpack.c.b16 %v4720, %v4716
      %v5201 = vpack.c.b16 %v4721, %v4717
      %v5202 = vpack.c.b16 %v4722, %v4718
      %v5203 = vpack.c.b16 %v4723, %v4719
      %v5204 = vpack.c.b16 %v4728, %v4724
      %v5205 = vpack.c.b16 %v4729, %v4725
      %v5206 = vpack.c.b16 %v4730, %v4726
      %v5207 = vpack.c.b16 %v4731, %v4727
      %v5208 = vpack.c.b16 %v4736, %v4732
      %v5209 = vpack.c.b16 %v4737, %v4733
      %v5210 = vpack.c.b16 %v4738, %v4734
      %v5211 = vpack.c.b16 %v4739, %v4735
      %v5212 = vpack.c.b16 %v4744, %v4740
      %v5213 = vpack.c.b16 %v4745, %v4741
      %v5214 = vpack.c.b16 %v4746, %v4742
      %v5215 = vpack.c.b16 %v4747, %v4743
      %v5216 = vpack.c.b16 %v4752, %v4748
      %v5217 = vpack.c.b16 %v4753, %v4749
      %v5218 = vpack.c.b16 %v4754, %v4750
      %v5219 = vpack.c.b16 %v4755, %v4751
      %v5220 = vpack.c.b16 %v4760, %v4756
      %v5221 = vpack.c.b16 %v4761, %v4757
      %v5222 = vpack.c.b16 %v4762, %v4758
      %v5223 = vpack.c.b16 %v4763, %v4759
      %v5224 = vpack.c.b16 %v4768, %v4764
      %v5225 = vpack.c.b16 %v4769, %v4765
      %v5226 = vpack.c.b16 %v4770, %v4766
      %v5227 = vpack.c.b16 %v4771, %v4767
      %v5228 = vpack.c.b16 %v4776, %v4772
      %v5229 = vpack.c.b16 %v4777, %v4773
      %v5230 = vpack.c.b16 %v4778, %v4774
      %v5231 = vpack.c.b16 %v4779, %v4775
      %v5232 = vpack.c.b16 %v4784, %v4780
      %v5233 = vpack.c.b16 %v4785, %v4781
      %v5234 = vpack.c.b16 %v4786, %v4782
      %v5235 = vpack.c.b16 %v4787, %v4783
      %v5236 = vpack.c.b16 %v4792, %v4788
      %v5237 = vpack.c.b16 %v4793, %v4789
      %v5238 = vpack.c.b16 %v4794, %v4790
      %v5239 = vpack.c.b16 %v4795, %v4791
      %v5240 = vpack.c.b16 %v4800, %v4796
      %v5241 = vpack.c.b16 %v4801, %v4797
      %v5242 = vpack.c.b16 %v4802, %v4798
      %v5243 = vpack.c.b16 %v4803, %v4799
      %v5244 = vpack.c.b16 %v4808, %v4804
      %v5245 = vpack.c.b16 %v4809, %v4805
      %v5246 = vpack.c.b16 %v4810, %v4806
      %v5247 = vpack.c.b16 %v4811, %v4807
      %v5248 = vpack.c.b16 %v4816, %v4812
      %v5249 = vpack.c.b16 %v4817, %v4813
      %v5250 = vpack.c.b16 %v4818, %v4814
      %v5251 = vpack.c.b16 %v4819, %v4815
      %v5252 = vpack.c.b16 %v4824, %v4820
      %v5253 = vpack.c.b16 %v4825, %v4821
      %v5254 = vpack.c.b16 %v4826, %v4822
      %v5255 = vpack.c.b16 %v4827, %v4823
      %v5256 = vpack.c.b16 %v4832, %v4828
      %v5257 = vpack.c.b16 %v4833, %v4829
      %v5258 = vpack.c.b16 %v4834, %v4830
      %v5259 = vpack.c.b16 %v4835, %v4831
      %v5260 = vpack.c.b16 %v4840, %v4836
      %v5261 = vpack.c.b16 %v4841, %v4837
      %v5262 = vpack.c.b16 %v4842, %v4838
      %v5263 = vpack.c.b16 %v4843, %v4839
      %v5264 = vpack.c.b16 %v4848, %v4844
      %v5265 = vpack.c.b16 %v4849, %v4845
      %v5266 = vpack.c.b16 %v4850, %v4846
      %v5267 = vpack.c.b16 %v4851, %v4847
      %v5268 = vpack.c.b16 %v4856, %v4852
      %v5269 = vpack.c.b16 %v4857, %v4853
      %v5270 = vpack.c.b16 %v4858, %v4854
      %v5271 = vpack.c.b16 %v4859, %v4855
      %v5272 = vpack.c.b16 %v4864, %v4860
      %v5273 = vpack.c.b16 %v4865, %v4861
      %v5274 = vpack.c.b16 %v4866, %v4862
      %v5275 = vpack.c.b16 %v4867, %v4863
      %v5276 = vpack.c.b16 %v4872, %v4868
      %v5277 = vpack.c.b16 %v4873, %v4869
      %v5278 = vpack.c.b16 %v4874, %v4870
      %v5279 = vpack.c.b16 %v4875, %v4871
      %v5280 = vpack.c.b16 %v4880, %v4876
      %v5281 = vpack.c.b16 %v4881, %v4877
      %v5282 = vpack.c.b16 %v4882, %v4878
      %v5283 = vpack.c.b16 %v4883, %v4879
      %v5284 = vpack.c.b16 %v4888, %v4884
      %v5285 = vpack.c.b16 %v4889, %v4885
      %v5286 = vpack.c.b16 %v4890, %v4886
      %v5287 = vpack.c.b16 %v4891, %v4887
      %v5288 = vpack.c.b16 %v4896, %v4892
      %v5289 = vpack.c.b16 %v4897, %v4893
      %v5290 = vpack.c.b16 %v4898, %v4894
      %v5291 = vpack.c.b16 %v4899, %v4895
      %v5292 = vpack.c.b16 %v4904, %v4900
      %v5293 = vpack.c.b16 %v4905, %v4901
      %v5294 = vpack.c.b16 %v4906, %v4902
      %v5295 = vpack.c.b16 %v4907, %v4903
      %v5296 = vpack.c.b16 %v4912, %v4908
      %v5297 = vpack.c.b16 %v4913, %v4909
      %v5298 = vpack.c.b16 %v4914, %v4910
      %v5299 = vpack.c.b16 %v4915, %v4911
      %5684 = vmatprep.subr.bf16.mxu0 %v4917
      %5685 = vmatpush1.bf16.msra.mxu0 %v4916
      %5686 = vmatprep.subr.bf16.mxu0 %v4921
      %5687 = vmatpush1.bf16.msra.mxu0 %v4920
      %5688 = vmatprep.subr.bf16.mxu0 %v4925
      %5689 = vmatpush1.bf16.msra.mxu0 %v4924
      %5690 = vmatprep.subr.bf16.mxu0 %v4929
      %5691 = vmatpush1.bf16.msra.mxu0 %v4928
      %5692 = vmatprep.subr.bf16.mxu0 %v4933
      %5693 = vmatpush1.bf16.msra.mxu0 %v4932
      %5694 = vmatprep.subr.bf16.mxu0 %v4937
      %5695 = vmatpush1.bf16.msra.mxu0 %v4936
      %5696 = vmatprep.subr.bf16.mxu0 %v4941
      %5697 = vmatpush1.bf16.msra.mxu0 %v4940
      %5698 = vmatprep.subr.bf16.mxu0 %v4945
      %5699 = vmatpush1.bf16.msra.mxu0 %v4944
      %5700 = vmatprep.subr.bf16.mxu0 %v4949
      %5701 = vmatpush1.bf16.msra.mxu0 %v4948
      %5702 = vmatprep.subr.bf16.mxu0 %v4953
      %5703 = vmatpush1.bf16.msra.mxu0 %v4952
      %5704 = vmatprep.subr.bf16.mxu0 %v4957
      %5705 = vmatpush1.bf16.msra.mxu0 %v4956
      %5706 = vmatprep.subr.bf16.mxu0 %v4961
      %5707 = vmatpush1.bf16.msra.mxu0 %v4960
      %5708 = vmatprep.subr.bf16.mxu0 %v4965
      %5709 = vmatpush1.bf16.msra.mxu0 %v4964
      %5710 = vmatprep.subr.bf16.mxu0 %v4969
      %5711 = vmatpush1.bf16.msra.mxu0 %v4968
      %5712 = vmatprep.subr.bf16.mxu0 %v4973
      %5713 = vmatpush1.bf16.msra.mxu0 %v4972
      %5714 = vmatprep.subr.bf16.mxu0 %v4977
      %5715 = vmatpush1.bf16.msra.mxu0 %v4976
      %5716 = vmatprep.mubr.bf16.mxu0 %v3348
      %5717 = vmatmul.mubr.bf16.gmra.mrb[0].mxu0 %v3347
      %v5718 = vpop.f32.mrb[0].mxu0
      %v5719 = vadd.f32 %v3747, %v5718
      %v5720 = vpop.f32.mrb[0].mxu0
      %v5721 = vadd.f32 %v3751, %v5720
      %v5722 = vpop.f32.mrb[0].mxu0
      %v5723 = vadd.f32 %v3747, %v5722
      %v5724 = vpop.f32.mrb[0].mxu0
      %v5725 = vadd.f32 %v3751, %v5724
      %5726 = vdwg.mxu0
      %5727 = vmatprep.subr.bf16.mxu0 %v4981
      %5728 = vmatpush1.bf16.msra.mxu0 %v4980
      %5729 = vmatprep.subr.bf16.mxu0 %v4985
      %5730 = vmatpush1.bf16.msra.mxu0 %v4984
      %5731 = vmatprep.subr.bf16.mxu0 %v4989
      %5732 = vmatpush1.bf16.msra.mxu0 %v4988
      %5733 = vmatprep.subr.bf16.mxu0 %v4993
      %5734 = vmatpush1.bf16.msra.mxu0 %v4992
      %5735 = vmatprep.subr.bf16.mxu0 %v4997
      %5736 = vmatpush1.bf16.msra.mxu0 %v4996
      %5737 = vmatprep.subr.bf16.mxu0 %v5001
      %5738 = vmatpush1.bf16.msra.mxu0 %v5000
      %5739 = vmatprep.subr.bf16.mxu0 %v5005
      %5740 = vmatpush1.bf16.msra.mxu0 %v5004
      %5741 = vmatprep.subr.bf16.mxu0 %v5009
      %5742 = vmatpush1.bf16.msra.mxu0 %v5008
      %5743 = vmatprep.subr.bf16.mxu0 %v5013
      %5744 = vmatpush1.bf16.msra.mxu0 %v5012
      %5745 = vmatprep.subr.bf16.mxu0 %v5017
      %5746 = vmatpush1.bf16.msra.mxu0 %v5016
      %5747 = vmatprep.subr.bf16.mxu0 %v5021
      %5748 = vmatpush1.bf16.msra.mxu0 %v5020
      %5749 = vmatprep.subr.bf16.mxu0 %v5025
      %5750 = vmatpush1.bf16.msra.mxu0 %v5024
      %5751 = vmatprep.subr.bf16.mxu0 %v5029
      %5752 = vmatpush1.bf16.msra.mxu0 %v5028
      %5753 = vmatprep.subr.bf16.mxu0 %v5033
      %5754 = vmatpush1.bf16.msra.mxu0 %v5032
      %5755 = vmatprep.subr.bf16.mxu0 %v5037
      %5756 = vmatpush1.bf16.msra.mxu0 %v5036
      %5757 = vmatprep.subr.bf16.mxu0 %v5041
      %5758 = vmatpush1.bf16.msra.mxu0 %v5040
      %5759 = vmatprep.mubr.bf16.mxu0 %v3350
      %5760 = vmatmul.mubr.bf16.gmra.mrb[0].mxu0 %v3349
      %v5761 = vpop.f32.mrb[0].mxu0
      %v5762 = vadd.f32 %v5719, %v5761
      %v5763 = vpop.f32.mrb[0].mxu0
      %v5764 = vadd.f32 %v5721, %v5763
      %v5765 = vpop.f32.mrb[0].mxu0
      %v5766 = vadd.f32 %v5723, %v5765
      %v5767 = vpop.f32.mrb[0].mxu0
      %v5768 = vadd.f32 %v5725, %v5767
      %5769 = vdwg.mxu0
      %5770 = vmatprep.subr.bf16.mxu0 %v5045
      %5771 = vmatpush1.bf16.msra.mxu0 %v5044
      %5772 = vmatprep.subr.bf16.mxu0 %v5049
      %5773 = vmatpush1.bf16.msra.mxu0 %v5048
      %5774 = vmatprep.subr.bf16.mxu0 %v5053
      %5775 = vmatpush1.bf16.msra.mxu0 %v5052
      %5776 = vmatprep.subr.bf16.mxu0 %v5057
      %5777 = vmatpush1.bf16.msra.mxu0 %v5056
      %5778 = vmatprep.subr.bf16.mxu0 %v5061
      %5779 = vmatpush1.bf16.msra.mxu0 %v5060
      %5780 = vmatprep.subr.bf16.mxu0 %v5065
      %5781 = vmatpush1.bf16.msra.mxu0 %v5064
      %5782 = vmatprep.subr.bf16.mxu0 %v5069
      %5783 = vmatpush1.bf16.msra.mxu0 %v5068
      %5784 = vmatprep.subr.bf16.mxu0 %v5073
      %5785 = vmatpush1.bf16.msra.mxu0 %v5072
      %5786 = vmatprep.subr.bf16.mxu0 %v5077
      %5787 = vmatpush1.bf16.msra.mxu0 %v5076
      %5788 = vmatprep.subr.bf16.mxu0 %v5081
      %5789 = vmatpush1.bf16.msra.mxu0 %v5080
      %5790 = vmatprep.subr.bf16.mxu0 %v5085
      %5791 = vmatpush1.bf16.msra.mxu0 %v5084
      %5792 = vmatprep.subr.bf16.mxu0 %v5089
      %5793 = vmatpush1.bf16.msra.mxu0 %v5088
      %5794 = vmatprep.subr.bf16.mxu0 %v5093
      %5795 = vmatpush1.bf16.msra.mxu0 %v5092
      %5796 = vmatprep.subr.bf16.mxu0 %v5097
      %5797 = vmatpush1.bf16.msra.mxu0 %v5096
      %5798 = vmatprep.subr.bf16.mxu0 %v5101
      %5799 = vmatpush1.bf16.msra.mxu0 %v5100
      %5800 = vmatprep.subr.bf16.mxu0 %v5105
      %5801 = vmatpush1.bf16.msra.mxu0 %v5104
      %5802 = vmatprep.mubr.bf16.mxu0 %v3352
      %5803 = vmatmul.mubr.bf16.gmra.mrb[0].mxu0 %v3351
      %v5804 = vpop.f32.mrb[0].mxu0
      %v5805 = vadd.f32 %v5762, %v5804
      %v5806 = vpop.f32.mrb[0].mxu0
      %v5807 = vadd.f32 %v5764, %v5806
      %v5808 = vpop.f32.mrb[0].mxu0
      %v5809 = vadd.f32 %v5766, %v5808
      %v5810 = vpop.f32.mrb[0].mxu0
      %v5811 = vadd.f32 %v5768, %v5810
      %5812 = vdwg.mxu0
      %5813 = vmatprep.subr.bf16.mxu0 %v5109
      %5814 = vmatpush1.bf16.msra.mxu0 %v5108
      %5815 = vmatprep.subr.bf16.mxu0 %v5113
      %5816 = vmatpush1.bf16.msra.mxu0 %v5112
      %5817 = vmatprep.subr.bf16.mxu0 %v5117
      %5818 = vmatpush1.bf16.msra.mxu0 %v5116
      %5819 = vmatprep.subr.bf16.mxu0 %v5121
      %5820 = vmatpush1.bf16.msra.mxu0 %v5120
      %5821 = vmatprep.subr.bf16.mxu0 %v5125
      %5822 = vmatpush1.bf16.msra.mxu0 %v5124
      %5823 = vmatprep.subr.bf16.mxu0 %v5129
      %5824 = vmatpush1.bf16.msra.mxu0 %v5128
      %5825 = vmatprep.subr.bf16.mxu0 %v5133
      %5826 = vmatpush1.bf16.msra.mxu0 %v5132
      %5827 = vmatprep.subr.bf16.mxu0 %v5137
      %5828 = vmatpush1.bf16.msra.mxu0 %v5136
      %5829 = vmatprep.subr.bf16.mxu0 %v5141
      %5830 = vmatpush1.bf16.msra.mxu0 %v5140
      %5831 = vmatprep.subr.bf16.mxu0 %v5145
      %5832 = vmatpush1.bf16.msra.mxu0 %v5144
      %5833 = vmatprep.subr.bf16.mxu0 %v5149
      %5834 = vmatpush1.bf16.msra.mxu0 %v5148
      %5835 = vmatprep.subr.bf16.mxu0 %v5153
      %5836 = vmatpush1.bf16.msra.mxu0 %v5152
      %5837 = vmatprep.subr.bf16.mxu0 %v5157
      %5838 = vmatpush1.bf16.msra.mxu0 %v5156
      %5839 = vmatprep.subr.bf16.mxu0 %v5161
      %5840 = vmatpush1.bf16.msra.mxu0 %v5160
      %5841 = vmatprep.subr.bf16.mxu0 %v5165
      %5842 = vmatpush1.bf16.msra.mxu0 %v5164
      %5843 = vmatprep.subr.bf16.mxu0 %v5169
      %5844 = vmatpush1.bf16.msra.mxu0 %v5168
      %5845 = vmatprep.mubr.bf16.mxu0 %v3354
      %5846 = vmatmul.mubr.bf16.gmra.mrb[0].mxu0 %v3353
      %v5847 = vpop.f32.mrb[0].mxu0
      %v5848 = vadd.f32 %v5805, %v5847
      %v5849 = vpop.f32.mrb[0].mxu0
      %v5850 = vadd.f32 %v5807, %v5849
      %v5851 = vpop.f32.mrb[0].mxu0
      %v5852 = vadd.f32 %v5809, %v5851
      %v5853 = vpop.f32.mrb[0].mxu0
      %v5854 = vadd.f32 %v5811, %v5853
      %5855 = vdwg.mxu0
      %5856 = vmatprep.subr.bf16.mxu0 %v5173
      %5857 = vmatpush1.bf16.msra.mxu0 %v5172
      %5858 = vmatprep.subr.bf16.mxu0 %v5177
      %5859 = vmatpush1.bf16.msra.mxu0 %v5176
      %5860 = vmatprep.subr.bf16.mxu0 %v5181
      %5861 = vmatpush1.bf16.msra.mxu0 %v5180
      %5862 = vmatprep.subr.bf16.mxu0 %v5185
      %5863 = vmatpush1.bf16.msra.mxu0 %v5184
      %5864 = vmatprep.subr.bf16.mxu0 %v5189
      %5865 = vmatpush1.bf16.msra.mxu0 %v5188
      %5866 = vmatprep.subr.bf16.mxu0 %v5193
      %5867 = vmatpush1.bf16.msra.mxu0 %v5192
      %5868 = vmatprep.subr.bf16.mxu0 %v5197
      %5869 = vmatpush1.bf16.msra.mxu0 %v5196
      %5870 = vmatprep.subr.bf16.mxu0 %v5201
      %5871 = vmatpush1.bf16.msra.mxu0 %v5200
      %5872 = vmatprep.subr.bf16.mxu0 %v5205
      %5873 = vmatpush1.bf16.msra.mxu0 %v5204
      %5874 = vmatprep.subr.bf16.mxu0 %v5209
      %5875 = vmatpush1.bf16.msra.mxu0 %v5208
      %5876 = vmatprep.subr.bf16.mxu0 %v5213
      %5877 = vmatpush1.bf16.msra.mxu0 %v5212
      %5878 = vmatprep.subr.bf16.mxu0 %v5217
      %5879 = vmatpush1.bf16.msra.mxu0 %v5216
      %5880 = vmatprep.subr.bf16.mxu0 %v5221
      %5881 = vmatpush1.bf16.msra.mxu0 %v5220
      %5882 = vmatprep.subr.bf16.mxu0 %v5225
      %5883 = vmatpush1.bf16.msra.mxu0 %v5224
      %5884 = vmatprep.subr.bf16.mxu0 %v5229
      %5885 = vmatpush1.bf16.msra.mxu0 %v5228
      %5886 = vmatprep.subr.bf16.mxu0 %v5233
      %5887 = vmatpush1.bf16.msra.mxu0 %v5232
      %5888 = vmatprep.mubr.bf16.mxu0 %v3356
      %5889 = vmatmul.mubr.bf16.gmra.mrb[0].mxu0 %v3355
      %v5890 = vpop.f32.mrb[0].mxu0
      %v5891 = vadd.f32 %v5848, %v5890
      %v5892 = vpop.f32.mrb[0].mxu0
      %v5893 = vadd.f32 %v5850, %v5892
      %v5894 = vpop.f32.mrb[0].mxu0
      %v5895 = vadd.f32 %v5852, %v5894
      %v5896 = vpop.f32.mrb[0].mxu0
      %v5897 = vadd.f32 %v5854, %v5896
      %5898 = vdwg.mxu0
      %5899 = vmatprep.subr.bf16.mxu0 %v5237
      %5900 = vmatpush1.bf16.msra.mxu0 %v5236
      %5901 = vmatprep.subr.bf16.mxu0 %v5241
      %5902 = vmatpush1.bf16.msra.mxu0 %v5240
      %5903 = vmatprep.subr.bf16.mxu0 %v5245
      %5904 = vmatpush1.bf16.msra.mxu0 %v5244
      %5905 = vmatprep.subr.bf16.mxu0 %v5249
      %5906 = vmatpush1.bf16.msra.mxu0 %v5248
      %5907 = vmatprep.subr.bf16.mxu0 %v5253
      %5908 = vmatpush1.bf16.msra.mxu0 %v5252
      %5909 = vmatprep.subr.bf16.mxu0 %v5257
      %5910 = vmatpush1.bf16.msra.mxu0 %v5256
      %5911 = vmatprep.subr.bf16.mxu0 %v5261
      %5912 = vmatpush1.bf16.msra.mxu0 %v5260
      %5913 = vmatprep.subr.bf16.mxu0 %v5265
      %5914 = vmatpush1.bf16.msra.mxu0 %v5264
      %5915 = vmatprep.subr.bf16.mxu0 %v5269
      %5916 = vmatpush1.bf16.msra.mxu0 %v5268
      %5917 = vmatprep.subr.bf16.mxu0 %v5273
      %5918 = vmatpush1.bf16.msra.mxu0 %v5272
      %5919 = vmatprep.subr.bf16.mxu0 %v5277
      %5920 = vmatpush1.bf16.msra.mxu0 %v5276
      %5921 = vmatprep.subr.bf16.mxu0 %v5281
      %5922 = vmatpush1.bf16.msra.mxu0 %v5280
      %5923 = vmatprep.subr.bf16.mxu0 %v5285
      %5924 = vmatpush1.bf16.msra.mxu0 %v5284
      %5925 = vmatprep.subr.bf16.mxu0 %v5289
      %5926 = vmatpush1.bf16.msra.mxu0 %v5288
      %5927 = vmatprep.subr.bf16.mxu0 %v5293
      %5928 = vmatpush1.bf16.msra.mxu0 %v5292
      %5929 = vmatprep.subr.bf16.mxu0 %v5297
      %5930 = vmatpush1.bf16.msra.mxu0 %v5296
      %5931 = vmatprep.mubr.bf16.mxu0 %v3358
      %5932 = vmatmul.mubr.bf16.gmra.mrb[0].mxu0 %v3357
      %v5933 = vpop.f32.mrb[0].mxu0
      %v5934 = vadd.f32 %v5891, %v5933
      %v5935 = vpop.f32.mrb[0].mxu0
      %v5936 = vadd.f32 %v5893, %v5935
      %v5937 = vpop.f32.mrb[0].mxu0
      %v5938 = vadd.f32 %v5895, %v5937
      %v5939 = vpop.f32.mrb[0].mxu0
      %v5940 = vadd.f32 %v5897, %v5939
      %5941 = vdwg.mxu0
      %5942 = vmatprep.subr.bf16.mxu0 %v4919
      %5943 = vmatpush1.bf16.msra.mxu0 %v4918
      %5944 = vmatprep.subr.bf16.mxu0 %v4923
      %5945 = vmatpush1.bf16.msra.mxu0 %v4922
      %5946 = vmatprep.subr.bf16.mxu0 %v4927
      %5947 = vmatpush1.bf16.msra.mxu0 %v4926
      %5948 = vmatprep.subr.bf16.mxu0 %v4931
      %5949 = vmatpush1.bf16.msra.mxu0 %v4930
      %5950 = vmatprep.subr.bf16.mxu0 %v4935
      %5951 = vmatpush1.bf16.msra.mxu0 %v4934
      %5952 = vmatprep.subr.bf16.mxu0 %v4939
      %5953 = vmatpush1.bf16.msra.mxu0 %v4938
      %5954 = vmatprep.subr.bf16.mxu0 %v4943
      %5955 = vmatpush1.bf16.msra.mxu0 %v4942
      %5956 = vmatprep.subr.bf16.mxu0 %v4947
      %5957 = vmatpush1.bf16.msra.mxu0 %v4946
      %5958 = vmatprep.subr.bf16.mxu0 %v4951
      %5959 = vmatpush1.bf16.msra.mxu0 %v4950
      %5960 = vmatprep.subr.bf16.mxu0 %v4955
      %5961 = vmatpush1.bf16.msra.mxu0 %v4954
      %5962 = vmatprep.subr.bf16.mxu0 %v4959
      %5963 = vmatpush1.bf16.msra.mxu0 %v4958
      %5964 = vmatprep.subr.bf16.mxu0 %v4963
      %5965 = vmatpush1.bf16.msra.mxu0 %v4962
      %5966 = vmatprep.subr.bf16.mxu0 %v4967
      %5967 = vmatpush1.bf16.msra.mxu0 %v4966
      %5968 = vmatprep.subr.bf16.mxu0 %v4971
      %5969 = vmatpush1.bf16.msra.mxu0 %v4970
      %5970 = vmatprep.subr.bf16.mxu0 %v4975
      %5971 = vmatpush1.bf16.msra.mxu0 %v4974
      %5972 = vmatprep.subr.bf16.mxu0 %v4979
      %5973 = vmatpush1.bf16.msra.mxu0 %v4978
      %5974 = vmatprep.mubr.bf16.mxu0 %v3348
      %5975 = vmatmul.mubr.bf16.gmra.mrb[0].mxu0 %v3347
      %v5976 = vpop.f32.mrb[0].mxu0
      %v5977 = vadd.f32 %v3755, %v5976
      %v5978 = vpop.f32.mrb[0].mxu0
      %v5979 = vadd.f32 %v3759, %v5978
      %v5980 = vpop.f32.mrb[0].mxu0
      %v5981 = vadd.f32 %v3755, %v5980
      %v5982 = vpop.f32.mrb[0].mxu0
      %v5983 = vadd.f32 %v3759, %v5982
      %5984 = vdwg.mxu0
      %5985 = vmatprep.subr.bf16.mxu0 %v4983
      %5986 = vmatpush1.bf16.msra.mxu0 %v4982
      %5987 = vmatprep.subr.bf16.mxu0 %v4987
      %5988 = vmatpush1.bf16.msra.mxu0 %v4986
      %5989 = vmatprep.subr.bf16.mxu0 %v4991
      %5990 = vmatpush1.bf16.msra.mxu0 %v4990
      %5991 = vmatprep.subr.bf16.mxu0 %v4995
      %5992 = vmatpush1.bf16.msra.mxu0 %v4994
      %5993 = vmatprep.subr.bf16.mxu0 %v4999
      %5994 = vmatpush1.bf16.msra.mxu0 %v4998
      %5995 = vmatprep.subr.bf16.mxu0 %v5003
      %5996 = vmatpush1.bf16.msra.mxu0 %v5002
      %5997 = vmatprep.subr.bf16.mxu0 %v5007
      %5998 = vmatpush1.bf16.msra.mxu0 %v5006
      %5999 = vmatprep.subr.bf16.mxu0 %v5011
      %6000 = vmatpush1.bf16.msra.mxu0 %v5010
      %6001 = vmatprep.subr.bf16.mxu0 %v5015
      %6002 = vmatpush1.bf16.msra.mxu0 %v5014
      %6003 = vmatprep.subr.bf16.mxu0 %v5019
      %6004 = vmatpush1.bf16.msra.mxu0 %v5018
      %6005 = vmatprep.subr.bf16.mxu0 %v5023
      %6006 = vmatpush1.bf16.msra.mxu0 %v5022
      %6007 = vmatprep.subr.bf16.mxu0 %v5027
      %6008 = vmatpush1.bf16.msra.mxu0 %v5026
      %6009 = vmatprep.subr.bf16.mxu0 %v5031
      %6010 = vmatpush1.bf16.msra.mxu0 %v5030
      %6011 = vmatprep.subr.bf16.mxu0 %v5035
      %6012 = vmatpush1.bf16.msra.mxu0 %v5034
      %6013 = vmatprep.subr.bf16.mxu0 %v5039
      %6014 = vmatpush1.bf16.msra.mxu0 %v5038
      %6015 = vmatprep.subr.bf16.mxu0 %v5043
      %6016 = vmatpush1.bf16.msra.mxu0 %v5042
      %6017 = vmatprep.mubr.bf16.mxu0 %v3350
      %6018 = vmatmul.mubr.bf16.gmra.mrb[0].mxu0 %v3349
      %v6019 = vpop.f32.mrb[0].mxu0
      %v6020 = vadd.f32 %v5977, %v6019
      %v6021 = vpop.f32.mrb[0].mxu0
      %v6022 = vadd.f32 %v5979, %v6021
      %v6023 = vpop.f32.mrb[0].mxu0
      %v6024 = vadd.f32 %v5981, %v6023
      %v6025 = vpop.f32.mrb[0].mxu0
      %v6026 = vadd.f32 %v5983, %v6025
      %6027 = vdwg.mxu0
      %6028 = vmatprep.subr.bf16.mxu0 %v5047
      %6029 = vmatpush1.bf16.msra.mxu0 %v5046
      %6030 = vmatprep.subr.bf16.mxu0 %v5051
      %6031 = vmatpush1.bf16.msra.mxu0 %v5050
      %6032 = vmatprep.subr.bf16.mxu0 %v5055
      %6033 = vmatpush1.bf16.msra.mxu0 %v5054
      %6034 = vmatprep.subr.bf16.mxu0 %v5059
      %6035 = vmatpush1.bf16.msra.mxu0 %v5058
      %6036 = vmatprep.subr.bf16.mxu0 %v5063
      %6037 = vmatpush1.bf16.msra.mxu0 %v5062
      %6038 = vmatprep.subr.bf16.mxu0 %v5067
      %6039 = vmatpush1.bf16.msra.mxu0 %v5066
      %6040 = vmatprep.subr.bf16.mxu0 %v5071
      %6041 = vmatpush1.bf16.msra.mxu0 %v5070
      %6042 = vmatprep.subr.bf16.mxu0 %v5075
      %6043 = vmatpush1.bf16.msra.mxu0 %v5074
      %6044 = vmatprep.subr.bf16.mxu0 %v5079
      %6045 = vmatpush1.bf16.msra.mxu0 %v5078
      %6046 = vmatprep.subr.bf16.mxu0 %v5083
      %6047 = vmatpush1.bf16.msra.mxu0 %v5082
      %6048 = vmatprep.subr.bf16.mxu0 %v5087
      %6049 = vmatpush1.bf16.msra.mxu0 %v5086
      %6050 = vmatprep.subr.bf16.mxu0 %v5091
      %6051 = vmatpush1.bf16.msra.mxu0 %v5090
      %6052 = vmatprep.subr.bf16.mxu0 %v5095
      %6053 = vmatpush1.bf16.msra.mxu0 %v5094
      %6054 = vmatprep.subr.bf16.mxu0 %v5099
      %6055 = vmatpush1.bf16.msra.mxu0 %v5098
      %6056 = vmatprep.subr.bf16.mxu0 %v5103
      %6057 = vmatpush1.bf16.msra.mxu0 %v5102
      %6058 = vmatprep.subr.bf16.mxu0 %v5107
      %6059 = vmatpush1.bf16.msra.mxu0 %v5106
      %6060 = vmatprep.mubr.bf16.mxu0 %v3352
      %6061 = vmatmul.mubr.bf16.gmra.mrb[0].mxu0 %v3351
      %v6062 = vpop.f32.mrb[0].mxu0
      %v6063 = vadd.f32 %v6020, %v6062
      %v6064 = vpop.f32.mrb[0].mxu0
      %v6065 = vadd.f32 %v6022, %v6064
      %v6066 = vpop.f32.mrb[0].mxu0
      %v6067 = vadd.f32 %v6024, %v6066
      %v6068 = vpop.f32.mrb[0].mxu0
      %v6069 = vadd.f32 %v6026, %v6068
      %6070 = vdwg.mxu0
      %6071 = vmatprep.subr.bf16.mxu0 %v5111
      %6072 = vmatpush1.bf16.msra.mxu0 %v5110
      %6073 = vmatprep.subr.bf16.mxu0 %v5115
      %6074 = vmatpush1.bf16.msra.mxu0 %v5114
      %6075 = vmatprep.subr.bf16.mxu0 %v5119
      %6076 = vmatpush1.bf16.msra.mxu0 %v5118
      %6077 = vmatprep.subr.bf16.mxu0 %v5123
      %6078 = vmatpush1.bf16.msra.mxu0 %v5122
      %6079 = vmatprep.subr.bf16.mxu0 %v5127
      %6080 = vmatpush1.bf16.msra.mxu0 %v5126
      %6081 = vmatprep.subr.bf16.mxu0 %v5131
      %6082 = vmatpush1.bf16.msra.mxu0 %v5130
      %6083 = vmatprep.subr.bf16.mxu0 %v5135
      %6084 = vmatpush1.bf16.msra.mxu0 %v5134
      %6085 = vmatprep.subr.bf16.mxu0 %v5139
      %6086 = vmatpush1.bf16.msra.mxu0 %v5138
      %6087 = vmatprep.subr.bf16.mxu0 %v5143
      %6088 = vmatpush1.bf16.msra.mxu0 %v5142
      %6089 = vmatprep.subr.bf16.mxu0 %v5147
      %6090 = vmatpush1.bf16.msra.mxu0 %v5146
      %6091 = vmatprep.subr.bf16.mxu0 %v5151
      %6092 = vmatpush1.bf16.msra.mxu0 %v5150
      %6093 = vmatprep.subr.bf16.mxu0 %v5155
      %6094 = vmatpush1.bf16.msra.mxu0 %v5154
      %6095 = vmatprep.subr.bf16.mxu0 %v5159
      %6096 = vmatpush1.bf16.msra.mxu0 %v5158
      %6097 = vmatprep.subr.bf16.mxu0 %v5163
      %6098 = vmatpush1.bf16.msra.mxu0 %v5162
      %6099 = vmatprep.subr.bf16.mxu0 %v5167
      %6100 = vmatpush1.bf16.msra.mxu0 %v5166
      %6101 = vmatprep.subr.bf16.mxu0 %v5171
      %6102 = vmatpush1.bf16.msra.mxu0 %v5170
      %6103 = vmatprep.mubr.bf16.mxu0 %v3354
      %6104 = vmatmul.mubr.bf16.gmra.mrb[0].mxu0 %v3353
      %v6105 = vpop.f32.mrb[0].mxu0
      %v6106 = vadd.f32 %v6063, %v6105
      %v6107 = vpop.f32.mrb[0].mxu0
      %v6108 = vadd.f32 %v6065, %v6107
      %v6109 = vpop.f32.mrb[0].mxu0
      %v6110 = vadd.f32 %v6067, %v6109
      %v6111 = vpop.f32.mrb[0].mxu0
      %v6112 = vadd.f32 %v6069, %v6111
      %6113 = vdwg.mxu0
      %6114 = vmatprep.subr.bf16.mxu0 %v5175
      %6115 = vmatpush1.bf16.msra.mxu0 %v5174
      %6116 = vmatprep.subr.bf16.mxu0 %v5179
      %6117 = vmatpush1.bf16.msra.mxu0 %v5178
      %6118 = vmatprep.subr.bf16.mxu0 %v5183
      %6119 = vmatpush1.bf16.msra.mxu0 %v5182
      %6120 = vmatprep.subr.bf16.mxu0 %v5187
      %6121 = vmatpush1.bf16.msra.mxu0 %v5186
      %6122 = vmatprep.subr.bf16.mxu0 %v5191
      %6123 = vmatpush1.bf16.msra.mxu0 %v5190
      %6124 = vmatprep.subr.bf16.mxu0 %v5195
      %6125 = vmatpush1.bf16.msra.mxu0 %v5194
      %6126 = vmatprep.subr.bf16.mxu0 %v5199
      %6127 = vmatpush1.bf16.msra.mxu0 %v5198
      %6128 = vmatprep.subr.bf16.mxu0 %v5203
      %6129 = vmatpush1.bf16.msra.mxu0 %v5202
      %6130 = vmatprep.subr.bf16.mxu0 %v5207
      %6131 = vmatpush1.bf16.msra.mxu0 %v5206
      %6132 = vmatprep.subr.bf16.mxu0 %v5211
      %6133 = vmatpush1.bf16.msra.mxu0 %v5210
      %6134 = vmatprep.subr.bf16.mxu0 %v5215
      %6135 = vmatpush1.bf16.msra.mxu0 %v5214
      %6136 = vmatprep.subr.bf16.mxu0 %v5219
      %6137 = vmatpush1.bf16.msra.mxu0 %v5218
      %6138 = vmatprep.subr.bf16.mxu0 %v5223
      %6139 = vmatpush1.bf16.msra.mxu0 %v5222
      %6140 = vmatprep.subr.bf16.mxu0 %v5227
      %6141 = vmatpush1.bf16.msra.mxu0 %v5226
      %6142 = vmatprep.subr.bf16.mxu0 %v5231
      %6143 = vmatpush1.bf16.msra.mxu0 %v5230
      %6144 = vmatprep.subr.bf16.mxu0 %v5235
      %6145 = vmatpush1.bf16.msra.mxu0 %v5234
      %6146 = vmatprep.mubr.bf16.mxu0 %v3356
      %6147 = vmatmul.mubr.bf16.gmra.mrb[0].mxu0 %v3355
      %v6148 = vpop.f32.mrb[0].mxu0
      %v6149 = vadd.f32 %v6106, %v6148
      %v6150 = vpop.f32.mrb[0].mxu0
      %v6151 = vadd.f32 %v6108, %v6150
      %v6152 = vpop.f32.mrb[0].mxu0
      %v6153 = vadd.f32 %v6110, %v6152
      %v6154 = vpop.f32.mrb[0].mxu0
      %v6155 = vadd.f32 %v6112, %v6154
      %6156 = vdwg.mxu0
      %6157 = vmatprep.subr.bf16.mxu0 %v5239
      %6158 = vmatpush1.bf16.msra.mxu0 %v5238
      %6159 = vmatprep.subr.bf16.mxu0 %v5243
      %6160 = vmatpush1.bf16.msra.mxu0 %v5242
      %6161 = vmatprep.subr.bf16.mxu0 %v5247
      %6162 = vmatpush1.bf16.msra.mxu0 %v5246
      %6163 = vmatprep.subr.bf16.mxu0 %v5251
      %6164 = vmatpush1.bf16.msra.mxu0 %v5250
      %6165 = vmatprep.subr.bf16.mxu0 %v5255
      %6166 = vmatpush1.bf16.msra.mxu0 %v5254
      %6167 = vmatprep.subr.bf16.mxu0 %v5259
      %6168 = vmatpush1.bf16.msra.mxu0 %v5258
      %6169 = vmatprep.subr.bf16.mxu0 %v5263
      %6170 = vmatpush1.bf16.msra.mxu0 %v5262
      %6171 = vmatprep.subr.bf16.mxu0 %v5267
      %6172 = vmatpush1.bf16.msra.mxu0 %v5266
      %6173 = vmatprep.subr.bf16.mxu0 %v5271
      %6174 = vmatpush1.bf16.msra.mxu0 %v5270
      %6175 = vmatprep.subr.bf16.mxu0 %v5275
      %6176 = vmatpush1.bf16.msra.mxu0 %v5274
      %6177 = vmatprep.subr.bf16.mxu0 %v5279
      %6178 = vmatpush1.bf16.msra.mxu0 %v5278
      %6179 = vmatprep.subr.bf16.mxu0 %v5283
      %6180 = vmatpush1.bf16.msra.mxu0 %v5282
      %6181 = vmatprep.subr.bf16.mxu0 %v5287
      %6182 = vmatpush1.bf16.msra.mxu0 %v5286
      %6183 = vmatprep.subr.bf16.mxu0 %v5291
      %6184 = vmatpush1.bf16.msra.mxu0 %v5290
      %6185 = vmatprep.subr.bf16.mxu0 %v5295
      %6186 = vmatpush1.bf16.msra.mxu0 %v5294
      %6187 = vmatprep.subr.bf16.mxu0 %v5299
      %6188 = vmatpush1.bf16.msra.mxu0 %v5298
      %6189 = vmatprep.mubr.bf16.mxu0 %v3358
      %6190 = vmatmul.mubr.bf16.gmra.mrb[0].mxu0 %v3357
      %v6191 = vpop.f32.mrb[0].mxu0
      %v6192 = vadd.f32 %v6149, %v6191
      %v6193 = vpop.f32.mrb[0].mxu0
      %v6194 = vadd.f32 %v6151, %v6193
      %v6195 = vpop.f32.mrb[0].mxu0
      %v6196 = vadd.f32 %v6153, %v6195
      %v6197 = vpop.f32.mrb[0].mxu0
      %v6198 = vadd.f32 %v6155, %v6197
      %6199 = vdwg.mxu0
      %v6200 = vadd.f32 %v5934, %v5938
      %v6201 = vrot.slane %v6200, 4
      %v6202 = vadd.f32 %v6200, %v6201
      %v6203 = vrot.slane %v6202, 2
      %v6204 = vadd.f32 %v6202, %v6203
      %v6205 = vrot.slane %v6204, 1
      %v6206 = vadd.f32 %v6204, %v6205
      %v6207 = vadd.f32 %v5936, %v5940
      %v6208 = vrot.slane %v6207, 4
      %v6209 = vadd.f32 %v6207, %v6208
      %v6210 = vrot.slane %v6209, 2
      %v6211 = vadd.f32 %v6209, %v6210
      %v6212 = vrot.slane %v6211, 1
      %v6213 = vadd.f32 %v6211, %v6212
      %v6214 = vadd.f32 %v6192, %v6196
      %v6215 = vrot.slane %v6214, 4
      %v6216 = vadd.f32 %v6214, %v6215
      %v6217 = vrot.slane %v6216, 2
      %v6218 = vadd.f32 %v6216, %v6217
      %v6219 = vrot.slane %v6218, 1
      %v6220 = vadd.f32 %v6218, %v6219
      %v6221 = vadd.f32 %v6194, %v6198
      %v6222 = vrot.slane %v6221, 4
      %v6223 = vadd.f32 %v6221, %v6222
      %v6224 = vrot.slane %v6223, 2
      %v6225 = vadd.f32 %v6223, %v6224
      %v6226 = vrot.slane %v6225, 1
      %v6227 = vadd.f32 %v6225, %v6226
      %v6228 = vmul.f32 %v6206, 0.00390625
      %v6229 = vmul.f32 %v6213, 0.00390625
      %v6230 = vmul.f32 %v6220, 0.00390625
      %v6231 = vmul.f32 %v6227, 0.00390625
      %v6232 = vld [vmem:[%s5] sm:$0xff]
      %v6233 = vld [vmem:[%s5 + $0x8] sm:$0xff]
      %v6234 = vld [vmem:[%s5 + $0x10] sm:$0xff]
      %v6235 = vld [vmem:[%s5 + $0x18] sm:$0xff]
      %v6236 = vld [vmem:[%s5 + $0x20] sm:$0xff]
      %v6237 = vld [vmem:[%s5 + $0x28] sm:$0xff]
      %v6238 = vld [vmem:[%s5 + $0x30] sm:$0xff]
      %v6239 = vld [vmem:[%s5 + $0x38] sm:$0xff]
      %v6240 = vld [vmem:[%s5 + $0x40] sm:$0xff]
      %v6241 = vld [vmem:[%s5 + $0x48] sm:$0xff]
      %v6242 = vld [vmem:[%s5 + $0x50] sm:$0xff]
      %v6243 = vld [vmem:[%s5 + $0x58] sm:$0xff]
      %v6244 = vld [vmem:[%s5 + $0x60] sm:$0xff]
      %v6245 = vld [vmem:[%s5 + $0x68] sm:$0xff]
      %v6246 = vld [vmem:[%s5 + $0x70] sm:$0xff]
      %v6247 = vld [vmem:[%s5 + $0x78] sm:$0xff]
      %v6248 = vld [vmem:[%s5 + $0x80] sm:$0xff]
      %v6249 = vld [vmem:[%s5 + $0x88] sm:$0xff]
      %v6250 = vld [vmem:[%s5 + $0x90] sm:$0xff]
      %v6251 = vld [vmem:[%s5 + $0x98] sm:$0xff]
      %v6252 = vld [vmem:[%s5 + $0xa0] sm:$0xff]
      %v6253 = vld [vmem:[%s5 + $0xa8] sm:$0xff]
      %v6254 = vld [vmem:[%s5 + $0xb0] sm:$0xff]
      %v6255 = vld [vmem:[%s5 + $0xb8] sm:$0xff]
      %v6256 = vld [vmem:[%s5 + $0xc0] sm:$0xff]
      %v6257 = vld [vmem:[%s5 + $0xc8] sm:$0xff]
      %v6258 = vld [vmem:[%s5 + $0xd0] sm:$0xff]
      %v6259 = vld [vmem:[%s5 + $0xd8] sm:$0xff]
      %v6260 = vld [vmem:[%s5 + $0xe0] sm:$0xff]
      %v6261 = vld [vmem:[%s5 + $0xe8] sm:$0xff]
      %v6262 = vld [vmem:[%s5 + $0xf0] sm:$0xff]
      %v6263 = vld [vmem:[%s5 + $0xf8] sm:$0xff]
      %v6264 = vld [vmem:[%s5 + $0x100] sm:$0xff]
      %v6265 = vld [vmem:[%s5 + $0x108] sm:$0xff]
      %v6266 = vld [vmem:[%s5 + $0x110] sm:$0xff]
      %v6267 = vld [vmem:[%s5 + $0x118] sm:$0xff]
      %v6268 = vld [vmem:[%s5 + $0x120] sm:$0xff]
      %v6269 = vld [vmem:[%s5 + $0x128] sm:$0xff]
      %v6270 = vld [vmem:[%s5 + $0x130] sm:$0xff]
      %v6271 = vld [vmem:[%s5 + $0x138] sm:$0xff]
      %v6272 = vld [vmem:[%s5 + $0x140] sm:$0xff]
      %v6273 = vld [vmem:[%s5 + $0x148] sm:$0xff]
      %v6274 = vld [vmem:[%s5 + $0x150] sm:$0xff]
      %v6275 = vld [vmem:[%s5 + $0x158] sm:$0xff]
      %v6276 = vld [vmem:[%s5 + $0x160] sm:$0xff]
      %v6277 = vld [vmem:[%s5 + $0x168] sm:$0xff]
      %v6278 = vld [vmem:[%s5 + $0x170] sm:$0xff]
      %v6279 = vld [vmem:[%s5 + $0x178] sm:$0xff]
      %v6280 = vld [vmem:[%s5 + $0x180] sm:$0xff]
      %v6281 = vld [vmem:[%s5 + $0x188] sm:$0xff]
      %v6282 = vld [vmem:[%s5 + $0x190] sm:$0xff]
      %v6283 = vld [vmem:[%s5 + $0x198] sm:$0xff]
      %v6284 = vld [vmem:[%s5 + $0x1a0] sm:$0xff]
      %v6285 = vld [vmem:[%s5 + $0x1a8] sm:$0xff]
      %v6286 = vld [vmem:[%s5 + $0x1b0] sm:$0xff]
      %v6287 = vld [vmem:[%s5 + $0x1b8] sm:$0xff]
      %v6288 = vld [vmem:[%s5 + $0x1c0] sm:$0xff]
      %v6289 = vld [vmem:[%s5 + $0x1c8] sm:$0xff]
      %v6290 = vld [vmem:[%s5 + $0x1d0] sm:$0xff]
      %v6291 = vld [vmem:[%s5 + $0x1d8] sm:$0xff]
      %v6292 = vld [vmem:[%s5 + $0x1e0] sm:$0xff]
      %v6293 = vld [vmem:[%s5 + $0x1e8] sm:$0xff]
      %v6294 = vld [vmem:[%s5 + $0x1f0] sm:$0xff]
      %v6295 = vld [vmem:[%s5 + $0x1f8] sm:$0xff]
      %v6296 = vld [vmem:[%s6] sm:$0x1]
      %6297 = vmatprep.subr.mxu0 0.0
      %6298 = vmatpush1.msra.mxu0 %v6232
      %6299 = vmatprep.subr.mxu0 0.0
      %6300 = vmatpush1.msra.mxu0 %v6233
      %6301 = vmatprep.subr.mxu0 0.0
      %6302 = vmatpush1.msra.mxu0 %v6234
      %6303 = vmatprep.subr.mxu0 0.0
      %6304 = vmatpush1.msra.mxu0 %v6235
      %6305 = vmatprep.subr.mxu0 0.0
      %6306 = vmatpush1.msra.mxu0 %v6236
      %6307 = vmatprep.subr.mxu0 0.0
      %6308 = vmatpush1.msra.mxu0 %v6237
      %6309 = vmatprep.subr.mxu0 0.0
      %6310 = vmatpush1.msra.mxu0 %v6238
      %6311 = vmatprep.subr.mxu0 0.0
      %6312 = vmatpush1.msra.mxu0 %v6239
      %6313 = vmatprep.subr.mxu0 0.0
      %6314 = vmatpush1.msra.mxu0 %v6240
      %6315 = vmatprep.subr.mxu0 0.0
      %6316 = vmatpush1.msra.mxu0 %v6241
      %6317 = vmatprep.subr.mxu0 0.0
      %6318 = vmatpush1.msra.mxu0 %v6242
      %6319 = vmatprep.subr.mxu0 0.0
      %6320 = vmatpush1.msra.mxu0 %v6243
      %6321 = vmatprep.subr.mxu0 0.0
      %6322 = vmatpush1.msra.mxu0 %v6244
      %6323 = vmatprep.subr.mxu0 0.0
      %6324 = vmatpush1.msra.mxu0 %v6245
      %6325 = vmatprep.subr.mxu0 0.0
      %6326 = vmatpush1.msra.mxu0 %v6246
      %6327 = vmatprep.subr.mxu0 0.0
      %6328 = vmatpush1.msra.mxu0 %v6247
      %6329 = vmatprep.subr.mxu0 0.0
      %6330 = vmatpush1.msra.mxu0 %v6248
      %6331 = vmatprep.subr.mxu0 0.0
      %6332 = vmatpush1.msra.mxu0 %v6249
      %6333 = vmatprep.subr.mxu0 0.0
      %6334 = vmatpush1.msra.mxu0 %v6250
      %6335 = vmatprep.subr.mxu0 0.0
      %6336 = vmatpush1.msra.mxu0 %v6251
      %6337 = vmatprep.subr.mxu0 0.0
      %6338 = vmatpush1.msra.mxu0 %v6252
      %6339 = vmatprep.subr.mxu0 0.0
      %6340 = vmatpush1.msra.mxu0 %v6253
      %6341 = vmatprep.subr.mxu0 0.0
      %6342 = vmatpush1.msra.mxu0 %v6254
      %6343 = vmatprep.subr.mxu0 0.0
      %6344 = vmatpush1.msra.mxu0 %v6255
      %6345 = vmatprep.subr.mxu0 0.0
      %6346 = vmatpush1.msra.mxu0 %v6256
      %6347 = vmatprep.subr.mxu0 0.0
      %6348 = vmatpush1.msra.mxu0 %v6257
      %6349 = vmatprep.subr.mxu0 0.0
      %6350 = vmatpush1.msra.mxu0 %v6258
      %6351 = vmatprep.subr.mxu0 0.0
      %6352 = vmatpush1.msra.mxu0 %v6259
      %6353 = vmatprep.subr.mxu0 0.0
      %6354 = vmatpush1.msra.mxu0 %v6260
      %6355 = vmatprep.subr.mxu0 0.0
      %6356 = vmatpush1.msra.mxu0 %v6261
      %6357 = vmatprep.subr.mxu0 0.0
      %6358 = vmatpush1.msra.mxu0 %v6262
      %6359 = vmatprep.subr.mxu0 0.0
      %6360 = vmatpush1.msra.mxu0 %v6263
      %6361 = vmatprep.mubr.f32.mxu0 %v6229
      %6362 = vmatmul.mubr.f32.gmra.mrb[0].mxu0 %v6228
      %v6363 = vpop.f32.mrb[0].mxu0
      %v6364 = vadd.f32 %v6296, %v6363
      %v6365 = vpop.f32.mrb[0].mxu0
      %6366 = vdwg.mxu0
      %6367 = vmatprep.subr.mxu0 0.0
      %6368 = vmatpush1.msra.mxu0 %v6264
      %6369 = vmatprep.subr.mxu0 0.0
      %6370 = vmatpush1.msra.mxu0 %v6265
      %6371 = vmatprep.subr.mxu0 0.0
      %6372 = vmatpush1.msra.mxu0 %v6266
      %6373 = vmatprep.subr.mxu0 0.0
      %6374 = vmatpush1.msra.mxu0 %v6267
      %6375 = vmatprep.subr.mxu0 0.0
      %6376 = vmatpush1.msra.mxu0 %v6268
      %6377 = vmatprep.subr.mxu0 0.0
      %6378 = vmatpush1.msra.mxu0 %v6269
      %6379 = vmatprep.subr.mxu0 0.0
      %6380 = vmatpush1.msra.mxu0 %v6270
      %6381 = vmatprep.subr.mxu0 0.0
      %6382 = vmatpush1.msra.mxu0 %v6271
      %6383 = vmatprep.subr.mxu0 0.0
      %6384 = vmatpush1.msra.mxu0 %v6272
      %6385 = vmatprep.subr.mxu0 0.0
      %6386 = vmatpush1.msra.mxu0 %v6273
      %6387 = vmatprep.subr.mxu0 0.0
      %6388 = vmatpush1.msra.mxu0 %v6274
      %6389 = vmatprep.subr.mxu0 0.0
      %6390 = vmatpush1.msra.mxu0 %v6275
      %6391 = vmatprep.subr.mxu0 0.0
      %6392 = vmatpush1.msra.mxu0 %v6276
      %6393 = vmatprep.subr.mxu0 0.0
      %6394 = vmatpush1.msra.mxu0 %v6277
      %6395 = vmatprep.subr.mxu0 0.0
      %6396 = vmatpush1.msra.mxu0 %v6278
      %6397 = vmatprep.subr.mxu0 0.0
      %6398 = vmatpush1.msra.mxu0 %v6279
      %6399 = vmatprep.subr.mxu0 0.0
      %6400 = vmatpush1.msra.mxu0 %v6280
      %6401 = vmatprep.subr.mxu0 0.0
      %6402 = vmatpush1.msra.mxu0 %v6281
      %6403 = vmatprep.subr.mxu0 0.0
      %6404 = vmatpush1.msra.mxu0 %v6282
      %6405 = vmatprep.subr.mxu0 0.0
      %6406 = vmatpush1.msra.mxu0 %v6283
      %6407 = vmatprep.subr.mxu0 0.0
      %6408 = vmatpush1.msra.mxu0 %v6284
      %6409 = vmatprep.subr.mxu0 0.0
      %6410 = vmatpush1.msra.mxu0 %v6285
      %6411 = vmatprep.subr.mxu0 0.0
      %6412 = vmatpush1.msra.mxu0 %v6286
      %6413 = vmatprep.subr.mxu0 0.0
      %6414 = vmatpush1.msra.mxu0 %v6287
      %6415 = vmatprep.subr.mxu0 0.0
      %6416 = vmatpush1.msra.mxu0 %v6288
      %6417 = vmatprep.subr.mxu0 0.0
      %6418 = vmatpush1.msra.mxu0 %v6289
      %6419 = vmatprep.subr.mxu0 0.0
      %6420 = vmatpush1.msra.mxu0 %v6290
      %6421 = vmatprep.subr.mxu0 0.0
      %6422 = vmatpush1.msra.mxu0 %v6291
      %6423 = vmatprep.subr.mxu0 0.0
      %6424 = vmatpush1.msra.mxu0 %v6292
      %6425 = vmatprep.subr.mxu0 0.0
      %6426 = vmatpush1.msra.mxu0 %v6293
      %6427 = vmatprep.subr.mxu0 0.0
      %6428 = vmatpush1.msra.mxu0 %v6294
      %6429 = vmatprep.subr.mxu0 0.0
      %6430 = vmatpush1.msra.mxu0 %v6295
      %6431 = vmatprep.mubr.f32.mxu0 %v6231
      %6432 = vmatmul.mubr.f32.gmra.mrb[0].mxu0 %v6230
      %v6433 = vpop.f32.mrb[0].mxu0
      %v6434 = vadd.f32 %v6364, %v6433
      %v6435 = vpop.f32.mrb[0].mxu0
      %6436 = vdwg.mxu0
      %v6437 = vmax.f32 %v6434, 0.0
      %v6438 = vld [vmem:[%s7] sm:$0xff]
      %v6439 = vld [vmem:[%s7 + $0x8] sm:$0xff]
      %v6440 = vld [vmem:[%s7 + $0x10] sm:$0xff]
      %v6441 = vld [vmem:[%s7 + $0x18] sm:$0xff]
      %v6442 = vld [vmem:[%s8] sm:$0xf]
      %v6444 = vlaneseq
      %v6445 = vshrl.u32 %v6444, 7
      %v6446 = vsub.s32 0, %v6445
      %v6447 = vrot.slane %v6442, %v6446
      %v6448 = vlaneseq
      %v6449 = vshrl.u32 %v6448, 7
      %v6450 = vsub.s32 1, %v6449
      %v6451 = vrot.slane %v6442, %v6450
      %v6452 = vlaneseq
      %v6453 = vshrl.u32 %v6452, 7
      %v6454 = vsub.s32 2, %v6453
      %v6455 = vrot.slane %v6442, %v6454
      %v6456 = vlaneseq
      %v6457 = vshrl.u32 %v6456, 7
      %v6458 = vsub.s32 3, %v6457
      %v6459 = vrot.slane %v6442, %v6458
      %vm6464 = vcmask 64512
      %v6466 = vsel %vm6464, %v6437, 0
      %6468 = vmatprep.subr.mxu0 %v6439
      %6469 = vmatpush1.msra.mxu0 %v6438
      %6470 = vmatprep.subr.mxu0 0.0
      %6471 = vmatpush1.msra.mxu0 0.0
      %6472 = vmatprep.subr.mxu0 0.0
      %6473 = vmatpush1.msra.mxu0 0.0
      %6474 = vmatprep.subr.mxu0 0.0
      %6475 = vmatpush1.msra.mxu0 0.0
      %6476 = vmatprep.subr.mxu0 0.0
      %6477 = vmatpush1.msra.mxu0 0.0
      %6478 = vmatprep.subr.mxu0 0.0
      %6479 = vmatpush1.msra.mxu0 0.0
      %6480 = vmatprep.subr.mxu0 0.0
      %6481 = vmatpush1.msra.mxu0 0.0
      %6482 = vmatprep.subr.mxu0 0.0
      %6483 = vmatpush1.msra.mxu0 0.0
      %6484 = vmatprep.subr.mxu0 0.0
      %6485 = vmatpush1.msra.mxu0 0.0
      %6486 = vmatprep.subr.mxu0 0.0
      %6487 = vmatpush1.msra.mxu0 0.0
      %6488 = vmatprep.subr.mxu0 0.0
      %6489 = vmatpush1.msra.mxu0 0.0
      %6490 = vmatprep.subr.mxu0 0.0
      %6491 = vmatpush1.msra.mxu0 0.0
      %6492 = vmatprep.subr.mxu0 0.0
      %6493 = vmatpush1.msra.mxu0 0.0
      %6494 = vmatprep.subr.mxu0 0.0
      %6495 = vmatpush1.msra.mxu0 0.0
      %6496 = vmatprep.subr.mxu0 0.0
      %6497 = vmatpush1.msra.mxu0 0.0
      %6498 = vmatprep.subr.mxu0 0.0
      %6499 = vmatpush1.msra.mxu0 0.0
      %6500 = vmatprep.subr.mxu0 0.0
      %6501 = vmatpush1.msra.mxu0 0.0
      %6502 = vmatprep.subr.mxu0 0.0
      %6503 = vmatpush1.msra.mxu0 0.0
      %6504 = vmatprep.subr.mxu0 0.0
      %6505 = vmatpush1.msra.mxu0 0.0
      %6506 = vmatprep.subr.mxu0 0.0
      %6507 = vmatpush1.msra.mxu0 0.0
      %6508 = vmatprep.subr.mxu0 0.0
      %6509 = vmatpush1.msra.mxu0 0.0
      %6510 = vmatprep.subr.mxu0 0.0
      %6511 = vmatpush1.msra.mxu0 0.0
      %6512 = vmatprep.subr.mxu0 0.0
      %6513 = vmatpush1.msra.mxu0 0.0
      %6514 = vmatprep.subr.mxu0 0.0
      %6515 = vmatpush1.msra.mxu0 0.0
      %6516 = vmatprep.subr.mxu0 0.0
      %6517 = vmatpush1.msra.mxu0 0.0
      %6518 = vmatprep.subr.mxu0 0.0
      %6519 = vmatpush1.msra.mxu0 0.0
      %6520 = vmatprep.subr.mxu0 0.0
      %6521 = vmatpush1.msra.mxu0 0.0
      %6522 = vmatprep.subr.mxu0 0.0
      %6523 = vmatpush1.msra.mxu0 0.0
      %6524 = vmatprep.subr.mxu0 0.0
      %6525 = vmatpush1.msra.mxu0 0.0
      %6526 = vmatprep.subr.mxu0 0.0
      %6527 = vmatpush1.msra.mxu0 0.0
      %6528 = vmatprep.subr.mxu0 0.0
      %6529 = vmatpush1.msra.mxu0 0.0
      %6530 = vmatprep.subr.mxu0 0.0
      %6531 = vmatpush1.msra.mxu0 0.0
      %6532 = vmatprep.mubr.f32.mxu0 0.0
      %6533 = vmatmul.mubr.f32.gmra.mrb[0].mxu0 %v6466
      %v6534 = vpop.f32.mrb[0].mxu0
      %v6535 = vadd.f32 %v6447, %v6534
      %v6536 = vpop.f32.mrb[0].mxu0
      %v6537 = vadd.f32 %v6451, %v6536
      %6538 = vdwg.mxu0
      %6539 = vmatprep.subr.mxu0 %v6441
      %6540 = vmatpush1.msra.mxu0 %v6440
      %6541 = vmatprep.subr.mxu0 0.0
      %6542 = vmatpush1.msra.mxu0 0.0
      %6543 = vmatprep.subr.mxu0 0.0
      %6544 = vmatpush1.msra.mxu0 0.0
      %6545 = vmatprep.subr.mxu0 0.0
      %6546 = vmatpush1.msra.mxu0 0.0
      %6547 = vmatprep.subr.mxu0 0.0
      %6548 = vmatpush1.msra.mxu0 0.0
      %6549 = vmatprep.subr.mxu0 0.0
      %6550 = vmatpush1.msra.mxu0 0.0
      %6551 = vmatprep.subr.mxu0 0.0
      %6552 = vmatpush1.msra.mxu0 0.0
      %6553 = vmatprep.subr.mxu0 0.0
      %6554 = vmatpush1.msra.mxu0 0.0
      %6555 = vmatprep.subr.mxu0 0.0
      %6556 = vmatpush1.msra.mxu0 0.0
      %6557 = vmatprep.subr.mxu0 0.0
      %6558 = vmatpush1.msra.mxu0 0.0
      %6559 = vmatprep.subr.mxu0 0.0
      %6560 = vmatpush1.msra.mxu0 0.0
      %6561 = vmatprep.subr.mxu0 0.0
      %6562 = vmatpush1.msra.mxu0 0.0
      %6563 = vmatprep.subr.mxu0 0.0
      %6564 = vmatpush1.msra.mxu0 0.0
      %6565 = vmatprep.subr.mxu0 0.0
      %6566 = vmatpush1.msra.mxu0 0.0
      %6567 = vmatprep.subr.mxu0 0.0
      %6568 = vmatpush1.msra.mxu0 0.0
      %6569 = vmatprep.subr.mxu0 0.0
      %6570 = vmatpush1.msra.mxu0 0.0
      %6571 = vmatprep.subr.mxu0 0.0
      %6572 = vmatpush1.msra.mxu0 0.0
      %6573 = vmatprep.subr.mxu0 0.0
      %6574 = vmatpush1.msra.mxu0 0.0
      %6575 = vmatprep.subr.mxu0 0.0
      %6576 = vmatpush1.msra.mxu0 0.0
      %6577 = vmatprep.subr.mxu0 0.0
      %6578 = vmatpush1.msra.mxu0 0.0
      %6579 = vmatprep.subr.mxu0 0.0
      %6580 = vmatpush1.msra.mxu0 0.0
      %6581 = vmatprep.subr.mxu0 0.0
      %6582 = vmatpush1.msra.mxu0 0.0
      %6583 = vmatprep.subr.mxu0 0.0
      %6584 = vmatpush1.msra.mxu0 0.0
      %6585 = vmatprep.subr.mxu0 0.0
      %6586 = vmatpush1.msra.mxu0 0.0
      %6587 = vmatprep.subr.mxu0 0.0
      %6588 = vmatpush1.msra.mxu0 0.0
      %6589 = vmatprep.subr.mxu0 0.0
      %6590 = vmatpush1.msra.mxu0 0.0
      %6591 = vmatprep.subr.mxu0 0.0
      %6592 = vmatpush1.msra.mxu0 0.0
      %6593 = vmatprep.subr.mxu0 0.0
      %6594 = vmatpush1.msra.mxu0 0.0
      %6595 = vmatprep.subr.mxu0 0.0
      %6596 = vmatpush1.msra.mxu0 0.0
      %6597 = vmatprep.subr.mxu0 0.0
      %6598 = vmatpush1.msra.mxu0 0.0
      %6599 = vmatprep.subr.mxu0 0.0
      %6600 = vmatpush1.msra.mxu0 0.0
      %6601 = vmatprep.subr.mxu0 0.0
      %6602 = vmatpush1.msra.mxu0 0.0
      %6603 = vmatprep.mubr.f32.mxu0 0.0
      %6604 = vmatmul.mubr.f32.gmra.mrb[0].mxu0 %v6466
      %v6605 = vpop.f32.mrb[0].mxu0
      %v6606 = vadd.f32 %v6455, %v6605
      %v6607 = vpop.f32.mrb[0].mxu0
      %v6608 = vadd.f32 %v6459, %v6607
      %6609 = vdwg.mxu0
      %v6610 = vxor.u32 %v6535, 2147483648
      %v6611 = vxor.u32 %v6537, 2147483648
      %v6612 = vxor.u32 %v6606, 2147483648
      %v6613 = vxor.u32 %v6608, 2147483648
      %v6614 = vmul.f32 %v6610, 1.442695
      %v6615 = vpow.pop %v6614
      %v6616 = vmul.f32 %v6611, 1.442695
      %v6617 = vpow.pop %v6616
      %v6618 = vmul.f32 %v6612, 1.442695
      %v6619 = vpow.pop %v6618
      %v6620 = vmul.f32 %v6613, 1.442695
      %v6621 = vpow.pop %v6620
      %v6622 = vadd.f32 %v6615, 1.0
      %v6623 = vadd.f32 %v6617, 1.0
      %v6624 = vadd.f32 %v6619, 1.0
      %v6625 = vadd.f32 %v6621, 1.0
      %v6626 = vrcp.pop %v6622
      %v6627 = vmul.f32 1.0, %v6626
      %v6628 = vrcp.pop %v6623
      %v6629 = vmul.f32 1.0, %v6628
      %v6630 = vrcp.pop %v6624
      %v6631 = vmul.f32 1.0, %v6630
      %v6632 = vrcp.pop %v6625
      %v6633 = vmul.f32 1.0, %v6632
      %v6634 = vlaneseq
      %v6635 = vshrl.u32 %v6634, 7
      %v6636 = vsub.s32 0, %v6635
      %v6637 = vrot.slane %v6627, %v6636
      %v6638 = vlaneseq
      %v6639 = vshrl.u32 %v6638, 7
      %v6640 = vsub.s32 0, %v6639
      %v6641 = vrot.slane %v6629, %v6640
      %v6642 = vlaneseq
      %v6643 = vshrl.u32 %v6642, 7
      %v6644 = vsub.s32 0, %v6643
      %v6645 = vrot.slane %v6631, %v6644
      %v6646 = vlaneseq
      %v6647 = vshrl.u32 %v6646, 7
      %v6648 = vsub.s32 0, %v6647
      %v6649 = vrot.slane %v6633, %v6648
      %v6650 = vmul.f32 %v5934, %v6637
      %v6651 = vmul.f32 %v5936, %v6641
      %v6652 = vmul.f32 %v6192, %v6645
      %v6653 = vmul.f32 %v6194, %v6649
      %v6654 = vmul.f32 %v5938, %v6637
      %v6655 = vmul.f32 %v5940, %v6641
      %v6656 = vmul.f32 %v6196, %v6645
      %v6657 = vmul.f32 %v6198, %v6649
      %v6658 = vadd.f32 %v6650, %v334
      %v6659 = vadd.f32 %v6651, %v335
      %v6660 = vadd.f32 %v6652, %v336
      %v6661 = vadd.f32 %v6653, %v337
      %v6662 = vadd.f32 %v6654, %v338
      %v6663 = vadd.f32 %v6655, %v339
      %v6664 = vadd.f32 %v6656, %v340
      %v6665 = vadd.f32 %v6657, %v341
      %6666 = vst [vmem:[%s332] sm:$0xff] %v6658
      %6667 = vst [vmem:[%s332 + $0x8] sm:$0xff] %v6659
      %6668 = vst [vmem:[%s332 + $0x10] sm:$0xff] %v6660
      %6669 = vst [vmem:[%s332 + $0x18] sm:$0xff] %v6661
      %6670 = vst [vmem:[%s332 + $0x20] sm:$0xff] %v6662
      %6671 = vst [vmem:[%s332 + $0x28] sm:$0xff] %v6663
      %6672 = vst [vmem:[%s332 + $0x30] sm:$0xff] %v6664
      %6673 = vst [vmem:[%s332 + $0x38] sm:$0xff] %v6665
      %p6674 = scmp.lt.s32.totalorder %s20, 1
      %s6675 = scalar_select %p6674, %s20, 1
      %s6676 = smul.addr %s6675, 8
      %s6677 = smul.addr %s6676, 8
      %s6678 = scalar_lea.vmem %s9, %s6677
      // Predicated region
      $region57: #{rcab_forward.1} parent=55 // pred_check
        %p6679 = pneg %p232
      $region58: #{rcab_forward.1} parent=55 // pred_check_branch
        %6681 = sbr.rel (%p6679) target = $region60
      $region59: #{rcab_forward.1} parent=55 // pred_region
        _
      $region60: #{rcab_forward.1} parent=55 // pred_fallthru
        _
    $region56: #{rcab_forward.1} parent=5 // pred_fallthru
      _
    %p6682 = scmp.le.s32.totalorder 2, %s15
    // Predicated region
    $region61: #{rcab_forward.1} parent=5 // pred_check
      %p6683 = pneg %p6682
    $region62: #{rcab_forward.1} parent=5 // pred_check_branch
      %6685 = sbr.rel (%p6683) target = $region64
    $region63: #{rcab_forward.1} parent=5 // pred_region
      %s6686 = ssub.s32 %s15, 2
      // Predicated region
      $region65: #{rcab_forward.1} parent=63 // pred_check
        %p6687 = pneg %p238
      $region66: #{rcab_forward.1} parent=63 // pred_check_branch
        %6689 = sbr.rel (%p6687) target = $region68
      $region67: #{rcab_forward.1} parent=63 // pred_region
        %p6690 = scmp.lt.s32.totalorder %s21, 1
        %s6691 = scalar_select %p6690, %s21, 1
        %s6692 = smul.addr %s6691, 8
        %s6693 = smul.addr %s6692, 8
        %s6694 = scalar_lea.vmem %s9, %s6693
      $region68: #{rcab_forward.1} parent=63 // pred_fallthru
        _
    $region64: #{rcab_forward.1} parent=5 // pred_fallthru
      _
  $region6: #{rcab_forward.1} parent=0 // loop_footer
    %s19 = sadd.s32 1, %s15
  $region7: #{rcab_forward.1} parent=0 // loop_footer_branch
    %14 = sbr.rel target = $region3
  $region8: #{rcab_forward.1} parent=0 // loop_exit
    _

</llo_original>
